<compile_context>
chip_gen: v7x
topology: tpu7x:2x2x1
jax: 0.10.0
libtpu: 0.0.40
codegen_flags: <defaults>
</compile_context>

<pallas_src>
import functools

import jax
import jax.numpy as jnp
import numpy as np
from jax.experimental import pallas as pl
from jax.experimental.pallas import tpu as pltpu

_WOFF = 8  # sublane-aligned W offset of the interior inside the padded scratches


# ----------------------------- fused Pallas kernel ----------------------------- #

def _fused_espcn_kernel(x_ref,
                        w1_ref, b1_ref, w2_ref, b2_ref,
                        w3_ref, b3_ref, w4_ref, b4_ref,
                        o_ref,
                        a1p_ref, a2p_ref, patch_ref,
                        *, Nb, H, W, cfg):
    """Fused conv1..conv4 for Nb images.

    x_ref    : (Nb, H, W, C0p)          channel-padded input block (f32)
    wX_ref   : (K*stride, CoutX)        im2col weights, (kw, kh, cin) order, rows
                                        [K*cin, stride) of each kw block are zero
    bX_ref   : (1, CoutX) f32
    o_ref    : (Nb, H, W, 128)          lane-dense conv4 output (pre pixel-shuffle)
    a1p_ref  : (Nb, H+2p1, WOFF+W+p1, 8)   padded conv1 input scratch (f32)
    a2p_ref  : (Nb, H+2,   WOFF+W+1, 64)   shared padded scratch for conv2/3/4 (f32)
    patch_ref: (Nb*H*W, max_width)      im2col patch scratch (compute dtype)
    cfg      : per-layer (K, cin, pad, stride, relu)
    """
    M = Nb * H * W

    def zero_halo(a_ref, pad):
        # Only the halo strips are written; the interior is fully overwritten by
        # stage() every step, so no full-buffer zero fill is needed.
        n, Ht, Wt, C = a_ref.shape
        zr = jnp.zeros((n, pad, Wt, C), a_ref.dtype)
        a_ref[:, 0:pad, :, :] = zr                       # top halo rows
        a_ref[:, pad + H:Ht, :, :] = zr                  # bottom halo rows
        zc = jnp.zeros((n, Ht, pad, C), a_ref.dtype)
        a_ref[:, :, _WOFF - pad:_WOFF, :] = zc           # left halo cols
        a_ref[:, :, _WOFF + W:_WOFF + W + pad, :] = zc   # right halo cols

    def stage(a_ref, val, pad, cin):
        # Interior write at a sublane-aligned W offset (_WOFF); halo untouched.
        a_ref[:, pad:pad + H, _WOFF:_WOFF + W, 0:cin] = val.astype(a_ref.dtype)

    def conv(a_ref, lcfg, w_ref, b_ref):
        K, cin, pad, stride, relu = lcfg
        tpc = 128 // cin                  # taps per 128-lane chunk (cin | 128)
        nck = stride // 128               # 128-lane chunks per kw block
        tail_taps = K - (nck - 1) * tpc
        fill = 128 - tail_taps * cin
        zfill = jnp.zeros((M, fill), a_ref.dtype) if fill else None
        for kw in range(K):
            # ONE sublane-shifted read per kw (hoisted out of the kh loop).
            ws = _WOFF - pad + kw
            sh = a_ref[:, :, ws:ws + W, 0:cin]           # (Nb, H+2p, W, cin)
            for c in range(nck):
                khs = range(c * tpc, min((c + 1) * tpc, K))
                # kh taps are free outer-axis slices of the per-kw value.
                pieces = [sh[:, kh:kh + H].reshape(M, cin) for kh in khs]
                if c == nck - 1 and zfill is not None:
                    pieces.append(zfill)
                chunk = pieces[0] if len(pieces) == 1 else jnp.concatenate(pieces, axis=-1)
                col = kw * stride + c * 128
                # Dense, 128-lane-aligned patch store.
                patch_ref[:, col:col + 128] = chunk.astype(patch_ref.dtype)
        acc = jnp.dot(patch_ref[:, 0:K * stride], w_ref[...],
                      preferred_element_type=jnp.float32)       # (M, Cout) f32
        acc = acc + b_ref[...]
        return jnp.maximum(acc, 0.0) if relu else acc

    # conv1: 5x5, pad 2, ReLU (input channels pre-padded to 8 in the wrapper)
    zero_halo(a1p_ref, cfg[0][2])
    stage(a1p_ref, x_ref[...], cfg[0][2], a1p_ref.shape[-1])
    z = conv(a1p_ref, cfg[0], w1_ref, b1_ref)            # (M, 64)

    # conv2/conv3/conv4 share one padded-activation scratch; its halo is zeroed
    # once per grid step (interior writes never touch it).
    zero_halo(a2p_ref, cfg[1][2])
    stage(a2p_ref, z.reshape(Nb, H, W, -1), cfg[1][2], z.shape[-1])
    z = conv(a2p_ref, cfg[1], w2_ref, b2_ref)            # (M, 64)

    stage(a2p_ref, z.reshape(Nb, H, W, -1), cfg[2][2], z.shape[-1])
    z = conv(a2p_ref, cfg[2], w3_ref, b3_ref)            # (M, 32)

    stage(a2p_ref, z.reshape(Nb, H, W, -1), cfg[3][2], z.shape[-1])
    z = conv(a2p_ref, cfg[3], w4_ref, b4_ref)            # (M, 128) lane-dense

    o_ref[...] = z.reshape(Nb, H, W, -1).astype(o_ref.dtype)


# --------------------------------- wrapper ------------------------------------- #

def _round_up(x, m):
    return ((x + m - 1) // m) * m


def _flatten_weight(w_hwio, cin_p, cout_p, stride, dtype):
    # Row order must match the kernel's patch build:
    #   row = kw*stride + kh*cin_p + c ; rows [K*cin_p, stride) of each kw block are 0.
    K, _, Cin, Cout = w_hwio.shape
    w = jnp.pad(w_hwio, ((0, 0), (0, 0), (0, cin_p - Cin), (0, cout_p - Cout)))
    w = jnp.transpose(w, (1, 0, 2, 3)).reshape(K, K * cin_p, cout_p)   # (kw, kh*cin, cout)
    w = jnp.pad(w, ((0, 0), (0, stride - K * cin_p), (0, 0)))
    return w.reshape(K * stride, cout_p).astype(dtype)


def pixel_shuffle_nhwc(x, r):
    # out[n, h*r+i, w*r+j, c] = x[n, h, w, c*r*r + i*r + j]  (PyTorch channel order)
    N, H, W, Cr2 = x.shape
    C = Cr2 // (r * r)
    x = x.reshape(N, H, W, C, r, r)
    x = x.transpose(0, 1, 4, 2, 5, 3)                    # (N, H, i, W, j, C)
    return x.reshape(N, H * r, W * r, C)


def pixel_shuffle_nchw(x, r):
    # Exact PyTorch nn.PixelShuffle semantics (for the cross-check reference).
    N, Cr2, H, W = x.shape
    C = Cr2 // (r * r)
    x = x.reshape(N, C, r, r, H, W)
    x = x.transpose(0, 1, 4, 2, 5, 3)                    # (N, C, H, i, W, j)
    return x.reshape(N, C, H * r, W * r)


def espcn_forward(x_nchw, params, upscale_factor=2, *,
                  use_bf16=False, images_per_step=None):
    """x_nchw: (N, C, H, W) f32 -> (N, C, H*r, W*r) f32, PyTorch ESPCN semantics."""
    assert len(params) == 4
    x = jnp.transpose(x_nchw, (0, 2, 3, 1)).astype(jnp.float32)      # NCHW -> NHWC
    N, H, W, C0 = x.shape
    r = upscale_factor
    cdt = jnp.bfloat16 if use_bf16 else jnp.float32

    # Layout-free (Nb,H,W,C) <-> (Nb*H*W,C) reshapes rely on W being a sublane multiple.
    assert W % 8 == 0 and H % 8 == 0, "H and W must be multiples of 8"

    cfg, wfs, bfs = [], [], []
    for li, (w, b) in enumerate(params):                 # w: HWIO (K, K, Cin, Cout)
        K, Cin, Cout = int(w.shape[0]), int(w.shape[2]), int(w.shape[3])
        cin_p = _round_up(Cin, 8) if li == 0 else Cin    # conv1: pad 3 -> 8
        assert 128 % cin_p == 0, f"layer {li}: Cin={cin_p} must divide 128"
        cout_p = _round_up(Cout, 128) if li == len(params) - 1 else Cout  # lane-dense out
        stride = _round_up(K * cin_p, 128)               # kw-block width in the patch
        cfg.append((K, cin_p, K // 2, stride, li < len(params) - 1))
        wfs.append(_flatten_weight(w, cin_p, cout_p, stride, cdt))
        bfs.append(jnp.pad(b, (0, cout_p - Cout)).reshape(1, cout_p).astype(jnp.float32))

    C0p = cfg[0][1]
    x = jnp.pad(x, ((0, 0), (0, 0), (0, 0), (0, C0p - C0)))

    if images_per_step is None:
        # Keep the grid >= 2 where possible (two v7x TensorCores) while still
        # folding several images into the matmul M dim on bigger batches.
        images_per_step = 1 if N <= 2 else min(4, N // 2)
        while N % images_per_step:
            images_per_step -= 1
    Nb = int(images_per_step)
    assert N % Nb == 0, f"N={N} must be divisible by images_per_step={Nb}"
    G = N // Nb
    M = Nb * H * W

    c4 = int(wfs[3].shape[1])                            # padded conv4 Cout (128)
    c4_real = int(params[3][1].shape[0])                 # real conv4 Cout (C*r*r)
    a2_ch = max(c[1] for c in cfg[1:])                   # shared hidden scratch channels
    max_width = max(c[0] * c[3] for c in cfg)            # widest im2col patch
    pad1 = cfg[0][2]
    pad2 = max(c[2] for c in cfg[1:])

    kernel = functools.partial(_fused_espcn_kernel, Nb=Nb, H=H, W=W, cfg=tuple(cfg))

    def const_spec(a):                                   # whole-array VMEM block
        return pl.BlockSpec(a.shape, lambda g: (0, 0))

    y = pl.pallas_call(
        kernel,
        out_shape=jax.ShapeDtypeStruct((N, H, W, c4), jnp.float32),
        grid=(G,),
        in_specs=[
            pl.BlockSpec((Nb, H, W, C0p), lambda g: (g, 0, 0, 0)),
            const_spec(wfs[0]), const_spec(bfs[0]),
            const_spec(wfs[1]), const_spec(bfs[1]),
            const_spec(wfs[2]), const_spec(bfs[2]),
            const_spec(wfs[3]), const_spec(bfs[3]),
        ],
        out_specs=pl.BlockSpec((Nb, H, W, c4), lambda g: (g, 0, 0, 0)),
        scratch_shapes=[
            pltpu.VMEM((Nb, H + 2 * pad1, _WOFF + W + pad1, C0p), jnp.float32),
            pltpu.VMEM((Nb, H + 2 * pad2, _WOFF + W + pad2, a2_ch), jnp.float32),
            pltpu.VMEM((M, max_width), cdt),
        ],
        compiler_params=pltpu.CompilerParams(
            dimension_semantics=("parallel",)),
    )(x, wfs[0], bfs[0], wfs[1], bfs[1], wfs[2], bfs[2], wfs[3], bfs[3])

    y = y[..., :c4_real]                                 # drop conv4 lane padding
    y = pixel_shuffle_nhwc(y, r)                         # (N, H*r, W*r, C)
    return jnp.transpose(y, (0, 3, 1, 2))                # NHWC -> NCHW


# --------------------------------- init ----------------------------------------- #

def _orthogonal(key, cout, fan_in, gain):
    # Matches torch.nn.init.orthogonal_ semantics (orthonormal rows when cout<=fan_in).
    a = jax.random.normal(key, (fan_in, cout), jnp.float32)
    q, _ = jnp.linalg.qr(a)                              # orthonormal columns
    return gain * q.T                                    # (cout, fan_in)


def init_espcn_params(key, nb_channel=3, upscale_factor=2, base_kernel=64):
    kernels = [int(x * base_kernel) for x in [1, 1, 1 / 2]]
    cfg = [
        (nb_channel, kernels[0], 5, np.sqrt(2.0)),       # conv1 (relu gain)
        (kernels[0], kernels[1], 3, np.sqrt(2.0)),       # conv2
        (kernels[1], kernels[2], 3, np.sqrt(2.0)),       # conv3
        (kernels[2], nb_channel * upscale_factor ** 2, 3, 1.0),  # conv4
    ]
    params = []
    for (cin, cout, k, gain) in cfg:
        key, kw_, kb_ = jax.random.split(key, 3)
        w_flat = _orthogonal(kw_, cout, cin * k * k, gain)   # (Cout, Cin*k*k)
        w = w_flat.reshape(cout, cin, k, k)                  # PyTorch OIHW
        w_hwio = jnp.transpose(w, (2, 3, 1, 0))              # -> HWIO
        bound = 1.0 / np.sqrt(cin * k * k)
        b = jax.random.uniform(kb_, (cout,), jnp.float32, -bound, bound)
        params.append((w_hwio, b))
    return params


# ------------------------------- references ------------------------------------- #

def _conv_ref_nhwc(x, w, b, relu):
    y = jax.lax.conv_general_dilated(
        x, w, window_strides=(1, 1), padding="SAME",
        dimension_numbers=("NHWC", "HWIO", "NHWC"))
    y = y + b.reshape(1, 1, 1, -1)
    return jnp.maximum(y, 0.0) if relu else y


def espcn_forward_ref_nhwc(x_nchw, params, upscale_factor=2):
    x = jnp.transpose(x_nchw, (0, 2, 3, 1))
    for i, (w, b) in enumerate(params):
        x = _conv_ref_nhwc(x, w, b, relu=(i < len(params) - 1))
    x = pixel_shuffle_nhwc(x, upscale_factor)
    return jnp.transpose(x, (0, 3, 1, 2))


def espcn_forward_ref_nchw(x_nchw, params, upscale_factor=2):
    # Pure-NCHW reference (OIHW weights + torch-style NCHW PixelShuffle):
    # independently validates the pixel-shuffle channel ordering.
    x = x_nchw
    for i, (w_hwio, b) in enumerate(params):
        w_oihw = jnp.transpose(w_hwio, (3, 2, 0, 1))
        y = jax.lax.conv_general_dilated(
            x, w_oihw, window_strides=(1, 1), padding="SAME",
            dimension_numbers=("NCHW", "OIHW", "NCHW"))
        y = y + b.reshape(1, -1, 1, 1)
        x = jnp.maximum(y, 0.0) if i < len(params) - 1 else y
    return pixel_shuffle_nchw(x, upscale_factor)


# ---------------------------------- main ----------------------------------------- #

if __name__ == "__main__":
    key = jax.random.PRNGKey(0)
    k_param, k_x = jax.random.split(key)

    nb_channel, upscale, base_kernel = 3, 2, 64
    params = init_espcn_params(k_param, nb_channel, upscale, base_kernel)

    x = jax.random.normal(k_x, (2, nb_channel, 16, 16), jnp.float32)   # NCHW

    ref_nhwc = jax.block_until_ready(espcn_forward_ref_nhwc(x, params, upscale))
    ref_nchw = jax.block_until_ready(espcn_forward_ref_nchw(x, params, upscale))

    # pixel-shuffle channel-ordering cross-check (NHWC shuffle vs torch NCHW shuffle)
    shuffle_err = float(jnp.max(jnp.abs(ref_nhwc - ref_nchw)))
    assert shuffle_err < 1e-3, f"pixel-shuffle mismatch {shuffle_err}"

    # f32 path, one image per grid step -> grid=(2,) "parallel" (both v7x TCs busy)
    out_a = jax.block_until_ready(
        espcn_forward(x, params, upscale, use_bf16=False, images_per_step=1))
    assert out_a.shape == (2, nb_channel, 16 * upscale, 16 * upscale), out_a.shape
    err_a = float(jnp.max(jnp.abs(out_a - ref_nchw)))
    assert err_a < 1e-3, f"f32 (grid=2) kernel max abs err {err_a}"

    # f32 path, both images folded into the matmul M dim -> grid=(1,)
    out_b = jax.block_until_ready(
        espcn_forward(x, params, upscale, use_bf16=False, images_per_step=2))
    err_b = float(jnp.max(jnp.abs(out_b - ref_nchw)))
    assert err_b < 1e-3, f"f32 (batched) kernel max abs err {err_b}"

    # bf16 MXU path: bf16 patch/weights, f32 accumulation (also good on v5e).
    out_c = jax.block_until_ready(espcn_forward(x, params, upscale, use_bf16=True))
    scale = float(jnp.max(jnp.abs(ref_nchw)))
    err_c = float(jnp.max(jnp.abs(out_c - ref_nchw)))
    assert err_c < 5e-2 * max(1.0, scale), f"bf16 kernel max abs err {err_c}"

    print("KERNEL_OK")
</pallas_src>

<mosaic_0001>
module attributes {stable_mosaic.version = 11 : i64} {
  func.func @_fused_espcn_kernel(%arg0: i32, %arg1: memref<1x16x16x8xf32, #tpu.memory_space<vmem>>, %arg2: memref<640x64xf32, #tpu.memory_space<vmem>>, %arg3: memref<1x64xf32, #tpu.memory_space<vmem>>, %arg4: memref<768x64xf32, #tpu.memory_space<vmem>>, %arg5: memref<1x64xf32, #tpu.memory_space<vmem>>, %arg6: memref<768x32xf32, #tpu.memory_space<vmem>>, %arg7: memref<1x32xf32, #tpu.memory_space<vmem>>, %arg8: memref<384x128xf32, #tpu.memory_space<vmem>>, %arg9: memref<1x128xf32, #tpu.memory_space<vmem>>, %arg10: memref<1x16x16x128xf32, #tpu.memory_space<vmem>>, %arg11: memref<1x20x26x8xf32, #tpu.memory_space<vmem>>, %arg12: memref<1x18x25x64xf32, #tpu.memory_space<vmem>>, %arg13: memref<256x768xf32, #tpu.memory_space<vmem>>) attributes {dimension_semantics = [#tpu.dimension_semantics<parallel>], iteration_bounds = array<i64: 2>, scalar_prefetch = 0 : i64, scratch_operands = 3 : i64, tpu.core_type = #tpu.core_type<tc>, window_params = [{transform_indices = @transform_0, window_bounds = array<i64: 1, 16, 16, 8>}, {pipeline_mode = #tpu.pipeline_mode<synchronous>, transform_indices = @transform_1, window_bounds = array<i64: 640, 64>}, {pipeline_mode = #tpu.pipeline_mode<synchronous>, transform_indices = @transform_2, window_bounds = array<i64: 1, 64>}, {pipeline_mode = #tpu.pipeline_mode<synchronous>, transform_indices = @transform_3, window_bounds = array<i64: 768, 64>}, {pipeline_mode = #tpu.pipeline_mode<synchronous>, transform_indices = @transform_4, window_bounds = array<i64: 1, 64>}, {pipeline_mode = #tpu.pipeline_mode<synchronous>, transform_indices = @transform_5, window_bounds = array<i64: 768, 32>}, {pipeline_mode = #tpu.pipeline_mode<synchronous>, transform_indices = @transform_6, window_bounds = array<i64: 1, 32>}, {pipeline_mode = #tpu.pipeline_mode<synchronous>, transform_indices = @transform_7, window_bounds = array<i64: 384, 128>}, {pipeline_mode = #tpu.pipeline_mode<synchronous>, transform_indices = @transform_8, window_bounds = array<i64: 1, 128>}, {transform_indices = @transform_9, window_bounds = array<i64: 1, 16, 16, 128>}]} {
    %cst = arith.constant 0.000000e+00 : f32
    %0 = vector.broadcast %cst : f32 to vector<1x2x26x8xf32>
    %c0 = arith.constant 0 : index
    %c0_0 = arith.constant 0 : index
    %c0_1 = arith.constant 0 : index
    %c0_2 = arith.constant 0 : index
    %1 = vector.load %arg11[%c0, %c0_0, %c0_1, %c0_2] : memref<1x20x26x8xf32, #tpu.memory_space<vmem>>, vector<1x2x26x8xf32>
    tpu.vector_store %arg11[%c0, %c0_0, %c0_1, %c0_2], %0 {strides = array<i32>} : memref<1x20x26x8xf32, #tpu.memory_space<vmem>>, vector<1x2x26x8xf32>,
    %c0_3 = arith.constant 0 : index
    %c18 = arith.constant 18 : index
    %c0_4 = arith.constant 0 : index
    %c0_5 = arith.constant 0 : index
    %2 = vector.load %arg11[%c0_3, %c18, %c0_4, %c0_5] : memref<1x20x26x8xf32, #tpu.memory_space<vmem>>, vector<1x2x26x8xf32>
    tpu.vector_store %arg11[%c0_3, %c18, %c0_4, %c0_5], %0 {strides = array<i32>} : memref<1x20x26x8xf32, #tpu.memory_space<vmem>>, vector<1x2x26x8xf32>,
    %cst_6 = arith.constant 0.000000e+00 : f32
    %3 = vector.broadcast %cst_6 : f32 to vector<1x20x2x8xf32>
    %c0_7 = arith.constant 0 : index
    %c0_8 = arith.constant 0 : index
    %c6 = arith.constant 6 : index
    %c0_9 = arith.constant 0 : index
    %4 = vector.load %arg11[%c0_7, %c0_8, %c6, %c0_9] : memref<1x20x26x8xf32, #tpu.memory_space<vmem>>, vector<1x20x2x8xf32>
    tpu.vector_store %arg11[%c0_7, %c0_8, %c6, %c0_9], %3 {strides = array<i32>} : memref<1x20x26x8xf32, #tpu.memory_space<vmem>>, vector<1x20x2x8xf32>,
    %c0_10 = arith.constant 0 : index
    %c0_11 = arith.constant 0 : index
    %c24 = arith.constant 24 : index
    %c0_12 = arith.constant 0 : index
    %5 = vector.load %arg11[%c0_10, %c0_11, %c24, %c0_12] : memref<1x20x26x8xf32, #tpu.memory_space<vmem>>, vector<1x20x2x8xf32>
    tpu.vector_store %arg11[%c0_10, %c0_11, %c24, %c0_12], %3 {strides = array<i32>} : memref<1x20x26x8xf32, #tpu.memory_space<vmem>>, vector<1x20x2x8xf32>,
    %c0_13 = arith.constant 0 : index
    %c0_14 = arith.constant 0 : index
    %c0_15 = arith.constant 0 : index
    %c0_16 = arith.constant 0 : index
    %6 = vector.load %arg1[%c0_13, %c0_14, %c0_15, %c0_16] : memref<1x16x16x8xf32, #tpu.memory_space<vmem>>, vector<1x16x16x8xf32>
    %c0_17 = arith.constant 0 : index
    %c2 = arith.constant 2 : index
    %c8 = arith.constant 8 : index
    %c0_18 = arith.constant 0 : index
    %7 = vector.load %arg11[%c0_17, %c2, %c8, %c0_18] : memref<1x20x26x8xf32, #tpu.memory_space<vmem>>, vector<1x16x16x8xf32>
    tpu.vector_store %arg11[%c0_17, %c2, %c8, %c0_18], %6 {strides = array<i32>} : memref<1x20x26x8xf32, #tpu.memory_space<vmem>>, vector<1x16x16x8xf32>,
    %cst_19 = arith.constant 0.000000e+00 : f32
    %8 = vector.broadcast %cst_19 : f32 to vector<256x88xf32>
    %c0_20 = arith.constant 0 : index
    %c0_21 = arith.constant 0 : index
    %c6_22 = arith.constant 6 : index
    %c0_23 = arith.constant 0 : index
    %9 = vector.load %arg11[%c0_20, %c0_21, %c6_22, %c0_23] : memref<1x20x26x8xf32, #tpu.memory_space<vmem>>, vector<1x20x16x8xf32>
    %10 = vector.extract_strided_slice %9 {offsets = [0, 0, 0, 0], sizes = [1, 16, 16, 8], strides = [1, 1, 1, 1]} : vector<1x20x16x8xf32> to vector<1x16x16x8xf32>
    %11 = vector.shape_cast %10 : vector<1x16x16x8xf32> to vector<256x8xf32>
    %12 = vector.extract_strided_slice %9 {offsets = [0, 1, 0, 0], sizes = [1, 16, 16, 8], strides = [1, 1, 1, 1]} : vector<1x20x16x8xf32> to vector<1x16x16x8xf32>
    %13 = vector.shape_cast %12 : vector<1x16x16x8xf32> to vector<256x8xf32>
    %14 = vector.extract_strided_slice %9 {offsets = [0, 2, 0, 0], sizes = [1, 16, 16, 8], strides = [1, 1, 1, 1]} : vector<1x20x16x8xf32> to vector<1x16x16x8xf32>
    %15 = vector.shape_cast %14 : vector<1x16x16x8xf32> to vector<256x8xf32>
    %16 = vector.extract_strided_slice %9 {offsets = [0, 3, 0, 0], sizes = [1, 16, 16, 8], strides = [1, 1, 1, 1]} : vector<1x20x16x8xf32> to vector<1x16x16x8xf32>
    %17 = vector.shape_cast %16 : vector<1x16x16x8xf32> to vector<256x8xf32>
    %18 = vector.extract_strided_slice %9 {offsets = [0, 4, 0, 0], sizes = [1, 16, 16, 8], strides = [1, 1, 1, 1]} : vector<1x20x16x8xf32> to vector<1x16x16x8xf32>
    %19 = vector.shape_cast %18 : vector<1x16x16x8xf32> to vector<256x8xf32>
    %20 = tpu.concatenate %11, %13, %15, %17, %19, %8 in 1 : vector<256x8xf32>, vector<256x8xf32>, vector<256x8xf32>, vector<256x8xf32>, vector<256x8xf32>, vector<256x88xf32> -> vector<256x128xf32>
    %c0_24 = arith.constant 0 : index
    %c0_25 = arith.constant 0 : index
    %21 = vector.load %arg13[%c0_24, %c0_25] : memref<256x768xf32, #tpu.memory_space<vmem>>, vector<256x128xf32>
    tpu.vector_store %arg13[%c0_24, %c0_25], %20 {strides = array<i32>} : memref<256x768xf32, #tpu.memory_space<vmem>>, vector<256x128xf32>,
    %c0_26 = arith.constant 0 : index
    %c0_27 = arith.constant 0 : index
    %c7 = arith.constant 7 : index
    %c0_28 = arith.constant 0 : index
    %22 = vector.load %arg11[%c0_26, %c0_27, %c7, %c0_28] : memref<1x20x26x8xf32, #tpu.memory_space<vmem>>, vector<1x20x16x8xf32>
    %23 = vector.extract_strided_slice %22 {offsets = [0, 0, 0, 0], sizes = [1, 16, 16, 8], strides = [1, 1, 1, 1]} : vector<1x20x16x8xf32> to vector<1x16x16x8xf32>
    %24 = vector.shape_cast %23 : vector<1x16x16x8xf32> to vector<256x8xf32>
    %25 = vector.extract_strided_slice %22 {offsets = [0, 1, 0, 0], sizes = [1, 16, 16, 8], strides = [1, 1, 1, 1]} : vector<1x20x16x8xf32> to vector<1x16x16x8xf32>
    %26 = vector.shape_cast %25 : vector<1x16x16x8xf32> to vector<256x8xf32>
    %27 = vector.extract_strided_slice %22 {offsets = [0, 2, 0, 0], sizes = [1, 16, 16, 8], strides = [1, 1, 1, 1]} : vector<1x20x16x8xf32> to vector<1x16x16x8xf32>
    %28 = vector.shape_cast %27 : vector<1x16x16x8xf32> to vector<256x8xf32>
    %29 = vector.extract_strided_slice %22 {offsets = [0, 3, 0, 0], sizes = [1, 16, 16, 8], strides = [1, 1, 1, 1]} : vector<1x20x16x8xf32> to vector<1x16x16x8xf32>
    %30 = vector.shape_cast %29 : vector<1x16x16x8xf32> to vector<256x8xf32>
    %31 = vector.extract_strided_slice %22 {offsets = [0, 4, 0, 0], sizes = [1, 16, 16, 8], strides = [1, 1, 1, 1]} : vector<1x20x16x8xf32> to vector<1x16x16x8xf32>
    %32 = vector.shape_cast %31 : vector<1x16x16x8xf32> to vector<256x8xf32>
    %33 = tpu.concatenate %24, %26, %28, %30, %32, %8 in 1 : vector<256x8xf32>, vector<256x8xf32>, vector<256x8xf32>, vector<256x8xf32>, vector<256x8xf32>, vector<256x88xf32> -> vector<256x128xf32>
    %c0_29 = arith.constant 0 : index
    %c128 = arith.constant 128 : index
    %34 = vector.load %arg13[%c0_29, %c128] : memref<256x768xf32, #tpu.memory_space<vmem>>, vector<256x128xf32>
    tpu.vector_store %arg13[%c0_29, %c128], %33 {strides = array<i32>} : memref<256x768xf32, #tpu.memory_space<vmem>>, vector<256x128xf32>,
    %c0_30 = arith.constant 0 : index
    %c0_31 = arith.constant 0 : index
    %c8_32 = arith.constant 8 : index
    %c0_33 = arith.constant 0 : index
    %35 = vector.load %arg11[%c0_30, %c0_31, %c8_32, %c0_33] : memref<1x20x26x8xf32, #tpu.memory_space<vmem>>, vector<1x20x16x8xf32>
    %36 = vector.extract_strided_slice %35 {offsets = [0, 0, 0, 0], sizes = [1, 16, 16, 8], strides = [1, 1, 1, 1]} : vector<1x20x16x8xf32> to vector<1x16x16x8xf32>
    %37 = vector.shape_cast %36 : vector<1x16x16x8xf32> to vector<256x8xf32>
    %38 = vector.extract_strided_slice %35 {offsets = [0, 1, 0, 0], sizes = [1, 16, 16, 8], strides = [1, 1, 1, 1]} : vector<1x20x16x8xf32> to vector<1x16x16x8xf32>
    %39 = vector.shape_cast %38 : vector<1x16x16x8xf32> to vector<256x8xf32>
    %40 = vector.extract_strided_slice %35 {offsets = [0, 2, 0, 0], sizes = [1, 16, 16, 8], strides = [1, 1, 1, 1]} : vector<1x20x16x8xf32> to vector<1x16x16x8xf32>
    %41 = vector.shape_cast %40 : vector<1x16x16x8xf32> to vector<256x8xf32>
    %42 = vector.extract_strided_slice %35 {offsets = [0, 3, 0, 0], sizes = [1, 16, 16, 8], strides = [1, 1, 1, 1]} : vector<1x20x16x8xf32> to vector<1x16x16x8xf32>
    %43 = vector.shape_cast %42 : vector<1x16x16x8xf32> to vector<256x8xf32>
    %44 = vector.extract_strided_slice %35 {offsets = [0, 4, 0, 0], sizes = [1, 16, 16, 8], strides = [1, 1, 1, 1]} : vector<1x20x16x8xf32> to vector<1x16x16x8xf32>
    %45 = vector.shape_cast %44 : vector<1x16x16x8xf32> to vector<256x8xf32>
    %46 = tpu.concatenate %37, %39, %41, %43, %45, %8 in 1 : vector<256x8xf32>, vector<256x8xf32>, vector<256x8xf32>, vector<256x8xf32>, vector<256x8xf32>, vector<256x88xf32> -> vector<256x128xf32>
    %c0_34 = arith.constant 0 : index
    %c256 = arith.constant 256 : index
    %47 = vector.load %arg13[%c0_34, %c256] : memref<256x768xf32, #tpu.memory_space<vmem>>, vector<256x128xf32>
    tpu.vector_store %arg13[%c0_34, %c256], %46 {strides = array<i32>} : memref<256x768xf32, #tpu.memory_space<vmem>>, vector<256x128xf32>,
    %c0_35 = arith.constant 0 : index
    %c0_36 = arith.constant 0 : index
    %c9 = arith.constant 9 : index
    %c0_37 = arith.constant 0 : index
    %48 = vector.load %arg11[%c0_35, %c0_36, %c9, %c0_37] : memref<1x20x26x8xf32, #tpu.memory_space<vmem>>, vector<1x20x16x8xf32>
    %49 = vector.extract_strided_slice %48 {offsets = [0, 0, 0, 0], sizes = [1, 16, 16, 8], strides = [1, 1, 1, 1]} : vector<1x20x16x8xf32> to vector<1x16x16x8xf32>
    %50 = vector.shape_cast %49 : vector<1x16x16x8xf32> to vector<256x8xf32>
    %51 = vector.extract_strided_slice %48 {offsets = [0, 1, 0, 0], sizes = [1, 16, 16, 8], strides = [1, 1, 1, 1]} : vector<1x20x16x8xf32> to vector<1x16x16x8xf32>
    %52 = vector.shape_cast %51 : vector<1x16x16x8xf32> to vector<256x8xf32>
    %53 = vector.extract_strided_slice %48 {offsets = [0, 2, 0, 0], sizes = [1, 16, 16, 8], strides = [1, 1, 1, 1]} : vector<1x20x16x8xf32> to vector<1x16x16x8xf32>
    %54 = vector.shape_cast %53 : vector<1x16x16x8xf32> to vector<256x8xf32>
    %55 = vector.extract_strided_slice %48 {offsets = [0, 3, 0, 0], sizes = [1, 16, 16, 8], strides = [1, 1, 1, 1]} : vector<1x20x16x8xf32> to vector<1x16x16x8xf32>
    %56 = vector.shape_cast %55 : vector<1x16x16x8xf32> to vector<256x8xf32>
    %57 = vector.extract_strided_slice %48 {offsets = [0, 4, 0, 0], sizes = [1, 16, 16, 8], strides = [1, 1, 1, 1]} : vector<1x20x16x8xf32> to vector<1x16x16x8xf32>
    %58 = vector.shape_cast %57 : vector<1x16x16x8xf32> to vector<256x8xf32>
    %59 = tpu.concatenate %50, %52, %54, %56, %58, %8 in 1 : vector<256x8xf32>, vector<256x8xf32>, vector<256x8xf32>, vector<256x8xf32>, vector<256x8xf32>, vector<256x88xf32> -> vector<256x128xf32>
    %c0_38 = arith.constant 0 : index
    %c384 = arith.constant 384 : index
    %60 = vector.load %arg13[%c0_38, %c384] : memref<256x768xf32, #tpu.memory_space<vmem>>, vector<256x128xf32>
    tpu.vector_store %arg13[%c0_38, %c384], %59 {strides = array<i32>} : memref<256x768xf32, #tpu.memory_space<vmem>>, vector<256x128xf32>,
    %c0_39 = arith.constant 0 : index
    %c0_40 = arith.constant 0 : index
    %c10 = arith.constant 10 : index
    %c0_41 = arith.constant 0 : index
    %61 = vector.load %arg11[%c0_39, %c0_40, %c10, %c0_41] : memref<1x20x26x8xf32, #tpu.memory_space<vmem>>, vector<1x20x16x8xf32>
    %62 = vector.extract_strided_slice %61 {offsets = [0, 0, 0, 0], sizes = [1, 16, 16, 8], strides = [1, 1, 1, 1]} : vector<1x20x16x8xf32> to vector<1x16x16x8xf32>
    %63 = vector.shape_cast %62 : vector<1x16x16x8xf32> to vector<256x8xf32>
    %64 = vector.extract_strided_slice %61 {offsets = [0, 1, 0, 0], sizes = [1, 16, 16, 8], strides = [1, 1, 1, 1]} : vector<1x20x16x8xf32> to vector<1x16x16x8xf32>
    %65 = vector.shape_cast %64 : vector<1x16x16x8xf32> to vector<256x8xf32>
    %66 = vector.extract_strided_slice %61 {offsets = [0, 2, 0, 0], sizes = [1, 16, 16, 8], strides = [1, 1, 1, 1]} : vector<1x20x16x8xf32> to vector<1x16x16x8xf32>
    %67 = vector.shape_cast %66 : vector<1x16x16x8xf32> to vector<256x8xf32>
    %68 = vector.extract_strided_slice %61 {offsets = [0, 3, 0, 0], sizes = [1, 16, 16, 8], strides = [1, 1, 1, 1]} : vector<1x20x16x8xf32> to vector<1x16x16x8xf32>
    %69 = vector.shape_cast %68 : vector<1x16x16x8xf32> to vector<256x8xf32>
    %70 = vector.extract_strided_slice %61 {offsets = [0, 4, 0, 0], sizes = [1, 16, 16, 8], strides = [1, 1, 1, 1]} : vector<1x20x16x8xf32> to vector<1x16x16x8xf32>
    %71 = vector.shape_cast %70 : vector<1x16x16x8xf32> to vector<256x8xf32>
    %72 = tpu.concatenate %63, %65, %67, %69, %71, %8 in 1 : vector<256x8xf32>, vector<256x8xf32>, vector<256x8xf32>, vector<256x8xf32>, vector<256x8xf32>, vector<256x88xf32> -> vector<256x128xf32>
    %c0_42 = arith.constant 0 : index
    %c512 = arith.constant 512 : index
    %73 = vector.load %arg13[%c0_42, %c512] : memref<256x768xf32, #tpu.memory_space<vmem>>, vector<256x128xf32>
    tpu.vector_store %arg13[%c0_42, %c512], %72 {strides = array<i32>} : memref<256x768xf32, #tpu.memory_space<vmem>>, vector<256x128xf32>,
    %c0_43 = arith.constant 0 : index
    %c0_44 = arith.constant 0 : index
    %74 = vector.load %arg13[%c0_43, %c0_44] : memref<256x768xf32, #tpu.memory_space<vmem>>, vector<256x640xf32>
    %c0_45 = arith.constant 0 : index
    %c0_46 = arith.constant 0 : index
    %75 = vector.load %arg2[%c0_45, %c0_46] : memref<640x64xf32, #tpu.memory_space<vmem>>, vector<640x64xf32>
    %cst_47 = arith.constant dense<0.000000e+00> : vector<256x64xf32>
    %76 = tpu.matmul %74, %75, %cst_47 {dimension_numbers = #tpu.dot_dimension_numbers<[1], [0], [0], [1], [0, 0, 1, 1], [], []>} : vector<256x640xf32>, vector<640x64xf32>, vector<256x64xf32> -> vector<256x64xf32>
    %c0_48 = arith.constant 0 : index
    %c0_49 = arith.constant 0 : index
    %77 = vector.load %arg3[%c0_48, %c0_49] : memref<1x64xf32, #tpu.memory_space<vmem>>, vector<1x64xf32>
    %78 = vector.broadcast %77 : vector<1x64xf32> to vector<256x64xf32>
    %79 = arith.addf %76, %78 : vector<256x64xf32>
    %cst_50 = arith.constant 0.000000e+00 : f32
    %80 = vector.broadcast %cst_50 : f32 to vector<256x64xf32>
    %81 = arith.maximumf %79, %80 : vector<256x64xf32>
    %cst_51 = arith.constant 0.000000e+00 : f32
    %82 = vector.broadcast %cst_51 : f32 to vector<1x1x25x64xf32>
    %c0_52 = arith.constant 0 : index
    %c0_53 = arith.constant 0 : index
    %c0_54 = arith.constant 0 : index
    %c0_55 = arith.constant 0 : index
    %83 = vector.load %arg12[%c0_52, %c0_53, %c0_54, %c0_55] : memref<1x18x25x64xf32, #tpu.memory_space<vmem>>, vector<1x1x25x64xf32>
    tpu.vector_store %arg12[%c0_52, %c0_53, %c0_54, %c0_55], %82 {strides = array<i32>} : memref<1x18x25x64xf32, #tpu.memory_space<vmem>>, vector<1x1x25x64xf32>,
    %c0_56 = arith.constant 0 : index
    %c17 = arith.constant 17 : index
    %c0_57 = arith.constant 0 : index
    %c0_58 = arith.constant 0 : index
    %84 = vector.load %arg12[%c0_56, %c17, %c0_57, %c0_58] : memref<1x18x25x64xf32, #tpu.memory_space<vmem>>, vector<1x1x25x64xf32>
    tpu.vector_store %arg12[%c0_56, %c17, %c0_57, %c0_58], %82 {strides = array<i32>} : memref<1x18x25x64xf32, #tpu.memory_space<vmem>>, vector<1x1x25x64xf32>,
    %cst_59 = arith.constant 0.000000e+00 : f32
    %85 = vector.broadcast %cst_59 : f32 to vector<1x18x1x64xf32>
    %c0_60 = arith.constant 0 : index
    %c0_61 = arith.constant 0 : index
    %c7_62 = arith.constant 7 : index
    %c0_63 = arith.constant 0 : index
    %86 = vector.load %arg12[%c0_60, %c0_61, %c7_62, %c0_63] : memref<1x18x25x64xf32, #tpu.memory_space<vmem>>, vector<1x18x1x64xf32>
    tpu.vector_store %arg12[%c0_60, %c0_61, %c7_62, %c0_63], %85 {strides = array<i32>} : memref<1x18x25x64xf32, #tpu.memory_space<vmem>>, vector<1x18x1x64xf32>,
    %c0_64 = arith.constant 0 : index
    %c0_65 = arith.constant 0 : index
    %c24_66 = arith.constant 24 : index
    %c0_67 = arith.constant 0 : index
    %87 = vector.load %arg12[%c0_64, %c0_65, %c24_66, %c0_67] : memref<1x18x25x64xf32, #tpu.memory_space<vmem>>, vector<1x18x1x64xf32>
    tpu.vector_store %arg12[%c0_64, %c0_65, %c24_66, %c0_67], %85 {strides = array<i32>} : memref<1x18x25x64xf32, #tpu.memory_space<vmem>>, vector<1x18x1x64xf32>,
    %88 = vector.shape_cast %81 : vector<256x64xf32> to vector<1x16x16x64xf32>
    %c0_68 = arith.constant 0 : index
    %c1 = arith.constant 1 : index
    %c8_69 = arith.constant 8 : index
    %c0_70 = arith.constant 0 : index
    %89 = vector.load %arg12[%c0_68, %c1, %c8_69, %c0_70] : memref<1x18x25x64xf32, #tpu.memory_space<vmem>>, vector<1x16x16x64xf32>
    tpu.vector_store %arg12[%c0_68, %c1, %c8_69, %c0_70], %88 {strides = array<i32>} : memref<1x18x25x64xf32, #tpu.memory_space<vmem>>, vector<1x16x16x64xf32>,
    %cst_71 = arith.constant 0.000000e+00 : f32
    %90 = vector.broadcast %cst_71 : f32 to vector<256x64xf32>
    %c0_72 = arith.constant 0 : index
    %c0_73 = arith.constant 0 : index
    %c7_74 = arith.constant 7 : index
    %c0_75 = arith.constant 0 : index
    %91 = vector.load %arg12[%c0_72, %c0_73, %c7_74, %c0_75] : memref<1x18x25x64xf32, #tpu.memory_space<vmem>>, vector<1x18x16x64xf32>
    %92 = vector.extract_strided_slice %91 {offsets = [0, 0, 0, 0], sizes = [1, 16, 16, 64], strides = [1, 1, 1, 1]} : vector<1x18x16x64xf32> to vector<1x16x16x64xf32>
    %93 = vector.shape_cast %92 : vector<1x16x16x64xf32> to vector<256x64xf32>
    %94 = vector.extract_strided_slice %91 {offsets = [0, 1, 0, 0], sizes = [1, 16, 16, 64], strides = [1, 1, 1, 1]} : vector<1x18x16x64xf32> to vector<1x16x16x64xf32>
    %95 = vector.shape_cast %94 : vector<1x16x16x64xf32> to vector<256x64xf32>
    %96 = tpu.concatenate %93, %95 in 1 : vector<256x64xf32>, vector<256x64xf32> -> vector<256x128xf32>
    %c0_76 = arith.constant 0 : index
    %c0_77 = arith.constant 0 : index
    %97 = vector.load %arg13[%c0_76, %c0_77] : memref<256x768xf32, #tpu.memory_space<vmem>>, vector<256x128xf32>
    tpu.vector_store %arg13[%c0_76, %c0_77], %96 {strides = array<i32>} : memref<256x768xf32, #tpu.memory_space<vmem>>, vector<256x128xf32>,
    %98 = vector.extract_strided_slice %91 {offsets = [0, 2, 0, 0], sizes = [1, 16, 16, 64], strides = [1, 1, 1, 1]} : vector<1x18x16x64xf32> to vector<1x16x16x64xf32>
    %99 = vector.shape_cast %98 : vector<1x16x16x64xf32> to vector<256x64xf32>
    %100 = tpu.concatenate %99, %90 in 1 : vector<256x64xf32>, vector<256x64xf32> -> vector<256x128xf32>
    %c0_78 = arith.constant 0 : index
    %c128_79 = arith.constant 128 : index
    %101 = vector.load %arg13[%c0_78, %c128_79] : memref<256x768xf32, #tpu.memory_space<vmem>>, vector<256x128xf32>
    tpu.vector_store %arg13[%c0_78, %c128_79], %100 {strides = array<i32>} : memref<256x768xf32, #tpu.memory_space<vmem>>, vector<256x128xf32>,
    %c0_80 = arith.constant 0 : index
    %c0_81 = arith.constant 0 : index
    %c8_82 = arith.constant 8 : index
    %c0_83 = arith.constant 0 : index
    %102 = vector.load %arg12[%c0_80, %c0_81, %c8_82, %c0_83] : memref<1x18x25x64xf32, #tpu.memory_space<vmem>>, vector<1x18x16x64xf32>
    %103 = vector.extract_strided_slice %102 {offsets = [0, 0, 0, 0], sizes = [1, 16, 16, 64], strides = [1, 1, 1, 1]} : vector<1x18x16x64xf32> to vector<1x16x16x64xf32>
    %104 = vector.shape_cast %103 : vector<1x16x16x64xf32> to vector<256x64xf32>
    %105 = vector.extract_strided_slice %102 {offsets = [0, 1, 0, 0], sizes = [1, 16, 16, 64], strides = [1, 1, 1, 1]} : vector<1x18x16x64xf32> to vector<1x16x16x64xf32>
    %106 = vector.shape_cast %105 : vector<1x16x16x64xf32> to vector<256x64xf32>
    %107 = tpu.concatenate %104, %106 in 1 : vector<256x64xf32>, vector<256x64xf32> -> vector<256x128xf32>
    %c0_84 = arith.constant 0 : index
    %c256_85 = arith.constant 256 : index
    %108 = vector.load %arg13[%c0_84, %c256_85] : memref<256x768xf32, #tpu.memory_space<vmem>>, vector<256x128xf32>
    tpu.vector_store %arg13[%c0_84, %c256_85], %107 {strides = array<i32>} : memref<256x768xf32, #tpu.memory_space<vmem>>, vector<256x128xf32>,
    %109 = vector.extract_strided_slice %102 {offsets = [0, 2, 0, 0], sizes = [1, 16, 16, 64], strides = [1, 1, 1, 1]} : vector<1x18x16x64xf32> to vector<1x16x16x64xf32>
    %110 = vector.shape_cast %109 : vector<1x16x16x64xf32> to vector<256x64xf32>
    %111 = tpu.concatenate %110, %90 in 1 : vector<256x64xf32>, vector<256x64xf32> -> vector<256x128xf32>
    %c0_86 = arith.constant 0 : index
    %c384_87 = arith.constant 384 : index
    %112 = vector.load %arg13[%c0_86, %c384_87] : memref<256x768xf32, #tpu.memory_space<vmem>>, vector<256x128xf32>
    tpu.vector_store %arg13[%c0_86, %c384_87], %111 {strides = array<i32>} : memref<256x768xf32, #tpu.memory_space<vmem>>, vector<256x128xf32>,
    %c0_88 = arith.constant 0 : index
    %c0_89 = arith.constant 0 : index
    %c9_90 = arith.constant 9 : index
    %c0_91 = arith.constant 0 : index
    %113 = vector.load %arg12[%c0_88, %c0_89, %c9_90, %c0_91] : memref<1x18x25x64xf32, #tpu.memory_space<vmem>>, vector<1x18x16x64xf32>
    %114 = vector.extract_strided_slice %113 {offsets = [0, 0, 0, 0], sizes = [1, 16, 16, 64], strides = [1, 1, 1, 1]} : vector<1x18x16x64xf32> to vector<1x16x16x64xf32>
    %115 = vector.shape_cast %114 : vector<1x16x16x64xf32> to vector<256x64xf32>
    %116 = vector.extract_strided_slice %113 {offsets = [0, 1, 0, 0], sizes = [1, 16, 16, 64], strides = [1, 1, 1, 1]} : vector<1x18x16x64xf32> to vector<1x16x16x64xf32>
    %117 = vector.shape_cast %116 : vector<1x16x16x64xf32> to vector<256x64xf32>
    %118 = tpu.concatenate %115, %117 in 1 : vector<256x64xf32>, vector<256x64xf32> -> vector<256x128xf32>
    %c0_92 = arith.constant 0 : index
    %c512_93 = arith.constant 512 : index
    %119 = vector.load %arg13[%c0_92, %c512_93] : memref<256x768xf32, #tpu.memory_space<vmem>>, vector<256x128xf32>
    tpu.vector_store %arg13[%c0_92, %c512_93], %118 {strides = array<i32>} : memref<256x768xf32, #tpu.memory_space<vmem>>, vector<256x128xf32>,
    %120 = vector.extract_strided_slice %113 {offsets = [0, 2, 0, 0], sizes = [1, 16, 16, 64], strides = [1, 1, 1, 1]} : vector<1x18x16x64xf32> to vector<1x16x16x64xf32>
    %121 = vector.shape_cast %120 : vector<1x16x16x64xf32> to vector<256x64xf32>
    %122 = tpu.concatenate %121, %90 in 1 : vector<256x64xf32>, vector<256x64xf32> -> vector<256x128xf32>
    %c0_94 = arith.constant 0 : index
    %c640 = arith.constant 640 : index
    %123 = vector.load %arg13[%c0_94, %c640] : memref<256x768xf32, #tpu.memory_space<vmem>>, vector<256x128xf32>
    tpu.vector_store %arg13[%c0_94, %c640], %122 {strides = array<i32>} : memref<256x768xf32, #tpu.memory_space<vmem>>, vector<256x128xf32>,
    %c0_95 = arith.constant 0 : index
    %c0_96 = arith.constant 0 : index
    %124 = vector.load %arg13[%c0_95, %c0_96] : memref<256x768xf32, #tpu.memory_space<vmem>>, vector<256x768xf32>
    %c0_97 = arith.constant 0 : index
    %c0_98 = arith.constant 0 : index
    %125 = vector.load %arg4[%c0_97, %c0_98] : memref<768x64xf32, #tpu.memory_space<vmem>>, vector<768x64xf32>
    %cst_99 = arith.constant dense<0.000000e+00> : vector<256x64xf32>
    %126 = tpu.matmul %124, %125, %cst_99 {dimension_numbers = #tpu.dot_dimension_numbers<[1], [0], [0], [1], [0, 0, 1, 1], [], []>} : vector<256x768xf32>, vector<768x64xf32>, vector<256x64xf32> -> vector<256x64xf32>
    %c0_100 = arith.constant 0 : index
    %c0_101 = arith.constant 0 : index
    %127 = vector.load %arg5[%c0_100, %c0_101] : memref<1x64xf32, #tpu.memory_space<vmem>>, vector<1x64xf32>
    %128 = vector.broadcast %127 : vector<1x64xf32> to vector<256x64xf32>
    %129 = arith.addf %126, %128 : vector<256x64xf32>
    %cst_102 = arith.constant 0.000000e+00 : f32
    %130 = vector.broadcast %cst_102 : f32 to vector<256x64xf32>
    %131 = arith.maximumf %129, %130 : vector<256x64xf32>
    %132 = vector.shape_cast %131 : vector<256x64xf32> to vector<1x16x16x64xf32>
    %c0_103 = arith.constant 0 : index
    %c1_104 = arith.constant 1 : index
    %c8_105 = arith.constant 8 : index
    %c0_106 = arith.constant 0 : index
    %133 = vector.load %arg12[%c0_103, %c1_104, %c8_105, %c0_106] : memref<1x18x25x64xf32, #tpu.memory_space<vmem>>, vector<1x16x16x64xf32>
    tpu.vector_store %arg12[%c0_103, %c1_104, %c8_105, %c0_106], %132 {strides = array<i32>} : memref<1x18x25x64xf32, #tpu.memory_space<vmem>>, vector<1x16x16x64xf32>,
    %cst_107 = arith.constant 0.000000e+00 : f32
    %134 = vector.broadcast %cst_107 : f32 to vector<256x64xf32>
    %c0_108 = arith.constant 0 : index
    %c0_109 = arith.constant 0 : index
    %c7_110 = arith.constant 7 : index
    %c0_111 = arith.constant 0 : index
    %135 = vector.load %arg12[%c0_108, %c0_109, %c7_110, %c0_111] : memref<1x18x25x64xf32, #tpu.memory_space<vmem>>, vector<1x18x16x64xf32>
    %136 = vector.extract_strided_slice %135 {offsets = [0, 0, 0, 0], sizes = [1, 16, 16, 64], strides = [1, 1, 1, 1]} : vector<1x18x16x64xf32> to vector<1x16x16x64xf32>
    %137 = vector.shape_cast %136 : vector<1x16x16x64xf32> to vector<256x64xf32>
    %138 = vector.extract_strided_slice %135 {offsets = [0, 1, 0, 0], sizes = [1, 16, 16, 64], strides = [1, 1, 1, 1]} : vector<1x18x16x64xf32> to vector<1x16x16x64xf32>
    %139 = vector.shape_cast %138 : vector<1x16x16x64xf32> to vector<256x64xf32>
    %140 = tpu.concatenate %137, %139 in 1 : vector<256x64xf32>, vector<256x64xf32> -> vector<256x128xf32>
    %c0_112 = arith.constant 0 : index
    %c0_113 = arith.constant 0 : index
    %141 = vector.load %arg13[%c0_112, %c0_113] : memref<256x768xf32, #tpu.memory_space<vmem>>, vector<256x128xf32>
    tpu.vector_store %arg13[%c0_112, %c0_113], %140 {strides = array<i32>} : memref<256x768xf32, #tpu.memory_space<vmem>>, vector<256x128xf32>,
    %142 = vector.extract_strided_slice %135 {offsets = [0, 2, 0, 0], sizes = [1, 16, 16, 64], strides = [1, 1, 1, 1]} : vector<1x18x16x64xf32> to vector<1x16x16x64xf32>
    %143 = vector.shape_cast %142 : vector<1x16x16x64xf32> to vector<256x64xf32>
    %144 = tpu.concatenate %143, %134 in 1 : vector<256x64xf32>, vector<256x64xf32> -> vector<256x128xf32>
    %c0_114 = arith.constant 0 : index
    %c128_115 = arith.constant 128 : index
    %145 = vector.load %arg13[%c0_114, %c128_115] : memref<256x768xf32, #tpu.memory_space<vmem>>, vector<256x128xf32>
    tpu.vector_store %arg13[%c0_114, %c128_115], %144 {strides = array<i32>} : memref<256x768xf32, #tpu.memory_space<vmem>>, vector<256x128xf32>,
    %c0_116 = arith.constant 0 : index
    %c0_117 = arith.constant 0 : index
    %c8_118 = arith.constant 8 : index
    %c0_119 = arith.constant 0 : index
    %146 = vector.load %arg12[%c0_116, %c0_117, %c8_118, %c0_119] : memref<1x18x25x64xf32, #tpu.memory_space<vmem>>, vector<1x18x16x64xf32>
    %147 = vector.extract_strided_slice %146 {offsets = [0, 0, 0, 0], sizes = [1, 16, 16, 64], strides = [1, 1, 1, 1]} : vector<1x18x16x64xf32> to vector<1x16x16x64xf32>
    %148 = vector.shape_cast %147 : vector<1x16x16x64xf32> to vector<256x64xf32>
    %149 = vector.extract_strided_slice %146 {offsets = [0, 1, 0, 0], sizes = [1, 16, 16, 64], strides = [1, 1, 1, 1]} : vector<1x18x16x64xf32> to vector<1x16x16x64xf32>
    %150 = vector.shape_cast %149 : vector<1x16x16x64xf32> to vector<256x64xf32>
    %151 = tpu.concatenate %148, %150 in 1 : vector<256x64xf32>, vector<256x64xf32> -> vector<256x128xf32>
    %c0_120 = arith.constant 0 : index
    %c256_121 = arith.constant 256 : index
    %152 = vector.load %arg13[%c0_120, %c256_121] : memref<256x768xf32, #tpu.memory_space<vmem>>, vector<256x128xf32>
    tpu.vector_store %arg13[%c0_120, %c256_121], %151 {strides = array<i32>} : memref<256x768xf32, #tpu.memory_space<vmem>>, vector<256x128xf32>,
    %153 = vector.extract_strided_slice %146 {offsets = [0, 2, 0, 0], sizes = [1, 16, 16, 64], strides = [1, 1, 1, 1]} : vector<1x18x16x64xf32> to vector<1x16x16x64xf32>
    %154 = vector.shape_cast %153 : vector<1x16x16x64xf32> to vector<256x64xf32>
    %155 = tpu.concatenate %154, %134 in 1 : vector<256x64xf32>, vector<256x64xf32> -> vector<256x128xf32>
    %c0_122 = arith.constant 0 : index
    %c384_123 = arith.constant 384 : index
    %156 = vector.load %arg13[%c0_122, %c384_123] : memref<256x768xf32, #tpu.memory_space<vmem>>, vector<256x128xf32>
    tpu.vector_store %arg13[%c0_122, %c384_123], %155 {strides = array<i32>} : memref<256x768xf32, #tpu.memory_space<vmem>>, vector<256x128xf32>,
    %c0_124 = arith.constant 0 : index
    %c0_125 = arith.constant 0 : index
    %c9_126 = arith.constant 9 : index
    %c0_127 = arith.constant 0 : index
    %157 = vector.load %arg12[%c0_124, %c0_125, %c9_126, %c0_127] : memref<1x18x25x64xf32, #tpu.memory_space<vmem>>, vector<1x18x16x64xf32>
    %158 = vector.extract_strided_slice %157 {offsets = [0, 0, 0, 0], sizes = [1, 16, 16, 64], strides = [1, 1, 1, 1]} : vector<1x18x16x64xf32> to vector<1x16x16x64xf32>
    %159 = vector.shape_cast %158 : vector<1x16x16x64xf32> to vector<256x64xf32>
    %160 = vector.extract_strided_slice %157 {offsets = [0, 1, 0, 0], sizes = [1, 16, 16, 64], strides = [1, 1, 1, 1]} : vector<1x18x16x64xf32> to vector<1x16x16x64xf32>
    %161 = vector.shape_cast %160 : vector<1x16x16x64xf32> to vector<256x64xf32>
    %162 = tpu.concatenate %159, %161 in 1 : vector<256x64xf32>, vector<256x64xf32> -> vector<256x128xf32>
    %c0_128 = arith.constant 0 : index
    %c512_129 = arith.constant 512 : index
    %163 = vector.load %arg13[%c0_128, %c512_129] : memref<256x768xf32, #tpu.memory_space<vmem>>, vector<256x128xf32>
    tpu.vector_store %arg13[%c0_128, %c512_129], %162 {strides = array<i32>} : memref<256x768xf32, #tpu.memory_space<vmem>>, vector<256x128xf32>,
    %164 = vector.extract_strided_slice %157 {offsets = [0, 2, 0, 0], sizes = [1, 16, 16, 64], strides = [1, 1, 1, 1]} : vector<1x18x16x64xf32> to vector<1x16x16x64xf32>
    %165 = vector.shape_cast %164 : vector<1x16x16x64xf32> to vector<256x64xf32>
    %166 = tpu.concatenate %165, %134 in 1 : vector<256x64xf32>, vector<256x64xf32> -> vector<256x128xf32>
    %c0_130 = arith.constant 0 : index
    %c640_131 = arith.constant 640 : index
    %167 = vector.load %arg13[%c0_130, %c640_131] : memref<256x768xf32, #tpu.memory_space<vmem>>, vector<256x128xf32>
    tpu.vector_store %arg13[%c0_130, %c640_131], %166 {strides = array<i32>} : memref<256x768xf32, #tpu.memory_space<vmem>>, vector<256x128xf32>,
    %c0_132 = arith.constant 0 : index
    %c0_133 = arith.constant 0 : index
    %168 = vector.load %arg13[%c0_132, %c0_133] : memref<256x768xf32, #tpu.memory_space<vmem>>, vector<256x768xf32>
    %c0_134 = arith.constant 0 : index
    %c0_135 = arith.constant 0 : index
    %169 = vector.load %arg6[%c0_134, %c0_135] : memref<768x32xf32, #tpu.memory_space<vmem>>, vector<768x32xf32>
    %cst_136 = arith.constant dense<0.000000e+00> : vector<256x32xf32>
    %170 = tpu.matmul %168, %169, %cst_136 {dimension_numbers = #tpu.dot_dimension_numbers<[1], [0], [0], [1], [0, 0, 1, 1], [], []>} : vector<256x768xf32>, vector<768x32xf32>, vector<256x32xf32> -> vector<256x32xf32>
    %c0_137 = arith.constant 0 : index
    %c0_138 = arith.constant 0 : index
    %171 = vector.load %arg7[%c0_137, %c0_138] : memref<1x32xf32, #tpu.memory_space<vmem>>, vector<1x32xf32>
    %172 = vector.broadcast %171 : vector<1x32xf32> to vector<256x32xf32>
    %173 = arith.addf %170, %172 : vector<256x32xf32>
    %cst_139 = arith.constant 0.000000e+00 : f32
    %174 = vector.broadcast %cst_139 : f32 to vector<256x32xf32>
    %175 = arith.maximumf %173, %174 : vector<256x32xf32>
    %176 = vector.shape_cast %175 : vector<256x32xf32> to vector<1x16x16x32xf32>
    %c0_140 = arith.constant 0 : index
    %c1_141 = arith.constant 1 : index
    %c8_142 = arith.constant 8 : index
    %c0_143 = arith.constant 0 : index
    %177 = vector.load %arg12[%c0_140, %c1_141, %c8_142, %c0_143] : memref<1x18x25x64xf32, #tpu.memory_space<vmem>>, vector<1x16x16x32xf32>
    tpu.vector_store %arg12[%c0_140, %c1_141, %c8_142, %c0_143], %176 {strides = array<i32>} : memref<1x18x25x64xf32, #tpu.memory_space<vmem>>, vector<1x16x16x32xf32>,
    %cst_144 = arith.constant 0.000000e+00 : f32
    %178 = vector.broadcast %cst_144 : f32 to vector<256x32xf32>
    %c0_145 = arith.constant 0 : index
    %c0_146 = arith.constant 0 : index
    %c7_147 = arith.constant 7 : index
    %c0_148 = arith.constant 0 : index
    %179 = vector.load %arg12[%c0_145, %c0_146, %c7_147, %c0_148] : memref<1x18x25x64xf32, #tpu.memory_space<vmem>>, vector<1x18x16x32xf32>
    %180 = vector.extract_strided_slice %179 {offsets = [0, 0, 0, 0], sizes = [1, 16, 16, 32], strides = [1, 1, 1, 1]} : vector<1x18x16x32xf32> to vector<1x16x16x32xf32>
    %181 = vector.shape_cast %180 : vector<1x16x16x32xf32> to vector<256x32xf32>
    %182 = vector.extract_strided_slice %179 {offsets = [0, 1, 0, 0], sizes = [1, 16, 16, 32], strides = [1, 1, 1, 1]} : vector<1x18x16x32xf32> to vector<1x16x16x32xf32>
    %183 = vector.shape_cast %182 : vector<1x16x16x32xf32> to vector<256x32xf32>
    %184 = vector.extract_strided_slice %179 {offsets = [0, 2, 0, 0], sizes = [1, 16, 16, 32], strides = [1, 1, 1, 1]} : vector<1x18x16x32xf32> to vector<1x16x16x32xf32>
    %185 = vector.shape_cast %184 : vector<1x16x16x32xf32> to vector<256x32xf32>
    %186 = tpu.concatenate %181, %183, %185, %178 in 1 : vector<256x32xf32>, vector<256x32xf32>, vector<256x32xf32>, vector<256x32xf32> -> vector<256x128xf32>
    %c0_149 = arith.constant 0 : index
    %c0_150 = arith.constant 0 : index
    %187 = vector.load %arg13[%c0_149, %c0_150] : memref<256x768xf32, #tpu.memory_space<vmem>>, vector<256x128xf32>
    tpu.vector_store %arg13[%c0_149, %c0_150], %186 {strides = array<i32>} : memref<256x768xf32, #tpu.memory_space<vmem>>, vector<256x128xf32>,
    %c0_151 = arith.constant 0 : index
    %c0_152 = arith.constant 0 : index
    %c8_153 = arith.constant 8 : index
    %c0_154 = arith.constant 0 : index
    %188 = vector.load %arg12[%c0_151, %c0_152, %c8_153, %c0_154] : memref<1x18x25x64xf32, #tpu.memory_space<vmem>>, vector<1x18x16x32xf32>
    %189 = vector.extract_strided_slice %188 {offsets = [0, 0, 0, 0], sizes = [1, 16, 16, 32], strides = [1, 1, 1, 1]} : vector<1x18x16x32xf32> to vector<1x16x16x32xf32>
    %190 = vector.shape_cast %189 : vector<1x16x16x32xf32> to vector<256x32xf32>
    %191 = vector.extract_strided_slice %188 {offsets = [0, 1, 0, 0], sizes = [1, 16, 16, 32], strides = [1, 1, 1, 1]} : vector<1x18x16x32xf32> to vector<1x16x16x32xf32>
    %192 = vector.shape_cast %191 : vector<1x16x16x32xf32> to vector<256x32xf32>
    %193 = vector.extract_strided_slice %188 {offsets = [0, 2, 0, 0], sizes = [1, 16, 16, 32], strides = [1, 1, 1, 1]} : vector<1x18x16x32xf32> to vector<1x16x16x32xf32>
    %194 = vector.shape_cast %193 : vector<1x16x16x32xf32> to vector<256x32xf32>
    %195 = tpu.concatenate %190, %192, %194, %178 in 1 : vector<256x32xf32>, vector<256x32xf32>, vector<256x32xf32>, vector<256x32xf32> -> vector<256x128xf32>
    %c0_155 = arith.constant 0 : index
    %c128_156 = arith.constant 128 : index
    %196 = vector.load %arg13[%c0_155, %c128_156] : memref<256x768xf32, #tpu.memory_space<vmem>>, vector<256x128xf32>
    tpu.vector_store %arg13[%c0_155, %c128_156], %195 {strides = array<i32>} : memref<256x768xf32, #tpu.memory_space<vmem>>, vector<256x128xf32>,
    %c0_157 = arith.constant 0 : index
    %c0_158 = arith.constant 0 : index
    %c9_159 = arith.constant 9 : index
    %c0_160 = arith.constant 0 : index
    %197 = vector.load %arg12[%c0_157, %c0_158, %c9_159, %c0_160] : memref<1x18x25x64xf32, #tpu.memory_space<vmem>>, vector<1x18x16x32xf32>
    %198 = vector.extract_strided_slice %197 {offsets = [0, 0, 0, 0], sizes = [1, 16, 16, 32], strides = [1, 1, 1, 1]} : vector<1x18x16x32xf32> to vector<1x16x16x32xf32>
    %199 = vector.shape_cast %198 : vector<1x16x16x32xf32> to vector<256x32xf32>
    %200 = vector.extract_strided_slice %197 {offsets = [0, 1, 0, 0], sizes = [1, 16, 16, 32], strides = [1, 1, 1, 1]} : vector<1x18x16x32xf32> to vector<1x16x16x32xf32>
    %201 = vector.shape_cast %200 : vector<1x16x16x32xf32> to vector<256x32xf32>
    %202 = vector.extract_strided_slice %197 {offsets = [0, 2, 0, 0], sizes = [1, 16, 16, 32], strides = [1, 1, 1, 1]} : vector<1x18x16x32xf32> to vector<1x16x16x32xf32>
    %203 = vector.shape_cast %202 : vector<1x16x16x32xf32> to vector<256x32xf32>
    %204 = tpu.concatenate %199, %201, %203, %178 in 1 : vector<256x32xf32>, vector<256x32xf32>, vector<256x32xf32>, vector<256x32xf32> -> vector<256x128xf32>
    %c0_161 = arith.constant 0 : index
    %c256_162 = arith.constant 256 : index
    %205 = vector.load %arg13[%c0_161, %c256_162] : memref<256x768xf32, #tpu.memory_space<vmem>>, vector<256x128xf32>
    tpu.vector_store %arg13[%c0_161, %c256_162], %204 {strides = array<i32>} : memref<256x768xf32, #tpu.memory_space<vmem>>, vector<256x128xf32>,
    %c0_163 = arith.constant 0 : index
    %c0_164 = arith.constant 0 : index
    %206 = vector.load %arg13[%c0_163, %c0_164] : memref<256x768xf32, #tpu.memory_space<vmem>>, vector<256x384xf32>
    %c0_165 = arith.constant 0 : index
    %c0_166 = arith.constant 0 : index
    %207 = vector.load %arg8[%c0_165, %c0_166] : memref<384x128xf32, #tpu.memory_space<vmem>>, vector<384x128xf32>
    %cst_167 = arith.constant dense<0.000000e+00> : vector<256x128xf32>
    %208 = tpu.matmul %206, %207, %cst_167 {dimension_numbers = #tpu.dot_dimension_numbers<[1], [0], [0], [1], [0, 0, 1, 1], [], []>} : vector<256x384xf32>, vector<384x128xf32>, vector<256x128xf32> -> vector<256x128xf32>
    %c0_168 = arith.constant 0 : index
    %c0_169 = arith.constant 0 : index
    %209 = vector.load %arg9[%c0_168, %c0_169] : memref<1x128xf32, #tpu.memory_space<vmem>>, vector<1x128xf32>
    %210 = vector.broadcast %209 : vector<1x128xf32> to vector<256x128xf32>
    %211 = arith.addf %208, %210 : vector<256x128xf32>
    %212 = vector.shape_cast %211 : vector<256x128xf32> to vector<1x16x16x128xf32>
    %c0_170 = arith.constant 0 : index
    %c0_171 = arith.constant 0 : index
    %c0_172 = arith.constant 0 : index
    %c0_173 = arith.constant 0 : index
    %213 = vector.load %arg10[%c0_170, %c0_171, %c0_172, %c0_173] : memref<1x16x16x128xf32, #tpu.memory_space<vmem>>, vector<1x16x16x128xf32>
    tpu.vector_store %arg10[%c0_170, %c0_171, %c0_172, %c0_173], %212 {strides = array<i32>} : memref<1x16x16x128xf32, #tpu.memory_space<vmem>>, vector<1x16x16x128xf32>,
    return
  }
  func.func @transform_0(%arg0: i32) -> (i32, i32, i32, i32) {
    %c0_i32 = arith.constant 0 : i32
    %c0_i32_0 = arith.constant 0 : i32
    %c0_i32_1 = arith.constant 0 : i32
    %c0_i32_2 = arith.constant 0 : i32
    return %arg0, %c0_i32, %c0_i32_0, %c0_i32_1 : i32, i32, i32, i32
  }
  func.func @transform_1(%arg0: i32) -> (i32, i32) {
    %c0_i32 = arith.constant 0 : i32
    %c0_i32_0 = arith.constant 0 : i32
    %c0_i32_1 = arith.constant 0 : i32
    return %c0_i32, %c0_i32_0 : i32, i32
  }
  func.func @transform_2(%arg0: i32) -> (i32, i32) {
    %c0_i32 = arith.constant 0 : i32
    %c0_i32_0 = arith.constant 0 : i32
    %c0_i32_1 = arith.constant 0 : i32
    return %c0_i32, %c0_i32_0 : i32, i32
  }
  func.func @transform_3(%arg0: i32) -> (i32, i32) {
    %c0_i32 = arith.constant 0 : i32
    %c0_i32_0 = arith.constant 0 : i32
    %c0_i32_1 = arith.constant 0 : i32
    return %c0_i32, %c0_i32_0 : i32, i32
  }
  func.func @transform_4(%arg0: i32) -> (i32, i32) {
    %c0_i32 = arith.constant 0 : i32
    %c0_i32_0 = arith.constant 0 : i32
    %c0_i32_1 = arith.constant 0 : i32
    return %c0_i32, %c0_i32_0 : i32, i32
  }
  func.func @transform_5(%arg0: i32) -> (i32, i32) {
    %c0_i32 = arith.constant 0 : i32
    %c0_i32_0 = arith.constant 0 : i32
    %c0_i32_1 = arith.constant 0 : i32
    return %c0_i32, %c0_i32_0 : i32, i32
  }
  func.func @transform_6(%arg0: i32) -> (i32, i32) {
    %c0_i32 = arith.constant 0 : i32
    %c0_i32_0 = arith.constant 0 : i32
    %c0_i32_1 = arith.constant 0 : i32
    return %c0_i32, %c0_i32_0 : i32, i32
  }
  func.func @transform_7(%arg0: i32) -> (i32, i32) {
    %c0_i32 = arith.constant 0 : i32
    %c0_i32_0 = arith.constant 0 : i32
    %c0_i32_1 = arith.constant 0 : i32
    return %c0_i32, %c0_i32_0 : i32, i32
  }
  func.func @transform_8(%arg0: i32) -> (i32, i32) {
    %c0_i32 = arith.constant 0 : i32
    %c0_i32_0 = arith.constant 0 : i32
    %c0_i32_1 = arith.constant 0 : i32
    return %c0_i32, %c0_i32_0 : i32, i32
  }
  func.func @transform_9(%arg0: i32) -> (i32, i32, i32, i32) {
    %c0_i32 = arith.constant 0 : i32
    %c0_i32_0 = arith.constant 0 : i32
    %c0_i32_1 = arith.constant 0 : i32
    %c0_i32_2 = arith.constant 0 : i32
    return %arg0, %c0_i32, %c0_i32_0, %c0_i32_1 : i32, i32, i32, i32
  }
}

</mosaic_0001>

<llo_original>
// kernel: tpu_custom_call.1
$region0: #{tpu_custom_call.1}
  #allocation0 [shape = 'u32[]', space=smem, size = 0x4, offset = 0x4, fixed_abs, tag = 'smem constant byte address 0x4 - core index']
  #allocation1 [shape = 'u32[144,128]{1,0:T(1,128)}', space=vmem, size = 0x12000, scoped, tag = 'internal scratch']
  #allocation2 [shape = 'f32[1,20,26,8]{3,2,1,0:T(8,128)}', space=vmem, size = 0x50000, scoped, tag = 'scratch operand']
  #allocation3 [shape = 'f32[1,18,25,64]{3,2,1,0:T(8,128)}', space=vmem, size = 0x48000, scoped, tag = 'scratch operand']
  #allocation4 [shape = 'f32[256,768]{1,0:T(8,128)}', space=vmem, size = 0xc0000, scoped, tag = 'scratch operand']
  %s0 = inlined_call_operand.vmem [shape: f32[2,16,16,8], index: 0, kind: input, shape index: {}]
  %s1 = inlined_call_operand.vmem [shape: f32[640,64], index: 1, kind: input, shape index: {}]
  %s2 = inlined_call_operand.vmem [shape: f32[1,64], index: 2, kind: input, shape index: {}]
  %s3 = inlined_call_operand.vmem [shape: f32[768,64], index: 3, kind: input, shape index: {}]
  %s4 = inlined_call_operand.vmem [shape: f32[1,64], index: 4, kind: input, shape index: {}]
  %s5 = inlined_call_operand.vmem [shape: f32[768,32], index: 5, kind: input, shape index: {}]
  %s6 = inlined_call_operand.vmem [shape: f32[1,32], index: 6, kind: input, shape index: {}]
  %s7 = inlined_call_operand.vmem [shape: f32[384,128], index: 7, kind: input, shape index: {}]
  %s8 = inlined_call_operand.vmem [shape: f32[1,128], index: 8, kind: input, shape index: {}]
  %s9 = inlined_call_operand.hbm [shape: f32[2,16,16,128], index: 9, kind: output, shape index: {}]
  %s10 = sld [smem:[#allocation0]]
  $region69: #{tpu_custom_call.1} parent=0
    _
  %s12 = ssub.s32 1, %s10
  %s13 = scalar_select 0, %s12, %s10
  $region1: #{tpu_custom_call.1} parent=0
    #allocation5 [shape = 'u8[262144]{0}', space=vmem, size = 0x40000, scoped, tag = 'output window, operand 0']
    #allocation6 [shape = 's32[2]{0}', space=sflag, size = 0x8, scoped, tag = 'scoped memory for tpu_custom_call.1']
    %14 = vsyncpa [#allocation6], 0
    %s15 = scalar_lea.sflag [#allocation6], 1
    %16 = vsyncpa %s15, 0
    loop: start=0, step=1, limit=4
    $region2: #{tpu_custom_call.1} parent=1 // loop_pre_header
      _
    $region3: #{tpu_custom_call.1} parent=1 // loop_header
      %s18 = sphi 0, %s22
      %p19 = scmp.ge.s32.totalorder %s18, 4
      %s28 = sphi 0, %s30
      %s31 = sphi 0, %s28
      %s32 = sphi 0, %s31
      %s48 = sphi 0, %s32
      %s52 = sphi 0, %s52
      %s54 = sphi 0, %s52
      %s55 = sphi 0, %s54
      %s69 = sphi 0, %s55
      %s73 = sphi 0, %s73
      %s75 = sphi 0, %s73
      %s76 = sphi 0, %s75
      %s90 = sphi 0, %s76
      %s94 = sphi 0, %s94
      %s96 = sphi 0, %s94
      %s97 = sphi 0, %s96
      %s111 = sphi 0, %s97
      %s115 = sphi 0, %s115
      %s117 = sphi 0, %s115
      %s118 = sphi 0, %s117
      %s132 = sphi 0, %s118
      %s136 = sphi 0, %s136
      %s138 = sphi 0, %s136
      %s139 = sphi 0, %s138
      %s153 = sphi 0, %s139
      %s157 = sphi 0, %s157
      %s159 = sphi 0, %s157
      %s160 = sphi 0, %s159
      %s174 = sphi 0, %s160
      %s178 = sphi 0, %s178
      %s180 = sphi 0, %s178
      %s181 = sphi 0, %s180
      %s195 = sphi 0, %s181
      %s199 = sphi 0, %s199
      %s201 = sphi 0, %s199
      %s202 = sphi 0, %s201
      %s216 = sphi 0, %s202
      %s222 = sphi 0, %s224
      %s225 = sphi 0, %s222
      %s226 = sphi 0, %s225
      %s242 = sphi 0, %s226
    $region4: #{tpu_custom_call.1} parent=1 // loop_header_branch
      %21 = sbr.rel (%p19) target = $region8
    $region5: #{tpu_custom_call.1} parent=1 // loop_body
      %s23 = ssub.s32 %s18, 1
      %s24 = ssub.s32 %s18, 2
      %s25 = sadd.s32 %s18, 1
      %s26 = ssub.s32 %s18, %s25
      %p27 = scmp.eq.s32.totalorder %s26, 0
      %s29 = sadd.s32 %s28, 1
      %s30 = scalar_select %p27, %s28, %s29
      %p33 = pneg %p27
      %p34 = scmp.eq.s32.totalorder %s18, 1
      %p35 = por %p33, %p34
      %p36 = scmp.ne.s32.totalorder %s28, %s31
      %p37 = scmp.eq.s32.totalorder %s18, 0
      %p38 = por %p36, %p37
      %p39 = scmp.ne.s32.totalorder %s28, %s31
      %p40 = scmp.eq.s32.totalorder %s23, 1
      %p41 = por %p39, %p40
      %p42 = scmp.ne.s32.totalorder %s31, %s32
      %p43 = scmp.eq.s32.totalorder %s23, 0
      %p44 = por %p42, %p43
      %p45 = scmp.ne.s32.totalorder %s31, %s32
      %p46 = scmp.eq.s32.totalorder %s24, 1
      %p47 = por %p45, %p46
      %p49 = scmp.ne.s32.totalorder %s32, %s48
      %p50 = scmp.eq.s32.totalorder %s24, 0
      %p51 = por %p49, %p50
      %s53 = sadd.s32 %s52, 1
      %p56 = scmp.eq.s32.totalorder %s18, 1
      %p57 = scmp.ne.s32.totalorder %s52, %s54
      %p58 = scmp.eq.s32.totalorder %s18, 0
      %p59 = por %p57, %p58
      %p60 = scmp.ne.s32.totalorder %s52, %s54
      %p61 = scmp.eq.s32.totalorder %s23, 1
      %p62 = por %p60, %p61
      %p63 = scmp.ne.s32.totalorder %s54, %s55
      %p64 = scmp.eq.s32.totalorder %s23, 0
      %p65 = por %p63, %p64
      %p66 = scmp.ne.s32.totalorder %s54, %s55
      %p67 = scmp.eq.s32.totalorder %s24, 1
      %p68 = por %p66, %p67
      %p70 = scmp.ne.s32.totalorder %s55, %s69
      %p71 = scmp.eq.s32.totalorder %s24, 0
      %p72 = por %p70, %p71
      %s74 = sadd.s32 %s73, 1
      %p77 = scmp.eq.s32.totalorder %s18, 1
      %p78 = scmp.ne.s32.totalorder %s73, %s75
      %p79 = scmp.eq.s32.totalorder %s18, 0
      %p80 = por %p78, %p79
      %p81 = scmp.ne.s32.totalorder %s73, %s75
      %p82 = scmp.eq.s32.totalorder %s23, 1
      %p83 = por %p81, %p82
      %p84 = scmp.ne.s32.totalorder %s75, %s76
      %p85 = scmp.eq.s32.totalorder %s23, 0
      %p86 = por %p84, %p85
      %p87 = scmp.ne.s32.totalorder %s75, %s76
      %p88 = scmp.eq.s32.totalorder %s24, 1
      %p89 = por %p87, %p88
      %p91 = scmp.ne.s32.totalorder %s76, %s90
      %p92 = scmp.eq.s32.totalorder %s24, 0
      %p93 = por %p91, %p92
      %s95 = sadd.s32 %s94, 1
      %p98 = scmp.eq.s32.totalorder %s18, 1
      %p99 = scmp.ne.s32.totalorder %s94, %s96
      %p100 = scmp.eq.s32.totalorder %s18, 0
      %p101 = por %p99, %p100
      %p102 = scmp.ne.s32.totalorder %s94, %s96
      %p103 = scmp.eq.s32.totalorder %s23, 1
      %p104 = por %p102, %p103
      %p105 = scmp.ne.s32.totalorder %s96, %s97
      %p106 = scmp.eq.s32.totalorder %s23, 0
      %p107 = por %p105, %p106
      %p108 = scmp.ne.s32.totalorder %s96, %s97
      %p109 = scmp.eq.s32.totalorder %s24, 1
      %p110 = por %p108, %p109
      %p112 = scmp.ne.s32.totalorder %s97, %s111
      %p113 = scmp.eq.s32.totalorder %s24, 0
      %p114 = por %p112, %p113
      %s116 = sadd.s32 %s115, 1
      %p119 = scmp.eq.s32.totalorder %s18, 1
      %p120 = scmp.ne.s32.totalorder %s115, %s117
      %p121 = scmp.eq.s32.totalorder %s18, 0
      %p122 = por %p120, %p121
      %p123 = scmp.ne.s32.totalorder %s115, %s117
      %p124 = scmp.eq.s32.totalorder %s23, 1
      %p125 = por %p123, %p124
      %p126 = scmp.ne.s32.totalorder %s117, %s118
      %p127 = scmp.eq.s32.totalorder %s23, 0
      %p128 = por %p126, %p127
      %p129 = scmp.ne.s32.totalorder %s117, %s118
      %p130 = scmp.eq.s32.totalorder %s24, 1
      %p131 = por %p129, %p130
      %p133 = scmp.ne.s32.totalorder %s118, %s132
      %p134 = scmp.eq.s32.totalorder %s24, 0
      %p135 = por %p133, %p134
      %s137 = sadd.s32 %s136, 1
      %p140 = scmp.eq.s32.totalorder %s18, 1
      %p141 = scmp.ne.s32.totalorder %s136, %s138
      %p142 = scmp.eq.s32.totalorder %s18, 0
      %p143 = por %p141, %p142
      %p144 = scmp.ne.s32.totalorder %s136, %s138
      %p145 = scmp.eq.s32.totalorder %s23, 1
      %p146 = por %p144, %p145
      %p147 = scmp.ne.s32.totalorder %s138, %s139
      %p148 = scmp.eq.s32.totalorder %s23, 0
      %p149 = por %p147, %p148
      %p150 = scmp.ne.s32.totalorder %s138, %s139
      %p151 = scmp.eq.s32.totalorder %s24, 1
      %p152 = por %p150, %p151
      %p154 = scmp.ne.s32.totalorder %s139, %s153
      %p155 = scmp.eq.s32.totalorder %s24, 0
      %p156 = por %p154, %p155
      %s158 = sadd.s32 %s157, 1
      %p161 = scmp.eq.s32.totalorder %s18, 1
      %p162 = scmp.ne.s32.totalorder %s157, %s159
      %p163 = scmp.eq.s32.totalorder %s18, 0
      %p164 = por %p162, %p163
      %p165 = scmp.ne.s32.totalorder %s157, %s159
      %p166 = scmp.eq.s32.totalorder %s23, 1
      %p167 = por %p165, %p166
      %p168 = scmp.ne.s32.totalorder %s159, %s160
      %p169 = scmp.eq.s32.totalorder %s23, 0
      %p170 = por %p168, %p169
      %p171 = scmp.ne.s32.totalorder %s159, %s160
      %p172 = scmp.eq.s32.totalorder %s24, 1
      %p173 = por %p171, %p172
      %p175 = scmp.ne.s32.totalorder %s160, %s174
      %p176 = scmp.eq.s32.totalorder %s24, 0
      %p177 = por %p175, %p176
      %s179 = sadd.s32 %s178, 1
      %p182 = scmp.eq.s32.totalorder %s18, 1
      %p183 = scmp.ne.s32.totalorder %s178, %s180
      %p184 = scmp.eq.s32.totalorder %s18, 0
      %p185 = por %p183, %p184
      %p186 = scmp.ne.s32.totalorder %s178, %s180
      %p187 = scmp.eq.s32.totalorder %s23, 1
      %p188 = por %p186, %p187
      %p189 = scmp.ne.s32.totalorder %s180, %s181
      %p190 = scmp.eq.s32.totalorder %s23, 0
      %p191 = por %p189, %p190
      %p192 = scmp.ne.s32.totalorder %s180, %s181
      %p193 = scmp.eq.s32.totalorder %s24, 1
      %p194 = por %p192, %p193
      %p196 = scmp.ne.s32.totalorder %s181, %s195
      %p197 = scmp.eq.s32.totalorder %s24, 0
      %p198 = por %p196, %p197
      %s200 = sadd.s32 %s199, 1
      %p203 = scmp.eq.s32.totalorder %s18, 1
      %p204 = scmp.ne.s32.totalorder %s199, %s201
      %p205 = scmp.eq.s32.totalorder %s18, 0
      %p206 = por %p204, %p205
      %p207 = scmp.ne.s32.totalorder %s199, %s201
      %p208 = scmp.eq.s32.totalorder %s23, 1
      %p209 = por %p207, %p208
      %p210 = scmp.ne.s32.totalorder %s201, %s202
      %p211 = scmp.eq.s32.totalorder %s23, 0
      %p212 = por %p210, %p211
      %p213 = scmp.ne.s32.totalorder %s201, %s202
      %p214 = scmp.eq.s32.totalorder %s24, 1
      %p215 = por %p213, %p214
      %p217 = scmp.ne.s32.totalorder %s202, %s216
      %p218 = scmp.eq.s32.totalorder %s24, 0
      %p219 = por %p217, %p218
      %s220 = ssub.s32 %s18, %s25
      %p221 = scmp.eq.s32.totalorder %s220, 0
      %s223 = sadd.s32 %s222, 1
      %s224 = scalar_select %p221, %s222, %s223
      %p227 = pneg %p221
      %p228 = scmp.eq.s32.totalorder %s18, 1
      %p229 = por %p227, %p228
      %p230 = scmp.ne.s32.totalorder %s222, %s225
      %p231 = scmp.eq.s32.totalorder %s18, 0
      %p232 = por %p230, %p231
      %p233 = scmp.ne.s32.totalorder %s222, %s225
      %p234 = scmp.eq.s32.totalorder %s23, 1
      %p235 = por %p233, %p234
      %p236 = scmp.ne.s32.totalorder %s225, %s226
      %p237 = scmp.eq.s32.totalorder %s23, 0
      %p238 = por %p236, %p237
      %p239 = scmp.ne.s32.totalorder %s225, %s226
      %p240 = scmp.eq.s32.totalorder %s24, 1
      %p241 = por %p239, %p240
      %p243 = scmp.ne.s32.totalorder %s226, %s242
      %p244 = scmp.eq.s32.totalorder %s24, 0
      %p245 = por %p243, %p244
      %p246 = scmp.le.s32.totalorder 1, %s18
      %p247 = scmp.lt.s32.totalorder %s18, 3
      %p248 = pnand %p246, %p247
      %p249 = pneg %p248
      // Predicated region
      $region9: #{tpu_custom_call.1} parent=5 // pred_check
        _
      $region10: #{tpu_custom_call.1} parent=5 // pred_check_branch
        %251 = sbr.rel (%p248) target = $region12
      $region11: #{tpu_custom_call.1} parent=5 // pred_region
        %s252 = ssub.s32 %s18, 1
        // Predicated region
        $region13: #{tpu_custom_call.1} parent=11 // pred_check
          %p253 = pneg %p65
        $region14: #{tpu_custom_call.1} parent=11 // pred_check_branch
          %255 = sbr.rel (%p253) target = $region16
        $region15: #{tpu_custom_call.1} parent=11 // pred_region
          _
        $region16: #{tpu_custom_call.1} parent=11 // pred_fallthru
          _
        // Predicated region
        $region17: #{tpu_custom_call.1} parent=11 // pred_check
          %p256 = pneg %p86
        $region18: #{tpu_custom_call.1} parent=11 // pred_check_branch
          %258 = sbr.rel (%p256) target = $region20
        $region19: #{tpu_custom_call.1} parent=11 // pred_region
          _
        $region20: #{tpu_custom_call.1} parent=11 // pred_fallthru
          _
        // Predicated region
        $region21: #{tpu_custom_call.1} parent=11 // pred_check
          %p259 = pneg %p107
        $region22: #{tpu_custom_call.1} parent=11 // pred_check_branch
          %261 = sbr.rel (%p259) target = $region24
        $region23: #{tpu_custom_call.1} parent=11 // pred_region
          _
        $region24: #{tpu_custom_call.1} parent=11 // pred_fallthru
          _
        // Predicated region
        $region25: #{tpu_custom_call.1} parent=11 // pred_check
          %p262 = pneg %p128
        $region26: #{tpu_custom_call.1} parent=11 // pred_check_branch
          %264 = sbr.rel (%p262) target = $region28
        $region27: #{tpu_custom_call.1} parent=11 // pred_region
          _
        $region28: #{tpu_custom_call.1} parent=11 // pred_fallthru
          _
        // Predicated region
        $region29: #{tpu_custom_call.1} parent=11 // pred_check
          %p265 = pneg %p149
        $region30: #{tpu_custom_call.1} parent=11 // pred_check_branch
          %267 = sbr.rel (%p265) target = $region32
        $region31: #{tpu_custom_call.1} parent=11 // pred_region
          _
        $region32: #{tpu_custom_call.1} parent=11 // pred_fallthru
          _
        // Predicated region
        $region33: #{tpu_custom_call.1} parent=11 // pred_check
          %p268 = pneg %p170
        $region34: #{tpu_custom_call.1} parent=11 // pred_check_branch
          %270 = sbr.rel (%p268) target = $region36
        $region35: #{tpu_custom_call.1} parent=11 // pred_region
          _
        $region36: #{tpu_custom_call.1} parent=11 // pred_fallthru
          _
        // Predicated region
        $region37: #{tpu_custom_call.1} parent=11 // pred_check
          %p271 = pneg %p191
        $region38: #{tpu_custom_call.1} parent=11 // pred_check_branch
          %273 = sbr.rel (%p271) target = $region40
        $region39: #{tpu_custom_call.1} parent=11 // pred_region
          _
        $region40: #{tpu_custom_call.1} parent=11 // pred_fallthru
          _
        // Predicated region
        $region41: #{tpu_custom_call.1} parent=11 // pred_check
          %p274 = pneg %p212
        $region42: #{tpu_custom_call.1} parent=11 // pred_check_branch
          %276 = sbr.rel (%p274) target = $region44
        $region43: #{tpu_custom_call.1} parent=11 // pred_region
          _
        $region44: #{tpu_custom_call.1} parent=11 // pred_fallthru
          _
      $region12: #{tpu_custom_call.1} parent=5 // pred_fallthru
        _
      %p277 = scmp.lt.s32.totalorder %s18, 2
      // Predicated region
      $region45: #{tpu_custom_call.1} parent=5 // pred_check
        %p278 = pneg %p277
      $region46: #{tpu_custom_call.1} parent=5 // pred_check_branch
        %280 = sbr.rel (%p278) target = $region48
      $region47: #{tpu_custom_call.1} parent=5 // pred_region
        // Predicated region
        $region49: #{tpu_custom_call.1} parent=47 // pred_check
          %p281 = pneg %p38
        $region50: #{tpu_custom_call.1} parent=47 // pred_check_branch
          %283 = sbr.rel (%p281) target = $region52
        $region51: #{tpu_custom_call.1} parent=47 // pred_region
          %p284 = scmp.lt.s32.totalorder %s18, 1
          %s285 = scalar_select %p284, %s18, 1
          %s286 = smul.addr %s285, 32
          %s287 = smul.addr %s286, 8
          %s288 = scalar_lea.vmem %s0, %s287
        $region52: #{tpu_custom_call.1} parent=47 // pred_fallthru
          _
      $region48: #{tpu_custom_call.1} parent=5 // pred_fallthru
        _
      %p289 = scmp.le.s32.totalorder 1, %s18
      %p290 = scmp.lt.s32.totalorder %s18, 3
      %p291 = pnand %p289, %p290
      %p292 = pneg %p291
      // Predicated region
      $region53: #{tpu_custom_call.1} parent=5 // pred_check
        _
      $region54: #{tpu_custom_call.1} parent=5 // pred_check_branch
        %294 = sbr.rel (%p291) target = $region56
      $region55: #{tpu_custom_call.1} parent=5 // pred_region
        %s295 = ssub.s32 %s18, 1
        %p296 = scmp.lt.s32.totalorder %s23, 1
        %s297 = scalar_select %p296, %s23, 1
        %s298 = smul.addr %s297, 32
        %s299 = smul.addr %s298, 8
        %s300 = scalar_lea.vmem %s0, %s299
        %p301 = pneg %p44
        %p302 = pneg %p41
        %p303 = pneg %p65
        %p304 = pneg %p62
        %p305 = pneg %p86
        %p306 = pneg %p83
        %p307 = pneg %p107
        %p308 = pneg %p104
        %p309 = pneg %p128
        %p310 = pneg %p125
        %p311 = pneg %p149
        %p312 = pneg %p146
        %p313 = pneg %p170
        %p314 = pneg %p167
        %p315 = pneg %p191
        %p316 = pneg %p188
        %p317 = pneg %p212
        %p318 = pneg %p209
        %p319 = pneg %p238
        %p320 = pneg %p235
        %s321 = sand.u32 %s225, 1
        %s322 = scalar_lea.sflag [#allocation6], %s321
        %s323 = sand.u32 %s225, 1
        %s324 = smul.addr %s323, 256
        %s325 = scalar_lea.vmem [#allocation5], %s324
        %p326 = scmp.lt.s32.totalorder %s23, 1
        %s327 = scalar_select %p326, %s23, 1
        %s328 = smul.addr %s327, 32
        %s329 = smul.addr %s328, 8
        %s330 = scalar_lea.vmem %s0, %s329
        %vm331 = vcmask 64512
        %332 = vst.msk [vmem:[#allocation2] sm:$0xff] %vm331, 0.0
        %333 = vst.msk [vmem:[#allocation2 + $0x8] sm:$0xff] %vm331, 0.0
        %334 = vst.msk [vmem:[#allocation2 + $0x10] sm:$0xff] %vm331, 0.0
        %vm335 = vcmask 58368
        %336 = vst.msk [vmem:[#allocation2 + $0x18] sm:$0x3] %vm335, 0.0
        %337 = vst.msk [vmem:[#allocation2 + $0x20] sm:$0xff] %vm331, 0.0
        %338 = vst.msk [vmem:[#allocation2 + $0x28] sm:$0xff] %vm331, 0.0
        %339 = vst.msk [vmem:[#allocation2 + $0x30] sm:$0xff] %vm331, 0.0
        %340 = vst.msk [vmem:[#allocation2 + $0x38] sm:$0x3] %vm335, 0.0
        %s341 = scalar_lea.vmem [#allocation2], 576
        %342 = vst.msk [vmem:[%s341] sm:$0xff] %vm331, 0.0
        %343 = vst.msk [vmem:[%s341 + $0x8] sm:$0xff] %vm331, 0.0
        %344 = vst.msk [vmem:[%s341 + $0x10] sm:$0xff] %vm331, 0.0
        %345 = vst.msk [vmem:[%s341 + $0x18] sm:$0x3] %vm335, 0.0
        %346 = vst.msk [vmem:[%s341 + $0x20] sm:$0xff] %vm331, 0.0
        %347 = vst.msk [vmem:[%s341 + $0x28] sm:$0xff] %vm331, 0.0
        %348 = vst.msk [vmem:[%s341 + $0x30] sm:$0xff] %vm331, 0.0
        %349 = vst.msk [vmem:[%s341 + $0x38] sm:$0x3] %vm335, 0.0
        %350 = vst.msk [vmem:[#allocation2 + $0x6] sm:$0x3] %vm335, 0.0
        %351 = vst.msk [vmem:[#allocation2 + $0x26] sm:$0x3] %vm335, 0.0
        %352 = vst.msk [vmem:[#allocation2 + $0x46] sm:$0x3] %vm335, 0.0
        %353 = vst.msk [vmem:[#allocation2 + $0x66] sm:$0x3] %vm335, 0.0
        %354 = vst.msk [vmem:[#allocation2 + $0x86] sm:$0x3] %vm335, 0.0
        %355 = vst.msk [vmem:[#allocation2 + $0xa6] sm:$0x3] %vm335, 0.0
        %356 = vst.msk [vmem:[#allocation2 + $0xc6] sm:$0x3] %vm335, 0.0
        %357 = vst.msk [vmem:[#allocation2 + $0xe6] sm:$0x3] %vm335, 0.0
        %358 = vst.msk [vmem:[#allocation2 + $0x106] sm:$0x3] %vm335, 0.0
        %359 = vst.msk [vmem:[#allocation2 + $0x126] sm:$0x3] %vm335, 0.0
        %360 = vst.msk [vmem:[#allocation2 + $0x146] sm:$0x3] %vm335, 0.0
        %361 = vst.msk [vmem:[#allocation2 + $0x166] sm:$0x3] %vm335, 0.0
        %362 = vst.msk [vmem:[#allocation2 + $0x186] sm:$0x3] %vm335, 0.0
        %363 = vst.msk [vmem:[#allocation2 + $0x1a6] sm:$0x3] %vm335, 0.0
        %364 = vst.msk [vmem:[#allocation2 + $0x1c6] sm:$0x3] %vm335, 0.0
        %365 = vst.msk [vmem:[#allocation2 + $0x1e6] sm:$0x3] %vm335, 0.0
        %366 = vst.msk [vmem:[#allocation2 + $0x206] sm:$0x3] %vm335, 0.0
        %367 = vst.msk [vmem:[#allocation2 + $0x226] sm:$0x3] %vm335, 0.0
        %368 = vst.msk [vmem:[#allocation2 + $0x246] sm:$0x3] %vm335, 0.0
        %369 = vst.msk [vmem:[#allocation2 + $0x266] sm:$0x3] %vm335, 0.0
        %370 = vst.msk [vmem:[#allocation2 + $0x18] sm:$0x3] %vm335, 0.0
        %371 = vst.msk [vmem:[#allocation2 + $0x38] sm:$0x3] %vm335, 0.0
        %372 = vst.msk [vmem:[#allocation2 + $0x58] sm:$0x3] %vm335, 0.0
        %373 = vst.msk [vmem:[#allocation2 + $0x78] sm:$0x3] %vm335, 0.0
        %374 = vst.msk [vmem:[#allocation2 + $0x98] sm:$0x3] %vm335, 0.0
        %375 = vst.msk [vmem:[#allocation2 + $0xb8] sm:$0x3] %vm335, 0.0
        %376 = vst.msk [vmem:[#allocation2 + $0xd8] sm:$0x3] %vm335, 0.0
        %377 = vst.msk [vmem:[#allocation2 + $0xf8] sm:$0x3] %vm335, 0.0
        %378 = vst.msk [vmem:[#allocation2 + $0x118] sm:$0x3] %vm335, 0.0
        %379 = vst.msk [vmem:[#allocation2 + $0x138] sm:$0x3] %vm335, 0.0
        %380 = vst.msk [vmem:[#allocation2 + $0x158] sm:$0x3] %vm335, 0.0
        %381 = vst.msk [vmem:[#allocation2 + $0x178] sm:$0x3] %vm335, 0.0
        %382 = vst.msk [vmem:[#allocation2 + $0x198] sm:$0x3] %vm335, 0.0
        %383 = vst.msk [vmem:[#allocation2 + $0x1b8] sm:$0x3] %vm335, 0.0
        %384 = vst.msk [vmem:[#allocation2 + $0x1d8] sm:$0x3] %vm335, 0.0
        %385 = vst.msk [vmem:[#allocation2 + $0x1f8] sm:$0x3] %vm335, 0.0
        %386 = vst.msk [vmem:[#allocation2 + $0x218] sm:$0x3] %vm335, 0.0
        %387 = vst.msk [vmem:[#allocation2 + $0x238] sm:$0x3] %vm335, 0.0
        %388 = vst.msk [vmem:[#allocation2 + $0x258] sm:$0x3] %vm335, 0.0
        %389 = vst.msk [vmem:[#allocation2 + $0x278] sm:$0x3] %vm335, 0.0
        %v390 = vld [vmem:[%s330] sm:$0xff]
        %v391 = vld [vmem:[%s330 + $0x8] sm:$0xff]
        %v392 = vld [vmem:[%s330 + $0x10] sm:$0xff]
        %v393 = vld [vmem:[%s330 + $0x18] sm:$0xff]
        %v394 = vld [vmem:[%s330 + $0x20] sm:$0xff]
        %v395 = vld [vmem:[%s330 + $0x28] sm:$0xff]
        %v396 = vld [vmem:[%s330 + $0x30] sm:$0xff]
        %v397 = vld [vmem:[%s330 + $0x38] sm:$0xff]
        %v398 = vld [vmem:[%s330 + $0x40] sm:$0xff]
        %v399 = vld [vmem:[%s330 + $0x48] sm:$0xff]
        %v400 = vld [vmem:[%s330 + $0x50] sm:$0xff]
        %v401 = vld [vmem:[%s330 + $0x58] sm:$0xff]
        %v402 = vld [vmem:[%s330 + $0x60] sm:$0xff]
        %v403 = vld [vmem:[%s330 + $0x68] sm:$0xff]
        %v404 = vld [vmem:[%s330 + $0x70] sm:$0xff]
        %v405 = vld [vmem:[%s330 + $0x78] sm:$0xff]
        %v406 = vld [vmem:[%s330 + $0x80] sm:$0xff]
        %v407 = vld [vmem:[%s330 + $0x88] sm:$0xff]
        %v408 = vld [vmem:[%s330 + $0x90] sm:$0xff]
        %v409 = vld [vmem:[%s330 + $0x98] sm:$0xff]
        %v410 = vld [vmem:[%s330 + $0xa0] sm:$0xff]
        %v411 = vld [vmem:[%s330 + $0xa8] sm:$0xff]
        %v412 = vld [vmem:[%s330 + $0xb0] sm:$0xff]
        %v413 = vld [vmem:[%s330 + $0xb8] sm:$0xff]
        %v414 = vld [vmem:[%s330 + $0xc0] sm:$0xff]
        %v415 = vld [vmem:[%s330 + $0xc8] sm:$0xff]
        %v416 = vld [vmem:[%s330 + $0xd0] sm:$0xff]
        %v417 = vld [vmem:[%s330 + $0xd8] sm:$0xff]
        %v418 = vld [vmem:[%s330 + $0xe0] sm:$0xff]
        %v419 = vld [vmem:[%s330 + $0xe8] sm:$0xff]
        %v420 = vld [vmem:[%s330 + $0xf0] sm:$0xff]
        %v421 = vld [vmem:[%s330 + $0xf8] sm:$0xff]
        %s422 = scalar_lea.vmem [#allocation2], 64
        %423 = vst.msk [vmem:[%s422 + $0x8] sm:$0xff] %vm331, %v390
        %424 = vst.msk [vmem:[%s422 + $0x10] sm:$0xff] %vm331, %v391
        %425 = vst.msk [vmem:[%s422 + $0x28] sm:$0xff] %vm331, %v392
        %426 = vst.msk [vmem:[%s422 + $0x30] sm:$0xff] %vm331, %v393
        %427 = vst.msk [vmem:[%s422 + $0x48] sm:$0xff] %vm331, %v394
        %428 = vst.msk [vmem:[%s422 + $0x50] sm:$0xff] %vm331, %v395
        %429 = vst.msk [vmem:[%s422 + $0x68] sm:$0xff] %vm331, %v396
        %430 = vst.msk [vmem:[%s422 + $0x70] sm:$0xff] %vm331, %v397
        %431 = vst.msk [vmem:[%s422 + $0x88] sm:$0xff] %vm331, %v398
        %432 = vst.msk [vmem:[%s422 + $0x90] sm:$0xff] %vm331, %v399
        %433 = vst.msk [vmem:[%s422 + $0xa8] sm:$0xff] %vm331, %v400
        %434 = vst.msk [vmem:[%s422 + $0xb0] sm:$0xff] %vm331, %v401
        %435 = vst.msk [vmem:[%s422 + $0xc8] sm:$0xff] %vm331, %v402
        %436 = vst.msk [vmem:[%s422 + $0xd0] sm:$0xff] %vm331, %v403
        %437 = vst.msk [vmem:[%s422 + $0xe8] sm:$0xff] %vm331, %v404
        %438 = vst.msk [vmem:[%s422 + $0xf0] sm:$0xff] %vm331, %v405
        %439 = vst.msk [vmem:[%s422 + $0x108] sm:$0xff] %vm331, %v406
        %440 = vst.msk [vmem:[%s422 + $0x110] sm:$0xff] %vm331, %v407
        %441 = vst.msk [vmem:[%s422 + $0x128] sm:$0xff] %vm331, %v408
        %442 = vst.msk [vmem:[%s422 + $0x130] sm:$0xff] %vm331, %v409
        %443 = vst.msk [vmem:[%s422 + $0x148] sm:$0xff] %vm331, %v410
        %444 = vst.msk [vmem:[%s422 + $0x150] sm:$0xff] %vm331, %v411
        %445 = vst.msk [vmem:[%s422 + $0x168] sm:$0xff] %vm331, %v412
        %446 = vst.msk [vmem:[%s422 + $0x170] sm:$0xff] %vm331, %v413
        %447 = vst.msk [vmem:[%s422 + $0x188] sm:$0xff] %vm331, %v414
        %448 = vst.msk [vmem:[%s422 + $0x190] sm:$0xff] %vm331, %v415
        %449 = vst.msk [vmem:[%s422 + $0x1a8] sm:$0xff] %vm331, %v416
        %450 = vst.msk [vmem:[%s422 + $0x1b0] sm:$0xff] %vm331, %v417
        %451 = vst.msk [vmem:[%s422 + $0x1c8] sm:$0xff] %vm331, %v418
        %452 = vst.msk [vmem:[%s422 + $0x1d0] sm:$0xff] %vm331, %v419
        %453 = vst.msk [vmem:[%s422 + $0x1e8] sm:$0xff] %vm331, %v420
        %454 = vst.msk [vmem:[%s422 + $0x1f0] sm:$0xff] %vm331, %v421
        %v455 = vld [vmem:[#allocation2 + $0x6] sm:$0xff]
        %v456 = vld [vmem:[#allocation2 + $0xe] sm:$0xff]
        %v457 = vld [vmem:[#allocation2 + $0x26] sm:$0xff]
        %v458 = vld [vmem:[#allocation2 + $0x2e] sm:$0xff]
        %v459 = vld [vmem:[#allocation2 + $0x46] sm:$0xff]
        %v460 = vld [vmem:[#allocation2 + $0x4e] sm:$0xff]
        %v461 = vld [vmem:[#allocation2 + $0x66] sm:$0xff]
        %v462 = vld [vmem:[#allocation2 + $0x6e] sm:$0xff]
        %v463 = vld [vmem:[#allocation2 + $0x86] sm:$0xff]
        %v464 = vld [vmem:[#allocation2 + $0x8e] sm:$0xff]
        %v465 = vld [vmem:[#allocation2 + $0xa6] sm:$0xff]
        %v466 = vld [vmem:[#allocation2 + $0xae] sm:$0xff]
        %v467 = vld [vmem:[#allocation2 + $0xc6] sm:$0xff]
        %v468 = vld [vmem:[#allocation2 + $0xce] sm:$0xff]
        %v469 = vld [vmem:[#allocation2 + $0xe6] sm:$0xff]
        %v470 = vld [vmem:[#allocation2 + $0xee] sm:$0xff]
        %v471 = vld [vmem:[#allocation2 + $0x106] sm:$0xff]
        %v472 = vld [vmem:[#allocation2 + $0x10e] sm:$0xff]
        %v473 = vld [vmem:[#allocation2 + $0x126] sm:$0xff]
        %v474 = vld [vmem:[#allocation2 + $0x12e] sm:$0xff]
        %v475 = vld [vmem:[#allocation2 + $0x146] sm:$0xff]
        %v476 = vld [vmem:[#allocation2 + $0x14e] sm:$0xff]
        %v477 = vld [vmem:[#allocation2 + $0x166] sm:$0xff]
        %v478 = vld [vmem:[#allocation2 + $0x16e] sm:$0xff]
        %v479 = vld [vmem:[#allocation2 + $0x186] sm:$0xff]
        %v480 = vld [vmem:[#allocation2 + $0x18e] sm:$0xff]
        %v481 = vld [vmem:[#allocation2 + $0x1a6] sm:$0xff]
        %v482 = vld [vmem:[#allocation2 + $0x1ae] sm:$0xff]
        %v483 = vld [vmem:[#allocation2 + $0x1c6] sm:$0xff]
        %v484 = vld [vmem:[#allocation2 + $0x1ce] sm:$0xff]
        %v485 = vld [vmem:[#allocation2 + $0x1e6] sm:$0xff]
        %v486 = vld [vmem:[#allocation2 + $0x1ee] sm:$0xff]
        %v487 = vld [vmem:[#allocation2 + $0x206] sm:$0xff]
        %v488 = vld [vmem:[#allocation2 + $0x20e] sm:$0xff]
        %v489 = vld [vmem:[#allocation2 + $0x226] sm:$0xff]
        %v490 = vld [vmem:[#allocation2 + $0x22e] sm:$0xff]
        %v491 = vld [vmem:[#allocation2 + $0x246] sm:$0xff]
        %v492 = vld [vmem:[#allocation2 + $0x24e] sm:$0xff]
        %v493 = vld [vmem:[#allocation2 + $0x266] sm:$0xff]
        %v494 = vld [vmem:[#allocation2 + $0x26e] sm:$0xff]
        %527 = vrot.lane.b32.xlu0 %v457, 8
        %v528 = vpop.permute.xlu0 %527
        %529 = vrot.lane.b32.xlu0 %v458, 8
        %v530 = vpop.permute.xlu0 %529
        %531 = vrot.lane.b32.xlu0 %v459, 8
        %v532 = vpop.permute.xlu0 %531
        %533 = vrot.lane.b32.xlu0 %v460, 8
        %v534 = vpop.permute.xlu0 %533
        %535 = vrot.lane.b32.xlu0 %v461, 8
        %v536 = vpop.permute.xlu0 %535
        %537 = vrot.lane.b32.xlu0 %v462, 8
        %v538 = vpop.permute.xlu0 %537
        %539 = vrot.lane.b32.xlu0 %v463, 8
        %v540 = vpop.permute.xlu0 %539
        %541 = vrot.lane.b32.xlu0 %v464, 8
        %v542 = vpop.permute.xlu0 %541
        %543 = vrot.lane.b32.xlu0 %v465, 8
        %v544 = vpop.permute.xlu0 %543
        %545 = vrot.lane.b32.xlu0 %v466, 8
        %v546 = vpop.permute.xlu0 %545
        %547 = vrot.lane.b32.xlu0 %v467, 8
        %v548 = vpop.permute.xlu0 %547
        %549 = vrot.lane.b32.xlu0 %v468, 8
        %v550 = vpop.permute.xlu0 %549
        %551 = vrot.lane.b32.xlu0 %v469, 8
        %v552 = vpop.permute.xlu0 %551
        %553 = vrot.lane.b32.xlu0 %v470, 8
        %v554 = vpop.permute.xlu0 %553
        %555 = vrot.lane.b32.xlu0 %v471, 8
        %v556 = vpop.permute.xlu0 %555
        %557 = vrot.lane.b32.xlu0 %v472, 8
        %v558 = vpop.permute.xlu0 %557
        %559 = vrot.lane.b32.xlu0 %v473, 8
        %v560 = vpop.permute.xlu0 %559
        %561 = vrot.lane.b32.xlu0 %v474, 8
        %v562 = vpop.permute.xlu0 %561
        %563 = vrot.lane.b32.xlu0 %v475, 8
        %v564 = vpop.permute.xlu0 %563
        %565 = vrot.lane.b32.xlu0 %v476, 8
        %v566 = vpop.permute.xlu0 %565
        %567 = vrot.lane.b32.xlu0 %v477, 8
        %v568 = vpop.permute.xlu0 %567
        %569 = vrot.lane.b32.xlu0 %v478, 8
        %v570 = vpop.permute.xlu0 %569
        %571 = vrot.lane.b32.xlu0 %v479, 8
        %v572 = vpop.permute.xlu0 %571
        %573 = vrot.lane.b32.xlu0 %v480, 8
        %v574 = vpop.permute.xlu0 %573
        %575 = vrot.lane.b32.xlu0 %v481, 8
        %v576 = vpop.permute.xlu0 %575
        %577 = vrot.lane.b32.xlu0 %v482, 8
        %v578 = vpop.permute.xlu0 %577
        %579 = vrot.lane.b32.xlu0 %v483, 8
        %v580 = vpop.permute.xlu0 %579
        %581 = vrot.lane.b32.xlu0 %v484, 8
        %v582 = vpop.permute.xlu0 %581
        %583 = vrot.lane.b32.xlu0 %v485, 8
        %v584 = vpop.permute.xlu0 %583
        %585 = vrot.lane.b32.xlu0 %v486, 8
        %v586 = vpop.permute.xlu0 %585
        %587 = vrot.lane.b32.xlu0 %v487, 8
        %v588 = vpop.permute.xlu0 %587
        %589 = vrot.lane.b32.xlu0 %v488, 8
        %v590 = vpop.permute.xlu0 %589
        %625 = vrot.lane.b32.xlu0 %v459, 16
        %v626 = vpop.permute.xlu0 %625
        %627 = vrot.lane.b32.xlu0 %v460, 16
        %v628 = vpop.permute.xlu0 %627
        %629 = vrot.lane.b32.xlu0 %v461, 16
        %v630 = vpop.permute.xlu0 %629
        %631 = vrot.lane.b32.xlu0 %v462, 16
        %v632 = vpop.permute.xlu0 %631
        %633 = vrot.lane.b32.xlu0 %v463, 16
        %v634 = vpop.permute.xlu0 %633
        %635 = vrot.lane.b32.xlu0 %v464, 16
        %v636 = vpop.permute.xlu0 %635
        %637 = vrot.lane.b32.xlu0 %v465, 16
        %v638 = vpop.permute.xlu0 %637
        %639 = vrot.lane.b32.xlu0 %v466, 16
        %v640 = vpop.permute.xlu0 %639
        %641 = vrot.lane.b32.xlu0 %v467, 16
        %v642 = vpop.permute.xlu0 %641
        %643 = vrot.lane.b32.xlu0 %v468, 16
        %v644 = vpop.permute.xlu0 %643
        %645 = vrot.lane.b32.xlu0 %v469, 16
        %v646 = vpop.permute.xlu0 %645
        %647 = vrot.lane.b32.xlu0 %v470, 16
        %v648 = vpop.permute.xlu0 %647
        %649 = vrot.lane.b32.xlu0 %v471, 16
        %v650 = vpop.permute.xlu0 %649
        %651 = vrot.lane.b32.xlu0 %v472, 16
        %v652 = vpop.permute.xlu0 %651
        %653 = vrot.lane.b32.xlu0 %v473, 16
        %v654 = vpop.permute.xlu0 %653
        %655 = vrot.lane.b32.xlu0 %v474, 16
        %v656 = vpop.permute.xlu0 %655
        %657 = vrot.lane.b32.xlu0 %v475, 16
        %v658 = vpop.permute.xlu0 %657
        %659 = vrot.lane.b32.xlu0 %v476, 16
        %v660 = vpop.permute.xlu0 %659
        %661 = vrot.lane.b32.xlu0 %v477, 16
        %v662 = vpop.permute.xlu0 %661
        %663 = vrot.lane.b32.xlu0 %v478, 16
        %v664 = vpop.permute.xlu0 %663
        %665 = vrot.lane.b32.xlu0 %v479, 16
        %v666 = vpop.permute.xlu0 %665
        %667 = vrot.lane.b32.xlu0 %v480, 16
        %v668 = vpop.permute.xlu0 %667
        %669 = vrot.lane.b32.xlu0 %v481, 16
        %v670 = vpop.permute.xlu0 %669
        %671 = vrot.lane.b32.xlu0 %v482, 16
        %v672 = vpop.permute.xlu0 %671
        %673 = vrot.lane.b32.xlu0 %v483, 16
        %v674 = vpop.permute.xlu0 %673
        %675 = vrot.lane.b32.xlu0 %v484, 16
        %v676 = vpop.permute.xlu0 %675
        %677 = vrot.lane.b32.xlu0 %v485, 16
        %v678 = vpop.permute.xlu0 %677
        %679 = vrot.lane.b32.xlu0 %v486, 16
        %v680 = vpop.permute.xlu0 %679
        %681 = vrot.lane.b32.xlu0 %v487, 16
        %v682 = vpop.permute.xlu0 %681
        %683 = vrot.lane.b32.xlu0 %v488, 16
        %v684 = vpop.permute.xlu0 %683
        %685 = vrot.lane.b32.xlu0 %v489, 16
        %v686 = vpop.permute.xlu0 %685
        %687 = vrot.lane.b32.xlu0 %v490, 16
        %v688 = vpop.permute.xlu0 %687
        %723 = vrot.lane.b32.xlu0 %v461, 24
        %v724 = vpop.permute.xlu0 %723
        %725 = vrot.lane.b32.xlu0 %v462, 24
        %v726 = vpop.permute.xlu0 %725
        %727 = vrot.lane.b32.xlu0 %v463, 24
        %v728 = vpop.permute.xlu0 %727
        %729 = vrot.lane.b32.xlu0 %v464, 24
        %v730 = vpop.permute.xlu0 %729
        %731 = vrot.lane.b32.xlu0 %v465, 24
        %v732 = vpop.permute.xlu0 %731
        %733 = vrot.lane.b32.xlu0 %v466, 24
        %v734 = vpop.permute.xlu0 %733
        %735 = vrot.lane.b32.xlu0 %v467, 24
        %v736 = vpop.permute.xlu0 %735
        %737 = vrot.lane.b32.xlu0 %v468, 24
        %v738 = vpop.permute.xlu0 %737
        %739 = vrot.lane.b32.xlu0 %v469, 24
        %v740 = vpop.permute.xlu0 %739
        %741 = vrot.lane.b32.xlu0 %v470, 24
        %v742 = vpop.permute.xlu0 %741
        %743 = vrot.lane.b32.xlu0 %v471, 24
        %v744 = vpop.permute.xlu0 %743
        %745 = vrot.lane.b32.xlu0 %v472, 24
        %v746 = vpop.permute.xlu0 %745
        %747 = vrot.lane.b32.xlu0 %v473, 24
        %v748 = vpop.permute.xlu0 %747
        %749 = vrot.lane.b32.xlu0 %v474, 24
        %v750 = vpop.permute.xlu0 %749
        %751 = vrot.lane.b32.xlu0 %v475, 24
        %v752 = vpop.permute.xlu0 %751
        %753 = vrot.lane.b32.xlu0 %v476, 24
        %v754 = vpop.permute.xlu0 %753
        %755 = vrot.lane.b32.xlu0 %v477, 24
        %v756 = vpop.permute.xlu0 %755
        %757 = vrot.lane.b32.xlu0 %v478, 24
        %v758 = vpop.permute.xlu0 %757
        %759 = vrot.lane.b32.xlu0 %v479, 24
        %v760 = vpop.permute.xlu0 %759
        %761 = vrot.lane.b32.xlu0 %v480, 24
        %v762 = vpop.permute.xlu0 %761
        %763 = vrot.lane.b32.xlu0 %v481, 24
        %v764 = vpop.permute.xlu0 %763
        %765 = vrot.lane.b32.xlu0 %v482, 24
        %v766 = vpop.permute.xlu0 %765
        %767 = vrot.lane.b32.xlu0 %v483, 24
        %v768 = vpop.permute.xlu0 %767
        %769 = vrot.lane.b32.xlu0 %v484, 24
        %v770 = vpop.permute.xlu0 %769
        %771 = vrot.lane.b32.xlu0 %v485, 24
        %v772 = vpop.permute.xlu0 %771
        %773 = vrot.lane.b32.xlu0 %v486, 24
        %v774 = vpop.permute.xlu0 %773
        %775 = vrot.lane.b32.xlu0 %v487, 24
        %v776 = vpop.permute.xlu0 %775
        %777 = vrot.lane.b32.xlu0 %v488, 24
        %v778 = vpop.permute.xlu0 %777
        %779 = vrot.lane.b32.xlu0 %v489, 24
        %v780 = vpop.permute.xlu0 %779
        %781 = vrot.lane.b32.xlu0 %v490, 24
        %v782 = vpop.permute.xlu0 %781
        %783 = vrot.lane.b32.xlu0 %v491, 24
        %v784 = vpop.permute.xlu0 %783
        %785 = vrot.lane.b32.xlu0 %v492, 24
        %v786 = vpop.permute.xlu0 %785
        %821 = vrot.lane.b32.xlu0 %v463, 32
        %v822 = vpop.permute.xlu0 %821
        %823 = vrot.lane.b32.xlu0 %v464, 32
        %v824 = vpop.permute.xlu0 %823
        %825 = vrot.lane.b32.xlu0 %v465, 32
        %v826 = vpop.permute.xlu0 %825
        %827 = vrot.lane.b32.xlu0 %v466, 32
        %v828 = vpop.permute.xlu0 %827
        %829 = vrot.lane.b32.xlu0 %v467, 32
        %v830 = vpop.permute.xlu0 %829
        %831 = vrot.lane.b32.xlu0 %v468, 32
        %v832 = vpop.permute.xlu0 %831
        %833 = vrot.lane.b32.xlu0 %v469, 32
        %v834 = vpop.permute.xlu0 %833
        %835 = vrot.lane.b32.xlu0 %v470, 32
        %v836 = vpop.permute.xlu0 %835
        %837 = vrot.lane.b32.xlu0 %v471, 32
        %v838 = vpop.permute.xlu0 %837
        %839 = vrot.lane.b32.xlu0 %v472, 32
        %v840 = vpop.permute.xlu0 %839
        %841 = vrot.lane.b32.xlu0 %v473, 32
        %v842 = vpop.permute.xlu0 %841
        %843 = vrot.lane.b32.xlu0 %v474, 32
        %v844 = vpop.permute.xlu0 %843
        %845 = vrot.lane.b32.xlu0 %v475, 32
        %v846 = vpop.permute.xlu0 %845
        %847 = vrot.lane.b32.xlu0 %v476, 32
        %v848 = vpop.permute.xlu0 %847
        %849 = vrot.lane.b32.xlu0 %v477, 32
        %v850 = vpop.permute.xlu0 %849
        %851 = vrot.lane.b32.xlu0 %v478, 32
        %v852 = vpop.permute.xlu0 %851
        %853 = vrot.lane.b32.xlu0 %v479, 32
        %v854 = vpop.permute.xlu0 %853
        %855 = vrot.lane.b32.xlu0 %v480, 32
        %v856 = vpop.permute.xlu0 %855
        %857 = vrot.lane.b32.xlu0 %v481, 32
        %v858 = vpop.permute.xlu0 %857
        %859 = vrot.lane.b32.xlu0 %v482, 32
        %v860 = vpop.permute.xlu0 %859
        %861 = vrot.lane.b32.xlu0 %v483, 32
        %v862 = vpop.permute.xlu0 %861
        %863 = vrot.lane.b32.xlu0 %v484, 32
        %v864 = vpop.permute.xlu0 %863
        %865 = vrot.lane.b32.xlu0 %v485, 32
        %v866 = vpop.permute.xlu0 %865
        %867 = vrot.lane.b32.xlu0 %v486, 32
        %v868 = vpop.permute.xlu0 %867
        %869 = vrot.lane.b32.xlu0 %v487, 32
        %v870 = vpop.permute.xlu0 %869
        %871 = vrot.lane.b32.xlu0 %v488, 32
        %v872 = vpop.permute.xlu0 %871
        %873 = vrot.lane.b32.xlu0 %v489, 32
        %v874 = vpop.permute.xlu0 %873
        %875 = vrot.lane.b32.xlu0 %v490, 32
        %v876 = vpop.permute.xlu0 %875
        %877 = vrot.lane.b32.xlu0 %v491, 32
        %v878 = vpop.permute.xlu0 %877
        %879 = vrot.lane.b32.xlu0 %v492, 32
        %v880 = vpop.permute.xlu0 %879
        %881 = vrot.lane.b32.xlu0 %v493, 32
        %v882 = vpop.permute.xlu0 %881
        %883 = vrot.lane.b32.xlu0 %v494, 32
        %v884 = vpop.permute.xlu0 %883
        %v917 = vsel %vm331, %v455, %v528
        %v918 = vsel %vm331, %v456, %v530
        %v919 = vsel %vm331, %v457, %v532
        %v920 = vsel %vm331, %v458, %v534
        %v921 = vsel %vm331, %v459, %v536
        %v922 = vsel %vm331, %v460, %v538
        %v923 = vsel %vm331, %v461, %v540
        %v924 = vsel %vm331, %v462, %v542
        %v925 = vsel %vm331, %v463, %v544
        %v926 = vsel %vm331, %v464, %v546
        %v927 = vsel %vm331, %v465, %v548
        %v928 = vsel %vm331, %v466, %v550
        %v929 = vsel %vm331, %v467, %v552
        %v930 = vsel %vm331, %v468, %v554
        %v931 = vsel %vm331, %v469, %v556
        %v932 = vsel %vm331, %v470, %v558
        %v933 = vsel %vm331, %v471, %v560
        %v934 = vsel %vm331, %v472, %v562
        %v935 = vsel %vm331, %v473, %v564
        %v936 = vsel %vm331, %v474, %v566
        %v937 = vsel %vm331, %v475, %v568
        %v938 = vsel %vm331, %v476, %v570
        %v939 = vsel %vm331, %v477, %v572
        %v940 = vsel %vm331, %v478, %v574
        %v941 = vsel %vm331, %v479, %v576
        %v942 = vsel %vm331, %v480, %v578
        %v943 = vsel %vm331, %v481, %v580
        %v944 = vsel %vm331, %v482, %v582
        %v945 = vsel %vm331, %v483, %v584
        %v946 = vsel %vm331, %v484, %v586
        %v947 = vsel %vm331, %v485, %v588
        %v948 = vsel %vm331, %v486, %v590
        %vm949 = vcmask 130048
        %v950 = vsel %vm949, %v917, %v626
        %v951 = vsel %vm949, %v918, %v628
        %v952 = vsel %vm949, %v919, %v630
        %v953 = vsel %vm949, %v920, %v632
        %v954 = vsel %vm949, %v921, %v634
        %v955 = vsel %vm949, %v922, %v636
        %v956 = vsel %vm949, %v923, %v638
        %v957 = vsel %vm949, %v924, %v640
        %v958 = vsel %vm949, %v925, %v642
        %v959 = vsel %vm949, %v926, %v644
        %v960 = vsel %vm949, %v927, %v646
        %v961 = vsel %vm949, %v928, %v648
        %v962 = vsel %vm949, %v929, %v650
        %v963 = vsel %vm949, %v930, %v652
        %v964 = vsel %vm949, %v931, %v654
        %v965 = vsel %vm949, %v932, %v656
        %v966 = vsel %vm949, %v933, %v658
        %v967 = vsel %vm949, %v934, %v660
        %v968 = vsel %vm949, %v935, %v662
        %v969 = vsel %vm949, %v936, %v664
        %v970 = vsel %vm949, %v937, %v666
        %v971 = vsel %vm949, %v938, %v668
        %v972 = vsel %vm949, %v939, %v670
        %v973 = vsel %vm949, %v940, %v672
        %v974 = vsel %vm949, %v941, %v674
        %v975 = vsel %vm949, %v942, %v676
        %v976 = vsel %vm949, %v943, %v678
        %v977 = vsel %vm949, %v944, %v680
        %v978 = vsel %vm949, %v945, %v682
        %v979 = vsel %vm949, %v946, %v684
        %v980 = vsel %vm949, %v947, %v686
        %v981 = vsel %vm949, %v948, %v688
        %vm982 = vcmask 195584
        %v983 = vsel %vm982, %v950, %v724
        %v984 = vsel %vm982, %v951, %v726
        %v985 = vsel %vm982, %v952, %v728
        %v986 = vsel %vm982, %v953, %v730
        %v987 = vsel %vm982, %v954, %v732
        %v988 = vsel %vm982, %v955, %v734
        %v989 = vsel %vm982, %v956, %v736
        %v990 = vsel %vm982, %v957, %v738
        %v991 = vsel %vm982, %v958, %v740
        %v992 = vsel %vm982, %v959, %v742
        %v993 = vsel %vm982, %v960, %v744
        %v994 = vsel %vm982, %v961, %v746
        %v995 = vsel %vm982, %v962, %v748
        %v996 = vsel %vm982, %v963, %v750
        %v997 = vsel %vm982, %v964, %v752
        %v998 = vsel %vm982, %v965, %v754
        %v999 = vsel %vm982, %v966, %v756
        %v1000 = vsel %vm982, %v967, %v758
        %v1001 = vsel %vm982, %v968, %v760
        %v1002 = vsel %vm982, %v969, %v762
        %v1003 = vsel %vm982, %v970, %v764
        %v1004 = vsel %vm982, %v971, %v766
        %v1005 = vsel %vm982, %v972, %v768
        %v1006 = vsel %vm982, %v973, %v770
        %v1007 = vsel %vm982, %v974, %v772
        %v1008 = vsel %vm982, %v975, %v774
        %v1009 = vsel %vm982, %v976, %v776
        %v1010 = vsel %vm982, %v977, %v778
        %v1011 = vsel %vm982, %v978, %v780
        %v1012 = vsel %vm982, %v979, %v782
        %v1013 = vsel %vm982, %v980, %v784
        %v1014 = vsel %vm982, %v981, %v786
        %vm1015 = vcmask 261120
        %v1016 = vsel %vm1015, %v983, %v822
        %v1017 = vsel %vm1015, %v984, %v824
        %v1018 = vsel %vm1015, %v985, %v826
        %v1019 = vsel %vm1015, %v986, %v828
        %v1020 = vsel %vm1015, %v987, %v830
        %v1021 = vsel %vm1015, %v988, %v832
        %v1022 = vsel %vm1015, %v989, %v834
        %v1023 = vsel %vm1015, %v990, %v836
        %v1024 = vsel %vm1015, %v991, %v838
        %v1025 = vsel %vm1015, %v992, %v840
        %v1026 = vsel %vm1015, %v993, %v842
        %v1027 = vsel %vm1015, %v994, %v844
        %v1028 = vsel %vm1015, %v995, %v846
        %v1029 = vsel %vm1015, %v996, %v848
        %v1030 = vsel %vm1015, %v997, %v850
        %v1031 = vsel %vm1015, %v998, %v852
        %v1032 = vsel %vm1015, %v999, %v854
        %v1033 = vsel %vm1015, %v1000, %v856
        %v1034 = vsel %vm1015, %v1001, %v858
        %v1035 = vsel %vm1015, %v1002, %v860
        %v1036 = vsel %vm1015, %v1003, %v862
        %v1037 = vsel %vm1015, %v1004, %v864
        %v1038 = vsel %vm1015, %v1005, %v866
        %v1039 = vsel %vm1015, %v1006, %v868
        %v1040 = vsel %vm1015, %v1007, %v870
        %v1041 = vsel %vm1015, %v1008, %v872
        %v1042 = vsel %vm1015, %v1009, %v874
        %v1043 = vsel %vm1015, %v1010, %v876
        %v1044 = vsel %vm1015, %v1011, %v878
        %v1045 = vsel %vm1015, %v1012, %v880
        %v1046 = vsel %vm1015, %v1013, %v882
        %v1047 = vsel %vm1015, %v1014, %v884
        %vm1048 = vcmask 326656
        %v1049 = vsel %vm1048, %v1016, 0.0
        %v1050 = vsel %vm1048, %v1017, 0.0
        %v1051 = vsel %vm1048, %v1018, 0.0
        %v1052 = vsel %vm1048, %v1019, 0.0
        %v1053 = vsel %vm1048, %v1020, 0.0
        %v1054 = vsel %vm1048, %v1021, 0.0
        %v1055 = vsel %vm1048, %v1022, 0.0
        %v1056 = vsel %vm1048, %v1023, 0.0
        %v1057 = vsel %vm1048, %v1024, 0.0
        %v1058 = vsel %vm1048, %v1025, 0.0
        %v1059 = vsel %vm1048, %v1026, 0.0
        %v1060 = vsel %vm1048, %v1027, 0.0
        %v1061 = vsel %vm1048, %v1028, 0.0
        %v1062 = vsel %vm1048, %v1029, 0.0
        %v1063 = vsel %vm1048, %v1030, 0.0
        %v1064 = vsel %vm1048, %v1031, 0.0
        %v1065 = vsel %vm1048, %v1032, 0.0
        %v1066 = vsel %vm1048, %v1033, 0.0
        %v1067 = vsel %vm1048, %v1034, 0.0
        %v1068 = vsel %vm1048, %v1035, 0.0
        %v1069 = vsel %vm1048, %v1036, 0.0
        %v1070 = vsel %vm1048, %v1037, 0.0
        %v1071 = vsel %vm1048, %v1038, 0.0
        %v1072 = vsel %vm1048, %v1039, 0.0
        %v1073 = vsel %vm1048, %v1040, 0.0
        %v1074 = vsel %vm1048, %v1041, 0.0
        %v1075 = vsel %vm1048, %v1042, 0.0
        %v1076 = vsel %vm1048, %v1043, 0.0
        %v1077 = vsel %vm1048, %v1044, 0.0
        %v1078 = vsel %vm1048, %v1045, 0.0
        %v1079 = vsel %vm1048, %v1046, 0.0
        %v1080 = vsel %vm1048, %v1047, 0.0
        %1081 = vst [vmem:[#allocation4] sm:$0xff] %v1049
        %1082 = vst [vmem:[#allocation4 + $0x30] sm:$0xff] %v1050
        %1083 = vst [vmem:[#allocation4 + $0x60] sm:$0xff] %v1051
        %1084 = vst [vmem:[#allocation4 + $0x90] sm:$0xff] %v1052
        %1085 = vst [vmem:[#allocation4 + $0xc0] sm:$0xff] %v1053
        %1086 = vst [vmem:[#allocation4 + $0xf0] sm:$0xff] %v1054
        %1087 = vst [vmem:[#allocation4 + $0x120] sm:$0xff] %v1055
        %1088 = vst [vmem:[#allocation4 + $0x150] sm:$0xff] %v1056
        %1089 = vst [vmem:[#allocation4 + $0x180] sm:$0xff] %v1057
        %1090 = vst [vmem:[#allocation4 + $0x1b0] sm:$0xff] %v1058
        %1091 = vst [vmem:[#allocation4 + $0x1e0] sm:$0xff] %v1059
        %1092 = vst [vmem:[#allocation4 + $0x210] sm:$0xff] %v1060
        %1093 = vst [vmem:[#allocation4 + $0x240] sm:$0xff] %v1061
        %1094 = vst [vmem:[#allocation4 + $0x270] sm:$0xff] %v1062
        %1095 = vst [vmem:[#allocation4 + $0x2a0] sm:$0xff] %v1063
        %1096 = vst [vmem:[#allocation4 + $0x2d0] sm:$0xff] %v1064
        %1097 = vst [vmem:[#allocation4 + $0x300] sm:$0xff] %v1065
        %1098 = vst [vmem:[#allocation4 + $0x330] sm:$0xff] %v1066
        %1099 = vst [vmem:[#allocation4 + $0x360] sm:$0xff] %v1067
        %1100 = vst [vmem:[#allocation4 + $0x390] sm:$0xff] %v1068
        %1101 = vst [vmem:[#allocation4 + $0x3c0] sm:$0xff] %v1069
        %1102 = vst [vmem:[#allocation4 + $0x3f0] sm:$0xff] %v1070
        %1103 = vst [vmem:[#allocation4 + $0x420] sm:$0xff] %v1071
        %1104 = vst [vmem:[#allocation4 + $0x450] sm:$0xff] %v1072
        %1105 = vst [vmem:[#allocation4 + $0x480] sm:$0xff] %v1073
        %1106 = vst [vmem:[#allocation4 + $0x4b0] sm:$0xff] %v1074
        %1107 = vst [vmem:[#allocation4 + $0x4e0] sm:$0xff] %v1075
        %1108 = vst [vmem:[#allocation4 + $0x510] sm:$0xff] %v1076
        %1109 = vst [vmem:[#allocation4 + $0x540] sm:$0xff] %v1077
        %1110 = vst [vmem:[#allocation4 + $0x570] sm:$0xff] %v1078
        %1111 = vst [vmem:[#allocation4 + $0x5a0] sm:$0xff] %v1079
        %1112 = vst [vmem:[#allocation4 + $0x5d0] sm:$0xff] %v1080
        %v1113 = vld [vmem:[#allocation2 + $0x7] sm:$0xff]
        %v1114 = vld [vmem:[#allocation2 + $0xf] sm:$0xff]
        %v1115 = vld [vmem:[#allocation2 + $0x27] sm:$0xff]
        %v1116 = vld [vmem:[#allocation2 + $0x2f] sm:$0xff]
        %v1117 = vld [vmem:[#allocation2 + $0x47] sm:$0xff]
        %v1118 = vld [vmem:[#allocation2 + $0x4f] sm:$0xff]
        %v1119 = vld [vmem:[#allocation2 + $0x67] sm:$0xff]
        %v1120 = vld [vmem:[#allocation2 + $0x6f] sm:$0xff]
        %v1121 = vld [vmem:[#allocation2 + $0x87] sm:$0xff]
        %v1122 = vld [vmem:[#allocation2 + $0x8f] sm:$0xff]
        %v1123 = vld [vmem:[#allocation2 + $0xa7] sm:$0xff]
        %v1124 = vld [vmem:[#allocation2 + $0xaf] sm:$0xff]
        %v1125 = vld [vmem:[#allocation2 + $0xc7] sm:$0xff]
        %v1126 = vld [vmem:[#allocation2 + $0xcf] sm:$0xff]
        %v1127 = vld [vmem:[#allocation2 + $0xe7] sm:$0xff]
        %v1128 = vld [vmem:[#allocation2 + $0xef] sm:$0xff]
        %v1129 = vld [vmem:[#allocation2 + $0x107] sm:$0xff]
        %v1130 = vld [vmem:[#allocation2 + $0x10f] sm:$0xff]
        %v1131 = vld [vmem:[#allocation2 + $0x127] sm:$0xff]
        %v1132 = vld [vmem:[#allocation2 + $0x12f] sm:$0xff]
        %v1133 = vld [vmem:[#allocation2 + $0x147] sm:$0xff]
        %v1134 = vld [vmem:[#allocation2 + $0x14f] sm:$0xff]
        %v1135 = vld [vmem:[#allocation2 + $0x167] sm:$0xff]
        %v1136 = vld [vmem:[#allocation2 + $0x16f] sm:$0xff]
        %v1137 = vld [vmem:[#allocation2 + $0x187] sm:$0xff]
        %v1138 = vld [vmem:[#allocation2 + $0x18f] sm:$0xff]
        %v1139 = vld [vmem:[#allocation2 + $0x1a7] sm:$0xff]
        %v1140 = vld [vmem:[#allocation2 + $0x1af] sm:$0xff]
        %v1141 = vld [vmem:[#allocation2 + $0x1c7] sm:$0xff]
        %v1142 = vld [vmem:[#allocation2 + $0x1cf] sm:$0xff]
        %v1143 = vld [vmem:[#allocation2 + $0x1e7] sm:$0xff]
        %v1144 = vld [vmem:[#allocation2 + $0x1ef] sm:$0xff]
        %v1145 = vld [vmem:[#allocation2 + $0x207] sm:$0xff]
        %v1146 = vld [vmem:[#allocation2 + $0x20f] sm:$0xff]
        %v1147 = vld [vmem:[#allocation2 + $0x227] sm:$0xff]
        %v1148 = vld [vmem:[#allocation2 + $0x22f] sm:$0xff]
        %v1149 = vld [vmem:[#allocation2 + $0x247] sm:$0xff]
        %v1150 = vld [vmem:[#allocation2 + $0x24f] sm:$0xff]
        %v1151 = vld [vmem:[#allocation2 + $0x267] sm:$0xff]
        %v1152 = vld [vmem:[#allocation2 + $0x26f] sm:$0xff]
        %1185 = vrot.lane.b32.xlu0 %v1115, 8
        %v1186 = vpop.permute.xlu0 %1185
        %1187 = vrot.lane.b32.xlu0 %v1116, 8
        %v1188 = vpop.permute.xlu0 %1187
        %1189 = vrot.lane.b32.xlu0 %v1117, 8
        %v1190 = vpop.permute.xlu0 %1189
        %1191 = vrot.lane.b32.xlu0 %v1118, 8
        %v1192 = vpop.permute.xlu0 %1191
        %1193 = vrot.lane.b32.xlu0 %v1119, 8
        %v1194 = vpop.permute.xlu0 %1193
        %1195 = vrot.lane.b32.xlu0 %v1120, 8
        %v1196 = vpop.permute.xlu0 %1195
        %1197 = vrot.lane.b32.xlu0 %v1121, 8
        %v1198 = vpop.permute.xlu0 %1197
        %1199 = vrot.lane.b32.xlu0 %v1122, 8
        %v1200 = vpop.permute.xlu0 %1199
        %1201 = vrot.lane.b32.xlu0 %v1123, 8
        %v1202 = vpop.permute.xlu0 %1201
        %1203 = vrot.lane.b32.xlu0 %v1124, 8
        %v1204 = vpop.permute.xlu0 %1203
        %1205 = vrot.lane.b32.xlu0 %v1125, 8
        %v1206 = vpop.permute.xlu0 %1205
        %1207 = vrot.lane.b32.xlu0 %v1126, 8
        %v1208 = vpop.permute.xlu0 %1207
        %1209 = vrot.lane.b32.xlu0 %v1127, 8
        %v1210 = vpop.permute.xlu0 %1209
        %1211 = vrot.lane.b32.xlu0 %v1128, 8
        %v1212 = vpop.permute.xlu0 %1211
        %1213 = vrot.lane.b32.xlu0 %v1129, 8
        %v1214 = vpop.permute.xlu0 %1213
        %1215 = vrot.lane.b32.xlu0 %v1130, 8
        %v1216 = vpop.permute.xlu0 %1215
        %1217 = vrot.lane.b32.xlu0 %v1131, 8
        %v1218 = vpop.permute.xlu0 %1217
        %1219 = vrot.lane.b32.xlu0 %v1132, 8
        %v1220 = vpop.permute.xlu0 %1219
        %1221 = vrot.lane.b32.xlu0 %v1133, 8
        %v1222 = vpop.permute.xlu0 %1221
        %1223 = vrot.lane.b32.xlu0 %v1134, 8
        %v1224 = vpop.permute.xlu0 %1223
        %1225 = vrot.lane.b32.xlu0 %v1135, 8
        %v1226 = vpop.permute.xlu0 %1225
        %1227 = vrot.lane.b32.xlu0 %v1136, 8
        %v1228 = vpop.permute.xlu0 %1227
        %1229 = vrot.lane.b32.xlu0 %v1137, 8
        %v1230 = vpop.permute.xlu0 %1229
        %1231 = vrot.lane.b32.xlu0 %v1138, 8
        %v1232 = vpop.permute.xlu0 %1231
        %1233 = vrot.lane.b32.xlu0 %v1139, 8
        %v1234 = vpop.permute.xlu0 %1233
        %1235 = vrot.lane.b32.xlu0 %v1140, 8
        %v1236 = vpop.permute.xlu0 %1235
        %1237 = vrot.lane.b32.xlu0 %v1141, 8
        %v1238 = vpop.permute.xlu0 %1237
        %1239 = vrot.lane.b32.xlu0 %v1142, 8
        %v1240 = vpop.permute.xlu0 %1239
        %1241 = vrot.lane.b32.xlu0 %v1143, 8
        %v1242 = vpop.permute.xlu0 %1241
        %1243 = vrot.lane.b32.xlu0 %v1144, 8
        %v1244 = vpop.permute.xlu0 %1243
        %1245 = vrot.lane.b32.xlu0 %v1145, 8
        %v1246 = vpop.permute.xlu0 %1245
        %1247 = vrot.lane.b32.xlu0 %v1146, 8
        %v1248 = vpop.permute.xlu0 %1247
        %1283 = vrot.lane.b32.xlu0 %v1117, 16
        %v1284 = vpop.permute.xlu0 %1283
        %1285 = vrot.lane.b32.xlu0 %v1118, 16
        %v1286 = vpop.permute.xlu0 %1285
        %1287 = vrot.lane.b32.xlu0 %v1119, 16
        %v1288 = vpop.permute.xlu0 %1287
        %1289 = vrot.lane.b32.xlu0 %v1120, 16
        %v1290 = vpop.permute.xlu0 %1289
        %1291 = vrot.lane.b32.xlu0 %v1121, 16
        %v1292 = vpop.permute.xlu0 %1291
        %1293 = vrot.lane.b32.xlu0 %v1122, 16
        %v1294 = vpop.permute.xlu0 %1293
        %1295 = vrot.lane.b32.xlu0 %v1123, 16
        %v1296 = vpop.permute.xlu0 %1295
        %1297 = vrot.lane.b32.xlu0 %v1124, 16
        %v1298 = vpop.permute.xlu0 %1297
        %1299 = vrot.lane.b32.xlu0 %v1125, 16
        %v1300 = vpop.permute.xlu0 %1299
        %1301 = vrot.lane.b32.xlu0 %v1126, 16
        %v1302 = vpop.permute.xlu0 %1301
        %1303 = vrot.lane.b32.xlu0 %v1127, 16
        %v1304 = vpop.permute.xlu0 %1303
        %1305 = vrot.lane.b32.xlu0 %v1128, 16
        %v1306 = vpop.permute.xlu0 %1305
        %1307 = vrot.lane.b32.xlu0 %v1129, 16
        %v1308 = vpop.permute.xlu0 %1307
        %1309 = vrot.lane.b32.xlu0 %v1130, 16
        %v1310 = vpop.permute.xlu0 %1309
        %1311 = vrot.lane.b32.xlu0 %v1131, 16
        %v1312 = vpop.permute.xlu0 %1311
        %1313 = vrot.lane.b32.xlu0 %v1132, 16
        %v1314 = vpop.permute.xlu0 %1313
        %1315 = vrot.lane.b32.xlu0 %v1133, 16
        %v1316 = vpop.permute.xlu0 %1315
        %1317 = vrot.lane.b32.xlu0 %v1134, 16
        %v1318 = vpop.permute.xlu0 %1317
        %1319 = vrot.lane.b32.xlu0 %v1135, 16
        %v1320 = vpop.permute.xlu0 %1319
        %1321 = vrot.lane.b32.xlu0 %v1136, 16
        %v1322 = vpop.permute.xlu0 %1321
        %1323 = vrot.lane.b32.xlu0 %v1137, 16
        %v1324 = vpop.permute.xlu0 %1323
        %1325 = vrot.lane.b32.xlu0 %v1138, 16
        %v1326 = vpop.permute.xlu0 %1325
        %1327 = vrot.lane.b32.xlu0 %v1139, 16
        %v1328 = vpop.permute.xlu0 %1327
        %1329 = vrot.lane.b32.xlu0 %v1140, 16
        %v1330 = vpop.permute.xlu0 %1329
        %1331 = vrot.lane.b32.xlu0 %v1141, 16
        %v1332 = vpop.permute.xlu0 %1331
        %1333 = vrot.lane.b32.xlu0 %v1142, 16
        %v1334 = vpop.permute.xlu0 %1333
        %1335 = vrot.lane.b32.xlu0 %v1143, 16
        %v1336 = vpop.permute.xlu0 %1335
        %1337 = vrot.lane.b32.xlu0 %v1144, 16
        %v1338 = vpop.permute.xlu0 %1337
        %1339 = vrot.lane.b32.xlu0 %v1145, 16
        %v1340 = vpop.permute.xlu0 %1339
        %1341 = vrot.lane.b32.xlu0 %v1146, 16
        %v1342 = vpop.permute.xlu0 %1341
        %1343 = vrot.lane.b32.xlu0 %v1147, 16
        %v1344 = vpop.permute.xlu0 %1343
        %1345 = vrot.lane.b32.xlu0 %v1148, 16
        %v1346 = vpop.permute.xlu0 %1345
        %1381 = vrot.lane.b32.xlu0 %v1119, 24
        %v1382 = vpop.permute.xlu0 %1381
        %1383 = vrot.lane.b32.xlu0 %v1120, 24
        %v1384 = vpop.permute.xlu0 %1383
        %1385 = vrot.lane.b32.xlu0 %v1121, 24
        %v1386 = vpop.permute.xlu0 %1385
        %1387 = vrot.lane.b32.xlu0 %v1122, 24
        %v1388 = vpop.permute.xlu0 %1387
        %1389 = vrot.lane.b32.xlu0 %v1123, 24
        %v1390 = vpop.permute.xlu0 %1389
        %1391 = vrot.lane.b32.xlu0 %v1124, 24
        %v1392 = vpop.permute.xlu0 %1391
        %1393 = vrot.lane.b32.xlu0 %v1125, 24
        %v1394 = vpop.permute.xlu0 %1393
        %1395 = vrot.lane.b32.xlu0 %v1126, 24
        %v1396 = vpop.permute.xlu0 %1395
        %1397 = vrot.lane.b32.xlu0 %v1127, 24
        %v1398 = vpop.permute.xlu0 %1397
        %1399 = vrot.lane.b32.xlu0 %v1128, 24
        %v1400 = vpop.permute.xlu0 %1399
        %1401 = vrot.lane.b32.xlu0 %v1129, 24
        %v1402 = vpop.permute.xlu0 %1401
        %1403 = vrot.lane.b32.xlu0 %v1130, 24
        %v1404 = vpop.permute.xlu0 %1403
        %1405 = vrot.lane.b32.xlu0 %v1131, 24
        %v1406 = vpop.permute.xlu0 %1405
        %1407 = vrot.lane.b32.xlu0 %v1132, 24
        %v1408 = vpop.permute.xlu0 %1407
        %1409 = vrot.lane.b32.xlu0 %v1133, 24
        %v1410 = vpop.permute.xlu0 %1409
        %1411 = vrot.lane.b32.xlu0 %v1134, 24
        %v1412 = vpop.permute.xlu0 %1411
        %1413 = vrot.lane.b32.xlu0 %v1135, 24
        %v1414 = vpop.permute.xlu0 %1413
        %1415 = vrot.lane.b32.xlu0 %v1136, 24
        %v1416 = vpop.permute.xlu0 %1415
        %1417 = vrot.lane.b32.xlu0 %v1137, 24
        %v1418 = vpop.permute.xlu0 %1417
        %1419 = vrot.lane.b32.xlu0 %v1138, 24
        %v1420 = vpop.permute.xlu0 %1419
        %1421 = vrot.lane.b32.xlu0 %v1139, 24
        %v1422 = vpop.permute.xlu0 %1421
        %1423 = vrot.lane.b32.xlu0 %v1140, 24
        %v1424 = vpop.permute.xlu0 %1423
        %1425 = vrot.lane.b32.xlu0 %v1141, 24
        %v1426 = vpop.permute.xlu0 %1425
        %1427 = vrot.lane.b32.xlu0 %v1142, 24
        %v1428 = vpop.permute.xlu0 %1427
        %1429 = vrot.lane.b32.xlu0 %v1143, 24
        %v1430 = vpop.permute.xlu0 %1429
        %1431 = vrot.lane.b32.xlu0 %v1144, 24
        %v1432 = vpop.permute.xlu0 %1431
        %1433 = vrot.lane.b32.xlu0 %v1145, 24
        %v1434 = vpop.permute.xlu0 %1433
        %1435 = vrot.lane.b32.xlu0 %v1146, 24
        %v1436 = vpop.permute.xlu0 %1435
        %1437 = vrot.lane.b32.xlu0 %v1147, 24
        %v1438 = vpop.permute.xlu0 %1437
        %1439 = vrot.lane.b32.xlu0 %v1148, 24
        %v1440 = vpop.permute.xlu0 %1439
        %1441 = vrot.lane.b32.xlu0 %v1149, 24
        %v1442 = vpop.permute.xlu0 %1441
        %1443 = vrot.lane.b32.xlu0 %v1150, 24
        %v1444 = vpop.permute.xlu0 %1443
        %1479 = vrot.lane.b32.xlu0 %v1121, 32
        %v1480 = vpop.permute.xlu0 %1479
        %1481 = vrot.lane.b32.xlu0 %v1122, 32
        %v1482 = vpop.permute.xlu0 %1481
        %1483 = vrot.lane.b32.xlu0 %v1123, 32
        %v1484 = vpop.permute.xlu0 %1483
        %1485 = vrot.lane.b32.xlu0 %v1124, 32
        %v1486 = vpop.permute.xlu0 %1485
        %1487 = vrot.lane.b32.xlu0 %v1125, 32
        %v1488 = vpop.permute.xlu0 %1487
        %1489 = vrot.lane.b32.xlu0 %v1126, 32
        %v1490 = vpop.permute.xlu0 %1489
        %1491 = vrot.lane.b32.xlu0 %v1127, 32
        %v1492 = vpop.permute.xlu0 %1491
        %1493 = vrot.lane.b32.xlu0 %v1128, 32
        %v1494 = vpop.permute.xlu0 %1493
        %1495 = vrot.lane.b32.xlu0 %v1129, 32
        %v1496 = vpop.permute.xlu0 %1495
        %1497 = vrot.lane.b32.xlu0 %v1130, 32
        %v1498 = vpop.permute.xlu0 %1497
        %1499 = vrot.lane.b32.xlu0 %v1131, 32
        %v1500 = vpop.permute.xlu0 %1499
        %1501 = vrot.lane.b32.xlu0 %v1132, 32
        %v1502 = vpop.permute.xlu0 %1501
        %1503 = vrot.lane.b32.xlu0 %v1133, 32
        %v1504 = vpop.permute.xlu0 %1503
        %1505 = vrot.lane.b32.xlu0 %v1134, 32
        %v1506 = vpop.permute.xlu0 %1505
        %1507 = vrot.lane.b32.xlu0 %v1135, 32
        %v1508 = vpop.permute.xlu0 %1507
        %1509 = vrot.lane.b32.xlu0 %v1136, 32
        %v1510 = vpop.permute.xlu0 %1509
        %1511 = vrot.lane.b32.xlu0 %v1137, 32
        %v1512 = vpop.permute.xlu0 %1511
        %1513 = vrot.lane.b32.xlu0 %v1138, 32
        %v1514 = vpop.permute.xlu0 %1513
        %1515 = vrot.lane.b32.xlu0 %v1139, 32
        %v1516 = vpop.permute.xlu0 %1515
        %1517 = vrot.lane.b32.xlu0 %v1140, 32
        %v1518 = vpop.permute.xlu0 %1517
        %1519 = vrot.lane.b32.xlu0 %v1141, 32
        %v1520 = vpop.permute.xlu0 %1519
        %1521 = vrot.lane.b32.xlu0 %v1142, 32
        %v1522 = vpop.permute.xlu0 %1521
        %1523 = vrot.lane.b32.xlu0 %v1143, 32
        %v1524 = vpop.permute.xlu0 %1523
        %1525 = vrot.lane.b32.xlu0 %v1144, 32
        %v1526 = vpop.permute.xlu0 %1525
        %1527 = vrot.lane.b32.xlu0 %v1145, 32
        %v1528 = vpop.permute.xlu0 %1527
        %1529 = vrot.lane.b32.xlu0 %v1146, 32
        %v1530 = vpop.permute.xlu0 %1529
        %1531 = vrot.lane.b32.xlu0 %v1147, 32
        %v1532 = vpop.permute.xlu0 %1531
        %1533 = vrot.lane.b32.xlu0 %v1148, 32
        %v1534 = vpop.permute.xlu0 %1533
        %1535 = vrot.lane.b32.xlu0 %v1149, 32
        %v1536 = vpop.permute.xlu0 %1535
        %1537 = vrot.lane.b32.xlu0 %v1150, 32
        %v1538 = vpop.permute.xlu0 %1537
        %1539 = vrot.lane.b32.xlu0 %v1151, 32
        %v1540 = vpop.permute.xlu0 %1539
        %1541 = vrot.lane.b32.xlu0 %v1152, 32
        %v1542 = vpop.permute.xlu0 %1541
        %v1575 = vsel %vm331, %v1113, %v1186
        %v1576 = vsel %vm331, %v1114, %v1188
        %v1577 = vsel %vm331, %v1115, %v1190
        %v1578 = vsel %vm331, %v1116, %v1192
        %v1579 = vsel %vm331, %v1117, %v1194
        %v1580 = vsel %vm331, %v1118, %v1196
        %v1581 = vsel %vm331, %v1119, %v1198
        %v1582 = vsel %vm331, %v1120, %v1200
        %v1583 = vsel %vm331, %v1121, %v1202
        %v1584 = vsel %vm331, %v1122, %v1204
        %v1585 = vsel %vm331, %v1123, %v1206
        %v1586 = vsel %vm331, %v1124, %v1208
        %v1587 = vsel %vm331, %v1125, %v1210
        %v1588 = vsel %vm331, %v1126, %v1212
        %v1589 = vsel %vm331, %v1127, %v1214
        %v1590 = vsel %vm331, %v1128, %v1216
        %v1591 = vsel %vm331, %v1129, %v1218
        %v1592 = vsel %vm331, %v1130, %v1220
        %v1593 = vsel %vm331, %v1131, %v1222
        %v1594 = vsel %vm331, %v1132, %v1224
        %v1595 = vsel %vm331, %v1133, %v1226
        %v1596 = vsel %vm331, %v1134, %v1228
        %v1597 = vsel %vm331, %v1135, %v1230
        %v1598 = vsel %vm331, %v1136, %v1232
        %v1599 = vsel %vm331, %v1137, %v1234
        %v1600 = vsel %vm331, %v1138, %v1236
        %v1601 = vsel %vm331, %v1139, %v1238
        %v1602 = vsel %vm331, %v1140, %v1240
        %v1603 = vsel %vm331, %v1141, %v1242
        %v1604 = vsel %vm331, %v1142, %v1244
        %v1605 = vsel %vm331, %v1143, %v1246
        %v1606 = vsel %vm331, %v1144, %v1248
        %v1607 = vsel %vm949, %v1575, %v1284
        %v1608 = vsel %vm949, %v1576, %v1286
        %v1609 = vsel %vm949, %v1577, %v1288
        %v1610 = vsel %vm949, %v1578, %v1290
        %v1611 = vsel %vm949, %v1579, %v1292
        %v1612 = vsel %vm949, %v1580, %v1294
        %v1613 = vsel %vm949, %v1581, %v1296
        %v1614 = vsel %vm949, %v1582, %v1298
        %v1615 = vsel %vm949, %v1583, %v1300
        %v1616 = vsel %vm949, %v1584, %v1302
        %v1617 = vsel %vm949, %v1585, %v1304
        %v1618 = vsel %vm949, %v1586, %v1306
        %v1619 = vsel %vm949, %v1587, %v1308
        %v1620 = vsel %vm949, %v1588, %v1310
        %v1621 = vsel %vm949, %v1589, %v1312
        %v1622 = vsel %vm949, %v1590, %v1314
        %v1623 = vsel %vm949, %v1591, %v1316
        %v1624 = vsel %vm949, %v1592, %v1318
        %v1625 = vsel %vm949, %v1593, %v1320
        %v1626 = vsel %vm949, %v1594, %v1322
        %v1627 = vsel %vm949, %v1595, %v1324
        %v1628 = vsel %vm949, %v1596, %v1326
        %v1629 = vsel %vm949, %v1597, %v1328
        %v1630 = vsel %vm949, %v1598, %v1330
        %v1631 = vsel %vm949, %v1599, %v1332
        %v1632 = vsel %vm949, %v1600, %v1334
        %v1633 = vsel %vm949, %v1601, %v1336
        %v1634 = vsel %vm949, %v1602, %v1338
        %v1635 = vsel %vm949, %v1603, %v1340
        %v1636 = vsel %vm949, %v1604, %v1342
        %v1637 = vsel %vm949, %v1605, %v1344
        %v1638 = vsel %vm949, %v1606, %v1346
        %v1639 = vsel %vm982, %v1607, %v1382
        %v1640 = vsel %vm982, %v1608, %v1384
        %v1641 = vsel %vm982, %v1609, %v1386
        %v1642 = vsel %vm982, %v1610, %v1388
        %v1643 = vsel %vm982, %v1611, %v1390
        %v1644 = vsel %vm982, %v1612, %v1392
        %v1645 = vsel %vm982, %v1613, %v1394
        %v1646 = vsel %vm982, %v1614, %v1396
        %v1647 = vsel %vm982, %v1615, %v1398
        %v1648 = vsel %vm982, %v1616, %v1400
        %v1649 = vsel %vm982, %v1617, %v1402
        %v1650 = vsel %vm982, %v1618, %v1404
        %v1651 = vsel %vm982, %v1619, %v1406
        %v1652 = vsel %vm982, %v1620, %v1408
        %v1653 = vsel %vm982, %v1621, %v1410
        %v1654 = vsel %vm982, %v1622, %v1412
        %v1655 = vsel %vm982, %v1623, %v1414
        %v1656 = vsel %vm982, %v1624, %v1416
        %v1657 = vsel %vm982, %v1625, %v1418
        %v1658 = vsel %vm982, %v1626, %v1420
        %v1659 = vsel %vm982, %v1627, %v1422
        %v1660 = vsel %vm982, %v1628, %v1424
        %v1661 = vsel %vm982, %v1629, %v1426
        %v1662 = vsel %vm982, %v1630, %v1428
        %v1663 = vsel %vm982, %v1631, %v1430
        %v1664 = vsel %vm982, %v1632, %v1432
        %v1665 = vsel %vm982, %v1633, %v1434
        %v1666 = vsel %vm982, %v1634, %v1436
        %v1667 = vsel %vm982, %v1635, %v1438
        %v1668 = vsel %vm982, %v1636, %v1440
        %v1669 = vsel %vm982, %v1637, %v1442
        %v1670 = vsel %vm982, %v1638, %v1444
        %v1671 = vsel %vm1015, %v1639, %v1480
        %v1672 = vsel %vm1015, %v1640, %v1482
        %v1673 = vsel %vm1015, %v1641, %v1484
        %v1674 = vsel %vm1015, %v1642, %v1486
        %v1675 = vsel %vm1015, %v1643, %v1488
        %v1676 = vsel %vm1015, %v1644, %v1490
        %v1677 = vsel %vm1015, %v1645, %v1492
        %v1678 = vsel %vm1015, %v1646, %v1494
        %v1679 = vsel %vm1015, %v1647, %v1496
        %v1680 = vsel %vm1015, %v1648, %v1498
        %v1681 = vsel %vm1015, %v1649, %v1500
        %v1682 = vsel %vm1015, %v1650, %v1502
        %v1683 = vsel %vm1015, %v1651, %v1504
        %v1684 = vsel %vm1015, %v1652, %v1506
        %v1685 = vsel %vm1015, %v1653, %v1508
        %v1686 = vsel %vm1015, %v1654, %v1510
        %v1687 = vsel %vm1015, %v1655, %v1512
        %v1688 = vsel %vm1015, %v1656, %v1514
        %v1689 = vsel %vm1015, %v1657, %v1516
        %v1690 = vsel %vm1015, %v1658, %v1518
        %v1691 = vsel %vm1015, %v1659, %v1520
        %v1692 = vsel %vm1015, %v1660, %v1522
        %v1693 = vsel %vm1015, %v1661, %v1524
        %v1694 = vsel %vm1015, %v1662, %v1526
        %v1695 = vsel %vm1015, %v1663, %v1528
        %v1696 = vsel %vm1015, %v1664, %v1530
        %v1697 = vsel %vm1015, %v1665, %v1532
        %v1698 = vsel %vm1015, %v1666, %v1534
        %v1699 = vsel %vm1015, %v1667, %v1536
        %v1700 = vsel %vm1015, %v1668, %v1538
        %v1701 = vsel %vm1015, %v1669, %v1540
        %v1702 = vsel %vm1015, %v1670, %v1542
        %v1703 = vsel %vm1048, %v1671, 0.0
        %v1704 = vsel %vm1048, %v1672, 0.0
        %v1705 = vsel %vm1048, %v1673, 0.0
        %v1706 = vsel %vm1048, %v1674, 0.0
        %v1707 = vsel %vm1048, %v1675, 0.0
        %v1708 = vsel %vm1048, %v1676, 0.0
        %v1709 = vsel %vm1048, %v1677, 0.0
        %v1710 = vsel %vm1048, %v1678, 0.0
        %v1711 = vsel %vm1048, %v1679, 0.0
        %v1712 = vsel %vm1048, %v1680, 0.0
        %v1713 = vsel %vm1048, %v1681, 0.0
        %v1714 = vsel %vm1048, %v1682, 0.0
        %v1715 = vsel %vm1048, %v1683, 0.0
        %v1716 = vsel %vm1048, %v1684, 0.0
        %v1717 = vsel %vm1048, %v1685, 0.0
        %v1718 = vsel %vm1048, %v1686, 0.0
        %v1719 = vsel %vm1048, %v1687, 0.0
        %v1720 = vsel %vm1048, %v1688, 0.0
        %v1721 = vsel %vm1048, %v1689, 0.0
        %v1722 = vsel %vm1048, %v1690, 0.0
        %v1723 = vsel %vm1048, %v1691, 0.0
        %v1724 = vsel %vm1048, %v1692, 0.0
        %v1725 = vsel %vm1048, %v1693, 0.0
        %v1726 = vsel %vm1048, %v1694, 0.0
        %v1727 = vsel %vm1048, %v1695, 0.0
        %v1728 = vsel %vm1048, %v1696, 0.0
        %v1729 = vsel %vm1048, %v1697, 0.0
        %v1730 = vsel %vm1048, %v1698, 0.0
        %v1731 = vsel %vm1048, %v1699, 0.0
        %v1732 = vsel %vm1048, %v1700, 0.0
        %v1733 = vsel %vm1048, %v1701, 0.0
        %v1734 = vsel %vm1048, %v1702, 0.0
        %1735 = vst [vmem:[#allocation4 + $0x8] sm:$0xff] %v1703
        %1736 = vst [vmem:[#allocation4 + $0x38] sm:$0xff] %v1704
        %1737 = vst [vmem:[#allocation4 + $0x68] sm:$0xff] %v1705
        %1738 = vst [vmem:[#allocation4 + $0x98] sm:$0xff] %v1706
        %1739 = vst [vmem:[#allocation4 + $0xc8] sm:$0xff] %v1707
        %1740 = vst [vmem:[#allocation4 + $0xf8] sm:$0xff] %v1708
        %1741 = vst [vmem:[#allocation4 + $0x128] sm:$0xff] %v1709
        %1742 = vst [vmem:[#allocation4 + $0x158] sm:$0xff] %v1710
        %1743 = vst [vmem:[#allocation4 + $0x188] sm:$0xff] %v1711
        %1744 = vst [vmem:[#allocation4 + $0x1b8] sm:$0xff] %v1712
        %1745 = vst [vmem:[#allocation4 + $0x1e8] sm:$0xff] %v1713
        %1746 = vst [vmem:[#allocation4 + $0x218] sm:$0xff] %v1714
        %1747 = vst [vmem:[#allocation4 + $0x248] sm:$0xff] %v1715
        %1748 = vst [vmem:[#allocation4 + $0x278] sm:$0xff] %v1716
        %1749 = vst [vmem:[#allocation4 + $0x2a8] sm:$0xff] %v1717
        %1750 = vst [vmem:[#allocation4 + $0x2d8] sm:$0xff] %v1718
        %1751 = vst [vmem:[#allocation4 + $0x308] sm:$0xff] %v1719
        %1752 = vst [vmem:[#allocation4 + $0x338] sm:$0xff] %v1720
        %1753 = vst [vmem:[#allocation4 + $0x368] sm:$0xff] %v1721
        %1754 = vst [vmem:[#allocation4 + $0x398] sm:$0xff] %v1722
        %1755 = vst [vmem:[#allocation4 + $0x3c8] sm:$0xff] %v1723
        %1756 = vst [vmem:[#allocation4 + $0x3f8] sm:$0xff] %v1724
        %1757 = vst [vmem:[#allocation4 + $0x428] sm:$0xff] %v1725
        %1758 = vst [vmem:[#allocation4 + $0x458] sm:$0xff] %v1726
        %1759 = vst [vmem:[#allocation4 + $0x488] sm:$0xff] %v1727
        %1760 = vst [vmem:[#allocation4 + $0x4b8] sm:$0xff] %v1728
        %1761 = vst [vmem:[#allocation4 + $0x4e8] sm:$0xff] %v1729
        %1762 = vst [vmem:[#allocation4 + $0x518] sm:$0xff] %v1730
        %1763 = vst [vmem:[#allocation4 + $0x548] sm:$0xff] %v1731
        %1764 = vst [vmem:[#allocation4 + $0x578] sm:$0xff] %v1732
        %1765 = vst [vmem:[#allocation4 + $0x5a8] sm:$0xff] %v1733
        %1766 = vst [vmem:[#allocation4 + $0x5d8] sm:$0xff] %v1734
        %v1767 = vld [vmem:[#allocation2 + $0x8] sm:$0xff]
        %v1768 = vld [vmem:[#allocation2 + $0x10] sm:$0xff]
        %v1769 = vld [vmem:[#allocation2 + $0x28] sm:$0xff]
        %v1770 = vld [vmem:[#allocation2 + $0x30] sm:$0xff]
        %v1771 = vld [vmem:[#allocation2 + $0x48] sm:$0xff]
        %v1772 = vld [vmem:[#allocation2 + $0x50] sm:$0xff]
        %v1773 = vld [vmem:[#allocation2 + $0x68] sm:$0xff]
        %v1774 = vld [vmem:[#allocation2 + $0x70] sm:$0xff]
        %v1775 = vld [vmem:[#allocation2 + $0x88] sm:$0xff]
        %v1776 = vld [vmem:[#allocation2 + $0x90] sm:$0xff]
        %v1777 = vld [vmem:[#allocation2 + $0xa8] sm:$0xff]
        %v1778 = vld [vmem:[#allocation2 + $0xb0] sm:$0xff]
        %v1779 = vld [vmem:[#allocation2 + $0xc8] sm:$0xff]
        %v1780 = vld [vmem:[#allocation2 + $0xd0] sm:$0xff]
        %v1781 = vld [vmem:[#allocation2 + $0xe8] sm:$0xff]
        %v1782 = vld [vmem:[#allocation2 + $0xf0] sm:$0xff]
        %v1783 = vld [vmem:[#allocation2 + $0x108] sm:$0xff]
        %v1784 = vld [vmem:[#allocation2 + $0x110] sm:$0xff]
        %v1785 = vld [vmem:[#allocation2 + $0x128] sm:$0xff]
        %v1786 = vld [vmem:[#allocation2 + $0x130] sm:$0xff]
        %v1787 = vld [vmem:[#allocation2 + $0x148] sm:$0xff]
        %v1788 = vld [vmem:[#allocation2 + $0x150] sm:$0xff]
        %v1789 = vld [vmem:[#allocation2 + $0x168] sm:$0xff]
        %v1790 = vld [vmem:[#allocation2 + $0x170] sm:$0xff]
        %v1791 = vld [vmem:[#allocation2 + $0x188] sm:$0xff]
        %v1792 = vld [vmem:[#allocation2 + $0x190] sm:$0xff]
        %v1793 = vld [vmem:[#allocation2 + $0x1a8] sm:$0xff]
        %v1794 = vld [vmem:[#allocation2 + $0x1b0] sm:$0xff]
        %v1795 = vld [vmem:[#allocation2 + $0x1c8] sm:$0xff]
        %v1796 = vld [vmem:[#allocation2 + $0x1d0] sm:$0xff]
        %v1797 = vld [vmem:[#allocation2 + $0x1e8] sm:$0xff]
        %v1798 = vld [vmem:[#allocation2 + $0x1f0] sm:$0xff]
        %v1799 = vld [vmem:[#allocation2 + $0x208] sm:$0xff]
        %v1800 = vld [vmem:[#allocation2 + $0x210] sm:$0xff]
        %v1801 = vld [vmem:[#allocation2 + $0x228] sm:$0xff]
        %v1802 = vld [vmem:[#allocation2 + $0x230] sm:$0xff]
        %v1803 = vld [vmem:[#allocation2 + $0x248] sm:$0xff]
        %v1804 = vld [vmem:[#allocation2 + $0x250] sm:$0xff]
        %v1805 = vld [vmem:[#allocation2 + $0x268] sm:$0xff]
        %v1806 = vld [vmem:[#allocation2 + $0x270] sm:$0xff]
        %1839 = vrot.lane.b32.xlu0 %v1769, 8
        %v1840 = vpop.permute.xlu0 %1839
        %1841 = vrot.lane.b32.xlu0 %v1770, 8
        %v1842 = vpop.permute.xlu0 %1841
        %1843 = vrot.lane.b32.xlu0 %v1771, 8
        %v1844 = vpop.permute.xlu0 %1843
        %1845 = vrot.lane.b32.xlu0 %v1772, 8
        %v1846 = vpop.permute.xlu0 %1845
        %1847 = vrot.lane.b32.xlu0 %v1773, 8
        %v1848 = vpop.permute.xlu0 %1847
        %1849 = vrot.lane.b32.xlu0 %v1774, 8
        %v1850 = vpop.permute.xlu0 %1849
        %1851 = vrot.lane.b32.xlu0 %v1775, 8
        %v1852 = vpop.permute.xlu0 %1851
        %1853 = vrot.lane.b32.xlu0 %v1776, 8
        %v1854 = vpop.permute.xlu0 %1853
        %1855 = vrot.lane.b32.xlu0 %v1777, 8
        %v1856 = vpop.permute.xlu0 %1855
        %1857 = vrot.lane.b32.xlu0 %v1778, 8
        %v1858 = vpop.permute.xlu0 %1857
        %1859 = vrot.lane.b32.xlu0 %v1779, 8
        %v1860 = vpop.permute.xlu0 %1859
        %1861 = vrot.lane.b32.xlu0 %v1780, 8
        %v1862 = vpop.permute.xlu0 %1861
        %1863 = vrot.lane.b32.xlu0 %v1781, 8
        %v1864 = vpop.permute.xlu0 %1863
        %1865 = vrot.lane.b32.xlu0 %v1782, 8
        %v1866 = vpop.permute.xlu0 %1865
        %1867 = vrot.lane.b32.xlu0 %v1783, 8
        %v1868 = vpop.permute.xlu0 %1867
        %1869 = vrot.lane.b32.xlu0 %v1784, 8
        %v1870 = vpop.permute.xlu0 %1869
        %1871 = vrot.lane.b32.xlu0 %v1785, 8
        %v1872 = vpop.permute.xlu0 %1871
        %1873 = vrot.lane.b32.xlu0 %v1786, 8
        %v1874 = vpop.permute.xlu0 %1873
        %1875 = vrot.lane.b32.xlu0 %v1787, 8
        %v1876 = vpop.permute.xlu0 %1875
        %1877 = vrot.lane.b32.xlu0 %v1788, 8
        %v1878 = vpop.permute.xlu0 %1877
        %1879 = vrot.lane.b32.xlu0 %v1789, 8
        %v1880 = vpop.permute.xlu0 %1879
        %1881 = vrot.lane.b32.xlu0 %v1790, 8
        %v1882 = vpop.permute.xlu0 %1881
        %1883 = vrot.lane.b32.xlu0 %v1791, 8
        %v1884 = vpop.permute.xlu0 %1883
        %1885 = vrot.lane.b32.xlu0 %v1792, 8
        %v1886 = vpop.permute.xlu0 %1885
        %1887 = vrot.lane.b32.xlu0 %v1793, 8
        %v1888 = vpop.permute.xlu0 %1887
        %1889 = vrot.lane.b32.xlu0 %v1794, 8
        %v1890 = vpop.permute.xlu0 %1889
        %1891 = vrot.lane.b32.xlu0 %v1795, 8
        %v1892 = vpop.permute.xlu0 %1891
        %1893 = vrot.lane.b32.xlu0 %v1796, 8
        %v1894 = vpop.permute.xlu0 %1893
        %1895 = vrot.lane.b32.xlu0 %v1797, 8
        %v1896 = vpop.permute.xlu0 %1895
        %1897 = vrot.lane.b32.xlu0 %v1798, 8
        %v1898 = vpop.permute.xlu0 %1897
        %1899 = vrot.lane.b32.xlu0 %v1799, 8
        %v1900 = vpop.permute.xlu0 %1899
        %1901 = vrot.lane.b32.xlu0 %v1800, 8
        %v1902 = vpop.permute.xlu0 %1901
        %1937 = vrot.lane.b32.xlu0 %v1771, 16
        %v1938 = vpop.permute.xlu0 %1937
        %1939 = vrot.lane.b32.xlu0 %v1772, 16
        %v1940 = vpop.permute.xlu0 %1939
        %1941 = vrot.lane.b32.xlu0 %v1773, 16
        %v1942 = vpop.permute.xlu0 %1941
        %1943 = vrot.lane.b32.xlu0 %v1774, 16
        %v1944 = vpop.permute.xlu0 %1943
        %1945 = vrot.lane.b32.xlu0 %v1775, 16
        %v1946 = vpop.permute.xlu0 %1945
        %1947 = vrot.lane.b32.xlu0 %v1776, 16
        %v1948 = vpop.permute.xlu0 %1947
        %1949 = vrot.lane.b32.xlu0 %v1777, 16
        %v1950 = vpop.permute.xlu0 %1949
        %1951 = vrot.lane.b32.xlu0 %v1778, 16
        %v1952 = vpop.permute.xlu0 %1951
        %1953 = vrot.lane.b32.xlu0 %v1779, 16
        %v1954 = vpop.permute.xlu0 %1953
        %1955 = vrot.lane.b32.xlu0 %v1780, 16
        %v1956 = vpop.permute.xlu0 %1955
        %1957 = vrot.lane.b32.xlu0 %v1781, 16
        %v1958 = vpop.permute.xlu0 %1957
        %1959 = vrot.lane.b32.xlu0 %v1782, 16
        %v1960 = vpop.permute.xlu0 %1959
        %1961 = vrot.lane.b32.xlu0 %v1783, 16
        %v1962 = vpop.permute.xlu0 %1961
        %1963 = vrot.lane.b32.xlu0 %v1784, 16
        %v1964 = vpop.permute.xlu0 %1963
        %1965 = vrot.lane.b32.xlu0 %v1785, 16
        %v1966 = vpop.permute.xlu0 %1965
        %1967 = vrot.lane.b32.xlu0 %v1786, 16
        %v1968 = vpop.permute.xlu0 %1967
        %1969 = vrot.lane.b32.xlu0 %v1787, 16
        %v1970 = vpop.permute.xlu0 %1969
        %1971 = vrot.lane.b32.xlu0 %v1788, 16
        %v1972 = vpop.permute.xlu0 %1971
        %1973 = vrot.lane.b32.xlu0 %v1789, 16
        %v1974 = vpop.permute.xlu0 %1973
        %1975 = vrot.lane.b32.xlu0 %v1790, 16
        %v1976 = vpop.permute.xlu0 %1975
        %1977 = vrot.lane.b32.xlu0 %v1791, 16
        %v1978 = vpop.permute.xlu0 %1977
        %1979 = vrot.lane.b32.xlu0 %v1792, 16
        %v1980 = vpop.permute.xlu0 %1979
        %1981 = vrot.lane.b32.xlu0 %v1793, 16
        %v1982 = vpop.permute.xlu0 %1981
        %1983 = vrot.lane.b32.xlu0 %v1794, 16
        %v1984 = vpop.permute.xlu0 %1983
        %1985 = vrot.lane.b32.xlu0 %v1795, 16
        %v1986 = vpop.permute.xlu0 %1985
        %1987 = vrot.lane.b32.xlu0 %v1796, 16
        %v1988 = vpop.permute.xlu0 %1987
        %1989 = vrot.lane.b32.xlu0 %v1797, 16
        %v1990 = vpop.permute.xlu0 %1989
        %1991 = vrot.lane.b32.xlu0 %v1798, 16
        %v1992 = vpop.permute.xlu0 %1991
        %1993 = vrot.lane.b32.xlu0 %v1799, 16
        %v1994 = vpop.permute.xlu0 %1993
        %1995 = vrot.lane.b32.xlu0 %v1800, 16
        %v1996 = vpop.permute.xlu0 %1995
        %1997 = vrot.lane.b32.xlu0 %v1801, 16
        %v1998 = vpop.permute.xlu0 %1997
        %1999 = vrot.lane.b32.xlu0 %v1802, 16
        %v2000 = vpop.permute.xlu0 %1999
        %2035 = vrot.lane.b32.xlu0 %v1773, 24
        %v2036 = vpop.permute.xlu0 %2035
        %2037 = vrot.lane.b32.xlu0 %v1774, 24
        %v2038 = vpop.permute.xlu0 %2037
        %2039 = vrot.lane.b32.xlu0 %v1775, 24
        %v2040 = vpop.permute.xlu0 %2039
        %2041 = vrot.lane.b32.xlu0 %v1776, 24
        %v2042 = vpop.permute.xlu0 %2041
        %2043 = vrot.lane.b32.xlu0 %v1777, 24
        %v2044 = vpop.permute.xlu0 %2043
        %2045 = vrot.lane.b32.xlu0 %v1778, 24
        %v2046 = vpop.permute.xlu0 %2045
        %2047 = vrot.lane.b32.xlu0 %v1779, 24
        %v2048 = vpop.permute.xlu0 %2047
        %2049 = vrot.lane.b32.xlu0 %v1780, 24
        %v2050 = vpop.permute.xlu0 %2049
        %2051 = vrot.lane.b32.xlu0 %v1781, 24
        %v2052 = vpop.permute.xlu0 %2051
        %2053 = vrot.lane.b32.xlu0 %v1782, 24
        %v2054 = vpop.permute.xlu0 %2053
        %2055 = vrot.lane.b32.xlu0 %v1783, 24
        %v2056 = vpop.permute.xlu0 %2055
        %2057 = vrot.lane.b32.xlu0 %v1784, 24
        %v2058 = vpop.permute.xlu0 %2057
        %2059 = vrot.lane.b32.xlu0 %v1785, 24
        %v2060 = vpop.permute.xlu0 %2059
        %2061 = vrot.lane.b32.xlu0 %v1786, 24
        %v2062 = vpop.permute.xlu0 %2061
        %2063 = vrot.lane.b32.xlu0 %v1787, 24
        %v2064 = vpop.permute.xlu0 %2063
        %2065 = vrot.lane.b32.xlu0 %v1788, 24
        %v2066 = vpop.permute.xlu0 %2065
        %2067 = vrot.lane.b32.xlu0 %v1789, 24
        %v2068 = vpop.permute.xlu0 %2067
        %2069 = vrot.lane.b32.xlu0 %v1790, 24
        %v2070 = vpop.permute.xlu0 %2069
        %2071 = vrot.lane.b32.xlu0 %v1791, 24
        %v2072 = vpop.permute.xlu0 %2071
        %2073 = vrot.lane.b32.xlu0 %v1792, 24
        %v2074 = vpop.permute.xlu0 %2073
        %2075 = vrot.lane.b32.xlu0 %v1793, 24
        %v2076 = vpop.permute.xlu0 %2075
        %2077 = vrot.lane.b32.xlu0 %v1794, 24
        %v2078 = vpop.permute.xlu0 %2077
        %2079 = vrot.lane.b32.xlu0 %v1795, 24
        %v2080 = vpop.permute.xlu0 %2079
        %2081 = vrot.lane.b32.xlu0 %v1796, 24
        %v2082 = vpop.permute.xlu0 %2081
        %2083 = vrot.lane.b32.xlu0 %v1797, 24
        %v2084 = vpop.permute.xlu0 %2083
        %2085 = vrot.lane.b32.xlu0 %v1798, 24
        %v2086 = vpop.permute.xlu0 %2085
        %2087 = vrot.lane.b32.xlu0 %v1799, 24
        %v2088 = vpop.permute.xlu0 %2087
        %2089 = vrot.lane.b32.xlu0 %v1800, 24
        %v2090 = vpop.permute.xlu0 %2089
        %2091 = vrot.lane.b32.xlu0 %v1801, 24
        %v2092 = vpop.permute.xlu0 %2091
        %2093 = vrot.lane.b32.xlu0 %v1802, 24
        %v2094 = vpop.permute.xlu0 %2093
        %2095 = vrot.lane.b32.xlu0 %v1803, 24
        %v2096 = vpop.permute.xlu0 %2095
        %2097 = vrot.lane.b32.xlu0 %v1804, 24
        %v2098 = vpop.permute.xlu0 %2097
        %2133 = vrot.lane.b32.xlu0 %v1775, 32
        %v2134 = vpop.permute.xlu0 %2133
        %2135 = vrot.lane.b32.xlu0 %v1776, 32
        %v2136 = vpop.permute.xlu0 %2135
        %2137 = vrot.lane.b32.xlu0 %v1777, 32
        %v2138 = vpop.permute.xlu0 %2137
        %2139 = vrot.lane.b32.xlu0 %v1778, 32
        %v2140 = vpop.permute.xlu0 %2139
        %2141 = vrot.lane.b32.xlu0 %v1779, 32
        %v2142 = vpop.permute.xlu0 %2141
        %2143 = vrot.lane.b32.xlu0 %v1780, 32
        %v2144 = vpop.permute.xlu0 %2143
        %2145 = vrot.lane.b32.xlu0 %v1781, 32
        %v2146 = vpop.permute.xlu0 %2145
        %2147 = vrot.lane.b32.xlu0 %v1782, 32
        %v2148 = vpop.permute.xlu0 %2147
        %2149 = vrot.lane.b32.xlu0 %v1783, 32
        %v2150 = vpop.permute.xlu0 %2149
        %2151 = vrot.lane.b32.xlu0 %v1784, 32
        %v2152 = vpop.permute.xlu0 %2151
        %2153 = vrot.lane.b32.xlu0 %v1785, 32
        %v2154 = vpop.permute.xlu0 %2153
        %2155 = vrot.lane.b32.xlu0 %v1786, 32
        %v2156 = vpop.permute.xlu0 %2155
        %2157 = vrot.lane.b32.xlu0 %v1787, 32
        %v2158 = vpop.permute.xlu0 %2157
        %2159 = vrot.lane.b32.xlu0 %v1788, 32
        %v2160 = vpop.permute.xlu0 %2159
        %2161 = vrot.lane.b32.xlu0 %v1789, 32
        %v2162 = vpop.permute.xlu0 %2161
        %2163 = vrot.lane.b32.xlu0 %v1790, 32
        %v2164 = vpop.permute.xlu0 %2163
        %2165 = vrot.lane.b32.xlu0 %v1791, 32
        %v2166 = vpop.permute.xlu0 %2165
        %2167 = vrot.lane.b32.xlu0 %v1792, 32
        %v2168 = vpop.permute.xlu0 %2167
        %2169 = vrot.lane.b32.xlu0 %v1793, 32
        %v2170 = vpop.permute.xlu0 %2169
        %2171 = vrot.lane.b32.xlu0 %v1794, 32
        %v2172 = vpop.permute.xlu0 %2171
        %2173 = vrot.lane.b32.xlu0 %v1795, 32
        %v2174 = vpop.permute.xlu0 %2173
        %2175 = vrot.lane.b32.xlu0 %v1796, 32
        %v2176 = vpop.permute.xlu0 %2175
        %2177 = vrot.lane.b32.xlu0 %v1797, 32
        %v2178 = vpop.permute.xlu0 %2177
        %2179 = vrot.lane.b32.xlu0 %v1798, 32
        %v2180 = vpop.permute.xlu0 %2179
        %2181 = vrot.lane.b32.xlu0 %v1799, 32
        %v2182 = vpop.permute.xlu0 %2181
        %2183 = vrot.lane.b32.xlu0 %v1800, 32
        %v2184 = vpop.permute.xlu0 %2183
        %2185 = vrot.lane.b32.xlu0 %v1801, 32
        %v2186 = vpop.permute.xlu0 %2185
        %2187 = vrot.lane.b32.xlu0 %v1802, 32
        %v2188 = vpop.permute.xlu0 %2187
        %2189 = vrot.lane.b32.xlu0 %v1803, 32
        %v2190 = vpop.permute.xlu0 %2189
        %2191 = vrot.lane.b32.xlu0 %v1804, 32
        %v2192 = vpop.permute.xlu0 %2191
        %2193 = vrot.lane.b32.xlu0 %v1805, 32
        %v2194 = vpop.permute.xlu0 %2193
        %2195 = vrot.lane.b32.xlu0 %v1806, 32
        %v2196 = vpop.permute.xlu0 %2195
        %v2229 = vsel %vm331, %v1767, %v1840
        %v2230 = vsel %vm331, %v1768, %v1842
        %v2231 = vsel %vm331, %v1769, %v1844
        %v2232 = vsel %vm331, %v1770, %v1846
        %v2233 = vsel %vm331, %v1771, %v1848
        %v2234 = vsel %vm331, %v1772, %v1850
        %v2235 = vsel %vm331, %v1773, %v1852
        %v2236 = vsel %vm331, %v1774, %v1854
        %v2237 = vsel %vm331, %v1775, %v1856
        %v2238 = vsel %vm331, %v1776, %v1858
        %v2239 = vsel %vm331, %v1777, %v1860
        %v2240 = vsel %vm331, %v1778, %v1862
        %v2241 = vsel %vm331, %v1779, %v1864
        %v2242 = vsel %vm331, %v1780, %v1866
        %v2243 = vsel %vm331, %v1781, %v1868
        %v2244 = vsel %vm331, %v1782, %v1870
        %v2245 = vsel %vm331, %v1783, %v1872
        %v2246 = vsel %vm331, %v1784, %v1874
        %v2247 = vsel %vm331, %v1785, %v1876
        %v2248 = vsel %vm331, %v1786, %v1878
        %v2249 = vsel %vm331, %v1787, %v1880
        %v2250 = vsel %vm331, %v1788, %v1882
        %v2251 = vsel %vm331, %v1789, %v1884
        %v2252 = vsel %vm331, %v1790, %v1886
        %v2253 = vsel %vm331, %v1791, %v1888
        %v2254 = vsel %vm331, %v1792, %v1890
        %v2255 = vsel %vm331, %v1793, %v1892
        %v2256 = vsel %vm331, %v1794, %v1894
        %v2257 = vsel %vm331, %v1795, %v1896
        %v2258 = vsel %vm331, %v1796, %v1898
        %v2259 = vsel %vm331, %v1797, %v1900
        %v2260 = vsel %vm331, %v1798, %v1902
        %v2261 = vsel %vm949, %v2229, %v1938
        %v2262 = vsel %vm949, %v2230, %v1940
        %v2263 = vsel %vm949, %v2231, %v1942
        %v2264 = vsel %vm949, %v2232, %v1944
        %v2265 = vsel %vm949, %v2233, %v1946
        %v2266 = vsel %vm949, %v2234, %v1948
        %v2267 = vsel %vm949, %v2235, %v1950
        %v2268 = vsel %vm949, %v2236, %v1952
        %v2269 = vsel %vm949, %v2237, %v1954
        %v2270 = vsel %vm949, %v2238, %v1956
        %v2271 = vsel %vm949, %v2239, %v1958
        %v2272 = vsel %vm949, %v2240, %v1960
        %v2273 = vsel %vm949, %v2241, %v1962
        %v2274 = vsel %vm949, %v2242, %v1964
        %v2275 = vsel %vm949, %v2243, %v1966
        %v2276 = vsel %vm949, %v2244, %v1968
        %v2277 = vsel %vm949, %v2245, %v1970
        %v2278 = vsel %vm949, %v2246, %v1972
        %v2279 = vsel %vm949, %v2247, %v1974
        %v2280 = vsel %vm949, %v2248, %v1976
        %v2281 = vsel %vm949, %v2249, %v1978
        %v2282 = vsel %vm949, %v2250, %v1980
        %v2283 = vsel %vm949, %v2251, %v1982
        %v2284 = vsel %vm949, %v2252, %v1984
        %v2285 = vsel %vm949, %v2253, %v1986
        %v2286 = vsel %vm949, %v2254, %v1988
        %v2287 = vsel %vm949, %v2255, %v1990
        %v2288 = vsel %vm949, %v2256, %v1992
        %v2289 = vsel %vm949, %v2257, %v1994
        %v2290 = vsel %vm949, %v2258, %v1996
        %v2291 = vsel %vm949, %v2259, %v1998
        %v2292 = vsel %vm949, %v2260, %v2000
        %v2293 = vsel %vm982, %v2261, %v2036
        %v2294 = vsel %vm982, %v2262, %v2038
        %v2295 = vsel %vm982, %v2263, %v2040
        %v2296 = vsel %vm982, %v2264, %v2042
        %v2297 = vsel %vm982, %v2265, %v2044
        %v2298 = vsel %vm982, %v2266, %v2046
        %v2299 = vsel %vm982, %v2267, %v2048
        %v2300 = vsel %vm982, %v2268, %v2050
        %v2301 = vsel %vm982, %v2269, %v2052
        %v2302 = vsel %vm982, %v2270, %v2054
        %v2303 = vsel %vm982, %v2271, %v2056
        %v2304 = vsel %vm982, %v2272, %v2058
        %v2305 = vsel %vm982, %v2273, %v2060
        %v2306 = vsel %vm982, %v2274, %v2062
        %v2307 = vsel %vm982, %v2275, %v2064
        %v2308 = vsel %vm982, %v2276, %v2066
        %v2309 = vsel %vm982, %v2277, %v2068
        %v2310 = vsel %vm982, %v2278, %v2070
        %v2311 = vsel %vm982, %v2279, %v2072
        %v2312 = vsel %vm982, %v2280, %v2074
        %v2313 = vsel %vm982, %v2281, %v2076
        %v2314 = vsel %vm982, %v2282, %v2078
        %v2315 = vsel %vm982, %v2283, %v2080
        %v2316 = vsel %vm982, %v2284, %v2082
        %v2317 = vsel %vm982, %v2285, %v2084
        %v2318 = vsel %vm982, %v2286, %v2086
        %v2319 = vsel %vm982, %v2287, %v2088
        %v2320 = vsel %vm982, %v2288, %v2090
        %v2321 = vsel %vm982, %v2289, %v2092
        %v2322 = vsel %vm982, %v2290, %v2094
        %v2323 = vsel %vm982, %v2291, %v2096
        %v2324 = vsel %vm982, %v2292, %v2098
        %v2325 = vsel %vm1015, %v2293, %v2134
        %v2326 = vsel %vm1015, %v2294, %v2136
        %v2327 = vsel %vm1015, %v2295, %v2138
        %v2328 = vsel %vm1015, %v2296, %v2140
        %v2329 = vsel %vm1015, %v2297, %v2142
        %v2330 = vsel %vm1015, %v2298, %v2144
        %v2331 = vsel %vm1015, %v2299, %v2146
        %v2332 = vsel %vm1015, %v2300, %v2148
        %v2333 = vsel %vm1015, %v2301, %v2150
        %v2334 = vsel %vm1015, %v2302, %v2152
        %v2335 = vsel %vm1015, %v2303, %v2154
        %v2336 = vsel %vm1015, %v2304, %v2156
        %v2337 = vsel %vm1015, %v2305, %v2158
        %v2338 = vsel %vm1015, %v2306, %v2160
        %v2339 = vsel %vm1015, %v2307, %v2162
        %v2340 = vsel %vm1015, %v2308, %v2164
        %v2341 = vsel %vm1015, %v2309, %v2166
        %v2342 = vsel %vm1015, %v2310, %v2168
        %v2343 = vsel %vm1015, %v2311, %v2170
        %v2344 = vsel %vm1015, %v2312, %v2172
        %v2345 = vsel %vm1015, %v2313, %v2174
        %v2346 = vsel %vm1015, %v2314, %v2176
        %v2347 = vsel %vm1015, %v2315, %v2178
        %v2348 = vsel %vm1015, %v2316, %v2180
        %v2349 = vsel %vm1015, %v2317, %v2182
        %v2350 = vsel %vm1015, %v2318, %v2184
        %v2351 = vsel %vm1015, %v2319, %v2186
        %v2352 = vsel %vm1015, %v2320, %v2188
        %v2353 = vsel %vm1015, %v2321, %v2190
        %v2354 = vsel %vm1015, %v2322, %v2192
        %v2355 = vsel %vm1015, %v2323, %v2194
        %v2356 = vsel %vm1015, %v2324, %v2196
        %v2357 = vsel %vm1048, %v2325, 0.0
        %v2358 = vsel %vm1048, %v2326, 0.0
        %v2359 = vsel %vm1048, %v2327, 0.0
        %v2360 = vsel %vm1048, %v2328, 0.0
        %v2361 = vsel %vm1048, %v2329, 0.0
        %v2362 = vsel %vm1048, %v2330, 0.0
        %v2363 = vsel %vm1048, %v2331, 0.0
        %v2364 = vsel %vm1048, %v2332, 0.0
        %v2365 = vsel %vm1048, %v2333, 0.0
        %v2366 = vsel %vm1048, %v2334, 0.0
        %v2367 = vsel %vm1048, %v2335, 0.0
        %v2368 = vsel %vm1048, %v2336, 0.0
        %v2369 = vsel %vm1048, %v2337, 0.0
        %v2370 = vsel %vm1048, %v2338, 0.0
        %v2371 = vsel %vm1048, %v2339, 0.0
        %v2372 = vsel %vm1048, %v2340, 0.0
        %v2373 = vsel %vm1048, %v2341, 0.0
        %v2374 = vsel %vm1048, %v2342, 0.0
        %v2375 = vsel %vm1048, %v2343, 0.0
        %v2376 = vsel %vm1048, %v2344, 0.0
        %v2377 = vsel %vm1048, %v2345, 0.0
        %v2378 = vsel %vm1048, %v2346, 0.0
        %v2379 = vsel %vm1048, %v2347, 0.0
        %v2380 = vsel %vm1048, %v2348, 0.0
        %v2381 = vsel %vm1048, %v2349, 0.0
        %v2382 = vsel %vm1048, %v2350, 0.0
        %v2383 = vsel %vm1048, %v2351, 0.0
        %v2384 = vsel %vm1048, %v2352, 0.0
        %v2385 = vsel %vm1048, %v2353, 0.0
        %v2386 = vsel %vm1048, %v2354, 0.0
        %v2387 = vsel %vm1048, %v2355, 0.0
        %v2388 = vsel %vm1048, %v2356, 0.0
        %2389 = vst [vmem:[#allocation4 + $0x10] sm:$0xff] %v2357
        %2390 = vst [vmem:[#allocation4 + $0x40] sm:$0xff] %v2358
        %2391 = vst [vmem:[#allocation4 + $0x70] sm:$0xff] %v2359
        %2392 = vst [vmem:[#allocation4 + $0xa0] sm:$0xff] %v2360
        %2393 = vst [vmem:[#allocation4 + $0xd0] sm:$0xff] %v2361
        %2394 = vst [vmem:[#allocation4 + $0x100] sm:$0xff] %v2362
        %2395 = vst [vmem:[#allocation4 + $0x130] sm:$0xff] %v2363
        %2396 = vst [vmem:[#allocation4 + $0x160] sm:$0xff] %v2364
        %2397 = vst [vmem:[#allocation4 + $0x190] sm:$0xff] %v2365
        %2398 = vst [vmem:[#allocation4 + $0x1c0] sm:$0xff] %v2366
        %2399 = vst [vmem:[#allocation4 + $0x1f0] sm:$0xff] %v2367
        %2400 = vst [vmem:[#allocation4 + $0x220] sm:$0xff] %v2368
        %2401 = vst [vmem:[#allocation4 + $0x250] sm:$0xff] %v2369
        %2402 = vst [vmem:[#allocation4 + $0x280] sm:$0xff] %v2370
        %2403 = vst [vmem:[#allocation4 + $0x2b0] sm:$0xff] %v2371
        %2404 = vst [vmem:[#allocation4 + $0x2e0] sm:$0xff] %v2372
        %2405 = vst [vmem:[#allocation4 + $0x310] sm:$0xff] %v2373
        %2406 = vst [vmem:[#allocation4 + $0x340] sm:$0xff] %v2374
        %2407 = vst [vmem:[#allocation4 + $0x370] sm:$0xff] %v2375
        %2408 = vst [vmem:[#allocation4 + $0x3a0] sm:$0xff] %v2376
        %2409 = vst [vmem:[#allocation4 + $0x3d0] sm:$0xff] %v2377
        %2410 = vst [vmem:[#allocation4 + $0x400] sm:$0xff] %v2378
        %2411 = vst [vmem:[#allocation4 + $0x430] sm:$0xff] %v2379
        %2412 = vst [vmem:[#allocation4 + $0x460] sm:$0xff] %v2380
        %2413 = vst [vmem:[#allocation4 + $0x490] sm:$0xff] %v2381
        %2414 = vst [vmem:[#allocation4 + $0x4c0] sm:$0xff] %v2382
        %2415 = vst [vmem:[#allocation4 + $0x4f0] sm:$0xff] %v2383
        %2416 = vst [vmem:[#allocation4 + $0x520] sm:$0xff] %v2384
        %2417 = vst [vmem:[#allocation4 + $0x550] sm:$0xff] %v2385
        %2418 = vst [vmem:[#allocation4 + $0x580] sm:$0xff] %v2386
        %2419 = vst [vmem:[#allocation4 + $0x5b0] sm:$0xff] %v2387
        %2420 = vst [vmem:[#allocation4 + $0x5e0] sm:$0xff] %v2388
        %v2421 = vld [vmem:[#allocation2 + $0x9] sm:$0xff]
        %v2422 = vld [vmem:[#allocation2 + $0x11] sm:$0xff]
        %v2423 = vld [vmem:[#allocation2 + $0x29] sm:$0xff]
        %v2424 = vld [vmem:[#allocation2 + $0x31] sm:$0xff]
        %v2425 = vld [vmem:[#allocation2 + $0x49] sm:$0xff]
        %v2426 = vld [vmem:[#allocation2 + $0x51] sm:$0xff]
        %v2427 = vld [vmem:[#allocation2 + $0x69] sm:$0xff]
        %v2428 = vld [vmem:[#allocation2 + $0x71] sm:$0xff]
        %v2429 = vld [vmem:[#allocation2 + $0x89] sm:$0xff]
        %v2430 = vld [vmem:[#allocation2 + $0x91] sm:$0xff]
        %v2431 = vld [vmem:[#allocation2 + $0xa9] sm:$0xff]
        %v2432 = vld [vmem:[#allocation2 + $0xb1] sm:$0xff]
        %v2433 = vld [vmem:[#allocation2 + $0xc9] sm:$0xff]
        %v2434 = vld [vmem:[#allocation2 + $0xd1] sm:$0xff]
        %v2435 = vld [vmem:[#allocation2 + $0xe9] sm:$0xff]
        %v2436 = vld [vmem:[#allocation2 + $0xf1] sm:$0xff]
        %v2437 = vld [vmem:[#allocation2 + $0x109] sm:$0xff]
        %v2438 = vld [vmem:[#allocation2 + $0x111] sm:$0xff]
        %v2439 = vld [vmem:[#allocation2 + $0x129] sm:$0xff]
        %v2440 = vld [vmem:[#allocation2 + $0x131] sm:$0xff]
        %v2441 = vld [vmem:[#allocation2 + $0x149] sm:$0xff]
        %v2442 = vld [vmem:[#allocation2 + $0x151] sm:$0xff]
        %v2443 = vld [vmem:[#allocation2 + $0x169] sm:$0xff]
        %v2444 = vld [vmem:[#allocation2 + $0x171] sm:$0xff]
        %v2445 = vld [vmem:[#allocation2 + $0x189] sm:$0xff]
        %v2446 = vld [vmem:[#allocation2 + $0x191] sm:$0xff]
        %v2447 = vld [vmem:[#allocation2 + $0x1a9] sm:$0xff]
        %v2448 = vld [vmem:[#allocation2 + $0x1b1] sm:$0xff]
        %v2449 = vld [vmem:[#allocation2 + $0x1c9] sm:$0xff]
        %v2450 = vld [vmem:[#allocation2 + $0x1d1] sm:$0xff]
        %v2451 = vld [vmem:[#allocation2 + $0x1e9] sm:$0xff]
        %v2452 = vld [vmem:[#allocation2 + $0x1f1] sm:$0xff]
        %v2453 = vld [vmem:[#allocation2 + $0x209] sm:$0xff]
        %v2454 = vld [vmem:[#allocation2 + $0x211] sm:$0xff]
        %v2455 = vld [vmem:[#allocation2 + $0x229] sm:$0xff]
        %v2456 = vld [vmem:[#allocation2 + $0x231] sm:$0xff]
        %v2457 = vld [vmem:[#allocation2 + $0x249] sm:$0xff]
        %v2458 = vld [vmem:[#allocation2 + $0x251] sm:$0xff]
        %v2459 = vld [vmem:[#allocation2 + $0x269] sm:$0xff]
        %v2460 = vld [vmem:[#allocation2 + $0x271] sm:$0xff]
        %2493 = vrot.lane.b32.xlu0 %v2423, 8
        %v2494 = vpop.permute.xlu0 %2493
        %2495 = vrot.lane.b32.xlu0 %v2424, 8
        %v2496 = vpop.permute.xlu0 %2495
        %2497 = vrot.lane.b32.xlu0 %v2425, 8
        %v2498 = vpop.permute.xlu0 %2497
        %2499 = vrot.lane.b32.xlu0 %v2426, 8
        %v2500 = vpop.permute.xlu0 %2499
        %2501 = vrot.lane.b32.xlu0 %v2427, 8
        %v2502 = vpop.permute.xlu0 %2501
        %2503 = vrot.lane.b32.xlu0 %v2428, 8
        %v2504 = vpop.permute.xlu0 %2503
        %2505 = vrot.lane.b32.xlu0 %v2429, 8
        %v2506 = vpop.permute.xlu0 %2505
        %2507 = vrot.lane.b32.xlu0 %v2430, 8
        %v2508 = vpop.permute.xlu0 %2507
        %2509 = vrot.lane.b32.xlu0 %v2431, 8
        %v2510 = vpop.permute.xlu0 %2509
        %2511 = vrot.lane.b32.xlu0 %v2432, 8
        %v2512 = vpop.permute.xlu0 %2511
        %2513 = vrot.lane.b32.xlu0 %v2433, 8
        %v2514 = vpop.permute.xlu0 %2513
        %2515 = vrot.lane.b32.xlu0 %v2434, 8
        %v2516 = vpop.permute.xlu0 %2515
        %2517 = vrot.lane.b32.xlu0 %v2435, 8
        %v2518 = vpop.permute.xlu0 %2517
        %2519 = vrot.lane.b32.xlu0 %v2436, 8
        %v2520 = vpop.permute.xlu0 %2519
        %2521 = vrot.lane.b32.xlu0 %v2437, 8
        %v2522 = vpop.permute.xlu0 %2521
        %2523 = vrot.lane.b32.xlu0 %v2438, 8
        %v2524 = vpop.permute.xlu0 %2523
        %2525 = vrot.lane.b32.xlu0 %v2439, 8
        %v2526 = vpop.permute.xlu0 %2525
        %2527 = vrot.lane.b32.xlu0 %v2440, 8
        %v2528 = vpop.permute.xlu0 %2527
        %2529 = vrot.lane.b32.xlu0 %v2441, 8
        %v2530 = vpop.permute.xlu0 %2529
        %2531 = vrot.lane.b32.xlu0 %v2442, 8
        %v2532 = vpop.permute.xlu0 %2531
        %2533 = vrot.lane.b32.xlu0 %v2443, 8
        %v2534 = vpop.permute.xlu0 %2533
        %2535 = vrot.lane.b32.xlu0 %v2444, 8
        %v2536 = vpop.permute.xlu0 %2535
        %2537 = vrot.lane.b32.xlu0 %v2445, 8
        %v2538 = vpop.permute.xlu0 %2537
        %2539 = vrot.lane.b32.xlu0 %v2446, 8
        %v2540 = vpop.permute.xlu0 %2539
        %2541 = vrot.lane.b32.xlu0 %v2447, 8
        %v2542 = vpop.permute.xlu0 %2541
        %2543 = vrot.lane.b32.xlu0 %v2448, 8
        %v2544 = vpop.permute.xlu0 %2543
        %2545 = vrot.lane.b32.xlu0 %v2449, 8
        %v2546 = vpop.permute.xlu0 %2545
        %2547 = vrot.lane.b32.xlu0 %v2450, 8
        %v2548 = vpop.permute.xlu0 %2547
        %2549 = vrot.lane.b32.xlu0 %v2451, 8
        %v2550 = vpop.permute.xlu0 %2549
        %2551 = vrot.lane.b32.xlu0 %v2452, 8
        %v2552 = vpop.permute.xlu0 %2551
        %2553 = vrot.lane.b32.xlu0 %v2453, 8
        %v2554 = vpop.permute.xlu0 %2553
        %2555 = vrot.lane.b32.xlu0 %v2454, 8
        %v2556 = vpop.permute.xlu0 %2555
        %2591 = vrot.lane.b32.xlu0 %v2425, 16
        %v2592 = vpop.permute.xlu0 %2591
        %2593 = vrot.lane.b32.xlu0 %v2426, 16
        %v2594 = vpop.permute.xlu0 %2593
        %2595 = vrot.lane.b32.xlu0 %v2427, 16
        %v2596 = vpop.permute.xlu0 %2595
        %2597 = vrot.lane.b32.xlu0 %v2428, 16
        %v2598 = vpop.permute.xlu0 %2597
        %2599 = vrot.lane.b32.xlu0 %v2429, 16
        %v2600 = vpop.permute.xlu0 %2599
        %2601 = vrot.lane.b32.xlu0 %v2430, 16
        %v2602 = vpop.permute.xlu0 %2601
        %2603 = vrot.lane.b32.xlu0 %v2431, 16
        %v2604 = vpop.permute.xlu0 %2603
        %2605 = vrot.lane.b32.xlu0 %v2432, 16
        %v2606 = vpop.permute.xlu0 %2605
        %2607 = vrot.lane.b32.xlu0 %v2433, 16
        %v2608 = vpop.permute.xlu0 %2607
        %2609 = vrot.lane.b32.xlu0 %v2434, 16
        %v2610 = vpop.permute.xlu0 %2609
        %2611 = vrot.lane.b32.xlu0 %v2435, 16
        %v2612 = vpop.permute.xlu0 %2611
        %2613 = vrot.lane.b32.xlu0 %v2436, 16
        %v2614 = vpop.permute.xlu0 %2613
        %2615 = vrot.lane.b32.xlu0 %v2437, 16
        %v2616 = vpop.permute.xlu0 %2615
        %2617 = vrot.lane.b32.xlu0 %v2438, 16
        %v2618 = vpop.permute.xlu0 %2617
        %2619 = vrot.lane.b32.xlu0 %v2439, 16
        %v2620 = vpop.permute.xlu0 %2619
        %2621 = vrot.lane.b32.xlu0 %v2440, 16
        %v2622 = vpop.permute.xlu0 %2621
        %2623 = vrot.lane.b32.xlu0 %v2441, 16
        %v2624 = vpop.permute.xlu0 %2623
        %2625 = vrot.lane.b32.xlu0 %v2442, 16
        %v2626 = vpop.permute.xlu0 %2625
        %2627 = vrot.lane.b32.xlu0 %v2443, 16
        %v2628 = vpop.permute.xlu0 %2627
        %2629 = vrot.lane.b32.xlu0 %v2444, 16
        %v2630 = vpop.permute.xlu0 %2629
        %2631 = vrot.lane.b32.xlu0 %v2445, 16
        %v2632 = vpop.permute.xlu0 %2631
        %2633 = vrot.lane.b32.xlu0 %v2446, 16
        %v2634 = vpop.permute.xlu0 %2633
        %2635 = vrot.lane.b32.xlu0 %v2447, 16
        %v2636 = vpop.permute.xlu0 %2635
        %2637 = vrot.lane.b32.xlu0 %v2448, 16
        %v2638 = vpop.permute.xlu0 %2637
        %2639 = vrot.lane.b32.xlu0 %v2449, 16
        %v2640 = vpop.permute.xlu0 %2639
        %2641 = vrot.lane.b32.xlu0 %v2450, 16
        %v2642 = vpop.permute.xlu0 %2641
        %2643 = vrot.lane.b32.xlu0 %v2451, 16
        %v2644 = vpop.permute.xlu0 %2643
        %2645 = vrot.lane.b32.xlu0 %v2452, 16
        %v2646 = vpop.permute.xlu0 %2645
        %2647 = vrot.lane.b32.xlu0 %v2453, 16
        %v2648 = vpop.permute.xlu0 %2647
        %2649 = vrot.lane.b32.xlu0 %v2454, 16
        %v2650 = vpop.permute.xlu0 %2649
        %2651 = vrot.lane.b32.xlu0 %v2455, 16
        %v2652 = vpop.permute.xlu0 %2651
        %2653 = vrot.lane.b32.xlu0 %v2456, 16
        %v2654 = vpop.permute.xlu0 %2653
        %2689 = vrot.lane.b32.xlu0 %v2427, 24
        %v2690 = vpop.permute.xlu0 %2689
        %2691 = vrot.lane.b32.xlu0 %v2428, 24
        %v2692 = vpop.permute.xlu0 %2691
        %2693 = vrot.lane.b32.xlu0 %v2429, 24
        %v2694 = vpop.permute.xlu0 %2693
        %2695 = vrot.lane.b32.xlu0 %v2430, 24
        %v2696 = vpop.permute.xlu0 %2695
        %2697 = vrot.lane.b32.xlu0 %v2431, 24
        %v2698 = vpop.permute.xlu0 %2697
        %2699 = vrot.lane.b32.xlu0 %v2432, 24
        %v2700 = vpop.permute.xlu0 %2699
        %2701 = vrot.lane.b32.xlu0 %v2433, 24
        %v2702 = vpop.permute.xlu0 %2701
        %2703 = vrot.lane.b32.xlu0 %v2434, 24
        %v2704 = vpop.permute.xlu0 %2703
        %2705 = vrot.lane.b32.xlu0 %v2435, 24
        %v2706 = vpop.permute.xlu0 %2705
        %2707 = vrot.lane.b32.xlu0 %v2436, 24
        %v2708 = vpop.permute.xlu0 %2707
        %2709 = vrot.lane.b32.xlu0 %v2437, 24
        %v2710 = vpop.permute.xlu0 %2709
        %2711 = vrot.lane.b32.xlu0 %v2438, 24
        %v2712 = vpop.permute.xlu0 %2711
        %2713 = vrot.lane.b32.xlu0 %v2439, 24
        %v2714 = vpop.permute.xlu0 %2713
        %2715 = vrot.lane.b32.xlu0 %v2440, 24
        %v2716 = vpop.permute.xlu0 %2715
        %2717 = vrot.lane.b32.xlu0 %v2441, 24
        %v2718 = vpop.permute.xlu0 %2717
        %2719 = vrot.lane.b32.xlu0 %v2442, 24
        %v2720 = vpop.permute.xlu0 %2719
        %2721 = vrot.lane.b32.xlu0 %v2443, 24
        %v2722 = vpop.permute.xlu0 %2721
        %2723 = vrot.lane.b32.xlu0 %v2444, 24
        %v2724 = vpop.permute.xlu0 %2723
        %2725 = vrot.lane.b32.xlu0 %v2445, 24
        %v2726 = vpop.permute.xlu0 %2725
        %2727 = vrot.lane.b32.xlu0 %v2446, 24
        %v2728 = vpop.permute.xlu0 %2727
        %2729 = vrot.lane.b32.xlu0 %v2447, 24
        %v2730 = vpop.permute.xlu0 %2729
        %2731 = vrot.lane.b32.xlu0 %v2448, 24
        %v2732 = vpop.permute.xlu0 %2731
        %2733 = vrot.lane.b32.xlu0 %v2449, 24
        %v2734 = vpop.permute.xlu0 %2733
        %2735 = vrot.lane.b32.xlu0 %v2450, 24
        %v2736 = vpop.permute.xlu0 %2735
        %2737 = vrot.lane.b32.xlu0 %v2451, 24
        %v2738 = vpop.permute.xlu0 %2737
        %2739 = vrot.lane.b32.xlu0 %v2452, 24
        %v2740 = vpop.permute.xlu0 %2739
        %2741 = vrot.lane.b32.xlu0 %v2453, 24
        %v2742 = vpop.permute.xlu0 %2741
        %2743 = vrot.lane.b32.xlu0 %v2454, 24
        %v2744 = vpop.permute.xlu0 %2743
        %2745 = vrot.lane.b32.xlu0 %v2455, 24
        %v2746 = vpop.permute.xlu0 %2745
        %2747 = vrot.lane.b32.xlu0 %v2456, 24
        %v2748 = vpop.permute.xlu0 %2747
        %2749 = vrot.lane.b32.xlu0 %v2457, 24
        %v2750 = vpop.permute.xlu0 %2749
        %2751 = vrot.lane.b32.xlu0 %v2458, 24
        %v2752 = vpop.permute.xlu0 %2751
        %2787 = vrot.lane.b32.xlu0 %v2429, 32
        %v2788 = vpop.permute.xlu0 %2787
        %2789 = vrot.lane.b32.xlu0 %v2430, 32
        %v2790 = vpop.permute.xlu0 %2789
        %2791 = vrot.lane.b32.xlu0 %v2431, 32
        %v2792 = vpop.permute.xlu0 %2791
        %2793 = vrot.lane.b32.xlu0 %v2432, 32
        %v2794 = vpop.permute.xlu0 %2793
        %2795 = vrot.lane.b32.xlu0 %v2433, 32
        %v2796 = vpop.permute.xlu0 %2795
        %2797 = vrot.lane.b32.xlu0 %v2434, 32
        %v2798 = vpop.permute.xlu0 %2797
        %2799 = vrot.lane.b32.xlu0 %v2435, 32
        %v2800 = vpop.permute.xlu0 %2799
        %2801 = vrot.lane.b32.xlu0 %v2436, 32
        %v2802 = vpop.permute.xlu0 %2801
        %2803 = vrot.lane.b32.xlu0 %v2437, 32
        %v2804 = vpop.permute.xlu0 %2803
        %2805 = vrot.lane.b32.xlu0 %v2438, 32
        %v2806 = vpop.permute.xlu0 %2805
        %2807 = vrot.lane.b32.xlu0 %v2439, 32
        %v2808 = vpop.permute.xlu0 %2807
        %2809 = vrot.lane.b32.xlu0 %v2440, 32
        %v2810 = vpop.permute.xlu0 %2809
        %2811 = vrot.lane.b32.xlu0 %v2441, 32
        %v2812 = vpop.permute.xlu0 %2811
        %2813 = vrot.lane.b32.xlu0 %v2442, 32
        %v2814 = vpop.permute.xlu0 %2813
        %2815 = vrot.lane.b32.xlu0 %v2443, 32
        %v2816 = vpop.permute.xlu0 %2815
        %2817 = vrot.lane.b32.xlu0 %v2444, 32
        %v2818 = vpop.permute.xlu0 %2817
        %2819 = vrot.lane.b32.xlu0 %v2445, 32
        %v2820 = vpop.permute.xlu0 %2819
        %2821 = vrot.lane.b32.xlu0 %v2446, 32
        %v2822 = vpop.permute.xlu0 %2821
        %2823 = vrot.lane.b32.xlu0 %v2447, 32
        %v2824 = vpop.permute.xlu0 %2823
        %2825 = vrot.lane.b32.xlu0 %v2448, 32
        %v2826 = vpop.permute.xlu0 %2825
        %2827 = vrot.lane.b32.xlu0 %v2449, 32
        %v2828 = vpop.permute.xlu0 %2827
        %2829 = vrot.lane.b32.xlu0 %v2450, 32
        %v2830 = vpop.permute.xlu0 %2829
        %2831 = vrot.lane.b32.xlu0 %v2451, 32
        %v2832 = vpop.permute.xlu0 %2831
        %2833 = vrot.lane.b32.xlu0 %v2452, 32
        %v2834 = vpop.permute.xlu0 %2833
        %2835 = vrot.lane.b32.xlu0 %v2453, 32
        %v2836 = vpop.permute.xlu0 %2835
        %2837 = vrot.lane.b32.xlu0 %v2454, 32
        %v2838 = vpop.permute.xlu0 %2837
        %2839 = vrot.lane.b32.xlu0 %v2455, 32
        %v2840 = vpop.permute.xlu0 %2839
        %2841 = vrot.lane.b32.xlu0 %v2456, 32
        %v2842 = vpop.permute.xlu0 %2841
        %2843 = vrot.lane.b32.xlu0 %v2457, 32
        %v2844 = vpop.permute.xlu0 %2843
        %2845 = vrot.lane.b32.xlu0 %v2458, 32
        %v2846 = vpop.permute.xlu0 %2845
        %2847 = vrot.lane.b32.xlu0 %v2459, 32
        %v2848 = vpop.permute.xlu0 %2847
        %2849 = vrot.lane.b32.xlu0 %v2460, 32
        %v2850 = vpop.permute.xlu0 %2849
        %v2883 = vsel %vm331, %v2421, %v2494
        %v2884 = vsel %vm331, %v2422, %v2496
        %v2885 = vsel %vm331, %v2423, %v2498
        %v2886 = vsel %vm331, %v2424, %v2500
        %v2887 = vsel %vm331, %v2425, %v2502
        %v2888 = vsel %vm331, %v2426, %v2504
        %v2889 = vsel %vm331, %v2427, %v2506
        %v2890 = vsel %vm331, %v2428, %v2508
        %v2891 = vsel %vm331, %v2429, %v2510
        %v2892 = vsel %vm331, %v2430, %v2512
        %v2893 = vsel %vm331, %v2431, %v2514
        %v2894 = vsel %vm331, %v2432, %v2516
        %v2895 = vsel %vm331, %v2433, %v2518
        %v2896 = vsel %vm331, %v2434, %v2520
        %v2897 = vsel %vm331, %v2435, %v2522
        %v2898 = vsel %vm331, %v2436, %v2524
        %v2899 = vsel %vm331, %v2437, %v2526
        %v2900 = vsel %vm331, %v2438, %v2528
        %v2901 = vsel %vm331, %v2439, %v2530
        %v2902 = vsel %vm331, %v2440, %v2532
        %v2903 = vsel %vm331, %v2441, %v2534
        %v2904 = vsel %vm331, %v2442, %v2536
        %v2905 = vsel %vm331, %v2443, %v2538
        %v2906 = vsel %vm331, %v2444, %v2540
        %v2907 = vsel %vm331, %v2445, %v2542
        %v2908 = vsel %vm331, %v2446, %v2544
        %v2909 = vsel %vm331, %v2447, %v2546
        %v2910 = vsel %vm331, %v2448, %v2548
        %v2911 = vsel %vm331, %v2449, %v2550
        %v2912 = vsel %vm331, %v2450, %v2552
        %v2913 = vsel %vm331, %v2451, %v2554
        %v2914 = vsel %vm331, %v2452, %v2556
        %v2915 = vsel %vm949, %v2883, %v2592
        %v2916 = vsel %vm949, %v2884, %v2594
        %v2917 = vsel %vm949, %v2885, %v2596
        %v2918 = vsel %vm949, %v2886, %v2598
        %v2919 = vsel %vm949, %v2887, %v2600
        %v2920 = vsel %vm949, %v2888, %v2602
        %v2921 = vsel %vm949, %v2889, %v2604
        %v2922 = vsel %vm949, %v2890, %v2606
        %v2923 = vsel %vm949, %v2891, %v2608
        %v2924 = vsel %vm949, %v2892, %v2610
        %v2925 = vsel %vm949, %v2893, %v2612
        %v2926 = vsel %vm949, %v2894, %v2614
        %v2927 = vsel %vm949, %v2895, %v2616
        %v2928 = vsel %vm949, %v2896, %v2618
        %v2929 = vsel %vm949, %v2897, %v2620
        %v2930 = vsel %vm949, %v2898, %v2622
        %v2931 = vsel %vm949, %v2899, %v2624
        %v2932 = vsel %vm949, %v2900, %v2626
        %v2933 = vsel %vm949, %v2901, %v2628
        %v2934 = vsel %vm949, %v2902, %v2630
        %v2935 = vsel %vm949, %v2903, %v2632
        %v2936 = vsel %vm949, %v2904, %v2634
        %v2937 = vsel %vm949, %v2905, %v2636
        %v2938 = vsel %vm949, %v2906, %v2638
        %v2939 = vsel %vm949, %v2907, %v2640
        %v2940 = vsel %vm949, %v2908, %v2642
        %v2941 = vsel %vm949, %v2909, %v2644
        %v2942 = vsel %vm949, %v2910, %v2646
        %v2943 = vsel %vm949, %v2911, %v2648
        %v2944 = vsel %vm949, %v2912, %v2650
        %v2945 = vsel %vm949, %v2913, %v2652
        %v2946 = vsel %vm949, %v2914, %v2654
        %v2947 = vsel %vm982, %v2915, %v2690
        %v2948 = vsel %vm982, %v2916, %v2692
        %v2949 = vsel %vm982, %v2917, %v2694
        %v2950 = vsel %vm982, %v2918, %v2696
        %v2951 = vsel %vm982, %v2919, %v2698
        %v2952 = vsel %vm982, %v2920, %v2700
        %v2953 = vsel %vm982, %v2921, %v2702
        %v2954 = vsel %vm982, %v2922, %v2704
        %v2955 = vsel %vm982, %v2923, %v2706
        %v2956 = vsel %vm982, %v2924, %v2708
        %v2957 = vsel %vm982, %v2925, %v2710
        %v2958 = vsel %vm982, %v2926, %v2712
        %v2959 = vsel %vm982, %v2927, %v2714
        %v2960 = vsel %vm982, %v2928, %v2716
        %v2961 = vsel %vm982, %v2929, %v2718
        %v2962 = vsel %vm982, %v2930, %v2720
        %v2963 = vsel %vm982, %v2931, %v2722
        %v2964 = vsel %vm982, %v2932, %v2724
        %v2965 = vsel %vm982, %v2933, %v2726
        %v2966 = vsel %vm982, %v2934, %v2728
        %v2967 = vsel %vm982, %v2935, %v2730
        %v2968 = vsel %vm982, %v2936, %v2732
        %v2969 = vsel %vm982, %v2937, %v2734
        %v2970 = vsel %vm982, %v2938, %v2736
        %v2971 = vsel %vm982, %v2939, %v2738
        %v2972 = vsel %vm982, %v2940, %v2740
        %v2973 = vsel %vm982, %v2941, %v2742
        %v2974 = vsel %vm982, %v2942, %v2744
        %v2975 = vsel %vm982, %v2943, %v2746
        %v2976 = vsel %vm982, %v2944, %v2748
        %v2977 = vsel %vm982, %v2945, %v2750
        %v2978 = vsel %vm982, %v2946, %v2752
        %v2979 = vsel %vm1015, %v2947, %v2788
        %v2980 = vsel %vm1015, %v2948, %v2790
        %v2981 = vsel %vm1015, %v2949, %v2792
        %v2982 = vsel %vm1015, %v2950, %v2794
        %v2983 = vsel %vm1015, %v2951, %v2796
        %v2984 = vsel %vm1015, %v2952, %v2798
        %v2985 = vsel %vm1015, %v2953, %v2800
        %v2986 = vsel %vm1015, %v2954, %v2802
        %v2987 = vsel %vm1015, %v2955, %v2804
        %v2988 = vsel %vm1015, %v2956, %v2806
        %v2989 = vsel %vm1015, %v2957, %v2808
        %v2990 = vsel %vm1015, %v2958, %v2810
        %v2991 = vsel %vm1015, %v2959, %v2812
        %v2992 = vsel %vm1015, %v2960, %v2814
        %v2993 = vsel %vm1015, %v2961, %v2816
        %v2994 = vsel %vm1015, %v2962, %v2818
        %v2995 = vsel %vm1015, %v2963, %v2820
        %v2996 = vsel %vm1015, %v2964, %v2822
        %v2997 = vsel %vm1015, %v2965, %v2824
        %v2998 = vsel %vm1015, %v2966, %v2826
        %v2999 = vsel %vm1015, %v2967, %v2828
        %v3000 = vsel %vm1015, %v2968, %v2830
        %v3001 = vsel %vm1015, %v2969, %v2832
        %v3002 = vsel %vm1015, %v2970, %v2834
        %v3003 = vsel %vm1015, %v2971, %v2836
        %v3004 = vsel %vm1015, %v2972, %v2838
        %v3005 = vsel %vm1015, %v2973, %v2840
        %v3006 = vsel %vm1015, %v2974, %v2842
        %v3007 = vsel %vm1015, %v2975, %v2844
        %v3008 = vsel %vm1015, %v2976, %v2846
        %v3009 = vsel %vm1015, %v2977, %v2848
        %v3010 = vsel %vm1015, %v2978, %v2850
        %v3011 = vsel %vm1048, %v2979, 0.0
        %v3012 = vsel %vm1048, %v2980, 0.0
        %v3013 = vsel %vm1048, %v2981, 0.0
        %v3014 = vsel %vm1048, %v2982, 0.0
        %v3015 = vsel %vm1048, %v2983, 0.0
        %v3016 = vsel %vm1048, %v2984, 0.0
        %v3017 = vsel %vm1048, %v2985, 0.0
        %v3018 = vsel %vm1048, %v2986, 0.0
        %v3019 = vsel %vm1048, %v2987, 0.0
        %v3020 = vsel %vm1048, %v2988, 0.0
        %v3021 = vsel %vm1048, %v2989, 0.0
        %v3022 = vsel %vm1048, %v2990, 0.0
        %v3023 = vsel %vm1048, %v2991, 0.0
        %v3024 = vsel %vm1048, %v2992, 0.0
        %v3025 = vsel %vm1048, %v2993, 0.0
        %v3026 = vsel %vm1048, %v2994, 0.0
        %v3027 = vsel %vm1048, %v2995, 0.0
        %v3028 = vsel %vm1048, %v2996, 0.0
        %v3029 = vsel %vm1048, %v2997, 0.0
        %v3030 = vsel %vm1048, %v2998, 0.0
        %v3031 = vsel %vm1048, %v2999, 0.0
        %v3032 = vsel %vm1048, %v3000, 0.0
        %v3033 = vsel %vm1048, %v3001, 0.0
        %v3034 = vsel %vm1048, %v3002, 0.0
        %v3035 = vsel %vm1048, %v3003, 0.0
        %v3036 = vsel %vm1048, %v3004, 0.0
        %v3037 = vsel %vm1048, %v3005, 0.0
        %v3038 = vsel %vm1048, %v3006, 0.0
        %v3039 = vsel %vm1048, %v3007, 0.0
        %v3040 = vsel %vm1048, %v3008, 0.0
        %v3041 = vsel %vm1048, %v3009, 0.0
        %v3042 = vsel %vm1048, %v3010, 0.0
        %3043 = vst [vmem:[#allocation4 + $0x18] sm:$0xff] %v3011
        %3044 = vst [vmem:[#allocation4 + $0x48] sm:$0xff] %v3012
        %3045 = vst [vmem:[#allocation4 + $0x78] sm:$0xff] %v3013
        %3046 = vst [vmem:[#allocation4 + $0xa8] sm:$0xff] %v3014
        %3047 = vst [vmem:[#allocation4 + $0xd8] sm:$0xff] %v3015
        %3048 = vst [vmem:[#allocation4 + $0x108] sm:$0xff] %v3016
        %3049 = vst [vmem:[#allocation4 + $0x138] sm:$0xff] %v3017
        %3050 = vst [vmem:[#allocation4 + $0x168] sm:$0xff] %v3018
        %3051 = vst [vmem:[#allocation4 + $0x198] sm:$0xff] %v3019
        %3052 = vst [vmem:[#allocation4 + $0x1c8] sm:$0xff] %v3020
        %3053 = vst [vmem:[#allocation4 + $0x1f8] sm:$0xff] %v3021
        %3054 = vst [vmem:[#allocation4 + $0x228] sm:$0xff] %v3022
        %3055 = vst [vmem:[#allocation4 + $0x258] sm:$0xff] %v3023
        %3056 = vst [vmem:[#allocation4 + $0x288] sm:$0xff] %v3024
        %3057 = vst [vmem:[#allocation4 + $0x2b8] sm:$0xff] %v3025
        %3058 = vst [vmem:[#allocation4 + $0x2e8] sm:$0xff] %v3026
        %3059 = vst [vmem:[#allocation4 + $0x318] sm:$0xff] %v3027
        %3060 = vst [vmem:[#allocation4 + $0x348] sm:$0xff] %v3028
        %3061 = vst [vmem:[#allocation4 + $0x378] sm:$0xff] %v3029
        %3062 = vst [vmem:[#allocation4 + $0x3a8] sm:$0xff] %v3030
        %3063 = vst [vmem:[#allocation4 + $0x3d8] sm:$0xff] %v3031
        %3064 = vst [vmem:[#allocation4 + $0x408] sm:$0xff] %v3032
        %3065 = vst [vmem:[#allocation4 + $0x438] sm:$0xff] %v3033
        %3066 = vst [vmem:[#allocation4 + $0x468] sm:$0xff] %v3034
        %3067 = vst [vmem:[#allocation4 + $0x498] sm:$0xff] %v3035
        %3068 = vst [vmem:[#allocation4 + $0x4c8] sm:$0xff] %v3036
        %3069 = vst [vmem:[#allocation4 + $0x4f8] sm:$0xff] %v3037
        %3070 = vst [vmem:[#allocation4 + $0x528] sm:$0xff] %v3038
        %3071 = vst [vmem:[#allocation4 + $0x558] sm:$0xff] %v3039
        %3072 = vst [vmem:[#allocation4 + $0x588] sm:$0xff] %v3040
        %3073 = vst [vmem:[#allocation4 + $0x5b8] sm:$0xff] %v3041
        %3074 = vst [vmem:[#allocation4 + $0x5e8] sm:$0xff] %v3042
        %v3075 = vld [vmem:[#allocation2 + $0xa] sm:$0xff]
        %v3076 = vld [vmem:[#allocation2 + $0x12] sm:$0xff]
        %v3077 = vld [vmem:[#allocation2 + $0x2a] sm:$0xff]
        %v3078 = vld [vmem:[#allocation2 + $0x32] sm:$0xff]
        %v3079 = vld [vmem:[#allocation2 + $0x4a] sm:$0xff]
        %v3080 = vld [vmem:[#allocation2 + $0x52] sm:$0xff]
        %v3081 = vld [vmem:[#allocation2 + $0x6a] sm:$0xff]
        %v3082 = vld [vmem:[#allocation2 + $0x72] sm:$0xff]
        %v3083 = vld [vmem:[#allocation2 + $0x8a] sm:$0xff]
        %v3084 = vld [vmem:[#allocation2 + $0x92] sm:$0xff]
        %v3085 = vld [vmem:[#allocation2 + $0xaa] sm:$0xff]
        %v3086 = vld [vmem:[#allocation2 + $0xb2] sm:$0xff]
        %v3087 = vld [vmem:[#allocation2 + $0xca] sm:$0xff]
        %v3088 = vld [vmem:[#allocation2 + $0xd2] sm:$0xff]
        %v3089 = vld [vmem:[#allocation2 + $0xea] sm:$0xff]
        %v3090 = vld [vmem:[#allocation2 + $0xf2] sm:$0xff]
        %v3091 = vld [vmem:[#allocation2 + $0x10a] sm:$0xff]
        %v3092 = vld [vmem:[#allocation2 + $0x112] sm:$0xff]
        %v3093 = vld [vmem:[#allocation2 + $0x12a] sm:$0xff]
        %v3094 = vld [vmem:[#allocation2 + $0x132] sm:$0xff]
        %v3095 = vld [vmem:[#allocation2 + $0x14a] sm:$0xff]
        %v3096 = vld [vmem:[#allocation2 + $0x152] sm:$0xff]
        %v3097 = vld [vmem:[#allocation2 + $0x16a] sm:$0xff]
        %v3098 = vld [vmem:[#allocation2 + $0x172] sm:$0xff]
        %v3099 = vld [vmem:[#allocation2 + $0x18a] sm:$0xff]
        %v3100 = vld [vmem:[#allocation2 + $0x192] sm:$0xff]
        %v3101 = vld [vmem:[#allocation2 + $0x1aa] sm:$0xff]
        %v3102 = vld [vmem:[#allocation2 + $0x1b2] sm:$0xff]
        %v3103 = vld [vmem:[#allocation2 + $0x1ca] sm:$0xff]
        %v3104 = vld [vmem:[#allocation2 + $0x1d2] sm:$0xff]
        %v3105 = vld [vmem:[#allocation2 + $0x1ea] sm:$0xff]
        %v3106 = vld [vmem:[#allocation2 + $0x1f2] sm:$0xff]
        %v3107 = vld [vmem:[#allocation2 + $0x20a] sm:$0xff]
        %v3108 = vld [vmem:[#allocation2 + $0x212] sm:$0xff]
        %v3109 = vld [vmem:[#allocation2 + $0x22a] sm:$0xff]
        %v3110 = vld [vmem:[#allocation2 + $0x232] sm:$0xff]
        %v3111 = vld [vmem:[#allocation2 + $0x24a] sm:$0xff]
        %v3112 = vld [vmem:[#allocation2 + $0x252] sm:$0xff]
        %v3113 = vld [vmem:[#allocation2 + $0x26a] sm:$0xff]
        %v3114 = vld [vmem:[#allocation2 + $0x272] sm:$0xff]
        %3147 = vrot.lane.b32.xlu0 %v3077, 8
        %v3148 = vpop.permute.xlu0 %3147
        %3149 = vrot.lane.b32.xlu0 %v3078, 8
        %v3150 = vpop.permute.xlu0 %3149
        %3151 = vrot.lane.b32.xlu0 %v3079, 8
        %v3152 = vpop.permute.xlu0 %3151
        %3153 = vrot.lane.b32.xlu0 %v3080, 8
        %v3154 = vpop.permute.xlu0 %3153
        %3155 = vrot.lane.b32.xlu0 %v3081, 8
        %v3156 = vpop.permute.xlu0 %3155
        %3157 = vrot.lane.b32.xlu0 %v3082, 8
        %v3158 = vpop.permute.xlu0 %3157
        %3159 = vrot.lane.b32.xlu0 %v3083, 8
        %v3160 = vpop.permute.xlu0 %3159
        %3161 = vrot.lane.b32.xlu0 %v3084, 8
        %v3162 = vpop.permute.xlu0 %3161
        %3163 = vrot.lane.b32.xlu0 %v3085, 8
        %v3164 = vpop.permute.xlu0 %3163
        %3165 = vrot.lane.b32.xlu0 %v3086, 8
        %v3166 = vpop.permute.xlu0 %3165
        %3167 = vrot.lane.b32.xlu0 %v3087, 8
        %v3168 = vpop.permute.xlu0 %3167
        %3169 = vrot.lane.b32.xlu0 %v3088, 8
        %v3170 = vpop.permute.xlu0 %3169
        %3171 = vrot.lane.b32.xlu0 %v3089, 8
        %v3172 = vpop.permute.xlu0 %3171
        %3173 = vrot.lane.b32.xlu0 %v3090, 8
        %v3174 = vpop.permute.xlu0 %3173
        %3175 = vrot.lane.b32.xlu0 %v3091, 8
        %v3176 = vpop.permute.xlu0 %3175
        %3177 = vrot.lane.b32.xlu0 %v3092, 8
        %v3178 = vpop.permute.xlu0 %3177
        %3179 = vrot.lane.b32.xlu0 %v3093, 8
        %v3180 = vpop.permute.xlu0 %3179
        %3181 = vrot.lane.b32.xlu0 %v3094, 8
        %v3182 = vpop.permute.xlu0 %3181
        %3183 = vrot.lane.b32.xlu0 %v3095, 8
        %v3184 = vpop.permute.xlu0 %3183
        %3185 = vrot.lane.b32.xlu0 %v3096, 8
        %v3186 = vpop.permute.xlu0 %3185
        %3187 = vrot.lane.b32.xlu0 %v3097, 8
        %v3188 = vpop.permute.xlu0 %3187
        %3189 = vrot.lane.b32.xlu0 %v3098, 8
        %v3190 = vpop.permute.xlu0 %3189
        %3191 = vrot.lane.b32.xlu0 %v3099, 8
        %v3192 = vpop.permute.xlu0 %3191
        %3193 = vrot.lane.b32.xlu0 %v3100, 8
        %v3194 = vpop.permute.xlu0 %3193
        %3195 = vrot.lane.b32.xlu0 %v3101, 8
        %v3196 = vpop.permute.xlu0 %3195
        %3197 = vrot.lane.b32.xlu0 %v3102, 8
        %v3198 = vpop.permute.xlu0 %3197
        %3199 = vrot.lane.b32.xlu0 %v3103, 8
        %v3200 = vpop.permute.xlu0 %3199
        %3201 = vrot.lane.b32.xlu0 %v3104, 8
        %v3202 = vpop.permute.xlu0 %3201
        %3203 = vrot.lane.b32.xlu0 %v3105, 8
        %v3204 = vpop.permute.xlu0 %3203
        %3205 = vrot.lane.b32.xlu0 %v3106, 8
        %v3206 = vpop.permute.xlu0 %3205
        %3207 = vrot.lane.b32.xlu0 %v3107, 8
        %v3208 = vpop.permute.xlu0 %3207
        %3209 = vrot.lane.b32.xlu0 %v3108, 8
        %v3210 = vpop.permute.xlu0 %3209
        %3245 = vrot.lane.b32.xlu0 %v3079, 16
        %v3246 = vpop.permute.xlu0 %3245
        %3247 = vrot.lane.b32.xlu0 %v3080, 16
        %v3248 = vpop.permute.xlu0 %3247
        %3249 = vrot.lane.b32.xlu0 %v3081, 16
        %v3250 = vpop.permute.xlu0 %3249
        %3251 = vrot.lane.b32.xlu0 %v3082, 16
        %v3252 = vpop.permute.xlu0 %3251
        %3253 = vrot.lane.b32.xlu0 %v3083, 16
        %v3254 = vpop.permute.xlu0 %3253
        %3255 = vrot.lane.b32.xlu0 %v3084, 16
        %v3256 = vpop.permute.xlu0 %3255
        %3257 = vrot.lane.b32.xlu0 %v3085, 16
        %v3258 = vpop.permute.xlu0 %3257
        %3259 = vrot.lane.b32.xlu0 %v3086, 16
        %v3260 = vpop.permute.xlu0 %3259
        %3261 = vrot.lane.b32.xlu0 %v3087, 16
        %v3262 = vpop.permute.xlu0 %3261
        %3263 = vrot.lane.b32.xlu0 %v3088, 16
        %v3264 = vpop.permute.xlu0 %3263
        %3265 = vrot.lane.b32.xlu0 %v3089, 16
        %v3266 = vpop.permute.xlu0 %3265
        %3267 = vrot.lane.b32.xlu0 %v3090, 16
        %v3268 = vpop.permute.xlu0 %3267
        %3269 = vrot.lane.b32.xlu0 %v3091, 16
        %v3270 = vpop.permute.xlu0 %3269
        %3271 = vrot.lane.b32.xlu0 %v3092, 16
        %v3272 = vpop.permute.xlu0 %3271
        %3273 = vrot.lane.b32.xlu0 %v3093, 16
        %v3274 = vpop.permute.xlu0 %3273
        %3275 = vrot.lane.b32.xlu0 %v3094, 16
        %v3276 = vpop.permute.xlu0 %3275
        %3277 = vrot.lane.b32.xlu0 %v3095, 16
        %v3278 = vpop.permute.xlu0 %3277
        %3279 = vrot.lane.b32.xlu0 %v3096, 16
        %v3280 = vpop.permute.xlu0 %3279
        %3281 = vrot.lane.b32.xlu0 %v3097, 16
        %v3282 = vpop.permute.xlu0 %3281
        %3283 = vrot.lane.b32.xlu0 %v3098, 16
        %v3284 = vpop.permute.xlu0 %3283
        %3285 = vrot.lane.b32.xlu0 %v3099, 16
        %v3286 = vpop.permute.xlu0 %3285
        %3287 = vrot.lane.b32.xlu0 %v3100, 16
        %v3288 = vpop.permute.xlu0 %3287
        %3289 = vrot.lane.b32.xlu0 %v3101, 16
        %v3290 = vpop.permute.xlu0 %3289
        %3291 = vrot.lane.b32.xlu0 %v3102, 16
        %v3292 = vpop.permute.xlu0 %3291
        %3293 = vrot.lane.b32.xlu0 %v3103, 16
        %v3294 = vpop.permute.xlu0 %3293
        %3295 = vrot.lane.b32.xlu0 %v3104, 16
        %v3296 = vpop.permute.xlu0 %3295
        %3297 = vrot.lane.b32.xlu0 %v3105, 16
        %v3298 = vpop.permute.xlu0 %3297
        %3299 = vrot.lane.b32.xlu0 %v3106, 16
        %v3300 = vpop.permute.xlu0 %3299
        %3301 = vrot.lane.b32.xlu0 %v3107, 16
        %v3302 = vpop.permute.xlu0 %3301
        %3303 = vrot.lane.b32.xlu0 %v3108, 16
        %v3304 = vpop.permute.xlu0 %3303
        %3305 = vrot.lane.b32.xlu0 %v3109, 16
        %v3306 = vpop.permute.xlu0 %3305
        %3307 = vrot.lane.b32.xlu0 %v3110, 16
        %v3308 = vpop.permute.xlu0 %3307
        %3343 = vrot.lane.b32.xlu0 %v3081, 24
        %v3344 = vpop.permute.xlu0 %3343
        %3345 = vrot.lane.b32.xlu0 %v3082, 24
        %v3346 = vpop.permute.xlu0 %3345
        %3347 = vrot.lane.b32.xlu0 %v3083, 24
        %v3348 = vpop.permute.xlu0 %3347
        %3349 = vrot.lane.b32.xlu0 %v3084, 24
        %v3350 = vpop.permute.xlu0 %3349
        %3351 = vrot.lane.b32.xlu0 %v3085, 24
        %v3352 = vpop.permute.xlu0 %3351
        %3353 = vrot.lane.b32.xlu0 %v3086, 24
        %v3354 = vpop.permute.xlu0 %3353
        %3355 = vrot.lane.b32.xlu0 %v3087, 24
        %v3356 = vpop.permute.xlu0 %3355
        %3357 = vrot.lane.b32.xlu0 %v3088, 24
        %v3358 = vpop.permute.xlu0 %3357
        %3359 = vrot.lane.b32.xlu0 %v3089, 24
        %v3360 = vpop.permute.xlu0 %3359
        %3361 = vrot.lane.b32.xlu0 %v3090, 24
        %v3362 = vpop.permute.xlu0 %3361
        %3363 = vrot.lane.b32.xlu0 %v3091, 24
        %v3364 = vpop.permute.xlu0 %3363
        %3365 = vrot.lane.b32.xlu0 %v3092, 24
        %v3366 = vpop.permute.xlu0 %3365
        %3367 = vrot.lane.b32.xlu0 %v3093, 24
        %v3368 = vpop.permute.xlu0 %3367
        %3369 = vrot.lane.b32.xlu0 %v3094, 24
        %v3370 = vpop.permute.xlu0 %3369
        %3371 = vrot.lane.b32.xlu0 %v3095, 24
        %v3372 = vpop.permute.xlu0 %3371
        %3373 = vrot.lane.b32.xlu0 %v3096, 24
        %v3374 = vpop.permute.xlu0 %3373
        %3375 = vrot.lane.b32.xlu0 %v3097, 24
        %v3376 = vpop.permute.xlu0 %3375
        %3377 = vrot.lane.b32.xlu0 %v3098, 24
        %v3378 = vpop.permute.xlu0 %3377
        %3379 = vrot.lane.b32.xlu0 %v3099, 24
        %v3380 = vpop.permute.xlu0 %3379
        %3381 = vrot.lane.b32.xlu0 %v3100, 24
        %v3382 = vpop.permute.xlu0 %3381
        %3383 = vrot.lane.b32.xlu0 %v3101, 24
        %v3384 = vpop.permute.xlu0 %3383
        %3385 = vrot.lane.b32.xlu0 %v3102, 24
        %v3386 = vpop.permute.xlu0 %3385
        %3387 = vrot.lane.b32.xlu0 %v3103, 24
        %v3388 = vpop.permute.xlu0 %3387
        %3389 = vrot.lane.b32.xlu0 %v3104, 24
        %v3390 = vpop.permute.xlu0 %3389
        %3391 = vrot.lane.b32.xlu0 %v3105, 24
        %v3392 = vpop.permute.xlu0 %3391
        %3393 = vrot.lane.b32.xlu0 %v3106, 24
        %v3394 = vpop.permute.xlu0 %3393
        %3395 = vrot.lane.b32.xlu0 %v3107, 24
        %v3396 = vpop.permute.xlu0 %3395
        %3397 = vrot.lane.b32.xlu0 %v3108, 24
        %v3398 = vpop.permute.xlu0 %3397
        %3399 = vrot.lane.b32.xlu0 %v3109, 24
        %v3400 = vpop.permute.xlu0 %3399
        %3401 = vrot.lane.b32.xlu0 %v3110, 24
        %v3402 = vpop.permute.xlu0 %3401
        %3403 = vrot.lane.b32.xlu0 %v3111, 24
        %v3404 = vpop.permute.xlu0 %3403
        %3405 = vrot.lane.b32.xlu0 %v3112, 24
        %v3406 = vpop.permute.xlu0 %3405
        %3441 = vrot.lane.b32.xlu0 %v3083, 32
        %v3442 = vpop.permute.xlu0 %3441
        %3443 = vrot.lane.b32.xlu0 %v3084, 32
        %v3444 = vpop.permute.xlu0 %3443
        %3445 = vrot.lane.b32.xlu0 %v3085, 32
        %v3446 = vpop.permute.xlu0 %3445
        %3447 = vrot.lane.b32.xlu0 %v3086, 32
        %v3448 = vpop.permute.xlu0 %3447
        %3449 = vrot.lane.b32.xlu0 %v3087, 32
        %v3450 = vpop.permute.xlu0 %3449
        %3451 = vrot.lane.b32.xlu0 %v3088, 32
        %v3452 = vpop.permute.xlu0 %3451
        %3453 = vrot.lane.b32.xlu0 %v3089, 32
        %v3454 = vpop.permute.xlu0 %3453
        %3455 = vrot.lane.b32.xlu0 %v3090, 32
        %v3456 = vpop.permute.xlu0 %3455
        %3457 = vrot.lane.b32.xlu0 %v3091, 32
        %v3458 = vpop.permute.xlu0 %3457
        %3459 = vrot.lane.b32.xlu0 %v3092, 32
        %v3460 = vpop.permute.xlu0 %3459
        %3461 = vrot.lane.b32.xlu0 %v3093, 32
        %v3462 = vpop.permute.xlu0 %3461
        %3463 = vrot.lane.b32.xlu0 %v3094, 32
        %v3464 = vpop.permute.xlu0 %3463
        %3465 = vrot.lane.b32.xlu0 %v3095, 32
        %v3466 = vpop.permute.xlu0 %3465
        %3467 = vrot.lane.b32.xlu0 %v3096, 32
        %v3468 = vpop.permute.xlu0 %3467
        %3469 = vrot.lane.b32.xlu0 %v3097, 32
        %v3470 = vpop.permute.xlu0 %3469
        %3471 = vrot.lane.b32.xlu0 %v3098, 32
        %v3472 = vpop.permute.xlu0 %3471
        %3473 = vrot.lane.b32.xlu0 %v3099, 32
        %v3474 = vpop.permute.xlu0 %3473
        %3475 = vrot.lane.b32.xlu0 %v3100, 32
        %v3476 = vpop.permute.xlu0 %3475
        %3477 = vrot.lane.b32.xlu0 %v3101, 32
        %v3478 = vpop.permute.xlu0 %3477
        %3479 = vrot.lane.b32.xlu0 %v3102, 32
        %v3480 = vpop.permute.xlu0 %3479
        %3481 = vrot.lane.b32.xlu0 %v3103, 32
        %v3482 = vpop.permute.xlu0 %3481
        %3483 = vrot.lane.b32.xlu0 %v3104, 32
        %v3484 = vpop.permute.xlu0 %3483
        %3485 = vrot.lane.b32.xlu0 %v3105, 32
        %v3486 = vpop.permute.xlu0 %3485
        %3487 = vrot.lane.b32.xlu0 %v3106, 32
        %v3488 = vpop.permute.xlu0 %3487
        %3489 = vrot.lane.b32.xlu0 %v3107, 32
        %v3490 = vpop.permute.xlu0 %3489
        %3491 = vrot.lane.b32.xlu0 %v3108, 32
        %v3492 = vpop.permute.xlu0 %3491
        %3493 = vrot.lane.b32.xlu0 %v3109, 32
        %v3494 = vpop.permute.xlu0 %3493
        %3495 = vrot.lane.b32.xlu0 %v3110, 32
        %v3496 = vpop.permute.xlu0 %3495
        %3497 = vrot.lane.b32.xlu0 %v3111, 32
        %v3498 = vpop.permute.xlu0 %3497
        %3499 = vrot.lane.b32.xlu0 %v3112, 32
        %v3500 = vpop.permute.xlu0 %3499
        %3501 = vrot.lane.b32.xlu0 %v3113, 32
        %v3502 = vpop.permute.xlu0 %3501
        %3503 = vrot.lane.b32.xlu0 %v3114, 32
        %v3504 = vpop.permute.xlu0 %3503
        %v3537 = vsel %vm331, %v3075, %v3148
        %v3538 = vsel %vm331, %v3076, %v3150
        %v3539 = vsel %vm331, %v3077, %v3152
        %v3540 = vsel %vm331, %v3078, %v3154
        %v3541 = vsel %vm331, %v3079, %v3156
        %v3542 = vsel %vm331, %v3080, %v3158
        %v3543 = vsel %vm331, %v3081, %v3160
        %v3544 = vsel %vm331, %v3082, %v3162
        %v3545 = vsel %vm331, %v3083, %v3164
        %v3546 = vsel %vm331, %v3084, %v3166
        %v3547 = vsel %vm331, %v3085, %v3168
        %v3548 = vsel %vm331, %v3086, %v3170
        %v3549 = vsel %vm331, %v3087, %v3172
        %v3550 = vsel %vm331, %v3088, %v3174
        %v3551 = vsel %vm331, %v3089, %v3176
        %v3552 = vsel %vm331, %v3090, %v3178
        %v3553 = vsel %vm331, %v3091, %v3180
        %v3554 = vsel %vm331, %v3092, %v3182
        %v3555 = vsel %vm331, %v3093, %v3184
        %v3556 = vsel %vm331, %v3094, %v3186
        %v3557 = vsel %vm331, %v3095, %v3188
        %v3558 = vsel %vm331, %v3096, %v3190
        %v3559 = vsel %vm331, %v3097, %v3192
        %v3560 = vsel %vm331, %v3098, %v3194
        %v3561 = vsel %vm331, %v3099, %v3196
        %v3562 = vsel %vm331, %v3100, %v3198
        %v3563 = vsel %vm331, %v3101, %v3200
        %v3564 = vsel %vm331, %v3102, %v3202
        %v3565 = vsel %vm331, %v3103, %v3204
        %v3566 = vsel %vm331, %v3104, %v3206
        %v3567 = vsel %vm331, %v3105, %v3208
        %v3568 = vsel %vm331, %v3106, %v3210
        %v3569 = vsel %vm949, %v3537, %v3246
        %v3570 = vsel %vm949, %v3538, %v3248
        %v3571 = vsel %vm949, %v3539, %v3250
        %v3572 = vsel %vm949, %v3540, %v3252
        %v3573 = vsel %vm949, %v3541, %v3254
        %v3574 = vsel %vm949, %v3542, %v3256
        %v3575 = vsel %vm949, %v3543, %v3258
        %v3576 = vsel %vm949, %v3544, %v3260
        %v3577 = vsel %vm949, %v3545, %v3262
        %v3578 = vsel %vm949, %v3546, %v3264
        %v3579 = vsel %vm949, %v3547, %v3266
        %v3580 = vsel %vm949, %v3548, %v3268
        %v3581 = vsel %vm949, %v3549, %v3270
        %v3582 = vsel %vm949, %v3550, %v3272
        %v3583 = vsel %vm949, %v3551, %v3274
        %v3584 = vsel %vm949, %v3552, %v3276
        %v3585 = vsel %vm949, %v3553, %v3278
        %v3586 = vsel %vm949, %v3554, %v3280
        %v3587 = vsel %vm949, %v3555, %v3282
        %v3588 = vsel %vm949, %v3556, %v3284
        %v3589 = vsel %vm949, %v3557, %v3286
        %v3590 = vsel %vm949, %v3558, %v3288
        %v3591 = vsel %vm949, %v3559, %v3290
        %v3592 = vsel %vm949, %v3560, %v3292
        %v3593 = vsel %vm949, %v3561, %v3294
        %v3594 = vsel %vm949, %v3562, %v3296
        %v3595 = vsel %vm949, %v3563, %v3298
        %v3596 = vsel %vm949, %v3564, %v3300
        %v3597 = vsel %vm949, %v3565, %v3302
        %v3598 = vsel %vm949, %v3566, %v3304
        %v3599 = vsel %vm949, %v3567, %v3306
        %v3600 = vsel %vm949, %v3568, %v3308
        %v3601 = vsel %vm982, %v3569, %v3344
        %v3602 = vsel %vm982, %v3570, %v3346
        %v3603 = vsel %vm982, %v3571, %v3348
        %v3604 = vsel %vm982, %v3572, %v3350
        %v3605 = vsel %vm982, %v3573, %v3352
        %v3606 = vsel %vm982, %v3574, %v3354
        %v3607 = vsel %vm982, %v3575, %v3356
        %v3608 = vsel %vm982, %v3576, %v3358
        %v3609 = vsel %vm982, %v3577, %v3360
        %v3610 = vsel %vm982, %v3578, %v3362
        %v3611 = vsel %vm982, %v3579, %v3364
        %v3612 = vsel %vm982, %v3580, %v3366
        %v3613 = vsel %vm982, %v3581, %v3368
        %v3614 = vsel %vm982, %v3582, %v3370
        %v3615 = vsel %vm982, %v3583, %v3372
        %v3616 = vsel %vm982, %v3584, %v3374
        %v3617 = vsel %vm982, %v3585, %v3376
        %v3618 = vsel %vm982, %v3586, %v3378
        %v3619 = vsel %vm982, %v3587, %v3380
        %v3620 = vsel %vm982, %v3588, %v3382
        %v3621 = vsel %vm982, %v3589, %v3384
        %v3622 = vsel %vm982, %v3590, %v3386
        %v3623 = vsel %vm982, %v3591, %v3388
        %v3624 = vsel %vm982, %v3592, %v3390
        %v3625 = vsel %vm982, %v3593, %v3392
        %v3626 = vsel %vm982, %v3594, %v3394
        %v3627 = vsel %vm982, %v3595, %v3396
        %v3628 = vsel %vm982, %v3596, %v3398
        %v3629 = vsel %vm982, %v3597, %v3400
        %v3630 = vsel %vm982, %v3598, %v3402
        %v3631 = vsel %vm982, %v3599, %v3404
        %v3632 = vsel %vm982, %v3600, %v3406
        %v3633 = vsel %vm1015, %v3601, %v3442
        %v3634 = vsel %vm1015, %v3602, %v3444
        %v3635 = vsel %vm1015, %v3603, %v3446
        %v3636 = vsel %vm1015, %v3604, %v3448
        %v3637 = vsel %vm1015, %v3605, %v3450
        %v3638 = vsel %vm1015, %v3606, %v3452
        %v3639 = vsel %vm1015, %v3607, %v3454
        %v3640 = vsel %vm1015, %v3608, %v3456
        %v3641 = vsel %vm1015, %v3609, %v3458
        %v3642 = vsel %vm1015, %v3610, %v3460
        %v3643 = vsel %vm1015, %v3611, %v3462
        %v3644 = vsel %vm1015, %v3612, %v3464
        %v3645 = vsel %vm1015, %v3613, %v3466
        %v3646 = vsel %vm1015, %v3614, %v3468
        %v3647 = vsel %vm1015, %v3615, %v3470
        %v3648 = vsel %vm1015, %v3616, %v3472
        %v3649 = vsel %vm1015, %v3617, %v3474
        %v3650 = vsel %vm1015, %v3618, %v3476
        %v3651 = vsel %vm1015, %v3619, %v3478
        %v3652 = vsel %vm1015, %v3620, %v3480
        %v3653 = vsel %vm1015, %v3621, %v3482
        %v3654 = vsel %vm1015, %v3622, %v3484
        %v3655 = vsel %vm1015, %v3623, %v3486
        %v3656 = vsel %vm1015, %v3624, %v3488
        %v3657 = vsel %vm1015, %v3625, %v3490
        %v3658 = vsel %vm1015, %v3626, %v3492
        %v3659 = vsel %vm1015, %v3627, %v3494
        %v3660 = vsel %vm1015, %v3628, %v3496
        %v3661 = vsel %vm1015, %v3629, %v3498
        %v3662 = vsel %vm1015, %v3630, %v3500
        %v3663 = vsel %vm1015, %v3631, %v3502
        %v3664 = vsel %vm1015, %v3632, %v3504
        %v3665 = vsel %vm1048, %v3633, 0.0
        %v3666 = vsel %vm1048, %v3634, 0.0
        %v3667 = vsel %vm1048, %v3635, 0.0
        %v3668 = vsel %vm1048, %v3636, 0.0
        %v3669 = vsel %vm1048, %v3637, 0.0
        %v3670 = vsel %vm1048, %v3638, 0.0
        %v3671 = vsel %vm1048, %v3639, 0.0
        %v3672 = vsel %vm1048, %v3640, 0.0
        %v3673 = vsel %vm1048, %v3641, 0.0
        %v3674 = vsel %vm1048, %v3642, 0.0
        %v3675 = vsel %vm1048, %v3643, 0.0
        %v3676 = vsel %vm1048, %v3644, 0.0
        %v3677 = vsel %vm1048, %v3645, 0.0
        %v3678 = vsel %vm1048, %v3646, 0.0
        %v3679 = vsel %vm1048, %v3647, 0.0
        %v3680 = vsel %vm1048, %v3648, 0.0
        %v3681 = vsel %vm1048, %v3649, 0.0
        %v3682 = vsel %vm1048, %v3650, 0.0
        %v3683 = vsel %vm1048, %v3651, 0.0
        %v3684 = vsel %vm1048, %v3652, 0.0
        %v3685 = vsel %vm1048, %v3653, 0.0
        %v3686 = vsel %vm1048, %v3654, 0.0
        %v3687 = vsel %vm1048, %v3655, 0.0
        %v3688 = vsel %vm1048, %v3656, 0.0
        %v3689 = vsel %vm1048, %v3657, 0.0
        %v3690 = vsel %vm1048, %v3658, 0.0
        %v3691 = vsel %vm1048, %v3659, 0.0
        %v3692 = vsel %vm1048, %v3660, 0.0
        %v3693 = vsel %vm1048, %v3661, 0.0
        %v3694 = vsel %vm1048, %v3662, 0.0
        %v3695 = vsel %vm1048, %v3663, 0.0
        %v3696 = vsel %vm1048, %v3664, 0.0
        %3697 = vst [vmem:[#allocation4 + $0x20] sm:$0xff] %v3665
        %3698 = vst [vmem:[#allocation4 + $0x50] sm:$0xff] %v3666
        %3699 = vst [vmem:[#allocation4 + $0x80] sm:$0xff] %v3667
        %3700 = vst [vmem:[#allocation4 + $0xb0] sm:$0xff] %v3668
        %3701 = vst [vmem:[#allocation4 + $0xe0] sm:$0xff] %v3669
        %3702 = vst [vmem:[#allocation4 + $0x110] sm:$0xff] %v3670
        %3703 = vst [vmem:[#allocation4 + $0x140] sm:$0xff] %v3671
        %3704 = vst [vmem:[#allocation4 + $0x170] sm:$0xff] %v3672
        %3705 = vst [vmem:[#allocation4 + $0x1a0] sm:$0xff] %v3673
        %3706 = vst [vmem:[#allocation4 + $0x1d0] sm:$0xff] %v3674
        %3707 = vst [vmem:[#allocation4 + $0x200] sm:$0xff] %v3675
        %3708 = vst [vmem:[#allocation4 + $0x230] sm:$0xff] %v3676
        %3709 = vst [vmem:[#allocation4 + $0x260] sm:$0xff] %v3677
        %3710 = vst [vmem:[#allocation4 + $0x290] sm:$0xff] %v3678
        %3711 = vst [vmem:[#allocation4 + $0x2c0] sm:$0xff] %v3679
        %3712 = vst [vmem:[#allocation4 + $0x2f0] sm:$0xff] %v3680
        %3713 = vst [vmem:[#allocation4 + $0x320] sm:$0xff] %v3681
        %3714 = vst [vmem:[#allocation4 + $0x350] sm:$0xff] %v3682
        %3715 = vst [vmem:[#allocation4 + $0x380] sm:$0xff] %v3683
        %3716 = vst [vmem:[#allocation4 + $0x3b0] sm:$0xff] %v3684
        %3717 = vst [vmem:[#allocation4 + $0x3e0] sm:$0xff] %v3685
        %3718 = vst [vmem:[#allocation4 + $0x410] sm:$0xff] %v3686
        %3719 = vst [vmem:[#allocation4 + $0x440] sm:$0xff] %v3687
        %3720 = vst [vmem:[#allocation4 + $0x470] sm:$0xff] %v3688
        %3721 = vst [vmem:[#allocation4 + $0x4a0] sm:$0xff] %v3689
        %3722 = vst [vmem:[#allocation4 + $0x4d0] sm:$0xff] %v3690
        %3723 = vst [vmem:[#allocation4 + $0x500] sm:$0xff] %v3691
        %3724 = vst [vmem:[#allocation4 + $0x530] sm:$0xff] %v3692
        %3725 = vst [vmem:[#allocation4 + $0x560] sm:$0xff] %v3693
        %3726 = vst [vmem:[#allocation4 + $0x590] sm:$0xff] %v3694
        %3727 = vst [vmem:[#allocation4 + $0x5c0] sm:$0xff] %v3695
        %3728 = vst [vmem:[#allocation4 + $0x5f0] sm:$0xff] %v3696
        %v3729 = vld [vmem:[#allocation4] sm:$0xff]
        %v3730 = vld [vmem:[#allocation4 + $0x8] sm:$0xff]
        %v3731 = vld [vmem:[#allocation4 + $0x10] sm:$0xff]
        %v3732 = vld [vmem:[#allocation4 + $0x18] sm:$0xff]
        %v3733 = vld [vmem:[#allocation4 + $0x20] sm:$0xff]
        %v3734 = vld [vmem:[#allocation4 + $0x30] sm:$0xff]
        %v3735 = vld [vmem:[#allocation4 + $0x38] sm:$0xff]
        %v3736 = vld [vmem:[#allocation4 + $0x40] sm:$0xff]
        %v3737 = vld [vmem:[#allocation4 + $0x48] sm:$0xff]
        %v3738 = vld [vmem:[#allocation4 + $0x50] sm:$0xff]
        %v3739 = vld [vmem:[#allocation4 + $0x60] sm:$0xff]
        %v3740 = vld [vmem:[#allocation4 + $0x68] sm:$0xff]
        %v3741 = vld [vmem:[#allocation4 + $0x70] sm:$0xff]
        %v3742 = vld [vmem:[#allocation4 + $0x78] sm:$0xff]
        %v3743 = vld [vmem:[#allocation4 + $0x80] sm:$0xff]
        %v3744 = vld [vmem:[#allocation4 + $0x90] sm:$0xff]
        %v3745 = vld [vmem:[#allocation4 + $0x98] sm:$0xff]
        %v3746 = vld [vmem:[#allocation4 + $0xa0] sm:$0xff]
        %v3747 = vld [vmem:[#allocation4 + $0xa8] sm:$0xff]
        %v3748 = vld [vmem:[#allocation4 + $0xb0] sm:$0xff]
        %v3749 = vld [vmem:[#allocation4 + $0xc0] sm:$0xff]
        %v3750 = vld [vmem:[#allocation4 + $0xc8] sm:$0xff]
        %v3751 = vld [vmem:[#allocation4 + $0xd0] sm:$0xff]
        %v3752 = vld [vmem:[#allocation4 + $0xd8] sm:$0xff]
        %v3753 = vld [vmem:[#allocation4 + $0xe0] sm:$0xff]
        %v3754 = vld [vmem:[#allocation4 + $0xf0] sm:$0xff]
        %v3755 = vld [vmem:[#allocation4 + $0xf8] sm:$0xff]
        %v3756 = vld [vmem:[#allocation4 + $0x100] sm:$0xff]
        %v3757 = vld [vmem:[#allocation4 + $0x108] sm:$0xff]
        %v3758 = vld [vmem:[#allocation4 + $0x110] sm:$0xff]
        %v3759 = vld [vmem:[#allocation4 + $0x120] sm:$0xff]
        %v3760 = vld [vmem:[#allocation4 + $0x128] sm:$0xff]
        %v3761 = vld [vmem:[#allocation4 + $0x130] sm:$0xff]
        %v3762 = vld [vmem:[#allocation4 + $0x138] sm:$0xff]
        %v3763 = vld [vmem:[#allocation4 + $0x140] sm:$0xff]
        %v3764 = vld [vmem:[#allocation4 + $0x150] sm:$0xff]
        %v3765 = vld [vmem:[#allocation4 + $0x158] sm:$0xff]
        %v3766 = vld [vmem:[#allocation4 + $0x160] sm:$0xff]
        %v3767 = vld [vmem:[#allocation4 + $0x168] sm:$0xff]
        %v3768 = vld [vmem:[#allocation4 + $0x170] sm:$0xff]
        %v3769 = vld [vmem:[#allocation4 + $0x180] sm:$0xff]
        %v3770 = vld [vmem:[#allocation4 + $0x188] sm:$0xff]
        %v3771 = vld [vmem:[#allocation4 + $0x190] sm:$0xff]
        %v3772 = vld [vmem:[#allocation4 + $0x198] sm:$0xff]
        %v3773 = vld [vmem:[#allocation4 + $0x1a0] sm:$0xff]
        %v3774 = vld [vmem:[#allocation4 + $0x1b0] sm:$0xff]
        %v3775 = vld [vmem:[#allocation4 + $0x1b8] sm:$0xff]
        %v3776 = vld [vmem:[#allocation4 + $0x1c0] sm:$0xff]
        %v3777 = vld [vmem:[#allocation4 + $0x1c8] sm:$0xff]
        %v3778 = vld [vmem:[#allocation4 + $0x1d0] sm:$0xff]
        %v3779 = vld [vmem:[#allocation4 + $0x1e0] sm:$0xff]
        %v3780 = vld [vmem:[#allocation4 + $0x1e8] sm:$0xff]
        %v3781 = vld [vmem:[#allocation4 + $0x1f0] sm:$0xff]
        %v3782 = vld [vmem:[#allocation4 + $0x1f8] sm:$0xff]
        %v3783 = vld [vmem:[#allocation4 + $0x200] sm:$0xff]
        %v3784 = vld [vmem:[#allocation4 + $0x210] sm:$0xff]
        %v3785 = vld [vmem:[#allocation4 + $0x218] sm:$0xff]
        %v3786 = vld [vmem:[#allocation4 + $0x220] sm:$0xff]
        %v3787 = vld [vmem:[#allocation4 + $0x228] sm:$0xff]
        %v3788 = vld [vmem:[#allocation4 + $0x230] sm:$0xff]
        %v3789 = vld [vmem:[#allocation4 + $0x240] sm:$0xff]
        %v3790 = vld [vmem:[#allocation4 + $0x248] sm:$0xff]
        %v3791 = vld [vmem:[#allocation4 + $0x250] sm:$0xff]
        %v3792 = vld [vmem:[#allocation4 + $0x258] sm:$0xff]
        %v3793 = vld [vmem:[#allocation4 + $0x260] sm:$0xff]
        %v3794 = vld [vmem:[#allocation4 + $0x270] sm:$0xff]
        %v3795 = vld [vmem:[#allocation4 + $0x278] sm:$0xff]
        %v3796 = vld [vmem:[#allocation4 + $0x280] sm:$0xff]
        %v3797 = vld [vmem:[#allocation4 + $0x288] sm:$0xff]
        %v3798 = vld [vmem:[#allocation4 + $0x290] sm:$0xff]
        %v3799 = vld [vmem:[#allocation4 + $0x2a0] sm:$0xff]
        %v3800 = vld [vmem:[#allocation4 + $0x2a8] sm:$0xff]
        %v3801 = vld [vmem:[#allocation4 + $0x2b0] sm:$0xff]
        %v3802 = vld [vmem:[#allocation4 + $0x2b8] sm:$0xff]
        %v3803 = vld [vmem:[#allocation4 + $0x2c0] sm:$0xff]
        %v3804 = vld [vmem:[#allocation4 + $0x2d0] sm:$0xff]
        %v3805 = vld [vmem:[#allocation4 + $0x2d8] sm:$0xff]
        %v3806 = vld [vmem:[#allocation4 + $0x2e0] sm:$0xff]
        %v3807 = vld [vmem:[#allocation4 + $0x2e8] sm:$0xff]
        %v3808 = vld [vmem:[#allocation4 + $0x2f0] sm:$0xff]
        %v3809 = vld [vmem:[#allocation4 + $0x300] sm:$0xff]
        %v3810 = vld [vmem:[#allocation4 + $0x308] sm:$0xff]
        %v3811 = vld [vmem:[#allocation4 + $0x310] sm:$0xff]
        %v3812 = vld [vmem:[#allocation4 + $0x318] sm:$0xff]
        %v3813 = vld [vmem:[#allocation4 + $0x320] sm:$0xff]
        %v3814 = vld [vmem:[#allocation4 + $0x330] sm:$0xff]
        %v3815 = vld [vmem:[#allocation4 + $0x338] sm:$0xff]
        %v3816 = vld [vmem:[#allocation4 + $0x340] sm:$0xff]
        %v3817 = vld [vmem:[#allocation4 + $0x348] sm:$0xff]
        %v3818 = vld [vmem:[#allocation4 + $0x350] sm:$0xff]
        %v3819 = vld [vmem:[#allocation4 + $0x360] sm:$0xff]
        %v3820 = vld [vmem:[#allocation4 + $0x368] sm:$0xff]
        %v3821 = vld [vmem:[#allocation4 + $0x370] sm:$0xff]
        %v3822 = vld [vmem:[#allocation4 + $0x378] sm:$0xff]
        %v3823 = vld [vmem:[#allocation4 + $0x380] sm:$0xff]
        %v3824 = vld [vmem:[#allocation4 + $0x390] sm:$0xff]
        %v3825 = vld [vmem:[#allocation4 + $0x398] sm:$0xff]
        %v3826 = vld [vmem:[#allocation4 + $0x3a0] sm:$0xff]
        %v3827 = vld [vmem:[#allocation4 + $0x3a8] sm:$0xff]
        %v3828 = vld [vmem:[#allocation4 + $0x3b0] sm:$0xff]
        %v3829 = vld [vmem:[#allocation4 + $0x3c0] sm:$0xff]
        %v3830 = vld [vmem:[#allocation4 + $0x3c8] sm:$0xff]
        %v3831 = vld [vmem:[#allocation4 + $0x3d0] sm:$0xff]
        %v3832 = vld [vmem:[#allocation4 + $0x3d8] sm:$0xff]
        %v3833 = vld [vmem:[#allocation4 + $0x3e0] sm:$0xff]
        %v3834 = vld [vmem:[#allocation4 + $0x3f0] sm:$0xff]
        %v3835 = vld [vmem:[#allocation4 + $0x3f8] sm:$0xff]
        %v3836 = vld [vmem:[#allocation4 + $0x400] sm:$0xff]
        %v3837 = vld [vmem:[#allocation4 + $0x408] sm:$0xff]
        %v3838 = vld [vmem:[#allocation4 + $0x410] sm:$0xff]
        %v3839 = vld [vmem:[#allocation4 + $0x420] sm:$0xff]
        %v3840 = vld [vmem:[#allocation4 + $0x428] sm:$0xff]
        %v3841 = vld [vmem:[#allocation4 + $0x430] sm:$0xff]
        %v3842 = vld [vmem:[#allocation4 + $0x438] sm:$0xff]
        %v3843 = vld [vmem:[#allocation4 + $0x440] sm:$0xff]
        %v3844 = vld [vmem:[#allocation4 + $0x450] sm:$0xff]
        %v3845 = vld [vmem:[#allocation4 + $0x458] sm:$0xff]
        %v3846 = vld [vmem:[#allocation4 + $0x460] sm:$0xff]
        %v3847 = vld [vmem:[#allocation4 + $0x468] sm:$0xff]
        %v3848 = vld [vmem:[#allocation4 + $0x470] sm:$0xff]
        %v3849 = vld [vmem:[#allocation4 + $0x480] sm:$0xff]
        %v3850 = vld [vmem:[#allocation4 + $0x488] sm:$0xff]
        %v3851 = vld [vmem:[#allocation4 + $0x490] sm:$0xff]
        %v3852 = vld [vmem:[#allocation4 + $0x498] sm:$0xff]
        %v3853 = vld [vmem:[#allocation4 + $0x4a0] sm:$0xff]
        %v3854 = vld [vmem:[#allocation4 + $0x4b0] sm:$0xff]
        %v3855 = vld [vmem:[#allocation4 + $0x4b8] sm:$0xff]
        %v3856 = vld [vmem:[#allocation4 + $0x4c0] sm:$0xff]
        %v3857 = vld [vmem:[#allocation4 + $0x4c8] sm:$0xff]
        %v3858 = vld [vmem:[#allocation4 + $0x4d0] sm:$0xff]
        %v3859 = vld [vmem:[#allocation4 + $0x4e0] sm:$0xff]
        %v3860 = vld [vmem:[#allocation4 + $0x4e8] sm:$0xff]
        %v3861 = vld [vmem:[#allocation4 + $0x4f0] sm:$0xff]
        %v3862 = vld [vmem:[#allocation4 + $0x4f8] sm:$0xff]
        %v3863 = vld [vmem:[#allocation4 + $0x500] sm:$0xff]
        %v3864 = vld [vmem:[#allocation4 + $0x510] sm:$0xff]
        %v3865 = vld [vmem:[#allocation4 + $0x518] sm:$0xff]
        %v3866 = vld [vmem:[#allocation4 + $0x520] sm:$0xff]
        %v3867 = vld [vmem:[#allocation4 + $0x528] sm:$0xff]
        %v3868 = vld [vmem:[#allocation4 + $0x530] sm:$0xff]
        %v3869 = vld [vmem:[#allocation4 + $0x540] sm:$0xff]
        %v3870 = vld [vmem:[#allocation4 + $0x548] sm:$0xff]
        %v3871 = vld [vmem:[#allocation4 + $0x550] sm:$0xff]
        %v3872 = vld [vmem:[#allocation4 + $0x558] sm:$0xff]
        %v3873 = vld [vmem:[#allocation4 + $0x560] sm:$0xff]
        %v3874 = vld [vmem:[#allocation4 + $0x570] sm:$0xff]
        %v3875 = vld [vmem:[#allocation4 + $0x578] sm:$0xff]
        %v3876 = vld [vmem:[#allocation4 + $0x580] sm:$0xff]
        %v3877 = vld [vmem:[#allocation4 + $0x588] sm:$0xff]
        %v3878 = vld [vmem:[#allocation4 + $0x590] sm:$0xff]
        %v3879 = vld [vmem:[#allocation4 + $0x5a0] sm:$0xff]
        %v3880 = vld [vmem:[#allocation4 + $0x5a8] sm:$0xff]
        %v3881 = vld [vmem:[#allocation4 + $0x5b0] sm:$0xff]
        %v3882 = vld [vmem:[#allocation4 + $0x5b8] sm:$0xff]
        %v3883 = vld [vmem:[#allocation4 + $0x5c0] sm:$0xff]
        %v3884 = vld [vmem:[#allocation4 + $0x5d0] sm:$0xff]
        %v3885 = vld [vmem:[#allocation4 + $0x5d8] sm:$0xff]
        %v3886 = vld [vmem:[#allocation4 + $0x5e0] sm:$0xff]
        %v3887 = vld [vmem:[#allocation4 + $0x5e8] sm:$0xff]
        %v3888 = vld [vmem:[#allocation4 + $0x5f0] sm:$0xff]
        %v3889 = vld [vmem:[%s1] sm:$0xff]
        %v3890 = vld [vmem:[%s1 + $0x8] sm:$0xff]
        %v3891 = vld [vmem:[%s1 + $0x10] sm:$0xff]
        %v3892 = vld [vmem:[%s1 + $0x18] sm:$0xff]
        %v3893 = vld [vmem:[%s1 + $0x20] sm:$0xff]
        %v3894 = vld [vmem:[%s1 + $0x28] sm:$0xff]
        %v3895 = vld [vmem:[%s1 + $0x30] sm:$0xff]
        %v3896 = vld [vmem:[%s1 + $0x38] sm:$0xff]
        %v3897 = vld [vmem:[%s1 + $0x40] sm:$0xff]
        %v3898 = vld [vmem:[%s1 + $0x48] sm:$0xff]
        %v3899 = vld [vmem:[%s1 + $0x50] sm:$0xff]
        %v3900 = vld [vmem:[%s1 + $0x58] sm:$0xff]
        %v3901 = vld [vmem:[%s1 + $0x60] sm:$0xff]
        %v3902 = vld [vmem:[%s1 + $0x68] sm:$0xff]
        %v3903 = vld [vmem:[%s1 + $0x70] sm:$0xff]
        %v3904 = vld [vmem:[%s1 + $0x78] sm:$0xff]
        %v3905 = vld [vmem:[%s1 + $0x80] sm:$0xff]
        %v3906 = vld [vmem:[%s1 + $0x88] sm:$0xff]
        %v3907 = vld [vmem:[%s1 + $0x90] sm:$0xff]
        %v3908 = vld [vmem:[%s1 + $0x98] sm:$0xff]
        %v3909 = vld [vmem:[%s1 + $0xa0] sm:$0xff]
        %v3910 = vld [vmem:[%s1 + $0xa8] sm:$0xff]
        %v3911 = vld [vmem:[%s1 + $0xb0] sm:$0xff]
        %v3912 = vld [vmem:[%s1 + $0xb8] sm:$0xff]
        %v3913 = vld [vmem:[%s1 + $0xc0] sm:$0xff]
        %v3914 = vld [vmem:[%s1 + $0xc8] sm:$0xff]
        %v3915 = vld [vmem:[%s1 + $0xd0] sm:$0xff]
        %v3916 = vld [vmem:[%s1 + $0xd8] sm:$0xff]
        %v3917 = vld [vmem:[%s1 + $0xe0] sm:$0xff]
        %v3918 = vld [vmem:[%s1 + $0xe8] sm:$0xff]
        %v3919 = vld [vmem:[%s1 + $0xf0] sm:$0xff]
        %v3920 = vld [vmem:[%s1 + $0xf8] sm:$0xff]
        %v3921 = vld [vmem:[%s1 + $0x100] sm:$0xff]
        %v3922 = vld [vmem:[%s1 + $0x108] sm:$0xff]
        %v3923 = vld [vmem:[%s1 + $0x110] sm:$0xff]
        %v3924 = vld [vmem:[%s1 + $0x118] sm:$0xff]
        %v3925 = vld [vmem:[%s1 + $0x120] sm:$0xff]
        %v3926 = vld [vmem:[%s1 + $0x128] sm:$0xff]
        %v3927 = vld [vmem:[%s1 + $0x130] sm:$0xff]
        %v3928 = vld [vmem:[%s1 + $0x138] sm:$0xff]
        %v3929 = vld [vmem:[%s1 + $0x140] sm:$0xff]
        %v3930 = vld [vmem:[%s1 + $0x148] sm:$0xff]
        %v3931 = vld [vmem:[%s1 + $0x150] sm:$0xff]
        %v3932 = vld [vmem:[%s1 + $0x158] sm:$0xff]
        %v3933 = vld [vmem:[%s1 + $0x160] sm:$0xff]
        %v3934 = vld [vmem:[%s1 + $0x168] sm:$0xff]
        %v3935 = vld [vmem:[%s1 + $0x170] sm:$0xff]
        %v3936 = vld [vmem:[%s1 + $0x178] sm:$0xff]
        %v3937 = vld [vmem:[%s1 + $0x180] sm:$0xff]
        %v3938 = vld [vmem:[%s1 + $0x188] sm:$0xff]
        %v3939 = vld [vmem:[%s1 + $0x190] sm:$0xff]
        %v3940 = vld [vmem:[%s1 + $0x198] sm:$0xff]
        %v3941 = vld [vmem:[%s1 + $0x1a0] sm:$0xff]
        %v3942 = vld [vmem:[%s1 + $0x1a8] sm:$0xff]
        %v3943 = vld [vmem:[%s1 + $0x1b0] sm:$0xff]
        %v3944 = vld [vmem:[%s1 + $0x1b8] sm:$0xff]
        %v3945 = vld [vmem:[%s1 + $0x1c0] sm:$0xff]
        %v3946 = vld [vmem:[%s1 + $0x1c8] sm:$0xff]
        %v3947 = vld [vmem:[%s1 + $0x1d0] sm:$0xff]
        %v3948 = vld [vmem:[%s1 + $0x1d8] sm:$0xff]
        %v3949 = vld [vmem:[%s1 + $0x1e0] sm:$0xff]
        %v3950 = vld [vmem:[%s1 + $0x1e8] sm:$0xff]
        %v3951 = vld [vmem:[%s1 + $0x1f0] sm:$0xff]
        %v3952 = vld [vmem:[%s1 + $0x1f8] sm:$0xff]
        %v3953 = vld [vmem:[%s1 + $0x200] sm:$0xff]
        %v3954 = vld [vmem:[%s1 + $0x208] sm:$0xff]
        %v3955 = vld [vmem:[%s1 + $0x210] sm:$0xff]
        %v3956 = vld [vmem:[%s1 + $0x218] sm:$0xff]
        %v3957 = vld [vmem:[%s1 + $0x220] sm:$0xff]
        %v3958 = vld [vmem:[%s1 + $0x228] sm:$0xff]
        %v3959 = vld [vmem:[%s1 + $0x230] sm:$0xff]
        %v3960 = vld [vmem:[%s1 + $0x238] sm:$0xff]
        %v3961 = vld [vmem:[%s1 + $0x240] sm:$0xff]
        %v3962 = vld [vmem:[%s1 + $0x248] sm:$0xff]
        %v3963 = vld [vmem:[%s1 + $0x250] sm:$0xff]
        %v3964 = vld [vmem:[%s1 + $0x258] sm:$0xff]
        %v3965 = vld [vmem:[%s1 + $0x260] sm:$0xff]
        %v3966 = vld [vmem:[%s1 + $0x268] sm:$0xff]
        %v3967 = vld [vmem:[%s1 + $0x270] sm:$0xff]
        %v3968 = vld [vmem:[%s1 + $0x278] sm:$0xff]
        %v3969 = vld [vmem:[%s2] sm:$0x1]
        %v3971 = vlaneseq
        %v3972 = vshrl.u32 %v3971, 7
        %v3973 = vsub.s32 0, %v3972
        %v3974 = vrot.slane %v3969, %v3973
        %3976 = vmatprep.subr.mxu0 0.0
        %3977 = vmatpush1.msra.mxu0 %v3889
        %3978 = vmatprep.subr.mxu0 0.0
        %3979 = vmatpush1.msra.mxu0 %v3890
        %3980 = vmatprep.subr.mxu0 0.0
        %3981 = vmatpush1.msra.mxu0 %v3891
        %3982 = vmatprep.subr.mxu0 0.0
        %3983 = vmatpush1.msra.mxu0 %v3892
        %3984 = vmatprep.subr.mxu0 0.0
        %3985 = vmatpush1.msra.mxu0 %v3893
        %3986 = vmatprep.subr.mxu0 0.0
        %3987 = vmatpush1.msra.mxu0 %v3894
        %3988 = vmatprep.subr.mxu0 0.0
        %3989 = vmatpush1.msra.mxu0 %v3895
        %3990 = vmatprep.subr.mxu0 0.0
        %3991 = vmatpush1.msra.mxu0 %v3896
        %3992 = vmatprep.subr.mxu0 0.0
        %3993 = vmatpush1.msra.mxu0 %v3897
        %3994 = vmatprep.subr.mxu0 0.0
        %3995 = vmatpush1.msra.mxu0 %v3898
        %3996 = vmatprep.subr.mxu0 0.0
        %3997 = vmatpush1.msra.mxu0 %v3899
        %3998 = vmatprep.subr.mxu0 0.0
        %3999 = vmatpush1.msra.mxu0 %v3900
        %4000 = vmatprep.subr.mxu0 0.0
        %4001 = vmatpush1.msra.mxu0 %v3901
        %4002 = vmatprep.subr.mxu0 0.0
        %4003 = vmatpush1.msra.mxu0 %v3902
        %4004 = vmatprep.subr.mxu0 0.0
        %4005 = vmatpush1.msra.mxu0 %v3903
        %4006 = vmatprep.subr.mxu0 0.0
        %4007 = vmatpush1.msra.mxu0 %v3904
        %4008 = vmatprep.subr.mxu0 0.0
        %4009 = vmatpush1.msra.mxu0 %v3905
        %4010 = vmatprep.subr.mxu0 0.0
        %4011 = vmatpush1.msra.mxu0 %v3906
        %4012 = vmatprep.subr.mxu0 0.0
        %4013 = vmatpush1.msra.mxu0 %v3907
        %4014 = vmatprep.subr.mxu0 0.0
        %4015 = vmatpush1.msra.mxu0 %v3908
        %4016 = vmatprep.subr.mxu0 0.0
        %4017 = vmatpush1.msra.mxu0 %v3909
        %4018 = vmatprep.subr.mxu0 0.0
        %4019 = vmatpush1.msra.mxu0 %v3910
        %4020 = vmatprep.subr.mxu0 0.0
        %4021 = vmatpush1.msra.mxu0 %v3911
        %4022 = vmatprep.subr.mxu0 0.0
        %4023 = vmatpush1.msra.mxu0 %v3912
        %4024 = vmatprep.subr.mxu0 0.0
        %4025 = vmatpush1.msra.mxu0 %v3913
        %4026 = vmatprep.subr.mxu0 0.0
        %4027 = vmatpush1.msra.mxu0 %v3914
        %4028 = vmatprep.subr.mxu0 0.0
        %4029 = vmatpush1.msra.mxu0 %v3915
        %4030 = vmatprep.subr.mxu0 0.0
        %4031 = vmatpush1.msra.mxu0 %v3916
        %4032 = vmatprep.subr.mxu0 0.0
        %4033 = vmatpush1.msra.mxu0 %v3917
        %4034 = vmatprep.subr.mxu0 0.0
        %4035 = vmatpush1.msra.mxu0 %v3918
        %4036 = vmatprep.subr.mxu0 0.0
        %4037 = vmatpush1.msra.mxu0 %v3919
        %4038 = vmatprep.subr.mxu0 0.0
        %4039 = vmatpush1.msra.mxu0 %v3920
        %4040 = vmatprep.mubr.f32.mxu0 %v3730
        %4041 = vmatmul.mubr.f32.gmra.mrb[0].mxu0 %v3729
        %v4042 = vpop.f32.mrb[0].mxu0
        %v4043 = vadd.f32 %v3974, %v4042
        %v4044 = vpop.f32.mrb[0].mxu0
        %4045 = vmatprep.mubr.f32.mxu0 %v3735
        %4046 = vmatmul.mubr.f32.gmra.mrb[0].mxu0 %v3734
        %v4047 = vpop.f32.mrb[0].mxu0
        %v4048 = vadd.f32 %v3974, %v4047
        %v4049 = vpop.f32.mrb[0].mxu0
        %4050 = vmatprep.mubr.f32.mxu0 %v3740
        %4051 = vmatmul.mubr.f32.gmra.mrb[0].mxu0 %v3739
        %v4052 = vpop.f32.mrb[0].mxu0
        %v4053 = vadd.f32 %v3974, %v4052
        %v4054 = vpop.f32.mrb[0].mxu0
        %4055 = vmatprep.mubr.f32.mxu0 %v3745
        %4056 = vmatmul.mubr.f32.gmra.mrb[0].mxu0 %v3744
        %v4057 = vpop.f32.mrb[0].mxu0
        %v4058 = vadd.f32 %v3974, %v4057
        %v4059 = vpop.f32.mrb[0].mxu0
        %4060 = vmatprep.mubr.f32.mxu0 %v3750
        %4061 = vmatmul.mubr.f32.gmra.mrb[0].mxu0 %v3749
        %v4062 = vpop.f32.mrb[0].mxu0
        %v4063 = vadd.f32 %v3974, %v4062
        %v4064 = vpop.f32.mrb[0].mxu0
        %4065 = vmatprep.mubr.f32.mxu0 %v3755
        %4066 = vmatmul.mubr.f32.gmra.mrb[0].mxu0 %v3754
        %v4067 = vpop.f32.mrb[0].mxu0
        %v4068 = vadd.f32 %v3974, %v4067
        %v4069 = vpop.f32.mrb[0].mxu0
        %4070 = vmatprep.mubr.f32.mxu0 %v3760
        %4071 = vmatmul.mubr.f32.gmra.mrb[0].mxu0 %v3759
        %v4072 = vpop.f32.mrb[0].mxu0
        %v4073 = vadd.f32 %v3974, %v4072
        %v4074 = vpop.f32.mrb[0].mxu0
        %4075 = vmatprep.mubr.f32.mxu0 %v3765
        %4076 = vmatmul.mubr.f32.gmra.mrb[0].mxu0 %v3764
        %v4077 = vpop.f32.mrb[0].mxu0
        %v4078 = vadd.f32 %v3974, %v4077
        %v4079 = vpop.f32.mrb[0].mxu0
        %4080 = vmatprep.mubr.f32.mxu0 %v3770
        %4081 = vmatmul.mubr.f32.gmra.mrb[0].mxu0 %v3769
        %v4082 = vpop.f32.mrb[0].mxu0
        %v4083 = vadd.f32 %v3974, %v4082
        %v4084 = vpop.f32.mrb[0].mxu0
        %4085 = vmatprep.mubr.f32.mxu0 %v3775
        %4086 = vmatmul.mubr.f32.gmra.mrb[0].mxu0 %v3774
        %v4087 = vpop.f32.mrb[0].mxu0
        %v4088 = vadd.f32 %v3974, %v4087
        %v4089 = vpop.f32.mrb[0].mxu0
        %4090 = vmatprep.mubr.f32.mxu0 %v3780
        %4091 = vmatmul.mubr.f32.gmra.mrb[0].mxu0 %v3779
        %v4092 = vpop.f32.mrb[0].mxu0
        %v4093 = vadd.f32 %v3974, %v4092
        %v4094 = vpop.f32.mrb[0].mxu0
        %4095 = vmatprep.mubr.f32.mxu0 %v3785
        %4096 = vmatmul.mubr.f32.gmra.mrb[0].mxu0 %v3784
        %v4097 = vpop.f32.mrb[0].mxu0
        %v4098 = vadd.f32 %v3974, %v4097
        %v4099 = vpop.f32.mrb[0].mxu0
        %4100 = vmatprep.mubr.f32.mxu0 %v3790
        %4101 = vmatmul.mubr.f32.gmra.mrb[0].mxu0 %v3789
        %v4102 = vpop.f32.mrb[0].mxu0
        %v4103 = vadd.f32 %v3974, %v4102
        %v4104 = vpop.f32.mrb[0].mxu0
        %4105 = vmatprep.mubr.f32.mxu0 %v3795
        %4106 = vmatmul.mubr.f32.gmra.mrb[0].mxu0 %v3794
        %v4107 = vpop.f32.mrb[0].mxu0
        %v4108 = vadd.f32 %v3974, %v4107
        %v4109 = vpop.f32.mrb[0].mxu0
        %4110 = vmatprep.mubr.f32.mxu0 %v3800
        %4111 = vmatmul.mubr.f32.gmra.mrb[0].mxu0 %v3799
        %v4112 = vpop.f32.mrb[0].mxu0
        %v4113 = vadd.f32 %v3974, %v4112
        %v4114 = vpop.f32.mrb[0].mxu0
        %4115 = vmatprep.mubr.f32.mxu0 %v3805
        %4116 = vmatmul.mubr.f32.gmra.mrb[0].mxu0 %v3804
        %v4117 = vpop.f32.mrb[0].mxu0
        %v4118 = vadd.f32 %v3974, %v4117
        %v4119 = vpop.f32.mrb[0].mxu0
        %4120 = vmatprep.mubr.f32.mxu0 %v3810
        %4121 = vmatmul.mubr.f32.gmra.mrb[0].mxu0 %v3809
        %v4122 = vpop.f32.mrb[0].mxu0
        %v4123 = vadd.f32 %v3974, %v4122
        %v4124 = vpop.f32.mrb[0].mxu0
        %4125 = vmatprep.mubr.f32.mxu0 %v3815
        %4126 = vmatmul.mubr.f32.gmra.mrb[0].mxu0 %v3814
        %v4127 = vpop.f32.mrb[0].mxu0
        %v4128 = vadd.f32 %v3974, %v4127
        %v4129 = vpop.f32.mrb[0].mxu0
        %4130 = vmatprep.mubr.f32.mxu0 %v3820
        %4131 = vmatmul.mubr.f32.gmra.mrb[0].mxu0 %v3819
        %v4132 = vpop.f32.mrb[0].mxu0
        %v4133 = vadd.f32 %v3974, %v4132
        %v4134 = vpop.f32.mrb[0].mxu0
        %4135 = vmatprep.mubr.f32.mxu0 %v3825
        %4136 = vmatmul.mubr.f32.gmra.mrb[0].mxu0 %v3824
        %v4137 = vpop.f32.mrb[0].mxu0
        %v4138 = vadd.f32 %v3974, %v4137
        %v4139 = vpop.f32.mrb[0].mxu0
        %4140 = vmatprep.mubr.f32.mxu0 %v3830
        %4141 = vmatmul.mubr.f32.gmra.mrb[0].mxu0 %v3829
        %v4142 = vpop.f32.mrb[0].mxu0
        %v4143 = vadd.f32 %v3974, %v4142
        %v4144 = vpop.f32.mrb[0].mxu0
        %4145 = vmatprep.mubr.f32.mxu0 %v3835
        %4146 = vmatmul.mubr.f32.gmra.mrb[0].mxu0 %v3834
        %v4147 = vpop.f32.mrb[0].mxu0
        %v4148 = vadd.f32 %v3974, %v4147
        %v4149 = vpop.f32.mrb[0].mxu0
        %4150 = vmatprep.mubr.f32.mxu0 %v3840
        %4151 = vmatmul.mubr.f32.gmra.mrb[0].mxu0 %v3839
        %v4152 = vpop.f32.mrb[0].mxu0
        %v4153 = vadd.f32 %v3974, %v4152
        %v4154 = vpop.f32.mrb[0].mxu0
        %4155 = vmatprep.mubr.f32.mxu0 %v3845
        %4156 = vmatmul.mubr.f32.gmra.mrb[0].mxu0 %v3844
        %v4157 = vpop.f32.mrb[0].mxu0
        %v4158 = vadd.f32 %v3974, %v4157
        %v4159 = vpop.f32.mrb[0].mxu0
        %4160 = vmatprep.mubr.f32.mxu0 %v3850
        %4161 = vmatmul.mubr.f32.gmra.mrb[0].mxu0 %v3849
        %v4162 = vpop.f32.mrb[0].mxu0
        %v4163 = vadd.f32 %v3974, %v4162
        %v4164 = vpop.f32.mrb[0].mxu0
        %4165 = vmatprep.mubr.f32.mxu0 %v3855
        %4166 = vmatmul.mubr.f32.gmra.mrb[0].mxu0 %v3854
        %v4167 = vpop.f32.mrb[0].mxu0
        %v4168 = vadd.f32 %v3974, %v4167
        %v4169 = vpop.f32.mrb[0].mxu0
        %4170 = vmatprep.mubr.f32.mxu0 %v3860
        %4171 = vmatmul.mubr.f32.gmra.mrb[0].mxu0 %v3859
        %v4172 = vpop.f32.mrb[0].mxu0
        %v4173 = vadd.f32 %v3974, %v4172
        %v4174 = vpop.f32.mrb[0].mxu0
        %4175 = vmatprep.mubr.f32.mxu0 %v3865
        %4176 = vmatmul.mubr.f32.gmra.mrb[0].mxu0 %v3864
        %v4177 = vpop.f32.mrb[0].mxu0
        %v4178 = vadd.f32 %v3974, %v4177
        %v4179 = vpop.f32.mrb[0].mxu0
        %4180 = vmatprep.mubr.f32.mxu0 %v3870
        %4181 = vmatmul.mubr.f32.gmra.mrb[0].mxu0 %v3869
        %v4182 = vpop.f32.mrb[0].mxu0
        %v4183 = vadd.f32 %v3974, %v4182
        %v4184 = vpop.f32.mrb[0].mxu0
        %4185 = vmatprep.mubr.f32.mxu0 %v3875
        %4186 = vmatmul.mubr.f32.gmra.mrb[0].mxu0 %v3874
        %v4187 = vpop.f32.mrb[0].mxu0
        %v4188 = vadd.f32 %v3974, %v4187
        %v4189 = vpop.f32.mrb[0].mxu0
        %4190 = vmatprep.mubr.f32.mxu0 %v3880
        %4191 = vmatmul.mubr.f32.gmra.mrb[0].mxu0 %v3879
        %v4192 = vpop.f32.mrb[0].mxu0
        %v4193 = vadd.f32 %v3974, %v4192
        %v4194 = vpop.f32.mrb[0].mxu0
        %4195 = vmatprep.mubr.f32.mxu0 %v3885
        %4196 = vmatmul.mubr.f32.gmra.mrb[0].mxu0 %v3884
        %v4197 = vpop.f32.mrb[0].mxu0
        %v4198 = vadd.f32 %v3974, %v4197
        %v4199 = vpop.f32.mrb[0].mxu0
        %4200 = vdwg.mxu0
        %4201 = vmatprep.subr.mxu0 0.0
        %4202 = vmatpush1.msra.mxu0 %v3921
        %4203 = vmatprep.subr.mxu0 0.0
        %4204 = vmatpush1.msra.mxu0 %v3922
        %4205 = vmatprep.subr.mxu0 0.0
        %4206 = vmatpush1.msra.mxu0 %v3923
        %4207 = vmatprep.subr.mxu0 0.0
        %4208 = vmatpush1.msra.mxu0 %v3924
        %4209 = vmatprep.subr.mxu0 0.0
        %4210 = vmatpush1.msra.mxu0 %v3925
        %4211 = vmatprep.subr.mxu0 0.0
        %4212 = vmatpush1.msra.mxu0 %v3926
        %4213 = vmatprep.subr.mxu0 0.0
        %4214 = vmatpush1.msra.mxu0 %v3927
        %4215 = vmatprep.subr.mxu0 0.0
        %4216 = vmatpush1.msra.mxu0 %v3928
        %4217 = vmatprep.subr.mxu0 0.0
        %4218 = vmatpush1.msra.mxu0 %v3929
        %4219 = vmatprep.subr.mxu0 0.0
        %4220 = vmatpush1.msra.mxu0 %v3930
        %4221 = vmatprep.subr.mxu0 0.0
        %4222 = vmatpush1.msra.mxu0 %v3931
        %4223 = vmatprep.subr.mxu0 0.0
        %4224 = vmatpush1.msra.mxu0 %v3932
        %4225 = vmatprep.subr.mxu0 0.0
        %4226 = vmatpush1.msra.mxu0 %v3933
        %4227 = vmatprep.subr.mxu0 0.0
        %4228 = vmatpush1.msra.mxu0 %v3934
        %4229 = vmatprep.subr.mxu0 0.0
        %4230 = vmatpush1.msra.mxu0 %v3935
        %4231 = vmatprep.subr.mxu0 0.0
        %4232 = vmatpush1.msra.mxu0 %v3936
        %4233 = vmatprep.subr.mxu0 0.0
        %4234 = vmatpush1.msra.mxu0 %v3937
        %4235 = vmatprep.subr.mxu0 0.0
        %4236 = vmatpush1.msra.mxu0 %v3938
        %4237 = vmatprep.subr.mxu0 0.0
        %4238 = vmatpush1.msra.mxu0 %v3939
        %4239 = vmatprep.subr.mxu0 0.0
        %4240 = vmatpush1.msra.mxu0 %v3940
        %4241 = vmatprep.subr.mxu0 0.0
        %4242 = vmatpush1.msra.mxu0 %v3941
        %4243 = vmatprep.subr.mxu0 0.0
        %4244 = vmatpush1.msra.mxu0 %v3942
        %4245 = vmatprep.subr.mxu0 0.0
        %4246 = vmatpush1.msra.mxu0 %v3943
        %4247 = vmatprep.subr.mxu0 0.0
        %4248 = vmatpush1.msra.mxu0 %v3944
        %4249 = vmatprep.subr.mxu0 0.0
        %4250 = vmatpush1.msra.mxu0 %v3945
        %4251 = vmatprep.subr.mxu0 0.0
        %4252 = vmatpush1.msra.mxu0 %v3946
        %4253 = vmatprep.subr.mxu0 0.0
        %4254 = vmatpush1.msra.mxu0 %v3947
        %4255 = vmatprep.subr.mxu0 0.0
        %4256 = vmatpush1.msra.mxu0 %v3948
        %4257 = vmatprep.subr.mxu0 0.0
        %4258 = vmatpush1.msra.mxu0 %v3949
        %4259 = vmatprep.subr.mxu0 0.0
        %4260 = vmatpush1.msra.mxu0 %v3950
        %4261 = vmatprep.subr.mxu0 0.0
        %4262 = vmatpush1.msra.mxu0 %v3951
        %4263 = vmatprep.subr.mxu0 0.0
        %4264 = vmatpush1.msra.mxu0 %v3952
        %4265 = vmatprep.mubr.f32.mxu0 %v3732
        %4266 = vmatmul.mubr.f32.gmra.mrb[0].mxu0 %v3731
        %v4267 = vpop.f32.mrb[0].mxu0
        %v4268 = vadd.f32 %v4043, %v4267
        %v4269 = vpop.f32.mrb[0].mxu0
        %4270 = vmatprep.mubr.f32.mxu0 %v3737
        %4271 = vmatmul.mubr.f32.gmra.mrb[0].mxu0 %v3736
        %v4272 = vpop.f32.mrb[0].mxu0
        %v4273 = vadd.f32 %v4048, %v4272
        %v4274 = vpop.f32.mrb[0].mxu0
        %4275 = vmatprep.mubr.f32.mxu0 %v3742
        %4276 = vmatmul.mubr.f32.gmra.mrb[0].mxu0 %v3741
        %v4277 = vpop.f32.mrb[0].mxu0
        %v4278 = vadd.f32 %v4053, %v4277
        %v4279 = vpop.f32.mrb[0].mxu0
        %4280 = vmatprep.mubr.f32.mxu0 %v3747
        %4281 = vmatmul.mubr.f32.gmra.mrb[0].mxu0 %v3746
        %v4282 = vpop.f32.mrb[0].mxu0
        %v4283 = vadd.f32 %v4058, %v4282
        %v4284 = vpop.f32.mrb[0].mxu0
        %4285 = vmatprep.mubr.f32.mxu0 %v3752
        %4286 = vmatmul.mubr.f32.gmra.mrb[0].mxu0 %v3751
        %v4287 = vpop.f32.mrb[0].mxu0
        %v4288 = vadd.f32 %v4063, %v4287
        %v4289 = vpop.f32.mrb[0].mxu0
        %4290 = vmatprep.mubr.f32.mxu0 %v3757
        %4291 = vmatmul.mubr.f32.gmra.mrb[0].mxu0 %v3756
        %v4292 = vpop.f32.mrb[0].mxu0
        %v4293 = vadd.f32 %v4068, %v4292
        %v4294 = vpop.f32.mrb[0].mxu0
        %4295 = vmatprep.mubr.f32.mxu0 %v3762
        %4296 = vmatmul.mubr.f32.gmra.mrb[0].mxu0 %v3761
        %v4297 = vpop.f32.mrb[0].mxu0
        %v4298 = vadd.f32 %v4073, %v4297
        %v4299 = vpop.f32.mrb[0].mxu0
        %4300 = vmatprep.mubr.f32.mxu0 %v3767
        %4301 = vmatmul.mubr.f32.gmra.mrb[0].mxu0 %v3766
        %v4302 = vpop.f32.mrb[0].mxu0
        %v4303 = vadd.f32 %v4078, %v4302
        %v4304 = vpop.f32.mrb[0].mxu0
        %4305 = vmatprep.mubr.f32.mxu0 %v3772
        %4306 = vmatmul.mubr.f32.gmra.mrb[0].mxu0 %v3771
        %v4307 = vpop.f32.mrb[0].mxu0
        %v4308 = vadd.f32 %v4083, %v4307
        %v4309 = vpop.f32.mrb[0].mxu0
        %4310 = vmatprep.mubr.f32.mxu0 %v3777
        %4311 = vmatmul.mubr.f32.gmra.mrb[0].mxu0 %v3776
        %v4312 = vpop.f32.mrb[0].mxu0
        %v4313 = vadd.f32 %v4088, %v4312
        %v4314 = vpop.f32.mrb[0].mxu0
        %4315 = vmatprep.mubr.f32.mxu0 %v3782
        %4316 = vmatmul.mubr.f32.gmra.mrb[0].mxu0 %v3781
        %v4317 = vpop.f32.mrb[0].mxu0
        %v4318 = vadd.f32 %v4093, %v4317
        %v4319 = vpop.f32.mrb[0].mxu0
        %4320 = vmatprep.mubr.f32.mxu0 %v3787
        %4321 = vmatmul.mubr.f32.gmra.mrb[0].mxu0 %v3786
        %v4322 = vpop.f32.mrb[0].mxu0
        %v4323 = vadd.f32 %v4098, %v4322
        %v4324 = vpop.f32.mrb[0].mxu0
        %4325 = vmatprep.mubr.f32.mxu0 %v3792
        %4326 = vmatmul.mubr.f32.gmra.mrb[0].mxu0 %v3791
        %v4327 = vpop.f32.mrb[0].mxu0
        %v4328 = vadd.f32 %v4103, %v4327
        %v4329 = vpop.f32.mrb[0].mxu0
        %4330 = vmatprep.mubr.f32.mxu0 %v3797
        %4331 = vmatmul.mubr.f32.gmra.mrb[0].mxu0 %v3796
        %v4332 = vpop.f32.mrb[0].mxu0
        %v4333 = vadd.f32 %v4108, %v4332
        %v4334 = vpop.f32.mrb[0].mxu0
        %4335 = vmatprep.mubr.f32.mxu0 %v3802
        %4336 = vmatmul.mubr.f32.gmra.mrb[0].mxu0 %v3801
        %v4337 = vpop.f32.mrb[0].mxu0
        %v4338 = vadd.f32 %v4113, %v4337
        %v4339 = vpop.f32.mrb[0].mxu0
        %4340 = vmatprep.mubr.f32.mxu0 %v3807
        %4341 = vmatmul.mubr.f32.gmra.mrb[0].mxu0 %v3806
        %v4342 = vpop.f32.mrb[0].mxu0
        %v4343 = vadd.f32 %v4118, %v4342
        %v4344 = vpop.f32.mrb[0].mxu0
        %4345 = vmatprep.mubr.f32.mxu0 %v3812
        %4346 = vmatmul.mubr.f32.gmra.mrb[0].mxu0 %v3811
        %v4347 = vpop.f32.mrb[0].mxu0
        %v4348 = vadd.f32 %v4123, %v4347
        %v4349 = vpop.f32.mrb[0].mxu0
        %4350 = vmatprep.mubr.f32.mxu0 %v3817
        %4351 = vmatmul.mubr.f32.gmra.mrb[0].mxu0 %v3816
        %v4352 = vpop.f32.mrb[0].mxu0
        %v4353 = vadd.f32 %v4128, %v4352
        %v4354 = vpop.f32.mrb[0].mxu0
        %4355 = vmatprep.mubr.f32.mxu0 %v3822
        %4356 = vmatmul.mubr.f32.gmra.mrb[0].mxu0 %v3821
        %v4357 = vpop.f32.mrb[0].mxu0
        %v4358 = vadd.f32 %v4133, %v4357
        %v4359 = vpop.f32.mrb[0].mxu0
        %4360 = vmatprep.mubr.f32.mxu0 %v3827
        %4361 = vmatmul.mubr.f32.gmra.mrb[0].mxu0 %v3826
        %v4362 = vpop.f32.mrb[0].mxu0
        %v4363 = vadd.f32 %v4138, %v4362
        %v4364 = vpop.f32.mrb[0].mxu0
        %4365 = vmatprep.mubr.f32.mxu0 %v3832
        %4366 = vmatmul.mubr.f32.gmra.mrb[0].mxu0 %v3831
        %v4367 = vpop.f32.mrb[0].mxu0
        %v4368 = vadd.f32 %v4143, %v4367
        %v4369 = vpop.f32.mrb[0].mxu0
        %4370 = vmatprep.mubr.f32.mxu0 %v3837
        %4371 = vmatmul.mubr.f32.gmra.mrb[0].mxu0 %v3836
        %v4372 = vpop.f32.mrb[0].mxu0
        %v4373 = vadd.f32 %v4148, %v4372
        %v4374 = vpop.f32.mrb[0].mxu0
        %4375 = vmatprep.mubr.f32.mxu0 %v3842
        %4376 = vmatmul.mubr.f32.gmra.mrb[0].mxu0 %v3841
        %v4377 = vpop.f32.mrb[0].mxu0
        %v4378 = vadd.f32 %v4153, %v4377
        %v4379 = vpop.f32.mrb[0].mxu0
        %4380 = vmatprep.mubr.f32.mxu0 %v3847
        %4381 = vmatmul.mubr.f32.gmra.mrb[0].mxu0 %v3846
        %v4382 = vpop.f32.mrb[0].mxu0
        %v4383 = vadd.f32 %v4158, %v4382
        %v4384 = vpop.f32.mrb[0].mxu0
        %4385 = vmatprep.mubr.f32.mxu0 %v3852
        %4386 = vmatmul.mubr.f32.gmra.mrb[0].mxu0 %v3851
        %v4387 = vpop.f32.mrb[0].mxu0
        %v4388 = vadd.f32 %v4163, %v4387
        %v4389 = vpop.f32.mrb[0].mxu0
        %4390 = vmatprep.mubr.f32.mxu0 %v3857
        %4391 = vmatmul.mubr.f32.gmra.mrb[0].mxu0 %v3856
        %v4392 = vpop.f32.mrb[0].mxu0
        %v4393 = vadd.f32 %v4168, %v4392
        %v4394 = vpop.f32.mrb[0].mxu0
        %4395 = vmatprep.mubr.f32.mxu0 %v3862
        %4396 = vmatmul.mubr.f32.gmra.mrb[0].mxu0 %v3861
        %v4397 = vpop.f32.mrb[0].mxu0
        %v4398 = vadd.f32 %v4173, %v4397
        %v4399 = vpop.f32.mrb[0].mxu0
        %4400 = vmatprep.mubr.f32.mxu0 %v3867
        %4401 = vmatmul.mubr.f32.gmra.mrb[0].mxu0 %v3866
        %v4402 = vpop.f32.mrb[0].mxu0
        %v4403 = vadd.f32 %v4178, %v4402
        %v4404 = vpop.f32.mrb[0].mxu0
        %4405 = vmatprep.mubr.f32.mxu0 %v3872
        %4406 = vmatmul.mubr.f32.gmra.mrb[0].mxu0 %v3871
        %v4407 = vpop.f32.mrb[0].mxu0
        %v4408 = vadd.f32 %v4183, %v4407
        %v4409 = vpop.f32.mrb[0].mxu0
        %4410 = vmatprep.mubr.f32.mxu0 %v3877
        %4411 = vmatmul.mubr.f32.gmra.mrb[0].mxu0 %v3876
        %v4412 = vpop.f32.mrb[0].mxu0
        %v4413 = vadd.f32 %v4188, %v4412
        %v4414 = vpop.f32.mrb[0].mxu0
        %4415 = vmatprep.mubr.f32.mxu0 %v3882
        %4416 = vmatmul.mubr.f32.gmra.mrb[0].mxu0 %v3881
        %v4417 = vpop.f32.mrb[0].mxu0
        %v4418 = vadd.f32 %v4193, %v4417
        %v4419 = vpop.f32.mrb[0].mxu0
        %4420 = vmatprep.mubr.f32.mxu0 %v3887
        %4421 = vmatmul.mubr.f32.gmra.mrb[0].mxu0 %v3886
        %v4422 = vpop.f32.mrb[0].mxu0
        %v4423 = vadd.f32 %v4198, %v4422
        %v4424 = vpop.f32.mrb[0].mxu0
        %4425 = vdwg.mxu0
        %4426 = vmatprep.subr.mxu0 0.0
        %4427 = vmatpush1.msra.mxu0 %v3953
        %4428 = vmatprep.subr.mxu0 0.0
        %4429 = vmatpush1.msra.mxu0 %v3954
        %4430 = vmatprep.subr.mxu0 0.0
        %4431 = vmatpush1.msra.mxu0 %v3955
        %4432 = vmatprep.subr.mxu0 0.0
        %4433 = vmatpush1.msra.mxu0 %v3956
        %4434 = vmatprep.subr.mxu0 0.0
        %4435 = vmatpush1.msra.mxu0 %v3957
        %4436 = vmatprep.subr.mxu0 0.0
        %4437 = vmatpush1.msra.mxu0 %v3958
        %4438 = vmatprep.subr.mxu0 0.0
        %4439 = vmatpush1.msra.mxu0 %v3959
        %4440 = vmatprep.subr.mxu0 0.0
        %4441 = vmatpush1.msra.mxu0 %v3960
        %4442 = vmatprep.subr.mxu0 0.0
        %4443 = vmatpush1.msra.mxu0 %v3961
        %4444 = vmatprep.subr.mxu0 0.0
        %4445 = vmatpush1.msra.mxu0 %v3962
        %4446 = vmatprep.subr.mxu0 0.0
        %4447 = vmatpush1.msra.mxu0 %v3963
        %4448 = vmatprep.subr.mxu0 0.0
        %4449 = vmatpush1.msra.mxu0 %v3964
        %4450 = vmatprep.subr.mxu0 0.0
        %4451 = vmatpush1.msra.mxu0 %v3965
        %4452 = vmatprep.subr.mxu0 0.0
        %4453 = vmatpush1.msra.mxu0 %v3966
        %4454 = vmatprep.subr.mxu0 0.0
        %4455 = vmatpush1.msra.mxu0 %v3967
        %4456 = vmatprep.subr.mxu0 0.0
        %4457 = vmatpush1.msra.mxu0 %v3968
        %4458 = vmatprep.subr.mxu0 0.0
        %4459 = vmatpush1.msra.mxu0 0.0
        %4460 = vmatprep.subr.mxu0 0.0
        %4461 = vmatpush1.msra.mxu0 0.0
        %4462 = vmatprep.subr.mxu0 0.0
        %4463 = vmatpush1.msra.mxu0 0.0
        %4464 = vmatprep.subr.mxu0 0.0
        %4465 = vmatpush1.msra.mxu0 0.0
        %4466 = vmatprep.subr.mxu0 0.0
        %4467 = vmatpush1.msra.mxu0 0.0
        %4468 = vmatprep.subr.mxu0 0.0
        %4469 = vmatpush1.msra.mxu0 0.0
        %4470 = vmatprep.subr.mxu0 0.0
        %4471 = vmatpush1.msra.mxu0 0.0
        %4472 = vmatprep.subr.mxu0 0.0
        %4473 = vmatpush1.msra.mxu0 0.0
        %4474 = vmatprep.subr.mxu0 0.0
        %4475 = vmatpush1.msra.mxu0 0.0
        %4476 = vmatprep.subr.mxu0 0.0
        %4477 = vmatpush1.msra.mxu0 0.0
        %4478 = vmatprep.subr.mxu0 0.0
        %4479 = vmatpush1.msra.mxu0 0.0
        %4480 = vmatprep.subr.mxu0 0.0
        %4481 = vmatpush1.msra.mxu0 0.0
        %4482 = vmatprep.subr.mxu0 0.0
        %4483 = vmatpush1.msra.mxu0 0.0
        %4484 = vmatprep.subr.mxu0 0.0
        %4485 = vmatpush1.msra.mxu0 0.0
        %4486 = vmatprep.subr.mxu0 0.0
        %4487 = vmatpush1.msra.mxu0 0.0
        %4488 = vmatprep.subr.mxu0 0.0
        %4489 = vmatpush1.msra.mxu0 0.0
        %4490 = vmatprep.mubr.f32.mxu0 0.0
        %4491 = vmatmul.mubr.f32.gmra.mrb[0].mxu0 %v3733
        %v4492 = vpop.f32.mrb[0].mxu0
        %v4493 = vadd.f32 %v4268, %v4492
        %v4494 = vpop.f32.mrb[0].mxu0
        %4495 = vmatprep.mubr.f32.mxu0 0.0
        %4496 = vmatmul.mubr.f32.gmra.mrb[0].mxu0 %v3738
        %v4497 = vpop.f32.mrb[0].mxu0
        %v4498 = vadd.f32 %v4273, %v4497
        %v4499 = vpop.f32.mrb[0].mxu0
        %4500 = vmatprep.mubr.f32.mxu0 0.0
        %4501 = vmatmul.mubr.f32.gmra.mrb[0].mxu0 %v3743
        %v4502 = vpop.f32.mrb[0].mxu0
        %v4503 = vadd.f32 %v4278, %v4502
        %v4504 = vpop.f32.mrb[0].mxu0
        %4505 = vmatprep.mubr.f32.mxu0 0.0
        %4506 = vmatmul.mubr.f32.gmra.mrb[0].mxu0 %v3748
        %v4507 = vpop.f32.mrb[0].mxu0
        %v4508 = vadd.f32 %v4283, %v4507
        %v4509 = vpop.f32.mrb[0].mxu0
        %4510 = vmatprep.mubr.f32.mxu0 0.0
        %4511 = vmatmul.mubr.f32.gmra.mrb[0].mxu0 %v3753
        %v4512 = vpop.f32.mrb[0].mxu0
        %v4513 = vadd.f32 %v4288, %v4512
        %v4514 = vpop.f32.mrb[0].mxu0
        %4515 = vmatprep.mubr.f32.mxu0 0.0
        %4516 = vmatmul.mubr.f32.gmra.mrb[0].mxu0 %v3758
        %v4517 = vpop.f32.mrb[0].mxu0
        %v4518 = vadd.f32 %v4293, %v4517
        %v4519 = vpop.f32.mrb[0].mxu0
        %4520 = vmatprep.mubr.f32.mxu0 0.0
        %4521 = vmatmul.mubr.f32.gmra.mrb[0].mxu0 %v3763
        %v4522 = vpop.f32.mrb[0].mxu0
        %v4523 = vadd.f32 %v4298, %v4522
        %v4524 = vpop.f32.mrb[0].mxu0
        %4525 = vmatprep.mubr.f32.mxu0 0.0
        %4526 = vmatmul.mubr.f32.gmra.mrb[0].mxu0 %v3768
        %v4527 = vpop.f32.mrb[0].mxu0
        %v4528 = vadd.f32 %v4303, %v4527
        %v4529 = vpop.f32.mrb[0].mxu0
        %4530 = vmatprep.mubr.f32.mxu0 0.0
        %4531 = vmatmul.mubr.f32.gmra.mrb[0].mxu0 %v3773
        %v4532 = vpop.f32.mrb[0].mxu0
        %v4533 = vadd.f32 %v4308, %v4532
        %v4534 = vpop.f32.mrb[0].mxu0
        %4535 = vmatprep.mubr.f32.mxu0 0.0
        %4536 = vmatmul.mubr.f32.gmra.mrb[0].mxu0 %v3778
        %v4537 = vpop.f32.mrb[0].mxu0
        %v4538 = vadd.f32 %v4313, %v4537
        %v4539 = vpop.f32.mrb[0].mxu0
        %4540 = vmatprep.mubr.f32.mxu0 0.0
        %4541 = vmatmul.mubr.f32.gmra.mrb[0].mxu0 %v3783
        %v4542 = vpop.f32.mrb[0].mxu0
        %v4543 = vadd.f32 %v4318, %v4542
        %v4544 = vpop.f32.mrb[0].mxu0
        %4545 = vmatprep.mubr.f32.mxu0 0.0
        %4546 = vmatmul.mubr.f32.gmra.mrb[0].mxu0 %v3788
        %v4547 = vpop.f32.mrb[0].mxu0
        %v4548 = vadd.f32 %v4323, %v4547
        %v4549 = vpop.f32.mrb[0].mxu0
        %4550 = vmatprep.mubr.f32.mxu0 0.0
        %4551 = vmatmul.mubr.f32.gmra.mrb[0].mxu0 %v3793
        %v4552 = vpop.f32.mrb[0].mxu0
        %v4553 = vadd.f32 %v4328, %v4552
        %v4554 = vpop.f32.mrb[0].mxu0
        %4555 = vmatprep.mubr.f32.mxu0 0.0
        %4556 = vmatmul.mubr.f32.gmra.mrb[0].mxu0 %v3798
        %v4557 = vpop.f32.mrb[0].mxu0
        %v4558 = vadd.f32 %v4333, %v4557
        %v4559 = vpop.f32.mrb[0].mxu0
        %4560 = vmatprep.mubr.f32.mxu0 0.0
        %4561 = vmatmul.mubr.f32.gmra.mrb[0].mxu0 %v3803
        %v4562 = vpop.f32.mrb[0].mxu0
        %v4563 = vadd.f32 %v4338, %v4562
        %v4564 = vpop.f32.mrb[0].mxu0
        %4565 = vmatprep.mubr.f32.mxu0 0.0
        %4566 = vmatmul.mubr.f32.gmra.mrb[0].mxu0 %v3808
        %v4567 = vpop.f32.mrb[0].mxu0
        %v4568 = vadd.f32 %v4343, %v4567
        %v4569 = vpop.f32.mrb[0].mxu0
        %4570 = vmatprep.mubr.f32.mxu0 0.0
        %4571 = vmatmul.mubr.f32.gmra.mrb[0].mxu0 %v3813
        %v4572 = vpop.f32.mrb[0].mxu0
        %v4573 = vadd.f32 %v4348, %v4572
        %v4574 = vpop.f32.mrb[0].mxu0
        %4575 = vmatprep.mubr.f32.mxu0 0.0
        %4576 = vmatmul.mubr.f32.gmra.mrb[0].mxu0 %v3818
        %v4577 = vpop.f32.mrb[0].mxu0
        %v4578 = vadd.f32 %v4353, %v4577
        %v4579 = vpop.f32.mrb[0].mxu0
        %4580 = vmatprep.mubr.f32.mxu0 0.0
        %4581 = vmatmul.mubr.f32.gmra.mrb[0].mxu0 %v3823
        %v4582 = vpop.f32.mrb[0].mxu0
        %v4583 = vadd.f32 %v4358, %v4582
        %v4584 = vpop.f32.mrb[0].mxu0
        %4585 = vmatprep.mubr.f32.mxu0 0.0
        %4586 = vmatmul.mubr.f32.gmra.mrb[0].mxu0 %v3828
        %v4587 = vpop.f32.mrb[0].mxu0
        %v4588 = vadd.f32 %v4363, %v4587
        %v4589 = vpop.f32.mrb[0].mxu0
        %4590 = vmatprep.mubr.f32.mxu0 0.0
        %4591 = vmatmul.mubr.f32.gmra.mrb[0].mxu0 %v3833
        %v4592 = vpop.f32.mrb[0].mxu0
        %v4593 = vadd.f32 %v4368, %v4592
        %v4594 = vpop.f32.mrb[0].mxu0
        %4595 = vmatprep.mubr.f32.mxu0 0.0
        %4596 = vmatmul.mubr.f32.gmra.mrb[0].mxu0 %v3838
        %v4597 = vpop.f32.mrb[0].mxu0
        %v4598 = vadd.f32 %v4373, %v4597
        %v4599 = vpop.f32.mrb[0].mxu0
        %4600 = vmatprep.mubr.f32.mxu0 0.0
        %4601 = vmatmul.mubr.f32.gmra.mrb[0].mxu0 %v3843
        %v4602 = vpop.f32.mrb[0].mxu0
        %v4603 = vadd.f32 %v4378, %v4602
        %v4604 = vpop.f32.mrb[0].mxu0
        %4605 = vmatprep.mubr.f32.mxu0 0.0
        %4606 = vmatmul.mubr.f32.gmra.mrb[0].mxu0 %v3848
        %v4607 = vpop.f32.mrb[0].mxu0
        %v4608 = vadd.f32 %v4383, %v4607
        %v4609 = vpop.f32.mrb[0].mxu0
        %4610 = vmatprep.mubr.f32.mxu0 0.0
        %4611 = vmatmul.mubr.f32.gmra.mrb[0].mxu0 %v3853
        %v4612 = vpop.f32.mrb[0].mxu0
        %v4613 = vadd.f32 %v4388, %v4612
        %v4614 = vpop.f32.mrb[0].mxu0
        %4615 = vmatprep.mubr.f32.mxu0 0.0
        %4616 = vmatmul.mubr.f32.gmra.mrb[0].mxu0 %v3858
        %v4617 = vpop.f32.mrb[0].mxu0
        %v4618 = vadd.f32 %v4393, %v4617
        %v4619 = vpop.f32.mrb[0].mxu0
        %4620 = vmatprep.mubr.f32.mxu0 0.0
        %4621 = vmatmul.mubr.f32.gmra.mrb[0].mxu0 %v3863
        %v4622 = vpop.f32.mrb[0].mxu0
        %v4623 = vadd.f32 %v4398, %v4622
        %v4624 = vpop.f32.mrb[0].mxu0
        %4625 = vmatprep.mubr.f32.mxu0 0.0
        %4626 = vmatmul.mubr.f32.gmra.mrb[0].mxu0 %v3868
        %v4627 = vpop.f32.mrb[0].mxu0
        %v4628 = vadd.f32 %v4403, %v4627
        %v4629 = vpop.f32.mrb[0].mxu0
        %4630 = vmatprep.mubr.f32.mxu0 0.0
        %4631 = vmatmul.mubr.f32.gmra.mrb[0].mxu0 %v3873
        %v4632 = vpop.f32.mrb[0].mxu0
        %v4633 = vadd.f32 %v4408, %v4632
        %v4634 = vpop.f32.mrb[0].mxu0
        %4635 = vmatprep.mubr.f32.mxu0 0.0
        %4636 = vmatmul.mubr.f32.gmra.mrb[0].mxu0 %v3878
        %v4637 = vpop.f32.mrb[0].mxu0
        %v4638 = vadd.f32 %v4413, %v4637
        %v4639 = vpop.f32.mrb[0].mxu0
        %4640 = vmatprep.mubr.f32.mxu0 0.0
        %4641 = vmatmul.mubr.f32.gmra.mrb[0].mxu0 %v3883
        %v4642 = vpop.f32.mrb[0].mxu0
        %v4643 = vadd.f32 %v4418, %v4642
        %v4644 = vpop.f32.mrb[0].mxu0
        %4645 = vmatprep.mubr.f32.mxu0 0.0
        %4646 = vmatmul.mubr.f32.gmra.mrb[0].mxu0 %v3888
        %v4647 = vpop.f32.mrb[0].mxu0
        %v4648 = vadd.f32 %v4423, %v4647
        %v4649 = vpop.f32.mrb[0].mxu0
        %4650 = vdwg.mxu0
        %v4651 = vmax.f32 %v4493, 0.0
        %v4652 = vmax.f32 %v4498, 0.0
        %v4653 = vmax.f32 %v4503, 0.0
        %v4654 = vmax.f32 %v4508, 0.0
        %v4655 = vmax.f32 %v4513, 0.0
        %v4656 = vmax.f32 %v4518, 0.0
        %v4657 = vmax.f32 %v4523, 0.0
        %v4658 = vmax.f32 %v4528, 0.0
        %v4659 = vmax.f32 %v4533, 0.0
        %v4660 = vmax.f32 %v4538, 0.0
        %v4661 = vmax.f32 %v4543, 0.0
        %v4662 = vmax.f32 %v4548, 0.0
        %v4663 = vmax.f32 %v4553, 0.0
        %v4664 = vmax.f32 %v4558, 0.0
        %v4665 = vmax.f32 %v4563, 0.0
        %v4666 = vmax.f32 %v4568, 0.0
        %v4667 = vmax.f32 %v4573, 0.0
        %v4668 = vmax.f32 %v4578, 0.0
        %v4669 = vmax.f32 %v4583, 0.0
        %v4670 = vmax.f32 %v4588, 0.0
        %v4671 = vmax.f32 %v4593, 0.0
        %v4672 = vmax.f32 %v4598, 0.0
        %v4673 = vmax.f32 %v4603, 0.0
        %v4674 = vmax.f32 %v4608, 0.0
        %v4675 = vmax.f32 %v4613, 0.0
        %v4676 = vmax.f32 %v4618, 0.0
        %v4677 = vmax.f32 %v4623, 0.0
        %v4678 = vmax.f32 %v4628, 0.0
        %v4679 = vmax.f32 %v4633, 0.0
        %v4680 = vmax.f32 %v4638, 0.0
        %v4681 = vmax.f32 %v4643, 0.0
        %v4682 = vmax.f32 %v4648, 0.0
        %vm4683 = vcmask 523264
        %4684 = vst.msk [vmem:[#allocation3] sm:$0xff] %vm4683, 0.0
        %4685 = vst.msk [vmem:[#allocation3 + $0x8] sm:$0xff] %vm4683, 0.0
        %4686 = vst.msk [vmem:[#allocation3 + $0x10] sm:$0xff] %vm4683, 0.0
        %vm4687 = vcmask 516096
        %4688 = vst.msk [vmem:[#allocation3 + $0x18] sm:$0x1] %vm4687, 0.0
        %s4689 = scalar_lea.vmem [#allocation3], 544
        %4690 = vst.msk [vmem:[%s4689] sm:$0xff] %vm4683, 0.0
        %4691 = vst.msk [vmem:[%s4689 + $0x8] sm:$0xff] %vm4683, 0.0
        %4692 = vst.msk [vmem:[%s4689 + $0x10] sm:$0xff] %vm4683, 0.0
        %4693 = vst.msk [vmem:[%s4689 + $0x18] sm:$0x1] %vm4687, 0.0
        %4694 = vst.msk [vmem:[#allocation3 + $0x7] sm:$0x1] %vm4687, 0.0
        %4695 = vst.msk [vmem:[#allocation3 + $0x27] sm:$0x1] %vm4687, 0.0
        %4696 = vst.msk [vmem:[#allocation3 + $0x47] sm:$0x1] %vm4687, 0.0
        %4697 = vst.msk [vmem:[#allocation3 + $0x67] sm:$0x1] %vm4687, 0.0
        %4698 = vst.msk [vmem:[#allocation3 + $0x87] sm:$0x1] %vm4687, 0.0
        %4699 = vst.msk [vmem:[#allocation3 + $0xa7] sm:$0x1] %vm4687, 0.0
        %4700 = vst.msk [vmem:[#allocation3 + $0xc7] sm:$0x1] %vm4687, 0.0
        %4701 = vst.msk [vmem:[#allocation3 + $0xe7] sm:$0x1] %vm4687, 0.0
        %4702 = vst.msk [vmem:[#allocation3 + $0x107] sm:$0x1] %vm4687, 0.0
        %4703 = vst.msk [vmem:[#allocation3 + $0x127] sm:$0x1] %vm4687, 0.0
        %4704 = vst.msk [vmem:[#allocation3 + $0x147] sm:$0x1] %vm4687, 0.0
        %4705 = vst.msk [vmem:[#allocation3 + $0x167] sm:$0x1] %vm4687, 0.0
        %4706 = vst.msk [vmem:[#allocation3 + $0x187] sm:$0x1] %vm4687, 0.0
        %4707 = vst.msk [vmem:[#allocation3 + $0x1a7] sm:$0x1] %vm4687, 0.0
        %4708 = vst.msk [vmem:[#allocation3 + $0x1c7] sm:$0x1] %vm4687, 0.0
        %4709 = vst.msk [vmem:[#allocation3 + $0x1e7] sm:$0x1] %vm4687, 0.0
        %4710 = vst.msk [vmem:[#allocation3 + $0x207] sm:$0x1] %vm4687, 0.0
        %4711 = vst.msk [vmem:[#allocation3 + $0x227] sm:$0x1] %vm4687, 0.0
        %4712 = vst.msk [vmem:[#allocation3 + $0x18] sm:$0x1] %vm4687, 0.0
        %4713 = vst.msk [vmem:[#allocation3 + $0x38] sm:$0x1] %vm4687, 0.0
        %4714 = vst.msk [vmem:[#allocation3 + $0x58] sm:$0x1] %vm4687, 0.0
        %4715 = vst.msk [vmem:[#allocation3 + $0x78] sm:$0x1] %vm4687, 0.0
        %4716 = vst.msk [vmem:[#allocation3 + $0x98] sm:$0x1] %vm4687, 0.0
        %4717 = vst.msk [vmem:[#allocation3 + $0xb8] sm:$0x1] %vm4687, 0.0
        %4718 = vst.msk [vmem:[#allocation3 + $0xd8] sm:$0x1] %vm4687, 0.0
        %4719 = vst.msk [vmem:[#allocation3 + $0xf8] sm:$0x1] %vm4687, 0.0
        %4720 = vst.msk [vmem:[#allocation3 + $0x118] sm:$0x1] %vm4687, 0.0
        %4721 = vst.msk [vmem:[#allocation3 + $0x138] sm:$0x1] %vm4687, 0.0
        %4722 = vst.msk [vmem:[#allocation3 + $0x158] sm:$0x1] %vm4687, 0.0
        %4723 = vst.msk [vmem:[#allocation3 + $0x178] sm:$0x1] %vm4687, 0.0
        %4724 = vst.msk [vmem:[#allocation3 + $0x198] sm:$0x1] %vm4687, 0.0
        %4725 = vst.msk [vmem:[#allocation3 + $0x1b8] sm:$0x1] %vm4687, 0.0
        %4726 = vst.msk [vmem:[#allocation3 + $0x1d8] sm:$0x1] %vm4687, 0.0
        %4727 = vst.msk [vmem:[#allocation3 + $0x1f8] sm:$0x1] %vm4687, 0.0
        %4728 = vst.msk [vmem:[#allocation3 + $0x218] sm:$0x1] %vm4687, 0.0
        %4729 = vst.msk [vmem:[#allocation3 + $0x238] sm:$0x1] %vm4687, 0.0
        %s4730 = scalar_lea.vmem [#allocation3], 32
        %4731 = vst.msk [vmem:[%s4730 + $0x8] sm:$0xff] %vm4683, %v4651
        %4732 = vst.msk [vmem:[%s4730 + $0x10] sm:$0xff] %vm4683, %v4652
        %4733 = vst.msk [vmem:[%s4730 + $0x28] sm:$0xff] %vm4683, %v4653
        %4734 = vst.msk [vmem:[%s4730 + $0x30] sm:$0xff] %vm4683, %v4654
        %4735 = vst.msk [vmem:[%s4730 + $0x48] sm:$0xff] %vm4683, %v4655
        %4736 = vst.msk [vmem:[%s4730 + $0x50] sm:$0xff] %vm4683, %v4656
        %4737 = vst.msk [vmem:[%s4730 + $0x68] sm:$0xff] %vm4683, %v4657
        %4738 = vst.msk [vmem:[%s4730 + $0x70] sm:$0xff] %vm4683, %v4658
        %4739 = vst.msk [vmem:[%s4730 + $0x88] sm:$0xff] %vm4683, %v4659
        %4740 = vst.msk [vmem:[%s4730 + $0x90] sm:$0xff] %vm4683, %v4660
        %4741 = vst.msk [vmem:[%s4730 + $0xa8] sm:$0xff] %vm4683, %v4661
        %4742 = vst.msk [vmem:[%s4730 + $0xb0] sm:$0xff] %vm4683, %v4662
        %4743 = vst.msk [vmem:[%s4730 + $0xc8] sm:$0xff] %vm4683, %v4663
        %4744 = vst.msk [vmem:[%s4730 + $0xd0] sm:$0xff] %vm4683, %v4664
        %4745 = vst.msk [vmem:[%s4730 + $0xe8] sm:$0xff] %vm4683, %v4665
        %4746 = vst.msk [vmem:[%s4730 + $0xf0] sm:$0xff] %vm4683, %v4666
        %4747 = vst.msk [vmem:[%s4730 + $0x108] sm:$0xff] %vm4683, %v4667
        %4748 = vst.msk [vmem:[%s4730 + $0x110] sm:$0xff] %vm4683, %v4668
        %4749 = vst.msk [vmem:[%s4730 + $0x128] sm:$0xff] %vm4683, %v4669
        %4750 = vst.msk [vmem:[%s4730 + $0x130] sm:$0xff] %vm4683, %v4670
        %4751 = vst.msk [vmem:[%s4730 + $0x148] sm:$0xff] %vm4683, %v4671
        %4752 = vst.msk [vmem:[%s4730 + $0x150] sm:$0xff] %vm4683, %v4672
        %4753 = vst.msk [vmem:[%s4730 + $0x168] sm:$0xff] %vm4683, %v4673
        %4754 = vst.msk [vmem:[%s4730 + $0x170] sm:$0xff] %vm4683, %v4674
        %4755 = vst.msk [vmem:[%s4730 + $0x188] sm:$0xff] %vm4683, %v4675
        %4756 = vst.msk [vmem:[%s4730 + $0x190] sm:$0xff] %vm4683, %v4676
        %4757 = vst.msk [vmem:[%s4730 + $0x1a8] sm:$0xff] %vm4683, %v4677
        %4758 = vst.msk [vmem:[%s4730 + $0x1b0] sm:$0xff] %vm4683, %v4678
        %4759 = vst.msk [vmem:[%s4730 + $0x1c8] sm:$0xff] %vm4683, %v4679
        %4760 = vst.msk [vmem:[%s4730 + $0x1d0] sm:$0xff] %vm4683, %v4680
        %4761 = vst.msk [vmem:[%s4730 + $0x1e8] sm:$0xff] %vm4683, %v4681
        %4762 = vst.msk [vmem:[%s4730 + $0x1f0] sm:$0xff] %vm4683, %v4682
        %v4763 = vld [vmem:[#allocation3 + $0x7] sm:$0xff]
        %v4764 = vld [vmem:[#allocation3 + $0xf] sm:$0xff]
        %v4765 = vld [vmem:[#allocation3 + $0x27] sm:$0xff]
        %v4766 = vld [vmem:[#allocation3 + $0x2f] sm:$0xff]
        %v4767 = vld [vmem:[#allocation3 + $0x47] sm:$0xff]
        %v4768 = vld [vmem:[#allocation3 + $0x4f] sm:$0xff]
        %v4769 = vld [vmem:[#allocation3 + $0x67] sm:$0xff]
        %v4770 = vld [vmem:[#allocation3 + $0x6f] sm:$0xff]
        %v4771 = vld [vmem:[#allocation3 + $0x87] sm:$0xff]
        %v4772 = vld [vmem:[#allocation3 + $0x8f] sm:$0xff]
        %v4773 = vld [vmem:[#allocation3 + $0xa7] sm:$0xff]
        %v4774 = vld [vmem:[#allocation3 + $0xaf] sm:$0xff]
        %v4775 = vld [vmem:[#allocation3 + $0xc7] sm:$0xff]
        %v4776 = vld [vmem:[#allocation3 + $0xcf] sm:$0xff]
        %v4777 = vld [vmem:[#allocation3 + $0xe7] sm:$0xff]
        %v4778 = vld [vmem:[#allocation3 + $0xef] sm:$0xff]
        %v4779 = vld [vmem:[#allocation3 + $0x107] sm:$0xff]
        %v4780 = vld [vmem:[#allocation3 + $0x10f] sm:$0xff]
        %v4781 = vld [vmem:[#allocation3 + $0x127] sm:$0xff]
        %v4782 = vld [vmem:[#allocation3 + $0x12f] sm:$0xff]
        %v4783 = vld [vmem:[#allocation3 + $0x147] sm:$0xff]
        %v4784 = vld [vmem:[#allocation3 + $0x14f] sm:$0xff]
        %v4785 = vld [vmem:[#allocation3 + $0x167] sm:$0xff]
        %v4786 = vld [vmem:[#allocation3 + $0x16f] sm:$0xff]
        %v4787 = vld [vmem:[#allocation3 + $0x187] sm:$0xff]
        %v4788 = vld [vmem:[#allocation3 + $0x18f] sm:$0xff]
        %v4789 = vld [vmem:[#allocation3 + $0x1a7] sm:$0xff]
        %v4790 = vld [vmem:[#allocation3 + $0x1af] sm:$0xff]
        %v4791 = vld [vmem:[#allocation3 + $0x1c7] sm:$0xff]
        %v4792 = vld [vmem:[#allocation3 + $0x1cf] sm:$0xff]
        %v4793 = vld [vmem:[#allocation3 + $0x1e7] sm:$0xff]
        %v4794 = vld [vmem:[#allocation3 + $0x1ef] sm:$0xff]
        %v4795 = vld [vmem:[#allocation3 + $0x207] sm:$0xff]
        %v4796 = vld [vmem:[#allocation3 + $0x20f] sm:$0xff]
        %v4797 = vld [vmem:[#allocation3 + $0x227] sm:$0xff]
        %v4798 = vld [vmem:[#allocation3 + $0x22f] sm:$0xff]
        %4831 = vrot.lane.b32.xlu0 %v4765, 64
        %v4832 = vpop.permute.xlu0 %4831
        %4833 = vrot.lane.b32.xlu0 %v4766, 64
        %v4834 = vpop.permute.xlu0 %4833
        %4835 = vrot.lane.b32.xlu0 %v4767, 64
        %v4836 = vpop.permute.xlu0 %4835
        %4837 = vrot.lane.b32.xlu0 %v4768, 64
        %v4838 = vpop.permute.xlu0 %4837
        %4839 = vrot.lane.b32.xlu0 %v4769, 64
        %v4840 = vpop.permute.xlu0 %4839
        %4841 = vrot.lane.b32.xlu0 %v4770, 64
        %v4842 = vpop.permute.xlu0 %4841
        %4843 = vrot.lane.b32.xlu0 %v4771, 64
        %v4844 = vpop.permute.xlu0 %4843
        %4845 = vrot.lane.b32.xlu0 %v4772, 64
        %v4846 = vpop.permute.xlu0 %4845
        %4847 = vrot.lane.b32.xlu0 %v4773, 64
        %v4848 = vpop.permute.xlu0 %4847
        %4849 = vrot.lane.b32.xlu0 %v4774, 64
        %v4850 = vpop.permute.xlu0 %4849
        %4851 = vrot.lane.b32.xlu0 %v4775, 64
        %v4852 = vpop.permute.xlu0 %4851
        %4853 = vrot.lane.b32.xlu0 %v4776, 64
        %v4854 = vpop.permute.xlu0 %4853
        %4855 = vrot.lane.b32.xlu0 %v4777, 64
        %v4856 = vpop.permute.xlu0 %4855
        %4857 = vrot.lane.b32.xlu0 %v4778, 64
        %v4858 = vpop.permute.xlu0 %4857
        %4859 = vrot.lane.b32.xlu0 %v4779, 64
        %v4860 = vpop.permute.xlu0 %4859
        %4861 = vrot.lane.b32.xlu0 %v4780, 64
        %v4862 = vpop.permute.xlu0 %4861
        %4863 = vrot.lane.b32.xlu0 %v4781, 64
        %v4864 = vpop.permute.xlu0 %4863
        %4865 = vrot.lane.b32.xlu0 %v4782, 64
        %v4866 = vpop.permute.xlu0 %4865
        %4867 = vrot.lane.b32.xlu0 %v4783, 64
        %v4868 = vpop.permute.xlu0 %4867
        %4869 = vrot.lane.b32.xlu0 %v4784, 64
        %v4870 = vpop.permute.xlu0 %4869
        %4871 = vrot.lane.b32.xlu0 %v4785, 64
        %v4872 = vpop.permute.xlu0 %4871
        %4873 = vrot.lane.b32.xlu0 %v4786, 64
        %v4874 = vpop.permute.xlu0 %4873
        %4875 = vrot.lane.b32.xlu0 %v4787, 64
        %v4876 = vpop.permute.xlu0 %4875
        %4877 = vrot.lane.b32.xlu0 %v4788, 64
        %v4878 = vpop.permute.xlu0 %4877
        %4879 = vrot.lane.b32.xlu0 %v4789, 64
        %v4880 = vpop.permute.xlu0 %4879
        %4881 = vrot.lane.b32.xlu0 %v4790, 64
        %v4882 = vpop.permute.xlu0 %4881
        %4883 = vrot.lane.b32.xlu0 %v4791, 64
        %v4884 = vpop.permute.xlu0 %4883
        %4885 = vrot.lane.b32.xlu0 %v4792, 64
        %v4886 = vpop.permute.xlu0 %4885
        %4887 = vrot.lane.b32.xlu0 %v4793, 64
        %v4888 = vpop.permute.xlu0 %4887
        %4889 = vrot.lane.b32.xlu0 %v4794, 64
        %v4890 = vpop.permute.xlu0 %4889
        %4891 = vrot.lane.b32.xlu0 %v4795, 64
        %v4892 = vpop.permute.xlu0 %4891
        %4893 = vrot.lane.b32.xlu0 %v4796, 64
        %v4894 = vpop.permute.xlu0 %4893
        %v4927 = vsel %vm4683, %v4763, %v4832
        %v4928 = vsel %vm4683, %v4764, %v4834
        %v4929 = vsel %vm4683, %v4765, %v4836
        %v4930 = vsel %vm4683, %v4766, %v4838
        %v4931 = vsel %vm4683, %v4767, %v4840
        %v4932 = vsel %vm4683, %v4768, %v4842
        %v4933 = vsel %vm4683, %v4769, %v4844
        %v4934 = vsel %vm4683, %v4770, %v4846
        %v4935 = vsel %vm4683, %v4771, %v4848
        %v4936 = vsel %vm4683, %v4772, %v4850
        %v4937 = vsel %vm4683, %v4773, %v4852
        %v4938 = vsel %vm4683, %v4774, %v4854
        %v4939 = vsel %vm4683, %v4775, %v4856
        %v4940 = vsel %vm4683, %v4776, %v4858
        %v4941 = vsel %vm4683, %v4777, %v4860
        %v4942 = vsel %vm4683, %v4778, %v4862
        %v4943 = vsel %vm4683, %v4779, %v4864
        %v4944 = vsel %vm4683, %v4780, %v4866
        %v4945 = vsel %vm4683, %v4781, %v4868
        %v4946 = vsel %vm4683, %v4782, %v4870
        %v4947 = vsel %vm4683, %v4783, %v4872
        %v4948 = vsel %vm4683, %v4784, %v4874
        %v4949 = vsel %vm4683, %v4785, %v4876
        %v4950 = vsel %vm4683, %v4786, %v4878
        %v4951 = vsel %vm4683, %v4787, %v4880
        %v4952 = vsel %vm4683, %v4788, %v4882
        %v4953 = vsel %vm4683, %v4789, %v4884
        %v4954 = vsel %vm4683, %v4790, %v4886
        %v4955 = vsel %vm4683, %v4791, %v4888
        %v4956 = vsel %vm4683, %v4792, %v4890
        %v4957 = vsel %vm4683, %v4793, %v4892
        %v4958 = vsel %vm4683, %v4794, %v4894
        %4959 = vst [vmem:[#allocation4] sm:$0xff] %v4927
        %4960 = vst [vmem:[#allocation4 + $0x30] sm:$0xff] %v4928
        %4961 = vst [vmem:[#allocation4 + $0x60] sm:$0xff] %v4929
        %4962 = vst [vmem:[#allocation4 + $0x90] sm:$0xff] %v4930
        %4963 = vst [vmem:[#allocation4 + $0xc0] sm:$0xff] %v4931
        %4964 = vst [vmem:[#allocation4 + $0xf0] sm:$0xff] %v4932
        %4965 = vst [vmem:[#allocation4 + $0x120] sm:$0xff] %v4933
        %4966 = vst [vmem:[#allocation4 + $0x150] sm:$0xff] %v4934
        %4967 = vst [vmem:[#allocation4 + $0x180] sm:$0xff] %v4935
        %4968 = vst [vmem:[#allocation4 + $0x1b0] sm:$0xff] %v4936
        %4969 = vst [vmem:[#allocation4 + $0x1e0] sm:$0xff] %v4937
        %4970 = vst [vmem:[#allocation4 + $0x210] sm:$0xff] %v4938
        %4971 = vst [vmem:[#allocation4 + $0x240] sm:$0xff] %v4939
        %4972 = vst [vmem:[#allocation4 + $0x270] sm:$0xff] %v4940
        %4973 = vst [vmem:[#allocation4 + $0x2a0] sm:$0xff] %v4941
        %4974 = vst [vmem:[#allocation4 + $0x2d0] sm:$0xff] %v4942
        %4975 = vst [vmem:[#allocation4 + $0x300] sm:$0xff] %v4943
        %4976 = vst [vmem:[#allocation4 + $0x330] sm:$0xff] %v4944
        %4977 = vst [vmem:[#allocation4 + $0x360] sm:$0xff] %v4945
        %4978 = vst [vmem:[#allocation4 + $0x390] sm:$0xff] %v4946
        %4979 = vst [vmem:[#allocation4 + $0x3c0] sm:$0xff] %v4947
        %4980 = vst [vmem:[#allocation4 + $0x3f0] sm:$0xff] %v4948
        %4981 = vst [vmem:[#allocation4 + $0x420] sm:$0xff] %v4949
        %4982 = vst [vmem:[#allocation4 + $0x450] sm:$0xff] %v4950
        %4983 = vst [vmem:[#allocation4 + $0x480] sm:$0xff] %v4951
        %4984 = vst [vmem:[#allocation4 + $0x4b0] sm:$0xff] %v4952
        %4985 = vst [vmem:[#allocation4 + $0x4e0] sm:$0xff] %v4953
        %4986 = vst [vmem:[#allocation4 + $0x510] sm:$0xff] %v4954
        %4987 = vst [vmem:[#allocation4 + $0x540] sm:$0xff] %v4955
        %4988 = vst [vmem:[#allocation4 + $0x570] sm:$0xff] %v4956
        %4989 = vst [vmem:[#allocation4 + $0x5a0] sm:$0xff] %v4957
        %4990 = vst [vmem:[#allocation4 + $0x5d0] sm:$0xff] %v4958
        %v4991 = vsel %vm4683, %v4767, 0.0
        %v4992 = vsel %vm4683, %v4768, 0.0
        %v4993 = vsel %vm4683, %v4769, 0.0
        %v4994 = vsel %vm4683, %v4770, 0.0
        %v4995 = vsel %vm4683, %v4771, 0.0
        %v4996 = vsel %vm4683, %v4772, 0.0
        %v4997 = vsel %vm4683, %v4773, 0.0
        %v4998 = vsel %vm4683, %v4774, 0.0
        %v4999 = vsel %vm4683, %v4775, 0.0
        %v5000 = vsel %vm4683, %v4776, 0.0
        %v5001 = vsel %vm4683, %v4777, 0.0
        %v5002 = vsel %vm4683, %v4778, 0.0
        %v5003 = vsel %vm4683, %v4779, 0.0
        %v5004 = vsel %vm4683, %v4780, 0.0
        %v5005 = vsel %vm4683, %v4781, 0.0
        %v5006 = vsel %vm4683, %v4782, 0.0
        %v5007 = vsel %vm4683, %v4783, 0.0
        %v5008 = vsel %vm4683, %v4784, 0.0
        %v5009 = vsel %vm4683, %v4785, 0.0
        %v5010 = vsel %vm4683, %v4786, 0.0
        %v5011 = vsel %vm4683, %v4787, 0.0
        %v5012 = vsel %vm4683, %v4788, 0.0
        %v5013 = vsel %vm4683, %v4789, 0.0
        %v5014 = vsel %vm4683, %v4790, 0.0
        %v5015 = vsel %vm4683, %v4791, 0.0
        %v5016 = vsel %vm4683, %v4792, 0.0
        %v5017 = vsel %vm4683, %v4793, 0.0
        %v5018 = vsel %vm4683, %v4794, 0.0
        %v5019 = vsel %vm4683, %v4795, 0.0
        %v5020 = vsel %vm4683, %v4796, 0.0
        %v5021 = vsel %vm4683, %v4797, 0.0
        %v5022 = vsel %vm4683, %v4798, 0.0
        %5023 = vst [vmem:[#allocation4 + $0x8] sm:$0xff] %v4991
        %5024 = vst [vmem:[#allocation4 + $0x38] sm:$0xff] %v4992
        %5025 = vst [vmem:[#allocation4 + $0x68] sm:$0xff] %v4993
        %5026 = vst [vmem:[#allocation4 + $0x98] sm:$0xff] %v4994
        %5027 = vst [vmem:[#allocation4 + $0xc8] sm:$0xff] %v4995
        %5028 = vst [vmem:[#allocation4 + $0xf8] sm:$0xff] %v4996
        %5029 = vst [vmem:[#allocation4 + $0x128] sm:$0xff] %v4997
        %5030 = vst [vmem:[#allocation4 + $0x158] sm:$0xff] %v4998
        %5031 = vst [vmem:[#allocation4 + $0x188] sm:$0xff] %v4999
        %5032 = vst [vmem:[#allocation4 + $0x1b8] sm:$0xff] %v5000
        %5033 = vst [vmem:[#allocation4 + $0x1e8] sm:$0xff] %v5001
        %5034 = vst [vmem:[#allocation4 + $0x218] sm:$0xff] %v5002
        %5035 = vst [vmem:[#allocation4 + $0x248] sm:$0xff] %v5003
        %5036 = vst [vmem:[#allocation4 + $0x278] sm:$0xff] %v5004
        %5037 = vst [vmem:[#allocation4 + $0x2a8] sm:$0xff] %v5005
        %5038 = vst [vmem:[#allocation4 + $0x2d8] sm:$0xff] %v5006
        %5039 = vst [vmem:[#allocation4 + $0x308] sm:$0xff] %v5007
        %5040 = vst [vmem:[#allocation4 + $0x338] sm:$0xff] %v5008
        %5041 = vst [vmem:[#allocation4 + $0x368] sm:$0xff] %v5009
        %5042 = vst [vmem:[#allocation4 + $0x398] sm:$0xff] %v5010
        %5043 = vst [vmem:[#allocation4 + $0x3c8] sm:$0xff] %v5011
        %5044 = vst [vmem:[#allocation4 + $0x3f8] sm:$0xff] %v5012
        %5045 = vst [vmem:[#allocation4 + $0x428] sm:$0xff] %v5013
        %5046 = vst [vmem:[#allocation4 + $0x458] sm:$0xff] %v5014
        %5047 = vst [vmem:[#allocation4 + $0x488] sm:$0xff] %v5015
        %5048 = vst [vmem:[#allocation4 + $0x4b8] sm:$0xff] %v5016
        %5049 = vst [vmem:[#allocation4 + $0x4e8] sm:$0xff] %v5017
        %5050 = vst [vmem:[#allocation4 + $0x518] sm:$0xff] %v5018
        %5051 = vst [vmem:[#allocation4 + $0x548] sm:$0xff] %v5019
        %5052 = vst [vmem:[#allocation4 + $0x578] sm:$0xff] %v5020
        %5053 = vst [vmem:[#allocation4 + $0x5a8] sm:$0xff] %v5021
        %5054 = vst [vmem:[#allocation4 + $0x5d8] sm:$0xff] %v5022
        %v5055 = vld [vmem:[#allocation3 + $0x8] sm:$0xff]
        %v5056 = vld [vmem:[#allocation3 + $0x10] sm:$0xff]
        %v5057 = vld [vmem:[#allocation3 + $0x28] sm:$0xff]
        %v5058 = vld [vmem:[#allocation3 + $0x30] sm:$0xff]
        %v5059 = vld [vmem:[#allocation3 + $0x48] sm:$0xff]
        %v5060 = vld [vmem:[#allocation3 + $0x50] sm:$0xff]
        %v5061 = vld [vmem:[#allocation3 + $0x68] sm:$0xff]
        %v5062 = vld [vmem:[#allocation3 + $0x70] sm:$0xff]
        %v5063 = vld [vmem:[#allocation3 + $0x88] sm:$0xff]
        %v5064 = vld [vmem:[#allocation3 + $0x90] sm:$0xff]
        %v5065 = vld [vmem:[#allocation3 + $0xa8] sm:$0xff]
        %v5066 = vld [vmem:[#allocation3 + $0xb0] sm:$0xff]
        %v5067 = vld [vmem:[#allocation3 + $0xc8] sm:$0xff]
        %v5068 = vld [vmem:[#allocation3 + $0xd0] sm:$0xff]
        %v5069 = vld [vmem:[#allocation3 + $0xe8] sm:$0xff]
        %v5070 = vld [vmem:[#allocation3 + $0xf0] sm:$0xff]
        %v5071 = vld [vmem:[#allocation3 + $0x108] sm:$0xff]
        %v5072 = vld [vmem:[#allocation3 + $0x110] sm:$0xff]
        %v5073 = vld [vmem:[#allocation3 + $0x128] sm:$0xff]
        %v5074 = vld [vmem:[#allocation3 + $0x130] sm:$0xff]
        %v5075 = vld [vmem:[#allocation3 + $0x148] sm:$0xff]
        %v5076 = vld [vmem:[#allocation3 + $0x150] sm:$0xff]
        %v5077 = vld [vmem:[#allocation3 + $0x168] sm:$0xff]
        %v5078 = vld [vmem:[#allocation3 + $0x170] sm:$0xff]
        %v5079 = vld [vmem:[#allocation3 + $0x188] sm:$0xff]
        %v5080 = vld [vmem:[#allocation3 + $0x190] sm:$0xff]
        %v5081 = vld [vmem:[#allocation3 + $0x1a8] sm:$0xff]
        %v5082 = vld [vmem:[#allocation3 + $0x1b0] sm:$0xff]
        %v5083 = vld [vmem:[#allocation3 + $0x1c8] sm:$0xff]
        %v5084 = vld [vmem:[#allocation3 + $0x1d0] sm:$0xff]
        %v5085 = vld [vmem:[#allocation3 + $0x1e8] sm:$0xff]
        %v5086 = vld [vmem:[#allocation3 + $0x1f0] sm:$0xff]
        %v5087 = vld [vmem:[#allocation3 + $0x208] sm:$0xff]
        %v5088 = vld [vmem:[#allocation3 + $0x210] sm:$0xff]
        %v5089 = vld [vmem:[#allocation3 + $0x228] sm:$0xff]
        %v5090 = vld [vmem:[#allocation3 + $0x230] sm:$0xff]
        %5123 = vrot.lane.b32.xlu0 %v5057, 64
        %v5124 = vpop.permute.xlu0 %5123
        %5125 = vrot.lane.b32.xlu0 %v5058, 64
        %v5126 = vpop.permute.xlu0 %5125
        %5127 = vrot.lane.b32.xlu0 %v5059, 64
        %v5128 = vpop.permute.xlu0 %5127
        %5129 = vrot.lane.b32.xlu0 %v5060, 64
        %v5130 = vpop.permute.xlu0 %5129
        %5131 = vrot.lane.b32.xlu0 %v5061, 64
        %v5132 = vpop.permute.xlu0 %5131
        %5133 = vrot.lane.b32.xlu0 %v5062, 64
        %v5134 = vpop.permute.xlu0 %5133
        %5135 = vrot.lane.b32.xlu0 %v5063, 64
        %v5136 = vpop.permute.xlu0 %5135
        %5137 = vrot.lane.b32.xlu0 %v5064, 64
        %v5138 = vpop.permute.xlu0 %5137
        %5139 = vrot.lane.b32.xlu0 %v5065, 64
        %v5140 = vpop.permute.xlu0 %5139
        %5141 = vrot.lane.b32.xlu0 %v5066, 64
        %v5142 = vpop.permute.xlu0 %5141
        %5143 = vrot.lane.b32.xlu0 %v5067, 64
        %v5144 = vpop.permute.xlu0 %5143
        %5145 = vrot.lane.b32.xlu0 %v5068, 64
        %v5146 = vpop.permute.xlu0 %5145
        %5147 = vrot.lane.b32.xlu0 %v5069, 64
        %v5148 = vpop.permute.xlu0 %5147
        %5149 = vrot.lane.b32.xlu0 %v5070, 64
        %v5150 = vpop.permute.xlu0 %5149
        %5151 = vrot.lane.b32.xlu0 %v5071, 64
        %v5152 = vpop.permute.xlu0 %5151
        %5153 = vrot.lane.b32.xlu0 %v5072, 64
        %v5154 = vpop.permute.xlu0 %5153
        %5155 = vrot.lane.b32.xlu0 %v5073, 64
        %v5156 = vpop.permute.xlu0 %5155
        %5157 = vrot.lane.b32.xlu0 %v5074, 64
        %v5158 = vpop.permute.xlu0 %5157
        %5159 = vrot.lane.b32.xlu0 %v5075, 64
        %v5160 = vpop.permute.xlu0 %5159
        %5161 = vrot.lane.b32.xlu0 %v5076, 64
        %v5162 = vpop.permute.xlu0 %5161
        %5163 = vrot.lane.b32.xlu0 %v5077, 64
        %v5164 = vpop.permute.xlu0 %5163
        %5165 = vrot.lane.b32.xlu0 %v5078, 64
        %v5166 = vpop.permute.xlu0 %5165
        %5167 = vrot.lane.b32.xlu0 %v5079, 64
        %v5168 = vpop.permute.xlu0 %5167
        %5169 = vrot.lane.b32.xlu0 %v5080, 64
        %v5170 = vpop.permute.xlu0 %5169
        %5171 = vrot.lane.b32.xlu0 %v5081, 64
        %v5172 = vpop.permute.xlu0 %5171
        %5173 = vrot.lane.b32.xlu0 %v5082, 64
        %v5174 = vpop.permute.xlu0 %5173
        %5175 = vrot.lane.b32.xlu0 %v5083, 64
        %v5176 = vpop.permute.xlu0 %5175
        %5177 = vrot.lane.b32.xlu0 %v5084, 64
        %v5178 = vpop.permute.xlu0 %5177
        %5179 = vrot.lane.b32.xlu0 %v5085, 64
        %v5180 = vpop.permute.xlu0 %5179
        %5181 = vrot.lane.b32.xlu0 %v5086, 64
        %v5182 = vpop.permute.xlu0 %5181
        %5183 = vrot.lane.b32.xlu0 %v5087, 64
        %v5184 = vpop.permute.xlu0 %5183
        %5185 = vrot.lane.b32.xlu0 %v5088, 64
        %v5186 = vpop.permute.xlu0 %5185
        %v5219 = vsel %vm4683, %v5055, %v5124
        %v5220 = vsel %vm4683, %v5056, %v5126
        %v5221 = vsel %vm4683, %v5057, %v5128
        %v5222 = vsel %vm4683, %v5058, %v5130
        %v5223 = vsel %vm4683, %v5059, %v5132
        %v5224 = vsel %vm4683, %v5060, %v5134
        %v5225 = vsel %vm4683, %v5061, %v5136
        %v5226 = vsel %vm4683, %v5062, %v5138
        %v5227 = vsel %vm4683, %v5063, %v5140
        %v5228 = vsel %vm4683, %v5064, %v5142
        %v5229 = vsel %vm4683, %v5065, %v5144
        %v5230 = vsel %vm4683, %v5066, %v5146
        %v5231 = vsel %vm4683, %v5067, %v5148
        %v5232 = vsel %vm4683, %v5068, %v5150
        %v5233 = vsel %vm4683, %v5069, %v5152
        %v5234 = vsel %vm4683, %v5070, %v5154
        %v5235 = vsel %vm4683, %v5071, %v5156
        %v5236 = vsel %vm4683, %v5072, %v5158
        %v5237 = vsel %vm4683, %v5073, %v5160
        %v5238 = vsel %vm4683, %v5074, %v5162
        %v5239 = vsel %vm4683, %v5075, %v5164
        %v5240 = vsel %vm4683, %v5076, %v5166
        %v5241 = vsel %vm4683, %v5077, %v5168
        %v5242 = vsel %vm4683, %v5078, %v5170
        %v5243 = vsel %vm4683, %v5079, %v5172
        %v5244 = vsel %vm4683, %v5080, %v5174
        %v5245 = vsel %vm4683, %v5081, %v5176
        %v5246 = vsel %vm4683, %v5082, %v5178
        %v5247 = vsel %vm4683, %v5083, %v5180
        %v5248 = vsel %vm4683, %v5084, %v5182
        %v5249 = vsel %vm4683, %v5085, %v5184
        %v5250 = vsel %vm4683, %v5086, %v5186
        %5251 = vst [vmem:[#allocation4 + $0x10] sm:$0xff] %v5219
        %5252 = vst [vmem:[#allocation4 + $0x40] sm:$0xff] %v5220
        %5253 = vst [vmem:[#allocation4 + $0x70] sm:$0xff] %v5221
        %5254 = vst [vmem:[#allocation4 + $0xa0] sm:$0xff] %v5222
        %5255 = vst [vmem:[#allocation4 + $0xd0] sm:$0xff] %v5223
        %5256 = vst [vmem:[#allocation4 + $0x100] sm:$0xff] %v5224
        %5257 = vst [vmem:[#allocation4 + $0x130] sm:$0xff] %v5225
        %5258 = vst [vmem:[#allocation4 + $0x160] sm:$0xff] %v5226
        %5259 = vst [vmem:[#allocation4 + $0x190] sm:$0xff] %v5227
        %5260 = vst [vmem:[#allocation4 + $0x1c0] sm:$0xff] %v5228
        %5261 = vst [vmem:[#allocation4 + $0x1f0] sm:$0xff] %v5229
        %5262 = vst [vmem:[#allocation4 + $0x220] sm:$0xff] %v5230
        %5263 = vst [vmem:[#allocation4 + $0x250] sm:$0xff] %v5231
        %5264 = vst [vmem:[#allocation4 + $0x280] sm:$0xff] %v5232
        %5265 = vst [vmem:[#allocation4 + $0x2b0] sm:$0xff] %v5233
        %5266 = vst [vmem:[#allocation4 + $0x2e0] sm:$0xff] %v5234
        %5267 = vst [vmem:[#allocation4 + $0x310] sm:$0xff] %v5235
        %5268 = vst [vmem:[#allocation4 + $0x340] sm:$0xff] %v5236
        %5269 = vst [vmem:[#allocation4 + $0x370] sm:$0xff] %v5237
        %5270 = vst [vmem:[#allocation4 + $0x3a0] sm:$0xff] %v5238
        %5271 = vst [vmem:[#allocation4 + $0x3d0] sm:$0xff] %v5239
        %5272 = vst [vmem:[#allocation4 + $0x400] sm:$0xff] %v5240
        %5273 = vst [vmem:[#allocation4 + $0x430] sm:$0xff] %v5241
        %5274 = vst [vmem:[#allocation4 + $0x460] sm:$0xff] %v5242
        %5275 = vst [vmem:[#allocation4 + $0x490] sm:$0xff] %v5243
        %5276 = vst [vmem:[#allocation4 + $0x4c0] sm:$0xff] %v5244
        %5277 = vst [vmem:[#allocation4 + $0x4f0] sm:$0xff] %v5245
        %5278 = vst [vmem:[#allocation4 + $0x520] sm:$0xff] %v5246
        %5279 = vst [vmem:[#allocation4 + $0x550] sm:$0xff] %v5247
        %5280 = vst [vmem:[#allocation4 + $0x580] sm:$0xff] %v5248
        %5281 = vst [vmem:[#allocation4 + $0x5b0] sm:$0xff] %v5249
        %5282 = vst [vmem:[#allocation4 + $0x5e0] sm:$0xff] %v5250
        %v5283 = vsel %vm4683, %v5059, 0.0
        %v5284 = vsel %vm4683, %v5060, 0.0
        %v5285 = vsel %vm4683, %v5061, 0.0
        %v5286 = vsel %vm4683, %v5062, 0.0
        %v5287 = vsel %vm4683, %v5063, 0.0
        %v5288 = vsel %vm4683, %v5064, 0.0
        %v5289 = vsel %vm4683, %v5065, 0.0
        %v5290 = vsel %vm4683, %v5066, 0.0
        %v5291 = vsel %vm4683, %v5067, 0.0
        %v5292 = vsel %vm4683, %v5068, 0.0
        %v5293 = vsel %vm4683, %v5069, 0.0
        %v5294 = vsel %vm4683, %v5070, 0.0
        %v5295 = vsel %vm4683, %v5071, 0.0
        %v5296 = vsel %vm4683, %v5072, 0.0
        %v5297 = vsel %vm4683, %v5073, 0.0
        %v5298 = vsel %vm4683, %v5074, 0.0
        %v5299 = vsel %vm4683, %v5075, 0.0
        %v5300 = vsel %vm4683, %v5076, 0.0
        %v5301 = vsel %vm4683, %v5077, 0.0
        %v5302 = vsel %vm4683, %v5078, 0.0
        %v5303 = vsel %vm4683, %v5079, 0.0
        %v5304 = vsel %vm4683, %v5080, 0.0
        %v5305 = vsel %vm4683, %v5081, 0.0
        %v5306 = vsel %vm4683, %v5082, 0.0
        %v5307 = vsel %vm4683, %v5083, 0.0
        %v5308 = vsel %vm4683, %v5084, 0.0
        %v5309 = vsel %vm4683, %v5085, 0.0
        %v5310 = vsel %vm4683, %v5086, 0.0
        %v5311 = vsel %vm4683, %v5087, 0.0
        %v5312 = vsel %vm4683, %v5088, 0.0
        %v5313 = vsel %vm4683, %v5089, 0.0
        %v5314 = vsel %vm4683, %v5090, 0.0
        %5315 = vst [vmem:[#allocation4 + $0x18] sm:$0xff] %v5283
        %5316 = vst [vmem:[#allocation4 + $0x48] sm:$0xff] %v5284
        %5317 = vst [vmem:[#allocation4 + $0x78] sm:$0xff] %v5285
        %5318 = vst [vmem:[#allocation4 + $0xa8] sm:$0xff] %v5286
        %5319 = vst [vmem:[#allocation4 + $0xd8] sm:$0xff] %v5287
        %5320 = vst [vmem:[#allocation4 + $0x108] sm:$0xff] %v5288
        %5321 = vst [vmem:[#allocation4 + $0x138] sm:$0xff] %v5289
        %5322 = vst [vmem:[#allocation4 + $0x168] sm:$0xff] %v5290
        %5323 = vst [vmem:[#allocation4 + $0x198] sm:$0xff] %v5291
        %5324 = vst [vmem:[#allocation4 + $0x1c8] sm:$0xff] %v5292
        %5325 = vst [vmem:[#allocation4 + $0x1f8] sm:$0xff] %v5293
        %5326 = vst [vmem:[#allocation4 + $0x228] sm:$0xff] %v5294
        %5327 = vst [vmem:[#allocation4 + $0x258] sm:$0xff] %v5295
        %5328 = vst [vmem:[#allocation4 + $0x288] sm:$0xff] %v5296
        %5329 = vst [vmem:[#allocation4 + $0x2b8] sm:$0xff] %v5297
        %5330 = vst [vmem:[#allocation4 + $0x2e8] sm:$0xff] %v5298
        %5331 = vst [vmem:[#allocation4 + $0x318] sm:$0xff] %v5299
        %5332 = vst [vmem:[#allocation4 + $0x348] sm:$0xff] %v5300
        %5333 = vst [vmem:[#allocation4 + $0x378] sm:$0xff] %v5301
        %5334 = vst [vmem:[#allocation4 + $0x3a8] sm:$0xff] %v5302
        %5335 = vst [vmem:[#allocation4 + $0x3d8] sm:$0xff] %v5303
        %5336 = vst [vmem:[#allocation4 + $0x408] sm:$0xff] %v5304
        %5337 = vst [vmem:[#allocation4 + $0x438] sm:$0xff] %v5305
        %5338 = vst [vmem:[#allocation4 + $0x468] sm:$0xff] %v5306
        %5339 = vst [vmem:[#allocation4 + $0x498] sm:$0xff] %v5307
        %5340 = vst [vmem:[#allocation4 + $0x4c8] sm:$0xff] %v5308
        %5341 = vst [vmem:[#allocation4 + $0x4f8] sm:$0xff] %v5309
        %5342 = vst [vmem:[#allocation4 + $0x528] sm:$0xff] %v5310
        %5343 = vst [vmem:[#allocation4 + $0x558] sm:$0xff] %v5311
        %5344 = vst [vmem:[#allocation4 + $0x588] sm:$0xff] %v5312
        %5345 = vst [vmem:[#allocation4 + $0x5b8] sm:$0xff] %v5313
        %5346 = vst [vmem:[#allocation4 + $0x5e8] sm:$0xff] %v5314
        %v5347 = vld [vmem:[#allocation3 + $0x9] sm:$0xff]
        %v5348 = vld [vmem:[#allocation3 + $0x11] sm:$0xff]
        %v5349 = vld [vmem:[#allocation3 + $0x29] sm:$0xff]
        %v5350 = vld [vmem:[#allocation3 + $0x31] sm:$0xff]
        %v5351 = vld [vmem:[#allocation3 + $0x49] sm:$0xff]
        %v5352 = vld [vmem:[#allocation3 + $0x51] sm:$0xff]
        %v5353 = vld [vmem:[#allocation3 + $0x69] sm:$0xff]
        %v5354 = vld [vmem:[#allocation3 + $0x71] sm:$0xff]
        %v5355 = vld [vmem:[#allocation3 + $0x89] sm:$0xff]
        %v5356 = vld [vmem:[#allocation3 + $0x91] sm:$0xff]
        %v5357 = vld [vmem:[#allocation3 + $0xa9] sm:$0xff]
        %v5358 = vld [vmem:[#allocation3 + $0xb1] sm:$0xff]
        %v5359 = vld [vmem:[#allocation3 + $0xc9] sm:$0xff]
        %v5360 = vld [vmem:[#allocation3 + $0xd1] sm:$0xff]
        %v5361 = vld [vmem:[#allocation3 + $0xe9] sm:$0xff]
        %v5362 = vld [vmem:[#allocation3 + $0xf1] sm:$0xff]
        %v5363 = vld [vmem:[#allocation3 + $0x109] sm:$0xff]
        %v5364 = vld [vmem:[#allocation3 + $0x111] sm:$0xff]
        %v5365 = vld [vmem:[#allocation3 + $0x129] sm:$0xff]
        %v5366 = vld [vmem:[#allocation3 + $0x131] sm:$0xff]
        %v5367 = vld [vmem:[#allocation3 + $0x149] sm:$0xff]
        %v5368 = vld [vmem:[#allocation3 + $0x151] sm:$0xff]
        %v5369 = vld [vmem:[#allocation3 + $0x169] sm:$0xff]
        %v5370 = vld [vmem:[#allocation3 + $0x171] sm:$0xff]
        %v5371 = vld [vmem:[#allocation3 + $0x189] sm:$0xff]
        %v5372 = vld [vmem:[#allocation3 + $0x191] sm:$0xff]
        %v5373 = vld [vmem:[#allocation3 + $0x1a9] sm:$0xff]
        %v5374 = vld [vmem:[#allocation3 + $0x1b1] sm:$0xff]
        %v5375 = vld [vmem:[#allocation3 + $0x1c9] sm:$0xff]
        %v5376 = vld [vmem:[#allocation3 + $0x1d1] sm:$0xff]
        %v5377 = vld [vmem:[#allocation3 + $0x1e9] sm:$0xff]
        %v5378 = vld [vmem:[#allocation3 + $0x1f1] sm:$0xff]
        %v5379 = vld [vmem:[#allocation3 + $0x209] sm:$0xff]
        %v5380 = vld [vmem:[#allocation3 + $0x211] sm:$0xff]
        %v5381 = vld [vmem:[#allocation3 + $0x229] sm:$0xff]
        %v5382 = vld [vmem:[#allocation3 + $0x231] sm:$0xff]
        %5415 = vrot.lane.b32.xlu0 %v5349, 64
        %v5416 = vpop.permute.xlu0 %5415
        %5417 = vrot.lane.b32.xlu0 %v5350, 64
        %v5418 = vpop.permute.xlu0 %5417
        %5419 = vrot.lane.b32.xlu0 %v5351, 64
        %v5420 = vpop.permute.xlu0 %5419
        %5421 = vrot.lane.b32.xlu0 %v5352, 64
        %v5422 = vpop.permute.xlu0 %5421
        %5423 = vrot.lane.b32.xlu0 %v5353, 64
        %v5424 = vpop.permute.xlu0 %5423
        %5425 = vrot.lane.b32.xlu0 %v5354, 64
        %v5426 = vpop.permute.xlu0 %5425
        %5427 = vrot.lane.b32.xlu0 %v5355, 64
        %v5428 = vpop.permute.xlu0 %5427
        %5429 = vrot.lane.b32.xlu0 %v5356, 64
        %v5430 = vpop.permute.xlu0 %5429
        %5431 = vrot.lane.b32.xlu0 %v5357, 64
        %v5432 = vpop.permute.xlu0 %5431
        %5433 = vrot.lane.b32.xlu0 %v5358, 64
        %v5434 = vpop.permute.xlu0 %5433
        %5435 = vrot.lane.b32.xlu0 %v5359, 64
        %v5436 = vpop.permute.xlu0 %5435
        %5437 = vrot.lane.b32.xlu0 %v5360, 64
        %v5438 = vpop.permute.xlu0 %5437
        %5439 = vrot.lane.b32.xlu0 %v5361, 64
        %v5440 = vpop.permute.xlu0 %5439
        %5441 = vrot.lane.b32.xlu0 %v5362, 64
        %v5442 = vpop.permute.xlu0 %5441
        %5443 = vrot.lane.b32.xlu0 %v5363, 64
        %v5444 = vpop.permute.xlu0 %5443
        %5445 = vrot.lane.b32.xlu0 %v5364, 64
        %v5446 = vpop.permute.xlu0 %5445
        %5447 = vrot.lane.b32.xlu0 %v5365, 64
        %v5448 = vpop.permute.xlu0 %5447
        %5449 = vrot.lane.b32.xlu0 %v5366, 64
        %v5450 = vpop.permute.xlu0 %5449
        %5451 = vrot.lane.b32.xlu0 %v5367, 64
        %v5452 = vpop.permute.xlu0 %5451
        %5453 = vrot.lane.b32.xlu0 %v5368, 64
        %v5454 = vpop.permute.xlu0 %5453
        %5455 = vrot.lane.b32.xlu0 %v5369, 64
        %v5456 = vpop.permute.xlu0 %5455
        %5457 = vrot.lane.b32.xlu0 %v5370, 64
        %v5458 = vpop.permute.xlu0 %5457
        %5459 = vrot.lane.b32.xlu0 %v5371, 64
        %v5460 = vpop.permute.xlu0 %5459
        %5461 = vrot.lane.b32.xlu0 %v5372, 64
        %v5462 = vpop.permute.xlu0 %5461
        %5463 = vrot.lane.b32.xlu0 %v5373, 64
        %v5464 = vpop.permute.xlu0 %5463
        %5465 = vrot.lane.b32.xlu0 %v5374, 64
        %v5466 = vpop.permute.xlu0 %5465
        %5467 = vrot.lane.b32.xlu0 %v5375, 64
        %v5468 = vpop.permute.xlu0 %5467
        %5469 = vrot.lane.b32.xlu0 %v5376, 64
        %v5470 = vpop.permute.xlu0 %5469
        %5471 = vrot.lane.b32.xlu0 %v5377, 64
        %v5472 = vpop.permute.xlu0 %5471
        %5473 = vrot.lane.b32.xlu0 %v5378, 64
        %v5474 = vpop.permute.xlu0 %5473
        %5475 = vrot.lane.b32.xlu0 %v5379, 64
        %v5476 = vpop.permute.xlu0 %5475
        %5477 = vrot.lane.b32.xlu0 %v5380, 64
        %v5478 = vpop.permute.xlu0 %5477
        %v5511 = vsel %vm4683, %v5347, %v5416
        %v5512 = vsel %vm4683, %v5348, %v5418
        %v5513 = vsel %vm4683, %v5349, %v5420
        %v5514 = vsel %vm4683, %v5350, %v5422
        %v5515 = vsel %vm4683, %v5351, %v5424
        %v5516 = vsel %vm4683, %v5352, %v5426
        %v5517 = vsel %vm4683, %v5353, %v5428
        %v5518 = vsel %vm4683, %v5354, %v5430
        %v5519 = vsel %vm4683, %v5355, %v5432
        %v5520 = vsel %vm4683, %v5356, %v5434
        %v5521 = vsel %vm4683, %v5357, %v5436
        %v5522 = vsel %vm4683, %v5358, %v5438
        %v5523 = vsel %vm4683, %v5359, %v5440
        %v5524 = vsel %vm4683, %v5360, %v5442
        %v5525 = vsel %vm4683, %v5361, %v5444
        %v5526 = vsel %vm4683, %v5362, %v5446
        %v5527 = vsel %vm4683, %v5363, %v5448
        %v5528 = vsel %vm4683, %v5364, %v5450
        %v5529 = vsel %vm4683, %v5365, %v5452
        %v5530 = vsel %vm4683, %v5366, %v5454
        %v5531 = vsel %vm4683, %v5367, %v5456
        %v5532 = vsel %vm4683, %v5368, %v5458
        %v5533 = vsel %vm4683, %v5369, %v5460
        %v5534 = vsel %vm4683, %v5370, %v5462
        %v5535 = vsel %vm4683, %v5371, %v5464
        %v5536 = vsel %vm4683, %v5372, %v5466
        %v5537 = vsel %vm4683, %v5373, %v5468
        %v5538 = vsel %vm4683, %v5374, %v5470
        %v5539 = vsel %vm4683, %v5375, %v5472
        %v5540 = vsel %vm4683, %v5376, %v5474
        %v5541 = vsel %vm4683, %v5377, %v5476
        %v5542 = vsel %vm4683, %v5378, %v5478
        %5543 = vst [vmem:[#allocation4 + $0x20] sm:$0xff] %v5511
        %5544 = vst [vmem:[#allocation4 + $0x50] sm:$0xff] %v5512
        %5545 = vst [vmem:[#allocation4 + $0x80] sm:$0xff] %v5513
        %5546 = vst [vmem:[#allocation4 + $0xb0] sm:$0xff] %v5514
        %5547 = vst [vmem:[#allocation4 + $0xe0] sm:$0xff] %v5515
        %5548 = vst [vmem:[#allocation4 + $0x110] sm:$0xff] %v5516
        %5549 = vst [vmem:[#allocation4 + $0x140] sm:$0xff] %v5517
        %5550 = vst [vmem:[#allocation4 + $0x170] sm:$0xff] %v5518
        %5551 = vst [vmem:[#allocation4 + $0x1a0] sm:$0xff] %v5519
        %5552 = vst [vmem:[#allocation4 + $0x1d0] sm:$0xff] %v5520
        %5553 = vst [vmem:[#allocation4 + $0x200] sm:$0xff] %v5521
        %5554 = vst [vmem:[#allocation4 + $0x230] sm:$0xff] %v5522
        %5555 = vst [vmem:[#allocation4 + $0x260] sm:$0xff] %v5523
        %5556 = vst [vmem:[#allocation4 + $0x290] sm:$0xff] %v5524
        %5557 = vst [vmem:[#allocation4 + $0x2c0] sm:$0xff] %v5525
        %5558 = vst [vmem:[#allocation4 + $0x2f0] sm:$0xff] %v5526
        %5559 = vst [vmem:[#allocation4 + $0x320] sm:$0xff] %v5527
        %5560 = vst [vmem:[#allocation4 + $0x350] sm:$0xff] %v5528
        %5561 = vst [vmem:[#allocation4 + $0x380] sm:$0xff] %v5529
        %5562 = vst [vmem:[#allocation4 + $0x3b0] sm:$0xff] %v5530
        %5563 = vst [vmem:[#allocation4 + $0x3e0] sm:$0xff] %v5531
        %5564 = vst [vmem:[#allocation4 + $0x410] sm:$0xff] %v5532
        %5565 = vst [vmem:[#allocation4 + $0x440] sm:$0xff] %v5533
        %5566 = vst [vmem:[#allocation4 + $0x470] sm:$0xff] %v5534
        %5567 = vst [vmem:[#allocation4 + $0x4a0] sm:$0xff] %v5535
        %5568 = vst [vmem:[#allocation4 + $0x4d0] sm:$0xff] %v5536
        %5569 = vst [vmem:[#allocation4 + $0x500] sm:$0xff] %v5537
        %5570 = vst [vmem:[#allocation4 + $0x530] sm:$0xff] %v5538
        %5571 = vst [vmem:[#allocation4 + $0x560] sm:$0xff] %v5539
        %5572 = vst [vmem:[#allocation4 + $0x590] sm:$0xff] %v5540
        %5573 = vst [vmem:[#allocation4 + $0x5c0] sm:$0xff] %v5541
        %5574 = vst [vmem:[#allocation4 + $0x5f0] sm:$0xff] %v5542
        %v5575 = vsel %vm4683, %v5351, 0.0
        %v5576 = vsel %vm4683, %v5352, 0.0
        %v5577 = vsel %vm4683, %v5353, 0.0
        %v5578 = vsel %vm4683, %v5354, 0.0
        %v5579 = vsel %vm4683, %v5355, 0.0
        %v5580 = vsel %vm4683, %v5356, 0.0
        %v5581 = vsel %vm4683, %v5357, 0.0
        %v5582 = vsel %vm4683, %v5358, 0.0
        %v5583 = vsel %vm4683, %v5359, 0.0
        %v5584 = vsel %vm4683, %v5360, 0.0
        %v5585 = vsel %vm4683, %v5361, 0.0
        %v5586 = vsel %vm4683, %v5362, 0.0
        %v5587 = vsel %vm4683, %v5363, 0.0
        %v5588 = vsel %vm4683, %v5364, 0.0
        %v5589 = vsel %vm4683, %v5365, 0.0
        %v5590 = vsel %vm4683, %v5366, 0.0
        %v5591 = vsel %vm4683, %v5367, 0.0
        %v5592 = vsel %vm4683, %v5368, 0.0
        %v5593 = vsel %vm4683, %v5369, 0.0
        %v5594 = vsel %vm4683, %v5370, 0.0
        %v5595 = vsel %vm4683, %v5371, 0.0
        %v5596 = vsel %vm4683, %v5372, 0.0
        %v5597 = vsel %vm4683, %v5373, 0.0
        %v5598 = vsel %vm4683, %v5374, 0.0
        %v5599 = vsel %vm4683, %v5375, 0.0
        %v5600 = vsel %vm4683, %v5376, 0.0
        %v5601 = vsel %vm4683, %v5377, 0.0
        %v5602 = vsel %vm4683, %v5378, 0.0
        %v5603 = vsel %vm4683, %v5379, 0.0
        %v5604 = vsel %vm4683, %v5380, 0.0
        %v5605 = vsel %vm4683, %v5381, 0.0
        %v5606 = vsel %vm4683, %v5382, 0.0
        %5607 = vst [vmem:[#allocation4 + $0x28] sm:$0xff] %v5575
        %5608 = vst [vmem:[#allocation4 + $0x58] sm:$0xff] %v5576
        %5609 = vst [vmem:[#allocation4 + $0x88] sm:$0xff] %v5577
        %5610 = vst [vmem:[#allocation4 + $0xb8] sm:$0xff] %v5578
        %5611 = vst [vmem:[#allocation4 + $0xe8] sm:$0xff] %v5579
        %5612 = vst [vmem:[#allocation4 + $0x118] sm:$0xff] %v5580
        %5613 = vst [vmem:[#allocation4 + $0x148] sm:$0xff] %v5581
        %5614 = vst [vmem:[#allocation4 + $0x178] sm:$0xff] %v5582
        %5615 = vst [vmem:[#allocation4 + $0x1a8] sm:$0xff] %v5583
        %5616 = vst [vmem:[#allocation4 + $0x1d8] sm:$0xff] %v5584
        %5617 = vst [vmem:[#allocation4 + $0x208] sm:$0xff] %v5585
        %5618 = vst [vmem:[#allocation4 + $0x238] sm:$0xff] %v5586
        %5619 = vst [vmem:[#allocation4 + $0x268] sm:$0xff] %v5587
        %5620 = vst [vmem:[#allocation4 + $0x298] sm:$0xff] %v5588
        %5621 = vst [vmem:[#allocation4 + $0x2c8] sm:$0xff] %v5589
        %5622 = vst [vmem:[#allocation4 + $0x2f8] sm:$0xff] %v5590
        %5623 = vst [vmem:[#allocation4 + $0x328] sm:$0xff] %v5591
        %5624 = vst [vmem:[#allocation4 + $0x358] sm:$0xff] %v5592
        %5625 = vst [vmem:[#allocation4 + $0x388] sm:$0xff] %v5593
        %5626 = vst [vmem:[#allocation4 + $0x3b8] sm:$0xff] %v5594
        %5627 = vst [vmem:[#allocation4 + $0x3e8] sm:$0xff] %v5595
        %5628 = vst [vmem:[#allocation4 + $0x418] sm:$0xff] %v5596
        %5629 = vst [vmem:[#allocation4 + $0x448] sm:$0xff] %v5597
        %5630 = vst [vmem:[#allocation4 + $0x478] sm:$0xff] %v5598
        %5631 = vst [vmem:[#allocation4 + $0x4a8] sm:$0xff] %v5599
        %5632 = vst [vmem:[#allocation4 + $0x4d8] sm:$0xff] %v5600
        %5633 = vst [vmem:[#allocation4 + $0x508] sm:$0xff] %v5601
        %5634 = vst [vmem:[#allocation4 + $0x538] sm:$0xff] %v5602
        %5635 = vst [vmem:[#allocation4 + $0x568] sm:$0xff] %v5603
        %5636 = vst [vmem:[#allocation4 + $0x598] sm:$0xff] %v5604
        %5637 = vst [vmem:[#allocation4 + $0x5c8] sm:$0xff] %v5605
        %5638 = vst [vmem:[#allocation4 + $0x5f8] sm:$0xff] %v5606
        %v5639 = vld [vmem:[#allocation4] sm:$0xff]
        %v5640 = vld [vmem:[#allocation4 + $0x8] sm:$0xff]
        %v5641 = vld [vmem:[#allocation4 + $0x10] sm:$0xff]
        %v5642 = vld [vmem:[#allocation4 + $0x18] sm:$0xff]
        %v5643 = vld [vmem:[#allocation4 + $0x20] sm:$0xff]
        %v5644 = vld [vmem:[#allocation4 + $0x28] sm:$0xff]
        %v5645 = vld [vmem:[#allocation4 + $0x30] sm:$0xff]
        %v5646 = vld [vmem:[#allocation4 + $0x38] sm:$0xff]
        %v5647 = vld [vmem:[#allocation4 + $0x40] sm:$0xff]
        %v5648 = vld [vmem:[#allocation4 + $0x48] sm:$0xff]
        %v5649 = vld [vmem:[#allocation4 + $0x50] sm:$0xff]
        %v5650 = vld [vmem:[#allocation4 + $0x58] sm:$0xff]
        %v5651 = vld [vmem:[#allocation4 + $0x60] sm:$0xff]
        %v5652 = vld [vmem:[#allocation4 + $0x68] sm:$0xff]
        %v5653 = vld [vmem:[#allocation4 + $0x70] sm:$0xff]
        %v5654 = vld [vmem:[#allocation4 + $0x78] sm:$0xff]
        %v5655 = vld [vmem:[#allocation4 + $0x80] sm:$0xff]
        %v5656 = vld [vmem:[#allocation4 + $0x88] sm:$0xff]
        %v5657 = vld [vmem:[#allocation4 + $0x90] sm:$0xff]
        %v5658 = vld [vmem:[#allocation4 + $0x98] sm:$0xff]
        %v5659 = vld [vmem:[#allocation4 + $0xa0] sm:$0xff]
        %v5660 = vld [vmem:[#allocation4 + $0xa8] sm:$0xff]
        %v5661 = vld [vmem:[#allocation4 + $0xb0] sm:$0xff]
        %v5662 = vld [vmem:[#allocation4 + $0xb8] sm:$0xff]
        %v5663 = vld [vmem:[#allocation4 + $0xc0] sm:$0xff]
        %v5664 = vld [vmem:[#allocation4 + $0xc8] sm:$0xff]
        %v5665 = vld [vmem:[#allocation4 + $0xd0] sm:$0xff]
        %v5666 = vld [vmem:[#allocation4 + $0xd8] sm:$0xff]
        %v5667 = vld [vmem:[#allocation4 + $0xe0] sm:$0xff]
        %v5668 = vld [vmem:[#allocation4 + $0xe8] sm:$0xff]
        %v5669 = vld [vmem:[#allocation4 + $0xf0] sm:$0xff]
        %v5670 = vld [vmem:[#allocation4 + $0xf8] sm:$0xff]
        %v5671 = vld [vmem:[#allocation4 + $0x100] sm:$0xff]
        %v5672 = vld [vmem:[#allocation4 + $0x108] sm:$0xff]
        %v5673 = vld [vmem:[#allocation4 + $0x110] sm:$0xff]
        %v5674 = vld [vmem:[#allocation4 + $0x118] sm:$0xff]
        %v5675 = vld [vmem:[#allocation4 + $0x120] sm:$0xff]
        %v5676 = vld [vmem:[#allocation4 + $0x128] sm:$0xff]
        %v5677 = vld [vmem:[#allocation4 + $0x130] sm:$0xff]
        %v5678 = vld [vmem:[#allocation4 + $0x138] sm:$0xff]
        %v5679 = vld [vmem:[#allocation4 + $0x140] sm:$0xff]
        %v5680 = vld [vmem:[#allocation4 + $0x148] sm:$0xff]
        %v5681 = vld [vmem:[#allocation4 + $0x150] sm:$0xff]
        %v5682 = vld [vmem:[#allocation4 + $0x158] sm:$0xff]
        %v5683 = vld [vmem:[#allocation4 + $0x160] sm:$0xff]
        %v5684 = vld [vmem:[#allocation4 + $0x168] sm:$0xff]
        %v5685 = vld [vmem:[#allocation4 + $0x170] sm:$0xff]
        %v5686 = vld [vmem:[#allocation4 + $0x178] sm:$0xff]
        %v5687 = vld [vmem:[#allocation4 + $0x180] sm:$0xff]
        %v5688 = vld [vmem:[#allocation4 + $0x188] sm:$0xff]
        %v5689 = vld [vmem:[#allocation4 + $0x190] sm:$0xff]
        %v5690 = vld [vmem:[#allocation4 + $0x198] sm:$0xff]
        %v5691 = vld [vmem:[#allocation4 + $0x1a0] sm:$0xff]
        %v5692 = vld [vmem:[#allocation4 + $0x1a8] sm:$0xff]
        %v5693 = vld [vmem:[#allocation4 + $0x1b0] sm:$0xff]
        %v5694 = vld [vmem:[#allocation4 + $0x1b8] sm:$0xff]
        %v5695 = vld [vmem:[#allocation4 + $0x1c0] sm:$0xff]
        %v5696 = vld [vmem:[#allocation4 + $0x1c8] sm:$0xff]
        %v5697 = vld [vmem:[#allocation4 + $0x1d0] sm:$0xff]
        %v5698 = vld [vmem:[#allocation4 + $0x1d8] sm:$0xff]
        %v5699 = vld [vmem:[#allocation4 + $0x1e0] sm:$0xff]
        %v5700 = vld [vmem:[#allocation4 + $0x1e8] sm:$0xff]
        %v5701 = vld [vmem:[#allocation4 + $0x1f0] sm:$0xff]
        %v5702 = vld [vmem:[#allocation4 + $0x1f8] sm:$0xff]
        %v5703 = vld [vmem:[#allocation4 + $0x200] sm:$0xff]
        %v5704 = vld [vmem:[#allocation4 + $0x208] sm:$0xff]
        %v5705 = vld [vmem:[#allocation4 + $0x210] sm:$0xff]
        %v5706 = vld [vmem:[#allocation4 + $0x218] sm:$0xff]
        %v5707 = vld [vmem:[#allocation4 + $0x220] sm:$0xff]
        %v5708 = vld [vmem:[#allocation4 + $0x228] sm:$0xff]
        %v5709 = vld [vmem:[#allocation4 + $0x230] sm:$0xff]
        %v5710 = vld [vmem:[#allocation4 + $0x238] sm:$0xff]
        %v5711 = vld [vmem:[#allocation4 + $0x240] sm:$0xff]
        %v5712 = vld [vmem:[#allocation4 + $0x248] sm:$0xff]
        %v5713 = vld [vmem:[#allocation4 + $0x250] sm:$0xff]
        %v5714 = vld [vmem:[#allocation4 + $0x258] sm:$0xff]
        %v5715 = vld [vmem:[#allocation4 + $0x260] sm:$0xff]
        %v5716 = vld [vmem:[#allocation4 + $0x268] sm:$0xff]
        %v5717 = vld [vmem:[#allocation4 + $0x270] sm:$0xff]
        %v5718 = vld [vmem:[#allocation4 + $0x278] sm:$0xff]
        %v5719 = vld [vmem:[#allocation4 + $0x280] sm:$0xff]
        %v5720 = vld [vmem:[#allocation4 + $0x288] sm:$0xff]
        %v5721 = vld [vmem:[#allocation4 + $0x290] sm:$0xff]
        %v5722 = vld [vmem:[#allocation4 + $0x298] sm:$0xff]
        %v5723 = vld [vmem:[#allocation4 + $0x2a0] sm:$0xff]
        %v5724 = vld [vmem:[#allocation4 + $0x2a8] sm:$0xff]
        %v5725 = vld [vmem:[#allocation4 + $0x2b0] sm:$0xff]
        %v5726 = vld [vmem:[#allocation4 + $0x2b8] sm:$0xff]
        %v5727 = vld [vmem:[#allocation4 + $0x2c0] sm:$0xff]
        %v5728 = vld [vmem:[#allocation4 + $0x2c8] sm:$0xff]
        %v5729 = vld [vmem:[#allocation4 + $0x2d0] sm:$0xff]
        %v5730 = vld [vmem:[#allocation4 + $0x2d8] sm:$0xff]
        %v5731 = vld [vmem:[#allocation4 + $0x2e0] sm:$0xff]
        %v5732 = vld [vmem:[#allocation4 + $0x2e8] sm:$0xff]
        %v5733 = vld [vmem:[#allocation4 + $0x2f0] sm:$0xff]
        %v5734 = vld [vmem:[#allocation4 + $0x2f8] sm:$0xff]
        %v5735 = vld [vmem:[#allocation4 + $0x300] sm:$0xff]
        %v5736 = vld [vmem:[#allocation4 + $0x308] sm:$0xff]
        %v5737 = vld [vmem:[#allocation4 + $0x310] sm:$0xff]
        %v5738 = vld [vmem:[#allocation4 + $0x318] sm:$0xff]
        %v5739 = vld [vmem:[#allocation4 + $0x320] sm:$0xff]
        %v5740 = vld [vmem:[#allocation4 + $0x328] sm:$0xff]
        %v5741 = vld [vmem:[#allocation4 + $0x330] sm:$0xff]
        %v5742 = vld [vmem:[#allocation4 + $0x338] sm:$0xff]
        %v5743 = vld [vmem:[#allocation4 + $0x340] sm:$0xff]
        %v5744 = vld [vmem:[#allocation4 + $0x348] sm:$0xff]
        %v5745 = vld [vmem:[#allocation4 + $0x350] sm:$0xff]
        %v5746 = vld [vmem:[#allocation4 + $0x358] sm:$0xff]
        %v5747 = vld [vmem:[#allocation4 + $0x360] sm:$0xff]
        %v5748 = vld [vmem:[#allocation4 + $0x368] sm:$0xff]
        %v5749 = vld [vmem:[#allocation4 + $0x370] sm:$0xff]
        %v5750 = vld [vmem:[#allocation4 + $0x378] sm:$0xff]
        %v5751 = vld [vmem:[#allocation4 + $0x380] sm:$0xff]
        %v5752 = vld [vmem:[#allocation4 + $0x388] sm:$0xff]
        %v5753 = vld [vmem:[#allocation4 + $0x390] sm:$0xff]
        %v5754 = vld [vmem:[#allocation4 + $0x398] sm:$0xff]
        %v5755 = vld [vmem:[#allocation4 + $0x3a0] sm:$0xff]
        %v5756 = vld [vmem:[#allocation4 + $0x3a8] sm:$0xff]
        %v5757 = vld [vmem:[#allocation4 + $0x3b0] sm:$0xff]
        %v5758 = vld [vmem:[#allocation4 + $0x3b8] sm:$0xff]
        %v5759 = vld [vmem:[#allocation4 + $0x3c0] sm:$0xff]
        %v5760 = vld [vmem:[#allocation4 + $0x3c8] sm:$0xff]
        %v5761 = vld [vmem:[#allocation4 + $0x3d0] sm:$0xff]
        %v5762 = vld [vmem:[#allocation4 + $0x3d8] sm:$0xff]
        %v5763 = vld [vmem:[#allocation4 + $0x3e0] sm:$0xff]
        %v5764 = vld [vmem:[#allocation4 + $0x3e8] sm:$0xff]
        %v5765 = vld [vmem:[#allocation4 + $0x3f0] sm:$0xff]
        %v5766 = vld [vmem:[#allocation4 + $0x3f8] sm:$0xff]
        %v5767 = vld [vmem:[#allocation4 + $0x400] sm:$0xff]
        %v5768 = vld [vmem:[#allocation4 + $0x408] sm:$0xff]
        %v5769 = vld [vmem:[#allocation4 + $0x410] sm:$0xff]
        %v5770 = vld [vmem:[#allocation4 + $0x418] sm:$0xff]
        %v5771 = vld [vmem:[#allocation4 + $0x420] sm:$0xff]
        %v5772 = vld [vmem:[#allocation4 + $0x428] sm:$0xff]
        %v5773 = vld [vmem:[#allocation4 + $0x430] sm:$0xff]
        %v5774 = vld [vmem:[#allocation4 + $0x438] sm:$0xff]
        %v5775 = vld [vmem:[#allocation4 + $0x440] sm:$0xff]
        %v5776 = vld [vmem:[#allocation4 + $0x448] sm:$0xff]
        %v5777 = vld [vmem:[#allocation4 + $0x450] sm:$0xff]
        %v5778 = vld [vmem:[#allocation4 + $0x458] sm:$0xff]
        %v5779 = vld [vmem:[#allocation4 + $0x460] sm:$0xff]
        %v5780 = vld [vmem:[#allocation4 + $0x468] sm:$0xff]
        %v5781 = vld [vmem:[#allocation4 + $0x470] sm:$0xff]
        %v5782 = vld [vmem:[#allocation4 + $0x478] sm:$0xff]
        %v5783 = vld [vmem:[#allocation4 + $0x480] sm:$0xff]
        %v5784 = vld [vmem:[#allocation4 + $0x488] sm:$0xff]
        %v5785 = vld [vmem:[#allocation4 + $0x490] sm:$0xff]
        %v5786 = vld [vmem:[#allocation4 + $0x498] sm:$0xff]
        %v5787 = vld [vmem:[#allocation4 + $0x4a0] sm:$0xff]
        %v5788 = vld [vmem:[#allocation4 + $0x4a8] sm:$0xff]
        %v5789 = vld [vmem:[#allocation4 + $0x4b0] sm:$0xff]
        %v5790 = vld [vmem:[#allocation4 + $0x4b8] sm:$0xff]
        %v5791 = vld [vmem:[#allocation4 + $0x4c0] sm:$0xff]
        %v5792 = vld [vmem:[#allocation4 + $0x4c8] sm:$0xff]
        %v5793 = vld [vmem:[#allocation4 + $0x4d0] sm:$0xff]
        %v5794 = vld [vmem:[#allocation4 + $0x4d8] sm:$0xff]
        %v5795 = vld [vmem:[#allocation4 + $0x4e0] sm:$0xff]
        %v5796 = vld [vmem:[#allocation4 + $0x4e8] sm:$0xff]
        %v5797 = vld [vmem:[#allocation4 + $0x4f0] sm:$0xff]
        %v5798 = vld [vmem:[#allocation4 + $0x4f8] sm:$0xff]
        %v5799 = vld [vmem:[#allocation4 + $0x500] sm:$0xff]
        %v5800 = vld [vmem:[#allocation4 + $0x508] sm:$0xff]
        %v5801 = vld [vmem:[#allocation4 + $0x510] sm:$0xff]
        %v5802 = vld [vmem:[#allocation4 + $0x518] sm:$0xff]
        %v5803 = vld [vmem:[#allocation4 + $0x520] sm:$0xff]
        %v5804 = vld [vmem:[#allocation4 + $0x528] sm:$0xff]
        %v5805 = vld [vmem:[#allocation4 + $0x530] sm:$0xff]
        %v5806 = vld [vmem:[#allocation4 + $0x538] sm:$0xff]
        %v5807 = vld [vmem:[#allocation4 + $0x540] sm:$0xff]
        %v5808 = vld [vmem:[#allocation4 + $0x548] sm:$0xff]
        %v5809 = vld [vmem:[#allocation4 + $0x550] sm:$0xff]
        %v5810 = vld [vmem:[#allocation4 + $0x558] sm:$0xff]
        %v5811 = vld [vmem:[#allocation4 + $0x560] sm:$0xff]
        %v5812 = vld [vmem:[#allocation4 + $0x568] sm:$0xff]
        %v5813 = vld [vmem:[#allocation4 + $0x570] sm:$0xff]
        %v5814 = vld [vmem:[#allocation4 + $0x578] sm:$0xff]
        %v5815 = vld [vmem:[#allocation4 + $0x580] sm:$0xff]
        %v5816 = vld [vmem:[#allocation4 + $0x588] sm:$0xff]
        %v5817 = vld [vmem:[#allocation4 + $0x590] sm:$0xff]
        %v5818 = vld [vmem:[#allocation4 + $0x598] sm:$0xff]
        %v5819 = vld [vmem:[#allocation4 + $0x5a0] sm:$0xff]
        %v5820 = vld [vmem:[#allocation4 + $0x5a8] sm:$0xff]
        %v5821 = vld [vmem:[#allocation4 + $0x5b0] sm:$0xff]
        %v5822 = vld [vmem:[#allocation4 + $0x5b8] sm:$0xff]
        %v5823 = vld [vmem:[#allocation4 + $0x5c0] sm:$0xff]
        %v5824 = vld [vmem:[#allocation4 + $0x5c8] sm:$0xff]
        %v5825 = vld [vmem:[#allocation4 + $0x5d0] sm:$0xff]
        %v5826 = vld [vmem:[#allocation4 + $0x5d8] sm:$0xff]
        %v5827 = vld [vmem:[#allocation4 + $0x5e0] sm:$0xff]
        %v5828 = vld [vmem:[#allocation4 + $0x5e8] sm:$0xff]
        %v5829 = vld [vmem:[#allocation4 + $0x5f0] sm:$0xff]
        %v5830 = vld [vmem:[#allocation4 + $0x5f8] sm:$0xff]
        %v5831 = vld [vmem:[%s3] sm:$0xff]
        %v5832 = vld [vmem:[%s3 + $0x8] sm:$0xff]
        %v5833 = vld [vmem:[%s3 + $0x10] sm:$0xff]
        %v5834 = vld [vmem:[%s3 + $0x18] sm:$0xff]
        %v5835 = vld [vmem:[%s3 + $0x20] sm:$0xff]
        %v5836 = vld [vmem:[%s3 + $0x28] sm:$0xff]
        %v5837 = vld [vmem:[%s3 + $0x30] sm:$0xff]
        %v5838 = vld [vmem:[%s3 + $0x38] sm:$0xff]
        %v5839 = vld [vmem:[%s3 + $0x40] sm:$0xff]
        %v5840 = vld [vmem:[%s3 + $0x48] sm:$0xff]
        %v5841 = vld [vmem:[%s3 + $0x50] sm:$0xff]
        %v5842 = vld [vmem:[%s3 + $0x58] sm:$0xff]
        %v5843 = vld [vmem:[%s3 + $0x60] sm:$0xff]
        %v5844 = vld [vmem:[%s3 + $0x68] sm:$0xff]
        %v5845 = vld [vmem:[%s3 + $0x70] sm:$0xff]
        %v5846 = vld [vmem:[%s3 + $0x78] sm:$0xff]
        %v5847 = vld [vmem:[%s3 + $0x80] sm:$0xff]
        %v5848 = vld [vmem:[%s3 + $0x88] sm:$0xff]
        %v5849 = vld [vmem:[%s3 + $0x90] sm:$0xff]
        %v5850 = vld [vmem:[%s3 + $0x98] sm:$0xff]
        %v5851 = vld [vmem:[%s3 + $0xa0] sm:$0xff]
        %v5852 = vld [vmem:[%s3 + $0xa8] sm:$0xff]
        %v5853 = vld [vmem:[%s3 + $0xb0] sm:$0xff]
        %v5854 = vld [vmem:[%s3 + $0xb8] sm:$0xff]
        %v5855 = vld [vmem:[%s3 + $0xc0] sm:$0xff]
        %v5856 = vld [vmem:[%s3 + $0xc8] sm:$0xff]
        %v5857 = vld [vmem:[%s3 + $0xd0] sm:$0xff]
        %v5858 = vld [vmem:[%s3 + $0xd8] sm:$0xff]
        %v5859 = vld [vmem:[%s3 + $0xe0] sm:$0xff]
        %v5860 = vld [vmem:[%s3 + $0xe8] sm:$0xff]
        %v5861 = vld [vmem:[%s3 + $0xf0] sm:$0xff]
        %v5862 = vld [vmem:[%s3 + $0xf8] sm:$0xff]
        %v5863 = vld [vmem:[%s3 + $0x100] sm:$0xff]
        %v5864 = vld [vmem:[%s3 + $0x108] sm:$0xff]
        %v5865 = vld [vmem:[%s3 + $0x110] sm:$0xff]
        %v5866 = vld [vmem:[%s3 + $0x118] sm:$0xff]
        %v5867 = vld [vmem:[%s3 + $0x120] sm:$0xff]
        %v5868 = vld [vmem:[%s3 + $0x128] sm:$0xff]
        %v5869 = vld [vmem:[%s3 + $0x130] sm:$0xff]
        %v5870 = vld [vmem:[%s3 + $0x138] sm:$0xff]
        %v5871 = vld [vmem:[%s3 + $0x140] sm:$0xff]
        %v5872 = vld [vmem:[%s3 + $0x148] sm:$0xff]
        %v5873 = vld [vmem:[%s3 + $0x150] sm:$0xff]
        %v5874 = vld [vmem:[%s3 + $0x158] sm:$0xff]
        %v5875 = vld [vmem:[%s3 + $0x160] sm:$0xff]
        %v5876 = vld [vmem:[%s3 + $0x168] sm:$0xff]
        %v5877 = vld [vmem:[%s3 + $0x170] sm:$0xff]
        %v5878 = vld [vmem:[%s3 + $0x178] sm:$0xff]
        %v5879 = vld [vmem:[%s3 + $0x180] sm:$0xff]
        %v5880 = vld [vmem:[%s3 + $0x188] sm:$0xff]
        %v5881 = vld [vmem:[%s3 + $0x190] sm:$0xff]
        %v5882 = vld [vmem:[%s3 + $0x198] sm:$0xff]
        %v5883 = vld [vmem:[%s3 + $0x1a0] sm:$0xff]
        %v5884 = vld [vmem:[%s3 + $0x1a8] sm:$0xff]
        %v5885 = vld [vmem:[%s3 + $0x1b0] sm:$0xff]
        %v5886 = vld [vmem:[%s3 + $0x1b8] sm:$0xff]
        %v5887 = vld [vmem:[%s3 + $0x1c0] sm:$0xff]
        %v5888 = vld [vmem:[%s3 + $0x1c8] sm:$0xff]
        %v5889 = vld [vmem:[%s3 + $0x1d0] sm:$0xff]
        %v5890 = vld [vmem:[%s3 + $0x1d8] sm:$0xff]
        %v5891 = vld [vmem:[%s3 + $0x1e0] sm:$0xff]
        %v5892 = vld [vmem:[%s3 + $0x1e8] sm:$0xff]
        %v5893 = vld [vmem:[%s3 + $0x1f0] sm:$0xff]
        %v5894 = vld [vmem:[%s3 + $0x1f8] sm:$0xff]
        %v5895 = vld [vmem:[%s3 + $0x200] sm:$0xff]
        %v5896 = vld [vmem:[%s3 + $0x208] sm:$0xff]
        %v5897 = vld [vmem:[%s3 + $0x210] sm:$0xff]
        %v5898 = vld [vmem:[%s3 + $0x218] sm:$0xff]
        %v5899 = vld [vmem:[%s3 + $0x220] sm:$0xff]
        %v5900 = vld [vmem:[%s3 + $0x228] sm:$0xff]
        %v5901 = vld [vmem:[%s3 + $0x230] sm:$0xff]
        %v5902 = vld [vmem:[%s3 + $0x238] sm:$0xff]
        %v5903 = vld [vmem:[%s3 + $0x240] sm:$0xff]
        %v5904 = vld [vmem:[%s3 + $0x248] sm:$0xff]
        %v5905 = vld [vmem:[%s3 + $0x250] sm:$0xff]
        %v5906 = vld [vmem:[%s3 + $0x258] sm:$0xff]
        %v5907 = vld [vmem:[%s3 + $0x260] sm:$0xff]
        %v5908 = vld [vmem:[%s3 + $0x268] sm:$0xff]
        %v5909 = vld [vmem:[%s3 + $0x270] sm:$0xff]
        %v5910 = vld [vmem:[%s3 + $0x278] sm:$0xff]
        %v5911 = vld [vmem:[%s3 + $0x280] sm:$0xff]
        %v5912 = vld [vmem:[%s3 + $0x288] sm:$0xff]
        %v5913 = vld [vmem:[%s3 + $0x290] sm:$0xff]
        %v5914 = vld [vmem:[%s3 + $0x298] sm:$0xff]
        %v5915 = vld [vmem:[%s3 + $0x2a0] sm:$0xff]
        %v5916 = vld [vmem:[%s3 + $0x2a8] sm:$0xff]
        %v5917 = vld [vmem:[%s3 + $0x2b0] sm:$0xff]
        %v5918 = vld [vmem:[%s3 + $0x2b8] sm:$0xff]
        %v5919 = vld [vmem:[%s3 + $0x2c0] sm:$0xff]
        %v5920 = vld [vmem:[%s3 + $0x2c8] sm:$0xff]
        %v5921 = vld [vmem:[%s3 + $0x2d0] sm:$0xff]
        %v5922 = vld [vmem:[%s3 + $0x2d8] sm:$0xff]
        %v5923 = vld [vmem:[%s3 + $0x2e0] sm:$0xff]
        %v5924 = vld [vmem:[%s3 + $0x2e8] sm:$0xff]
        %v5925 = vld [vmem:[%s3 + $0x2f0] sm:$0xff]
        %v5926 = vld [vmem:[%s3 + $0x2f8] sm:$0xff]
        %v5927 = vld [vmem:[%s4] sm:$0x1]
        %v5929 = vlaneseq
        %v5930 = vshrl.u32 %v5929, 7
        %v5931 = vsub.s32 0, %v5930
        %v5932 = vrot.slane %v5927, %v5931
        %5934 = vmatprep.subr.mxu0 0.0
        %5935 = vmatpush1.msra.mxu0 %v5831
        %5936 = vmatprep.subr.mxu0 0.0
        %5937 = vmatpush1.msra.mxu0 %v5832
        %5938 = vmatprep.subr.mxu0 0.0
        %5939 = vmatpush1.msra.mxu0 %v5833
        %5940 = vmatprep.subr.mxu0 0.0
        %5941 = vmatpush1.msra.mxu0 %v5834
        %5942 = vmatprep.subr.mxu0 0.0
        %5943 = vmatpush1.msra.mxu0 %v5835
        %5944 = vmatprep.subr.mxu0 0.0
        %5945 = vmatpush1.msra.mxu0 %v5836
        %5946 = vmatprep.subr.mxu0 0.0
        %5947 = vmatpush1.msra.mxu0 %v5837
        %5948 = vmatprep.subr.mxu0 0.0
        %5949 = vmatpush1.msra.mxu0 %v5838
        %5950 = vmatprep.subr.mxu0 0.0
        %5951 = vmatpush1.msra.mxu0 %v5839
        %5952 = vmatprep.subr.mxu0 0.0
        %5953 = vmatpush1.msra.mxu0 %v5840
        %5954 = vmatprep.subr.mxu0 0.0
        %5955 = vmatpush1.msra.mxu0 %v5841
        %5956 = vmatprep.subr.mxu0 0.0
        %5957 = vmatpush1.msra.mxu0 %v5842
        %5958 = vmatprep.subr.mxu0 0.0
        %5959 = vmatpush1.msra.mxu0 %v5843
        %5960 = vmatprep.subr.mxu0 0.0
        %5961 = vmatpush1.msra.mxu0 %v5844
        %5962 = vmatprep.subr.mxu0 0.0
        %5963 = vmatpush1.msra.mxu0 %v5845
        %5964 = vmatprep.subr.mxu0 0.0
        %5965 = vmatpush1.msra.mxu0 %v5846
        %5966 = vmatprep.subr.mxu0 0.0
        %5967 = vmatpush1.msra.mxu0 %v5847
        %5968 = vmatprep.subr.mxu0 0.0
        %5969 = vmatpush1.msra.mxu0 %v5848
        %5970 = vmatprep.subr.mxu0 0.0
        %5971 = vmatpush1.msra.mxu0 %v5849
        %5972 = vmatprep.subr.mxu0 0.0
        %5973 = vmatpush1.msra.mxu0 %v5850
        %5974 = vmatprep.subr.mxu0 0.0
        %5975 = vmatpush1.msra.mxu0 %v5851
        %5976 = vmatprep.subr.mxu0 0.0
        %5977 = vmatpush1.msra.mxu0 %v5852
        %5978 = vmatprep.subr.mxu0 0.0
        %5979 = vmatpush1.msra.mxu0 %v5853
        %5980 = vmatprep.subr.mxu0 0.0
        %5981 = vmatpush1.msra.mxu0 %v5854
        %5982 = vmatprep.subr.mxu0 0.0
        %5983 = vmatpush1.msra.mxu0 %v5855
        %5984 = vmatprep.subr.mxu0 0.0
        %5985 = vmatpush1.msra.mxu0 %v5856
        %5986 = vmatprep.subr.mxu0 0.0
        %5987 = vmatpush1.msra.mxu0 %v5857
        %5988 = vmatprep.subr.mxu0 0.0
        %5989 = vmatpush1.msra.mxu0 %v5858
        %5990 = vmatprep.subr.mxu0 0.0
        %5991 = vmatpush1.msra.mxu0 %v5859
        %5992 = vmatprep.subr.mxu0 0.0
        %5993 = vmatpush1.msra.mxu0 %v5860
        %5994 = vmatprep.subr.mxu0 0.0
        %5995 = vmatpush1.msra.mxu0 %v5861
        %5996 = vmatprep.subr.mxu0 0.0
        %5997 = vmatpush1.msra.mxu0 %v5862
        %5998 = vmatprep.mubr.f32.mxu0 %v5640
        %5999 = vmatmul.mubr.f32.gmra.mrb[0].mxu0 %v5639
        %v6000 = vpop.f32.mrb[0].mxu0
        %v6001 = vadd.f32 %v5932, %v6000
        %v6002 = vpop.f32.mrb[0].mxu0
        %6003 = vmatprep.mubr.f32.mxu0 %v5646
        %6004 = vmatmul.mubr.f32.gmra.mrb[0].mxu0 %v5645
        %v6005 = vpop.f32.mrb[0].mxu0
        %v6006 = vadd.f32 %v5932, %v6005
        %v6007 = vpop.f32.mrb[0].mxu0
        %6008 = vmatprep.mubr.f32.mxu0 %v5652
        %6009 = vmatmul.mubr.f32.gmra.mrb[0].mxu0 %v5651
        %v6010 = vpop.f32.mrb[0].mxu0
        %v6011 = vadd.f32 %v5932, %v6010
        %v6012 = vpop.f32.mrb[0].mxu0
        %6013 = vmatprep.mubr.f32.mxu0 %v5658
        %6014 = vmatmul.mubr.f32.gmra.mrb[0].mxu0 %v5657
        %v6015 = vpop.f32.mrb[0].mxu0
        %v6016 = vadd.f32 %v5932, %v6015
        %v6017 = vpop.f32.mrb[0].mxu0
        %6018 = vmatprep.mubr.f32.mxu0 %v5664
        %6019 = vmatmul.mubr.f32.gmra.mrb[0].mxu0 %v5663
        %v6020 = vpop.f32.mrb[0].mxu0
        %v6021 = vadd.f32 %v5932, %v6020
        %v6022 = vpop.f32.mrb[0].mxu0
        %6023 = vmatprep.mubr.f32.mxu0 %v5670
        %6024 = vmatmul.mubr.f32.gmra.mrb[0].mxu0 %v5669
        %v6025 = vpop.f32.mrb[0].mxu0
        %v6026 = vadd.f32 %v5932, %v6025
        %v6027 = vpop.f32.mrb[0].mxu0
        %6028 = vmatprep.mubr.f32.mxu0 %v5676
        %6029 = vmatmul.mubr.f32.gmra.mrb[0].mxu0 %v5675
        %v6030 = vpop.f32.mrb[0].mxu0
        %v6031 = vadd.f32 %v5932, %v6030
        %v6032 = vpop.f32.mrb[0].mxu0
        %6033 = vmatprep.mubr.f32.mxu0 %v5682
        %6034 = vmatmul.mubr.f32.gmra.mrb[0].mxu0 %v5681
        %v6035 = vpop.f32.mrb[0].mxu0
        %v6036 = vadd.f32 %v5932, %v6035
        %v6037 = vpop.f32.mrb[0].mxu0
        %6038 = vmatprep.mubr.f32.mxu0 %v5688
        %6039 = vmatmul.mubr.f32.gmra.mrb[0].mxu0 %v5687
        %v6040 = vpop.f32.mrb[0].mxu0
        %v6041 = vadd.f32 %v5932, %v6040
        %v6042 = vpop.f32.mrb[0].mxu0
        %6043 = vmatprep.mubr.f32.mxu0 %v5694
        %6044 = vmatmul.mubr.f32.gmra.mrb[0].mxu0 %v5693
        %v6045 = vpop.f32.mrb[0].mxu0
        %v6046 = vadd.f32 %v5932, %v6045
        %v6047 = vpop.f32.mrb[0].mxu0
        %6048 = vmatprep.mubr.f32.mxu0 %v5700
        %6049 = vmatmul.mubr.f32.gmra.mrb[0].mxu0 %v5699
        %v6050 = vpop.f32.mrb[0].mxu0
        %v6051 = vadd.f32 %v5932, %v6050
        %v6052 = vpop.f32.mrb[0].mxu0
        %6053 = vmatprep.mubr.f32.mxu0 %v5706
        %6054 = vmatmul.mubr.f32.gmra.mrb[0].mxu0 %v5705
        %v6055 = vpop.f32.mrb[0].mxu0
        %v6056 = vadd.f32 %v5932, %v6055
        %v6057 = vpop.f32.mrb[0].mxu0
        %6058 = vmatprep.mubr.f32.mxu0 %v5712
        %6059 = vmatmul.mubr.f32.gmra.mrb[0].mxu0 %v5711
        %v6060 = vpop.f32.mrb[0].mxu0
        %v6061 = vadd.f32 %v5932, %v6060
        %v6062 = vpop.f32.mrb[0].mxu0
        %6063 = vmatprep.mubr.f32.mxu0 %v5718
        %6064 = vmatmul.mubr.f32.gmra.mrb[0].mxu0 %v5717
        %v6065 = vpop.f32.mrb[0].mxu0
        %v6066 = vadd.f32 %v5932, %v6065
        %v6067 = vpop.f32.mrb[0].mxu0
        %6068 = vmatprep.mubr.f32.mxu0 %v5724
        %6069 = vmatmul.mubr.f32.gmra.mrb[0].mxu0 %v5723
        %v6070 = vpop.f32.mrb[0].mxu0
        %v6071 = vadd.f32 %v5932, %v6070
        %v6072 = vpop.f32.mrb[0].mxu0
        %6073 = vmatprep.mubr.f32.mxu0 %v5730
        %6074 = vmatmul.mubr.f32.gmra.mrb[0].mxu0 %v5729
        %v6075 = vpop.f32.mrb[0].mxu0
        %v6076 = vadd.f32 %v5932, %v6075
        %v6077 = vpop.f32.mrb[0].mxu0
        %6078 = vmatprep.mubr.f32.mxu0 %v5736
        %6079 = vmatmul.mubr.f32.gmra.mrb[0].mxu0 %v5735
        %v6080 = vpop.f32.mrb[0].mxu0
        %v6081 = vadd.f32 %v5932, %v6080
        %v6082 = vpop.f32.mrb[0].mxu0
        %6083 = vmatprep.mubr.f32.mxu0 %v5742
        %6084 = vmatmul.mubr.f32.gmra.mrb[0].mxu0 %v5741
        %v6085 = vpop.f32.mrb[0].mxu0
        %v6086 = vadd.f32 %v5932, %v6085
        %v6087 = vpop.f32.mrb[0].mxu0
        %6088 = vmatprep.mubr.f32.mxu0 %v5748
        %6089 = vmatmul.mubr.f32.gmra.mrb[0].mxu0 %v5747
        %v6090 = vpop.f32.mrb[0].mxu0
        %v6091 = vadd.f32 %v5932, %v6090
        %v6092 = vpop.f32.mrb[0].mxu0
        %6093 = vmatprep.mubr.f32.mxu0 %v5754
        %6094 = vmatmul.mubr.f32.gmra.mrb[0].mxu0 %v5753
        %v6095 = vpop.f32.mrb[0].mxu0
        %v6096 = vadd.f32 %v5932, %v6095
        %v6097 = vpop.f32.mrb[0].mxu0
        %6098 = vmatprep.mubr.f32.mxu0 %v5760
        %6099 = vmatmul.mubr.f32.gmra.mrb[0].mxu0 %v5759
        %v6100 = vpop.f32.mrb[0].mxu0
        %v6101 = vadd.f32 %v5932, %v6100
        %v6102 = vpop.f32.mrb[0].mxu0
        %6103 = vmatprep.mubr.f32.mxu0 %v5766
        %6104 = vmatmul.mubr.f32.gmra.mrb[0].mxu0 %v5765
        %v6105 = vpop.f32.mrb[0].mxu0
        %v6106 = vadd.f32 %v5932, %v6105
        %v6107 = vpop.f32.mrb[0].mxu0
        %6108 = vmatprep.mubr.f32.mxu0 %v5772
        %6109 = vmatmul.mubr.f32.gmra.mrb[0].mxu0 %v5771
        %v6110 = vpop.f32.mrb[0].mxu0
        %v6111 = vadd.f32 %v5932, %v6110
        %v6112 = vpop.f32.mrb[0].mxu0
        %6113 = vmatprep.mubr.f32.mxu0 %v5778
        %6114 = vmatmul.mubr.f32.gmra.mrb[0].mxu0 %v5777
        %v6115 = vpop.f32.mrb[0].mxu0
        %v6116 = vadd.f32 %v5932, %v6115
        %v6117 = vpop.f32.mrb[0].mxu0
        %6118 = vmatprep.mubr.f32.mxu0 %v5784
        %6119 = vmatmul.mubr.f32.gmra.mrb[0].mxu0 %v5783
        %v6120 = vpop.f32.mrb[0].mxu0
        %v6121 = vadd.f32 %v5932, %v6120
        %v6122 = vpop.f32.mrb[0].mxu0
        %6123 = vmatprep.mubr.f32.mxu0 %v5790
        %6124 = vmatmul.mubr.f32.gmra.mrb[0].mxu0 %v5789
        %v6125 = vpop.f32.mrb[0].mxu0
        %v6126 = vadd.f32 %v5932, %v6125
        %v6127 = vpop.f32.mrb[0].mxu0
        %6128 = vmatprep.mubr.f32.mxu0 %v5796
        %6129 = vmatmul.mubr.f32.gmra.mrb[0].mxu0 %v5795
        %v6130 = vpop.f32.mrb[0].mxu0
        %v6131 = vadd.f32 %v5932, %v6130
        %v6132 = vpop.f32.mrb[0].mxu0
        %6133 = vmatprep.mubr.f32.mxu0 %v5802
        %6134 = vmatmul.mubr.f32.gmra.mrb[0].mxu0 %v5801
        %v6135 = vpop.f32.mrb[0].mxu0
        %v6136 = vadd.f32 %v5932, %v6135
        %v6137 = vpop.f32.mrb[0].mxu0
        %6138 = vmatprep.mubr.f32.mxu0 %v5808
        %6139 = vmatmul.mubr.f32.gmra.mrb[0].mxu0 %v5807
        %v6140 = vpop.f32.mrb[0].mxu0
        %v6141 = vadd.f32 %v5932, %v6140
        %v6142 = vpop.f32.mrb[0].mxu0
        %6143 = vmatprep.mubr.f32.mxu0 %v5814
        %6144 = vmatmul.mubr.f32.gmra.mrb[0].mxu0 %v5813
        %v6145 = vpop.f32.mrb[0].mxu0
        %v6146 = vadd.f32 %v5932, %v6145
        %v6147 = vpop.f32.mrb[0].mxu0
        %6148 = vmatprep.mubr.f32.mxu0 %v5820
        %6149 = vmatmul.mubr.f32.gmra.mrb[0].mxu0 %v5819
        %v6150 = vpop.f32.mrb[0].mxu0
        %v6151 = vadd.f32 %v5932, %v6150
        %v6152 = vpop.f32.mrb[0].mxu0
        %6153 = vmatprep.mubr.f32.mxu0 %v5826
        %6154 = vmatmul.mubr.f32.gmra.mrb[0].mxu0 %v5825
        %v6155 = vpop.f32.mrb[0].mxu0
        %v6156 = vadd.f32 %v5932, %v6155
        %v6157 = vpop.f32.mrb[0].mxu0
        %6158 = vdwg.mxu0
        %6159 = vmatprep.subr.mxu0 0.0
        %6160 = vmatpush1.msra.mxu0 %v5863
        %6161 = vmatprep.subr.mxu0 0.0
        %6162 = vmatpush1.msra.mxu0 %v5864
        %6163 = vmatprep.subr.mxu0 0.0
        %6164 = vmatpush1.msra.mxu0 %v5865
        %6165 = vmatprep.subr.mxu0 0.0
        %6166 = vmatpush1.msra.mxu0 %v5866
        %6167 = vmatprep.subr.mxu0 0.0
        %6168 = vmatpush1.msra.mxu0 %v5867
        %6169 = vmatprep.subr.mxu0 0.0
        %6170 = vmatpush1.msra.mxu0 %v5868
        %6171 = vmatprep.subr.mxu0 0.0
        %6172 = vmatpush1.msra.mxu0 %v5869
        %6173 = vmatprep.subr.mxu0 0.0
        %6174 = vmatpush1.msra.mxu0 %v5870
        %6175 = vmatprep.subr.mxu0 0.0
        %6176 = vmatpush1.msra.mxu0 %v5871
        %6177 = vmatprep.subr.mxu0 0.0
        %6178 = vmatpush1.msra.mxu0 %v5872
        %6179 = vmatprep.subr.mxu0 0.0
        %6180 = vmatpush1.msra.mxu0 %v5873
        %6181 = vmatprep.subr.mxu0 0.0
        %6182 = vmatpush1.msra.mxu0 %v5874
        %6183 = vmatprep.subr.mxu0 0.0
        %6184 = vmatpush1.msra.mxu0 %v5875
        %6185 = vmatprep.subr.mxu0 0.0
        %6186 = vmatpush1.msra.mxu0 %v5876
        %6187 = vmatprep.subr.mxu0 0.0
        %6188 = vmatpush1.msra.mxu0 %v5877
        %6189 = vmatprep.subr.mxu0 0.0
        %6190 = vmatpush1.msra.mxu0 %v5878
        %6191 = vmatprep.subr.mxu0 0.0
        %6192 = vmatpush1.msra.mxu0 %v5879
        %6193 = vmatprep.subr.mxu0 0.0
        %6194 = vmatpush1.msra.mxu0 %v5880
        %6195 = vmatprep.subr.mxu0 0.0
        %6196 = vmatpush1.msra.mxu0 %v5881
        %6197 = vmatprep.subr.mxu0 0.0
        %6198 = vmatpush1.msra.mxu0 %v5882
        %6199 = vmatprep.subr.mxu0 0.0
        %6200 = vmatpush1.msra.mxu0 %v5883
        %6201 = vmatprep.subr.mxu0 0.0
        %6202 = vmatpush1.msra.mxu0 %v5884
        %6203 = vmatprep.subr.mxu0 0.0
        %6204 = vmatpush1.msra.mxu0 %v5885
        %6205 = vmatprep.subr.mxu0 0.0
        %6206 = vmatpush1.msra.mxu0 %v5886
        %6207 = vmatprep.subr.mxu0 0.0
        %6208 = vmatpush1.msra.mxu0 %v5887
        %6209 = vmatprep.subr.mxu0 0.0
        %6210 = vmatpush1.msra.mxu0 %v5888
        %6211 = vmatprep.subr.mxu0 0.0
        %6212 = vmatpush1.msra.mxu0 %v5889
        %6213 = vmatprep.subr.mxu0 0.0
        %6214 = vmatpush1.msra.mxu0 %v5890
        %6215 = vmatprep.subr.mxu0 0.0
        %6216 = vmatpush1.msra.mxu0 %v5891
        %6217 = vmatprep.subr.mxu0 0.0
        %6218 = vmatpush1.msra.mxu0 %v5892
        %6219 = vmatprep.subr.mxu0 0.0
        %6220 = vmatpush1.msra.mxu0 %v5893
        %6221 = vmatprep.subr.mxu0 0.0
        %6222 = vmatpush1.msra.mxu0 %v5894
        %6223 = vmatprep.mubr.f32.mxu0 %v5642
        %6224 = vmatmul.mubr.f32.gmra.mrb[0].mxu0 %v5641
        %v6225 = vpop.f32.mrb[0].mxu0
        %v6226 = vadd.f32 %v6001, %v6225
        %v6227 = vpop.f32.mrb[0].mxu0
        %6228 = vmatprep.mubr.f32.mxu0 %v5648
        %6229 = vmatmul.mubr.f32.gmra.mrb[0].mxu0 %v5647
        %v6230 = vpop.f32.mrb[0].mxu0
        %v6231 = vadd.f32 %v6006, %v6230
        %v6232 = vpop.f32.mrb[0].mxu0
        %6233 = vmatprep.mubr.f32.mxu0 %v5654
        %6234 = vmatmul.mubr.f32.gmra.mrb[0].mxu0 %v5653
        %v6235 = vpop.f32.mrb[0].mxu0
        %v6236 = vadd.f32 %v6011, %v6235
        %v6237 = vpop.f32.mrb[0].mxu0
        %6238 = vmatprep.mubr.f32.mxu0 %v5660
        %6239 = vmatmul.mubr.f32.gmra.mrb[0].mxu0 %v5659
        %v6240 = vpop.f32.mrb[0].mxu0
        %v6241 = vadd.f32 %v6016, %v6240
        %v6242 = vpop.f32.mrb[0].mxu0
        %6243 = vmatprep.mubr.f32.mxu0 %v5666
        %6244 = vmatmul.mubr.f32.gmra.mrb[0].mxu0 %v5665
        %v6245 = vpop.f32.mrb[0].mxu0
        %v6246 = vadd.f32 %v6021, %v6245
        %v6247 = vpop.f32.mrb[0].mxu0
        %6248 = vmatprep.mubr.f32.mxu0 %v5672
        %6249 = vmatmul.mubr.f32.gmra.mrb[0].mxu0 %v5671
        %v6250 = vpop.f32.mrb[0].mxu0
        %v6251 = vadd.f32 %v6026, %v6250
        %v6252 = vpop.f32.mrb[0].mxu0
        %6253 = vmatprep.mubr.f32.mxu0 %v5678
        %6254 = vmatmul.mubr.f32.gmra.mrb[0].mxu0 %v5677
        %v6255 = vpop.f32.mrb[0].mxu0
        %v6256 = vadd.f32 %v6031, %v6255
        %v6257 = vpop.f32.mrb[0].mxu0
        %6258 = vmatprep.mubr.f32.mxu0 %v5684
        %6259 = vmatmul.mubr.f32.gmra.mrb[0].mxu0 %v5683
        %v6260 = vpop.f32.mrb[0].mxu0
        %v6261 = vadd.f32 %v6036, %v6260
        %v6262 = vpop.f32.mrb[0].mxu0
        %6263 = vmatprep.mubr.f32.mxu0 %v5690
        %6264 = vmatmul.mubr.f32.gmra.mrb[0].mxu0 %v5689
        %v6265 = vpop.f32.mrb[0].mxu0
        %v6266 = vadd.f32 %v6041, %v6265
        %v6267 = vpop.f32.mrb[0].mxu0
        %6268 = vmatprep.mubr.f32.mxu0 %v5696
        %6269 = vmatmul.mubr.f32.gmra.mrb[0].mxu0 %v5695
        %v6270 = vpop.f32.mrb[0].mxu0
        %v6271 = vadd.f32 %v6046, %v6270
        %v6272 = vpop.f32.mrb[0].mxu0
        %6273 = vmatprep.mubr.f32.mxu0 %v5702
        %6274 = vmatmul.mubr.f32.gmra.mrb[0].mxu0 %v5701
        %v6275 = vpop.f32.mrb[0].mxu0
        %v6276 = vadd.f32 %v6051, %v6275
        %v6277 = vpop.f32.mrb[0].mxu0
        %6278 = vmatprep.mubr.f32.mxu0 %v5708
        %6279 = vmatmul.mubr.f32.gmra.mrb[0].mxu0 %v5707
        %v6280 = vpop.f32.mrb[0].mxu0
        %v6281 = vadd.f32 %v6056, %v6280
        %v6282 = vpop.f32.mrb[0].mxu0
        %6283 = vmatprep.mubr.f32.mxu0 %v5714
        %6284 = vmatmul.mubr.f32.gmra.mrb[0].mxu0 %v5713
        %v6285 = vpop.f32.mrb[0].mxu0
        %v6286 = vadd.f32 %v6061, %v6285
        %v6287 = vpop.f32.mrb[0].mxu0
        %6288 = vmatprep.mubr.f32.mxu0 %v5720
        %6289 = vmatmul.mubr.f32.gmra.mrb[0].mxu0 %v5719
        %v6290 = vpop.f32.mrb[0].mxu0
        %v6291 = vadd.f32 %v6066, %v6290
        %v6292 = vpop.f32.mrb[0].mxu0
        %6293 = vmatprep.mubr.f32.mxu0 %v5726
        %6294 = vmatmul.mubr.f32.gmra.mrb[0].mxu0 %v5725
        %v6295 = vpop.f32.mrb[0].mxu0
        %v6296 = vadd.f32 %v6071, %v6295
        %v6297 = vpop.f32.mrb[0].mxu0
        %6298 = vmatprep.mubr.f32.mxu0 %v5732
        %6299 = vmatmul.mubr.f32.gmra.mrb[0].mxu0 %v5731
        %v6300 = vpop.f32.mrb[0].mxu0
        %v6301 = vadd.f32 %v6076, %v6300
        %v6302 = vpop.f32.mrb[0].mxu0
        %6303 = vmatprep.mubr.f32.mxu0 %v5738
        %6304 = vmatmul.mubr.f32.gmra.mrb[0].mxu0 %v5737
        %v6305 = vpop.f32.mrb[0].mxu0
        %v6306 = vadd.f32 %v6081, %v6305
        %v6307 = vpop.f32.mrb[0].mxu0
        %6308 = vmatprep.mubr.f32.mxu0 %v5744
        %6309 = vmatmul.mubr.f32.gmra.mrb[0].mxu0 %v5743
        %v6310 = vpop.f32.mrb[0].mxu0
        %v6311 = vadd.f32 %v6086, %v6310
        %v6312 = vpop.f32.mrb[0].mxu0
        %6313 = vmatprep.mubr.f32.mxu0 %v5750
        %6314 = vmatmul.mubr.f32.gmra.mrb[0].mxu0 %v5749
        %v6315 = vpop.f32.mrb[0].mxu0
        %v6316 = vadd.f32 %v6091, %v6315
        %v6317 = vpop.f32.mrb[0].mxu0
        %6318 = vmatprep.mubr.f32.mxu0 %v5756
        %6319 = vmatmul.mubr.f32.gmra.mrb[0].mxu0 %v5755
        %v6320 = vpop.f32.mrb[0].mxu0
        %v6321 = vadd.f32 %v6096, %v6320
        %v6322 = vpop.f32.mrb[0].mxu0
        %6323 = vmatprep.mubr.f32.mxu0 %v5762
        %6324 = vmatmul.mubr.f32.gmra.mrb[0].mxu0 %v5761
        %v6325 = vpop.f32.mrb[0].mxu0
        %v6326 = vadd.f32 %v6101, %v6325
        %v6327 = vpop.f32.mrb[0].mxu0
        %6328 = vmatprep.mubr.f32.mxu0 %v5768
        %6329 = vmatmul.mubr.f32.gmra.mrb[0].mxu0 %v5767
        %v6330 = vpop.f32.mrb[0].mxu0
        %v6331 = vadd.f32 %v6106, %v6330
        %v6332 = vpop.f32.mrb[0].mxu0
        %6333 = vmatprep.mubr.f32.mxu0 %v5774
        %6334 = vmatmul.mubr.f32.gmra.mrb[0].mxu0 %v5773
        %v6335 = vpop.f32.mrb[0].mxu0
        %v6336 = vadd.f32 %v6111, %v6335
        %v6337 = vpop.f32.mrb[0].mxu0
        %6338 = vmatprep.mubr.f32.mxu0 %v5780
        %6339 = vmatmul.mubr.f32.gmra.mrb[0].mxu0 %v5779
        %v6340 = vpop.f32.mrb[0].mxu0
        %v6341 = vadd.f32 %v6116, %v6340
        %v6342 = vpop.f32.mrb[0].mxu0
        %6343 = vmatprep.mubr.f32.mxu0 %v5786
        %6344 = vmatmul.mubr.f32.gmra.mrb[0].mxu0 %v5785
        %v6345 = vpop.f32.mrb[0].mxu0
        %v6346 = vadd.f32 %v6121, %v6345
        %v6347 = vpop.f32.mrb[0].mxu0
        %6348 = vmatprep.mubr.f32.mxu0 %v5792
        %6349 = vmatmul.mubr.f32.gmra.mrb[0].mxu0 %v5791
        %v6350 = vpop.f32.mrb[0].mxu0
        %v6351 = vadd.f32 %v6126, %v6350
        %v6352 = vpop.f32.mrb[0].mxu0
        %6353 = vmatprep.mubr.f32.mxu0 %v5798
        %6354 = vmatmul.mubr.f32.gmra.mrb[0].mxu0 %v5797
        %v6355 = vpop.f32.mrb[0].mxu0
        %v6356 = vadd.f32 %v6131, %v6355
        %v6357 = vpop.f32.mrb[0].mxu0
        %6358 = vmatprep.mubr.f32.mxu0 %v5804
        %6359 = vmatmul.mubr.f32.gmra.mrb[0].mxu0 %v5803
        %v6360 = vpop.f32.mrb[0].mxu0
        %v6361 = vadd.f32 %v6136, %v6360
        %v6362 = vpop.f32.mrb[0].mxu0
        %6363 = vmatprep.mubr.f32.mxu0 %v5810
        %6364 = vmatmul.mubr.f32.gmra.mrb[0].mxu0 %v5809
        %v6365 = vpop.f32.mrb[0].mxu0
        %v6366 = vadd.f32 %v6141, %v6365
        %v6367 = vpop.f32.mrb[0].mxu0
        %6368 = vmatprep.mubr.f32.mxu0 %v5816
        %6369 = vmatmul.mubr.f32.gmra.mrb[0].mxu0 %v5815
        %v6370 = vpop.f32.mrb[0].mxu0
        %v6371 = vadd.f32 %v6146, %v6370
        %v6372 = vpop.f32.mrb[0].mxu0
        %6373 = vmatprep.mubr.f32.mxu0 %v5822
        %6374 = vmatmul.mubr.f32.gmra.mrb[0].mxu0 %v5821
        %v6375 = vpop.f32.mrb[0].mxu0
        %v6376 = vadd.f32 %v6151, %v6375
        %v6377 = vpop.f32.mrb[0].mxu0
        %6378 = vmatprep.mubr.f32.mxu0 %v5828
        %6379 = vmatmul.mubr.f32.gmra.mrb[0].mxu0 %v5827
        %v6380 = vpop.f32.mrb[0].mxu0
        %v6381 = vadd.f32 %v6156, %v6380
        %v6382 = vpop.f32.mrb[0].mxu0
        %6383 = vdwg.mxu0
        %6384 = vmatprep.subr.mxu0 0.0
        %6385 = vmatpush1.msra.mxu0 %v5895
        %6386 = vmatprep.subr.mxu0 0.0
        %6387 = vmatpush1.msra.mxu0 %v5896
        %6388 = vmatprep.subr.mxu0 0.0
        %6389 = vmatpush1.msra.mxu0 %v5897
        %6390 = vmatprep.subr.mxu0 0.0
        %6391 = vmatpush1.msra.mxu0 %v5898
        %6392 = vmatprep.subr.mxu0 0.0
        %6393 = vmatpush1.msra.mxu0 %v5899
        %6394 = vmatprep.subr.mxu0 0.0
        %6395 = vmatpush1.msra.mxu0 %v5900
        %6396 = vmatprep.subr.mxu0 0.0
        %6397 = vmatpush1.msra.mxu0 %v5901
        %6398 = vmatprep.subr.mxu0 0.0
        %6399 = vmatpush1.msra.mxu0 %v5902
        %6400 = vmatprep.subr.mxu0 0.0
        %6401 = vmatpush1.msra.mxu0 %v5903
        %6402 = vmatprep.subr.mxu0 0.0
        %6403 = vmatpush1.msra.mxu0 %v5904
        %6404 = vmatprep.subr.mxu0 0.0
        %6405 = vmatpush1.msra.mxu0 %v5905
        %6406 = vmatprep.subr.mxu0 0.0
        %6407 = vmatpush1.msra.mxu0 %v5906
        %6408 = vmatprep.subr.mxu0 0.0
        %6409 = vmatpush1.msra.mxu0 %v5907
        %6410 = vmatprep.subr.mxu0 0.0
        %6411 = vmatpush1.msra.mxu0 %v5908
        %6412 = vmatprep.subr.mxu0 0.0
        %6413 = vmatpush1.msra.mxu0 %v5909
        %6414 = vmatprep.subr.mxu0 0.0
        %6415 = vmatpush1.msra.mxu0 %v5910
        %6416 = vmatprep.subr.mxu0 0.0
        %6417 = vmatpush1.msra.mxu0 %v5911
        %6418 = vmatprep.subr.mxu0 0.0
        %6419 = vmatpush1.msra.mxu0 %v5912
        %6420 = vmatprep.subr.mxu0 0.0
        %6421 = vmatpush1.msra.mxu0 %v5913
        %6422 = vmatprep.subr.mxu0 0.0
        %6423 = vmatpush1.msra.mxu0 %v5914
        %6424 = vmatprep.subr.mxu0 0.0
        %6425 = vmatpush1.msra.mxu0 %v5915
        %6426 = vmatprep.subr.mxu0 0.0
        %6427 = vmatpush1.msra.mxu0 %v5916
        %6428 = vmatprep.subr.mxu0 0.0
        %6429 = vmatpush1.msra.mxu0 %v5917
        %6430 = vmatprep.subr.mxu0 0.0
        %6431 = vmatpush1.msra.mxu0 %v5918
        %6432 = vmatprep.subr.mxu0 0.0
        %6433 = vmatpush1.msra.mxu0 %v5919
        %6434 = vmatprep.subr.mxu0 0.0
        %6435 = vmatpush1.msra.mxu0 %v5920
        %6436 = vmatprep.subr.mxu0 0.0
        %6437 = vmatpush1.msra.mxu0 %v5921
        %6438 = vmatprep.subr.mxu0 0.0
        %6439 = vmatpush1.msra.mxu0 %v5922
        %6440 = vmatprep.subr.mxu0 0.0
        %6441 = vmatpush1.msra.mxu0 %v5923
        %6442 = vmatprep.subr.mxu0 0.0
        %6443 = vmatpush1.msra.mxu0 %v5924
        %6444 = vmatprep.subr.mxu0 0.0
        %6445 = vmatpush1.msra.mxu0 %v5925
        %6446 = vmatprep.subr.mxu0 0.0
        %6447 = vmatpush1.msra.mxu0 %v5926
        %6448 = vmatprep.mubr.f32.mxu0 %v5644
        %6449 = vmatmul.mubr.f32.gmra.mrb[0].mxu0 %v5643
        %v6450 = vpop.f32.mrb[0].mxu0
        %v6451 = vadd.f32 %v6226, %v6450
        %v6452 = vpop.f32.mrb[0].mxu0
        %6453 = vmatprep.mubr.f32.mxu0 %v5650
        %6454 = vmatmul.mubr.f32.gmra.mrb[0].mxu0 %v5649
        %v6455 = vpop.f32.mrb[0].mxu0
        %v6456 = vadd.f32 %v6231, %v6455
        %v6457 = vpop.f32.mrb[0].mxu0
        %6458 = vmatprep.mubr.f32.mxu0 %v5656
        %6459 = vmatmul.mubr.f32.gmra.mrb[0].mxu0 %v5655
        %v6460 = vpop.f32.mrb[0].mxu0
        %v6461 = vadd.f32 %v6236, %v6460
        %v6462 = vpop.f32.mrb[0].mxu0
        %6463 = vmatprep.mubr.f32.mxu0 %v5662
        %6464 = vmatmul.mubr.f32.gmra.mrb[0].mxu0 %v5661
        %v6465 = vpop.f32.mrb[0].mxu0
        %v6466 = vadd.f32 %v6241, %v6465
        %v6467 = vpop.f32.mrb[0].mxu0
        %6468 = vmatprep.mubr.f32.mxu0 %v5668
        %6469 = vmatmul.mubr.f32.gmra.mrb[0].mxu0 %v5667
        %v6470 = vpop.f32.mrb[0].mxu0
        %v6471 = vadd.f32 %v6246, %v6470
        %v6472 = vpop.f32.mrb[0].mxu0
        %6473 = vmatprep.mubr.f32.mxu0 %v5674
        %6474 = vmatmul.mubr.f32.gmra.mrb[0].mxu0 %v5673
        %v6475 = vpop.f32.mrb[0].mxu0
        %v6476 = vadd.f32 %v6251, %v6475
        %v6477 = vpop.f32.mrb[0].mxu0
        %6478 = vmatprep.mubr.f32.mxu0 %v5680
        %6479 = vmatmul.mubr.f32.gmra.mrb[0].mxu0 %v5679
        %v6480 = vpop.f32.mrb[0].mxu0
        %v6481 = vadd.f32 %v6256, %v6480
        %v6482 = vpop.f32.mrb[0].mxu0
        %6483 = vmatprep.mubr.f32.mxu0 %v5686
        %6484 = vmatmul.mubr.f32.gmra.mrb[0].mxu0 %v5685
        %v6485 = vpop.f32.mrb[0].mxu0
        %v6486 = vadd.f32 %v6261, %v6485
        %v6487 = vpop.f32.mrb[0].mxu0
        %6488 = vmatprep.mubr.f32.mxu0 %v5692
        %6489 = vmatmul.mubr.f32.gmra.mrb[0].mxu0 %v5691
        %v6490 = vpop.f32.mrb[0].mxu0
        %v6491 = vadd.f32 %v6266, %v6490
        %v6492 = vpop.f32.mrb[0].mxu0
        %6493 = vmatprep.mubr.f32.mxu0 %v5698
        %6494 = vmatmul.mubr.f32.gmra.mrb[0].mxu0 %v5697
        %v6495 = vpop.f32.mrb[0].mxu0
        %v6496 = vadd.f32 %v6271, %v6495
        %v6497 = vpop.f32.mrb[0].mxu0
        %6498 = vmatprep.mubr.f32.mxu0 %v5704
        %6499 = vmatmul.mubr.f32.gmra.mrb[0].mxu0 %v5703
        %v6500 = vpop.f32.mrb[0].mxu0
        %v6501 = vadd.f32 %v6276, %v6500
        %v6502 = vpop.f32.mrb[0].mxu0
        %6503 = vmatprep.mubr.f32.mxu0 %v5710
        %6504 = vmatmul.mubr.f32.gmra.mrb[0].mxu0 %v5709
        %v6505 = vpop.f32.mrb[0].mxu0
        %v6506 = vadd.f32 %v6281, %v6505
        %v6507 = vpop.f32.mrb[0].mxu0
        %6508 = vmatprep.mubr.f32.mxu0 %v5716
        %6509 = vmatmul.mubr.f32.gmra.mrb[0].mxu0 %v5715
        %v6510 = vpop.f32.mrb[0].mxu0
        %v6511 = vadd.f32 %v6286, %v6510
        %v6512 = vpop.f32.mrb[0].mxu0
        %6513 = vmatprep.mubr.f32.mxu0 %v5722
        %6514 = vmatmul.mubr.f32.gmra.mrb[0].mxu0 %v5721
        %v6515 = vpop.f32.mrb[0].mxu0
        %v6516 = vadd.f32 %v6291, %v6515
        %v6517 = vpop.f32.mrb[0].mxu0
        %6518 = vmatprep.mubr.f32.mxu0 %v5728
        %6519 = vmatmul.mubr.f32.gmra.mrb[0].mxu0 %v5727
        %v6520 = vpop.f32.mrb[0].mxu0
        %v6521 = vadd.f32 %v6296, %v6520
        %v6522 = vpop.f32.mrb[0].mxu0
        %6523 = vmatprep.mubr.f32.mxu0 %v5734
        %6524 = vmatmul.mubr.f32.gmra.mrb[0].mxu0 %v5733
        %v6525 = vpop.f32.mrb[0].mxu0
        %v6526 = vadd.f32 %v6301, %v6525
        %v6527 = vpop.f32.mrb[0].mxu0
        %6528 = vmatprep.mubr.f32.mxu0 %v5740
        %6529 = vmatmul.mubr.f32.gmra.mrb[0].mxu0 %v5739
        %v6530 = vpop.f32.mrb[0].mxu0
        %v6531 = vadd.f32 %v6306, %v6530
        %v6532 = vpop.f32.mrb[0].mxu0
        %6533 = vmatprep.mubr.f32.mxu0 %v5746
        %6534 = vmatmul.mubr.f32.gmra.mrb[0].mxu0 %v5745
        %v6535 = vpop.f32.mrb[0].mxu0
        %v6536 = vadd.f32 %v6311, %v6535
        %v6537 = vpop.f32.mrb[0].mxu0
        %6538 = vmatprep.mubr.f32.mxu0 %v5752
        %6539 = vmatmul.mubr.f32.gmra.mrb[0].mxu0 %v5751
        %v6540 = vpop.f32.mrb[0].mxu0
        %v6541 = vadd.f32 %v6316, %v6540
        %v6542 = vpop.f32.mrb[0].mxu0
        %6543 = vmatprep.mubr.f32.mxu0 %v5758
        %6544 = vmatmul.mubr.f32.gmra.mrb[0].mxu0 %v5757
        %v6545 = vpop.f32.mrb[0].mxu0
        %v6546 = vadd.f32 %v6321, %v6545
        %v6547 = vpop.f32.mrb[0].mxu0
        %6548 = vmatprep.mubr.f32.mxu0 %v5764
        %6549 = vmatmul.mubr.f32.gmra.mrb[0].mxu0 %v5763
        %v6550 = vpop.f32.mrb[0].mxu0
        %v6551 = vadd.f32 %v6326, %v6550
        %v6552 = vpop.f32.mrb[0].mxu0
        %6553 = vmatprep.mubr.f32.mxu0 %v5770
        %6554 = vmatmul.mubr.f32.gmra.mrb[0].mxu0 %v5769
        %v6555 = vpop.f32.mrb[0].mxu0
        %v6556 = vadd.f32 %v6331, %v6555
        %v6557 = vpop.f32.mrb[0].mxu0
        %6558 = vmatprep.mubr.f32.mxu0 %v5776
        %6559 = vmatmul.mubr.f32.gmra.mrb[0].mxu0 %v5775
        %v6560 = vpop.f32.mrb[0].mxu0
        %v6561 = vadd.f32 %v6336, %v6560
        %v6562 = vpop.f32.mrb[0].mxu0
        %6563 = vmatprep.mubr.f32.mxu0 %v5782
        %6564 = vmatmul.mubr.f32.gmra.mrb[0].mxu0 %v5781
        %v6565 = vpop.f32.mrb[0].mxu0
        %v6566 = vadd.f32 %v6341, %v6565
        %v6567 = vpop.f32.mrb[0].mxu0
        %6568 = vmatprep.mubr.f32.mxu0 %v5788
        %6569 = vmatmul.mubr.f32.gmra.mrb[0].mxu0 %v5787
        %v6570 = vpop.f32.mrb[0].mxu0
        %v6571 = vadd.f32 %v6346, %v6570
        %v6572 = vpop.f32.mrb[0].mxu0
        %6573 = vmatprep.mubr.f32.mxu0 %v5794
        %6574 = vmatmul.mubr.f32.gmra.mrb[0].mxu0 %v5793
        %v6575 = vpop.f32.mrb[0].mxu0
        %v6576 = vadd.f32 %v6351, %v6575
        %v6577 = vpop.f32.mrb[0].mxu0
        %6578 = vmatprep.mubr.f32.mxu0 %v5800
        %6579 = vmatmul.mubr.f32.gmra.mrb[0].mxu0 %v5799
        %v6580 = vpop.f32.mrb[0].mxu0
        %v6581 = vadd.f32 %v6356, %v6580
        %v6582 = vpop.f32.mrb[0].mxu0
        %6583 = vmatprep.mubr.f32.mxu0 %v5806
        %6584 = vmatmul.mubr.f32.gmra.mrb[0].mxu0 %v5805
        %v6585 = vpop.f32.mrb[0].mxu0
        %v6586 = vadd.f32 %v6361, %v6585
        %v6587 = vpop.f32.mrb[0].mxu0
        %6588 = vmatprep.mubr.f32.mxu0 %v5812
        %6589 = vmatmul.mubr.f32.gmra.mrb[0].mxu0 %v5811
        %v6590 = vpop.f32.mrb[0].mxu0
        %v6591 = vadd.f32 %v6366, %v6590
        %v6592 = vpop.f32.mrb[0].mxu0
        %6593 = vmatprep.mubr.f32.mxu0 %v5818
        %6594 = vmatmul.mubr.f32.gmra.mrb[0].mxu0 %v5817
        %v6595 = vpop.f32.mrb[0].mxu0
        %v6596 = vadd.f32 %v6371, %v6595
        %v6597 = vpop.f32.mrb[0].mxu0
        %6598 = vmatprep.mubr.f32.mxu0 %v5824
        %6599 = vmatmul.mubr.f32.gmra.mrb[0].mxu0 %v5823
        %v6600 = vpop.f32.mrb[0].mxu0
        %v6601 = vadd.f32 %v6376, %v6600
        %v6602 = vpop.f32.mrb[0].mxu0
        %6603 = vmatprep.mubr.f32.mxu0 %v5830
        %6604 = vmatmul.mubr.f32.gmra.mrb[0].mxu0 %v5829
        %v6605 = vpop.f32.mrb[0].mxu0
        %v6606 = vadd.f32 %v6381, %v6605
        %v6607 = vpop.f32.mrb[0].mxu0
        %6608 = vdwg.mxu0
        %v6609 = vmax.f32 %v6451, 0.0
        %v6610 = vmax.f32 %v6456, 0.0
        %v6611 = vmax.f32 %v6461, 0.0
        %v6612 = vmax.f32 %v6466, 0.0
        %v6613 = vmax.f32 %v6471, 0.0
        %v6614 = vmax.f32 %v6476, 0.0
        %v6615 = vmax.f32 %v6481, 0.0
        %v6616 = vmax.f32 %v6486, 0.0
        %v6617 = vmax.f32 %v6491, 0.0
        %v6618 = vmax.f32 %v6496, 0.0
        %v6619 = vmax.f32 %v6501, 0.0
        %v6620 = vmax.f32 %v6506, 0.0
        %v6621 = vmax.f32 %v6511, 0.0
        %v6622 = vmax.f32 %v6516, 0.0
        %v6623 = vmax.f32 %v6521, 0.0
        %v6624 = vmax.f32 %v6526, 0.0
        %v6625 = vmax.f32 %v6531, 0.0
        %v6626 = vmax.f32 %v6536, 0.0
        %v6627 = vmax.f32 %v6541, 0.0
        %v6628 = vmax.f32 %v6546, 0.0
        %v6629 = vmax.f32 %v6551, 0.0
        %v6630 = vmax.f32 %v6556, 0.0
        %v6631 = vmax.f32 %v6561, 0.0
        %v6632 = vmax.f32 %v6566, 0.0
        %v6633 = vmax.f32 %v6571, 0.0
        %v6634 = vmax.f32 %v6576, 0.0
        %v6635 = vmax.f32 %v6581, 0.0
        %v6636 = vmax.f32 %v6586, 0.0
        %v6637 = vmax.f32 %v6591, 0.0
        %v6638 = vmax.f32 %v6596, 0.0
        %v6639 = vmax.f32 %v6601, 0.0
        %v6640 = vmax.f32 %v6606, 0.0
        %6641 = vst.msk [vmem:[%s4730 + $0x8] sm:$0xff] %vm4683, %v6609
        %6642 = vst.msk [vmem:[%s4730 + $0x10] sm:$0xff] %vm4683, %v6610
        %6643 = vst.msk [vmem:[%s4730 + $0x28] sm:$0xff] %vm4683, %v6611
        %6644 = vst.msk [vmem:[%s4730 + $0x30] sm:$0xff] %vm4683, %v6612
        %6645 = vst.msk [vmem:[%s4730 + $0x48] sm:$0xff] %vm4683, %v6613
        %6646 = vst.msk [vmem:[%s4730 + $0x50] sm:$0xff] %vm4683, %v6614
        %6647 = vst.msk [vmem:[%s4730 + $0x68] sm:$0xff] %vm4683, %v6615
        %6648 = vst.msk [vmem:[%s4730 + $0x70] sm:$0xff] %vm4683, %v6616
        %6649 = vst.msk [vmem:[%s4730 + $0x88] sm:$0xff] %vm4683, %v6617
        %6650 = vst.msk [vmem:[%s4730 + $0x90] sm:$0xff] %vm4683, %v6618
        %6651 = vst.msk [vmem:[%s4730 + $0xa8] sm:$0xff] %vm4683, %v6619
        %6652 = vst.msk [vmem:[%s4730 + $0xb0] sm:$0xff] %vm4683, %v6620
        %6653 = vst.msk [vmem:[%s4730 + $0xc8] sm:$0xff] %vm4683, %v6621
        %6654 = vst.msk [vmem:[%s4730 + $0xd0] sm:$0xff] %vm4683, %v6622
        %6655 = vst.msk [vmem:[%s4730 + $0xe8] sm:$0xff] %vm4683, %v6623
        %6656 = vst.msk [vmem:[%s4730 + $0xf0] sm:$0xff] %vm4683, %v6624
        %6657 = vst.msk [vmem:[%s4730 + $0x108] sm:$0xff] %vm4683, %v6625
        %6658 = vst.msk [vmem:[%s4730 + $0x110] sm:$0xff] %vm4683, %v6626
        %6659 = vst.msk [vmem:[%s4730 + $0x128] sm:$0xff] %vm4683, %v6627
        %6660 = vst.msk [vmem:[%s4730 + $0x130] sm:$0xff] %vm4683, %v6628
        %6661 = vst.msk [vmem:[%s4730 + $0x148] sm:$0xff] %vm4683, %v6629
        %6662 = vst.msk [vmem:[%s4730 + $0x150] sm:$0xff] %vm4683, %v6630
        %6663 = vst.msk [vmem:[%s4730 + $0x168] sm:$0xff] %vm4683, %v6631
        %6664 = vst.msk [vmem:[%s4730 + $0x170] sm:$0xff] %vm4683, %v6632
        %6665 = vst.msk [vmem:[%s4730 + $0x188] sm:$0xff] %vm4683, %v6633
        %6666 = vst.msk [vmem:[%s4730 + $0x190] sm:$0xff] %vm4683, %v6634
        %6667 = vst.msk [vmem:[%s4730 + $0x1a8] sm:$0xff] %vm4683, %v6635
        %6668 = vst.msk [vmem:[%s4730 + $0x1b0] sm:$0xff] %vm4683, %v6636
        %6669 = vst.msk [vmem:[%s4730 + $0x1c8] sm:$0xff] %vm4683, %v6637
        %6670 = vst.msk [vmem:[%s4730 + $0x1d0] sm:$0xff] %vm4683, %v6638
        %6671 = vst.msk [vmem:[%s4730 + $0x1e8] sm:$0xff] %vm4683, %v6639
        %6672 = vst.msk [vmem:[%s4730 + $0x1f0] sm:$0xff] %vm4683, %v6640
        %v6673 = vld [vmem:[#allocation3 + $0x7] sm:$0xff]
        %v6674 = vld [vmem:[#allocation3 + $0xf] sm:$0xff]
        %v6675 = vld [vmem:[#allocation3 + $0x27] sm:$0xff]
        %v6676 = vld [vmem:[#allocation3 + $0x2f] sm:$0xff]
        %v6677 = vld [vmem:[#allocation3 + $0x47] sm:$0xff]
        %v6678 = vld [vmem:[#allocation3 + $0x4f] sm:$0xff]
        %v6679 = vld [vmem:[#allocation3 + $0x67] sm:$0xff]
        %v6680 = vld [vmem:[#allocation3 + $0x6f] sm:$0xff]
        %v6681 = vld [vmem:[#allocation3 + $0x87] sm:$0xff]
        %v6682 = vld [vmem:[#allocation3 + $0x8f] sm:$0xff]
        %v6683 = vld [vmem:[#allocation3 + $0xa7] sm:$0xff]
        %v6684 = vld [vmem:[#allocation3 + $0xaf] sm:$0xff]
        %v6685 = vld [vmem:[#allocation3 + $0xc7] sm:$0xff]
        %v6686 = vld [vmem:[#allocation3 + $0xcf] sm:$0xff]
        %v6687 = vld [vmem:[#allocation3 + $0xe7] sm:$0xff]
        %v6688 = vld [vmem:[#allocation3 + $0xef] sm:$0xff]
        %v6689 = vld [vmem:[#allocation3 + $0x107] sm:$0xff]
        %v6690 = vld [vmem:[#allocation3 + $0x10f] sm:$0xff]
        %v6691 = vld [vmem:[#allocation3 + $0x127] sm:$0xff]
        %v6692 = vld [vmem:[#allocation3 + $0x12f] sm:$0xff]
        %v6693 = vld [vmem:[#allocation3 + $0x147] sm:$0xff]
        %v6694 = vld [vmem:[#allocation3 + $0x14f] sm:$0xff]
        %v6695 = vld [vmem:[#allocation3 + $0x167] sm:$0xff]
        %v6696 = vld [vmem:[#allocation3 + $0x16f] sm:$0xff]
        %v6697 = vld [vmem:[#allocation3 + $0x187] sm:$0xff]
        %v6698 = vld [vmem:[#allocation3 + $0x18f] sm:$0xff]
        %v6699 = vld [vmem:[#allocation3 + $0x1a7] sm:$0xff]
        %v6700 = vld [vmem:[#allocation3 + $0x1af] sm:$0xff]
        %v6701 = vld [vmem:[#allocation3 + $0x1c7] sm:$0xff]
        %v6702 = vld [vmem:[#allocation3 + $0x1cf] sm:$0xff]
        %v6703 = vld [vmem:[#allocation3 + $0x1e7] sm:$0xff]
        %v6704 = vld [vmem:[#allocation3 + $0x1ef] sm:$0xff]
        %v6705 = vld [vmem:[#allocation3 + $0x207] sm:$0xff]
        %v6706 = vld [vmem:[#allocation3 + $0x20f] sm:$0xff]
        %v6707 = vld [vmem:[#allocation3 + $0x227] sm:$0xff]
        %v6708 = vld [vmem:[#allocation3 + $0x22f] sm:$0xff]
        %6741 = vrot.lane.b32.xlu0 %v6675, 64
        %v6742 = vpop.permute.xlu0 %6741
        %6743 = vrot.lane.b32.xlu0 %v6676, 64
        %v6744 = vpop.permute.xlu0 %6743
        %6745 = vrot.lane.b32.xlu0 %v6677, 64
        %v6746 = vpop.permute.xlu0 %6745
        %6747 = vrot.lane.b32.xlu0 %v6678, 64
        %v6748 = vpop.permute.xlu0 %6747
        %6749 = vrot.lane.b32.xlu0 %v6679, 64
        %v6750 = vpop.permute.xlu0 %6749
        %6751 = vrot.lane.b32.xlu0 %v6680, 64
        %v6752 = vpop.permute.xlu0 %6751
        %6753 = vrot.lane.b32.xlu0 %v6681, 64
        %v6754 = vpop.permute.xlu0 %6753
        %6755 = vrot.lane.b32.xlu0 %v6682, 64
        %v6756 = vpop.permute.xlu0 %6755
        %6757 = vrot.lane.b32.xlu0 %v6683, 64
        %v6758 = vpop.permute.xlu0 %6757
        %6759 = vrot.lane.b32.xlu0 %v6684, 64
        %v6760 = vpop.permute.xlu0 %6759
        %6761 = vrot.lane.b32.xlu0 %v6685, 64
        %v6762 = vpop.permute.xlu0 %6761
        %6763 = vrot.lane.b32.xlu0 %v6686, 64
        %v6764 = vpop.permute.xlu0 %6763
        %6765 = vrot.lane.b32.xlu0 %v6687, 64
        %v6766 = vpop.permute.xlu0 %6765
        %6767 = vrot.lane.b32.xlu0 %v6688, 64
        %v6768 = vpop.permute.xlu0 %6767
        %6769 = vrot.lane.b32.xlu0 %v6689, 64
        %v6770 = vpop.permute.xlu0 %6769
        %6771 = vrot.lane.b32.xlu0 %v6690, 64
        %v6772 = vpop.permute.xlu0 %6771
        %6773 = vrot.lane.b32.xlu0 %v6691, 64
        %v6774 = vpop.permute.xlu0 %6773
        %6775 = vrot.lane.b32.xlu0 %v6692, 64
        %v6776 = vpop.permute.xlu0 %6775
        %6777 = vrot.lane.b32.xlu0 %v6693, 64
        %v6778 = vpop.permute.xlu0 %6777
        %6779 = vrot.lane.b32.xlu0 %v6694, 64
        %v6780 = vpop.permute.xlu0 %6779
        %6781 = vrot.lane.b32.xlu0 %v6695, 64
        %v6782 = vpop.permute.xlu0 %6781
        %6783 = vrot.lane.b32.xlu0 %v6696, 64
        %v6784 = vpop.permute.xlu0 %6783
        %6785 = vrot.lane.b32.xlu0 %v6697, 64
        %v6786 = vpop.permute.xlu0 %6785
        %6787 = vrot.lane.b32.xlu0 %v6698, 64
        %v6788 = vpop.permute.xlu0 %6787
        %6789 = vrot.lane.b32.xlu0 %v6699, 64
        %v6790 = vpop.permute.xlu0 %6789
        %6791 = vrot.lane.b32.xlu0 %v6700, 64
        %v6792 = vpop.permute.xlu0 %6791
        %6793 = vrot.lane.b32.xlu0 %v6701, 64
        %v6794 = vpop.permute.xlu0 %6793
        %6795 = vrot.lane.b32.xlu0 %v6702, 64
        %v6796 = vpop.permute.xlu0 %6795
        %6797 = vrot.lane.b32.xlu0 %v6703, 64
        %v6798 = vpop.permute.xlu0 %6797
        %6799 = vrot.lane.b32.xlu0 %v6704, 64
        %v6800 = vpop.permute.xlu0 %6799
        %6801 = vrot.lane.b32.xlu0 %v6705, 64
        %v6802 = vpop.permute.xlu0 %6801
        %6803 = vrot.lane.b32.xlu0 %v6706, 64
        %v6804 = vpop.permute.xlu0 %6803
        %v6837 = vsel %vm4683, %v6673, %v6742
        %v6838 = vsel %vm4683, %v6674, %v6744
        %v6839 = vsel %vm4683, %v6675, %v6746
        %v6840 = vsel %vm4683, %v6676, %v6748
        %v6841 = vsel %vm4683, %v6677, %v6750
        %v6842 = vsel %vm4683, %v6678, %v6752
        %v6843 = vsel %vm4683, %v6679, %v6754
        %v6844 = vsel %vm4683, %v6680, %v6756
        %v6845 = vsel %vm4683, %v6681, %v6758
        %v6846 = vsel %vm4683, %v6682, %v6760
        %v6847 = vsel %vm4683, %v6683, %v6762
        %v6848 = vsel %vm4683, %v6684, %v6764
        %v6849 = vsel %vm4683, %v6685, %v6766
        %v6850 = vsel %vm4683, %v6686, %v6768
        %v6851 = vsel %vm4683, %v6687, %v6770
        %v6852 = vsel %vm4683, %v6688, %v6772
        %v6853 = vsel %vm4683, %v6689, %v6774
        %v6854 = vsel %vm4683, %v6690, %v6776
        %v6855 = vsel %vm4683, %v6691, %v6778
        %v6856 = vsel %vm4683, %v6692, %v6780
        %v6857 = vsel %vm4683, %v6693, %v6782
        %v6858 = vsel %vm4683, %v6694, %v6784
        %v6859 = vsel %vm4683, %v6695, %v6786
        %v6860 = vsel %vm4683, %v6696, %v6788
        %v6861 = vsel %vm4683, %v6697, %v6790
        %v6862 = vsel %vm4683, %v6698, %v6792
        %v6863 = vsel %vm4683, %v6699, %v6794
        %v6864 = vsel %vm4683, %v6700, %v6796
        %v6865 = vsel %vm4683, %v6701, %v6798
        %v6866 = vsel %vm4683, %v6702, %v6800
        %v6867 = vsel %vm4683, %v6703, %v6802
        %v6868 = vsel %vm4683, %v6704, %v6804
        %6869 = vst [vmem:[#allocation4] sm:$0xff] %v6837
        %6870 = vst [vmem:[#allocation4 + $0x30] sm:$0xff] %v6838
        %6871 = vst [vmem:[#allocation4 + $0x60] sm:$0xff] %v6839
        %6872 = vst [vmem:[#allocation4 + $0x90] sm:$0xff] %v6840
        %6873 = vst [vmem:[#allocation4 + $0xc0] sm:$0xff] %v6841
        %6874 = vst [vmem:[#allocation4 + $0xf0] sm:$0xff] %v6842
        %6875 = vst [vmem:[#allocation4 + $0x120] sm:$0xff] %v6843
        %6876 = vst [vmem:[#allocation4 + $0x150] sm:$0xff] %v6844
        %6877 = vst [vmem:[#allocation4 + $0x180] sm:$0xff] %v6845
        %6878 = vst [vmem:[#allocation4 + $0x1b0] sm:$0xff] %v6846
        %6879 = vst [vmem:[#allocation4 + $0x1e0] sm:$0xff] %v6847
        %6880 = vst [vmem:[#allocation4 + $0x210] sm:$0xff] %v6848
        %6881 = vst [vmem:[#allocation4 + $0x240] sm:$0xff] %v6849
        %6882 = vst [vmem:[#allocation4 + $0x270] sm:$0xff] %v6850
        %6883 = vst [vmem:[#allocation4 + $0x2a0] sm:$0xff] %v6851
        %6884 = vst [vmem:[#allocation4 + $0x2d0] sm:$0xff] %v6852
        %6885 = vst [vmem:[#allocation4 + $0x300] sm:$0xff] %v6853
        %6886 = vst [vmem:[#allocation4 + $0x330] sm:$0xff] %v6854
        %6887 = vst [vmem:[#allocation4 + $0x360] sm:$0xff] %v6855
        %6888 = vst [vmem:[#allocation4 + $0x390] sm:$0xff] %v6856
        %6889 = vst [vmem:[#allocation4 + $0x3c0] sm:$0xff] %v6857
        %6890 = vst [vmem:[#allocation4 + $0x3f0] sm:$0xff] %v6858
        %6891 = vst [vmem:[#allocation4 + $0x420] sm:$0xff] %v6859
        %6892 = vst [vmem:[#allocation4 + $0x450] sm:$0xff] %v6860
        %6893 = vst [vmem:[#allocation4 + $0x480] sm:$0xff] %v6861
        %6894 = vst [vmem:[#allocation4 + $0x4b0] sm:$0xff] %v6862
        %6895 = vst [vmem:[#allocation4 + $0x4e0] sm:$0xff] %v6863
        %6896 = vst [vmem:[#allocation4 + $0x510] sm:$0xff] %v6864
        %6897 = vst [vmem:[#allocation4 + $0x540] sm:$0xff] %v6865
        %6898 = vst [vmem:[#allocation4 + $0x570] sm:$0xff] %v6866
        %6899 = vst [vmem:[#allocation4 + $0x5a0] sm:$0xff] %v6867
        %6900 = vst [vmem:[#allocation4 + $0x5d0] sm:$0xff] %v6868
        %v6901 = vsel %vm4683, %v6677, 0.0
        %v6902 = vsel %vm4683, %v6678, 0.0
        %v6903 = vsel %vm4683, %v6679, 0.0
        %v6904 = vsel %vm4683, %v6680, 0.0
        %v6905 = vsel %vm4683, %v6681, 0.0
        %v6906 = vsel %vm4683, %v6682, 0.0
        %v6907 = vsel %vm4683, %v6683, 0.0
        %v6908 = vsel %vm4683, %v6684, 0.0
        %v6909 = vsel %vm4683, %v6685, 0.0
        %v6910 = vsel %vm4683, %v6686, 0.0
        %v6911 = vsel %vm4683, %v6687, 0.0
        %v6912 = vsel %vm4683, %v6688, 0.0
        %v6913 = vsel %vm4683, %v6689, 0.0
        %v6914 = vsel %vm4683, %v6690, 0.0
        %v6915 = vsel %vm4683, %v6691, 0.0
        %v6916 = vsel %vm4683, %v6692, 0.0
        %v6917 = vsel %vm4683, %v6693, 0.0
        %v6918 = vsel %vm4683, %v6694, 0.0
        %v6919 = vsel %vm4683, %v6695, 0.0
        %v6920 = vsel %vm4683, %v6696, 0.0
        %v6921 = vsel %vm4683, %v6697, 0.0
        %v6922 = vsel %vm4683, %v6698, 0.0
        %v6923 = vsel %vm4683, %v6699, 0.0
        %v6924 = vsel %vm4683, %v6700, 0.0
        %v6925 = vsel %vm4683, %v6701, 0.0
        %v6926 = vsel %vm4683, %v6702, 0.0
        %v6927 = vsel %vm4683, %v6703, 0.0
        %v6928 = vsel %vm4683, %v6704, 0.0
        %v6929 = vsel %vm4683, %v6705, 0.0
        %v6930 = vsel %vm4683, %v6706, 0.0
        %v6931 = vsel %vm4683, %v6707, 0.0
        %v6932 = vsel %vm4683, %v6708, 0.0
        %6933 = vst [vmem:[#allocation4 + $0x8] sm:$0xff] %v6901
        %6934 = vst [vmem:[#allocation4 + $0x38] sm:$0xff] %v6902
        %6935 = vst [vmem:[#allocation4 + $0x68] sm:$0xff] %v6903
        %6936 = vst [vmem:[#allocation4 + $0x98] sm:$0xff] %v6904
        %6937 = vst [vmem:[#allocation4 + $0xc8] sm:$0xff] %v6905
        %6938 = vst [vmem:[#allocation4 + $0xf8] sm:$0xff] %v6906
        %6939 = vst [vmem:[#allocation4 + $0x128] sm:$0xff] %v6907
        %6940 = vst [vmem:[#allocation4 + $0x158] sm:$0xff] %v6908
        %6941 = vst [vmem:[#allocation4 + $0x188] sm:$0xff] %v6909
        %6942 = vst [vmem:[#allocation4 + $0x1b8] sm:$0xff] %v6910
        %6943 = vst [vmem:[#allocation4 + $0x1e8] sm:$0xff] %v6911
        %6944 = vst [vmem:[#allocation4 + $0x218] sm:$0xff] %v6912
        %6945 = vst [vmem:[#allocation4 + $0x248] sm:$0xff] %v6913
        %6946 = vst [vmem:[#allocation4 + $0x278] sm:$0xff] %v6914
        %6947 = vst [vmem:[#allocation4 + $0x2a8] sm:$0xff] %v6915
        %6948 = vst [vmem:[#allocation4 + $0x2d8] sm:$0xff] %v6916
        %6949 = vst [vmem:[#allocation4 + $0x308] sm:$0xff] %v6917
        %6950 = vst [vmem:[#allocation4 + $0x338] sm:$0xff] %v6918
        %6951 = vst [vmem:[#allocation4 + $0x368] sm:$0xff] %v6919
        %6952 = vst [vmem:[#allocation4 + $0x398] sm:$0xff] %v6920
        %6953 = vst [vmem:[#allocation4 + $0x3c8] sm:$0xff] %v6921
        %6954 = vst [vmem:[#allocation4 + $0x3f8] sm:$0xff] %v6922
        %6955 = vst [vmem:[#allocation4 + $0x428] sm:$0xff] %v6923
        %6956 = vst [vmem:[#allocation4 + $0x458] sm:$0xff] %v6924
        %6957 = vst [vmem:[#allocation4 + $0x488] sm:$0xff] %v6925
        %6958 = vst [vmem:[#allocation4 + $0x4b8] sm:$0xff] %v6926
        %6959 = vst [vmem:[#allocation4 + $0x4e8] sm:$0xff] %v6927
        %6960 = vst [vmem:[#allocation4 + $0x518] sm:$0xff] %v6928
        %6961 = vst [vmem:[#allocation4 + $0x548] sm:$0xff] %v6929
        %6962 = vst [vmem:[#allocation4 + $0x578] sm:$0xff] %v6930
        %6963 = vst [vmem:[#allocation4 + $0x5a8] sm:$0xff] %v6931
        %6964 = vst [vmem:[#allocation4 + $0x5d8] sm:$0xff] %v6932
        %v6965 = vld [vmem:[#allocation3 + $0x8] sm:$0xff]
        %v6966 = vld [vmem:[#allocation3 + $0x10] sm:$0xff]
        %v6967 = vld [vmem:[#allocation3 + $0x28] sm:$0xff]
        %v6968 = vld [vmem:[#allocation3 + $0x30] sm:$0xff]
        %v6969 = vld [vmem:[#allocation3 + $0x48] sm:$0xff]
        %v6970 = vld [vmem:[#allocation3 + $0x50] sm:$0xff]
        %v6971 = vld [vmem:[#allocation3 + $0x68] sm:$0xff]
        %v6972 = vld [vmem:[#allocation3 + $0x70] sm:$0xff]
        %v6973 = vld [vmem:[#allocation3 + $0x88] sm:$0xff]
        %v6974 = vld [vmem:[#allocation3 + $0x90] sm:$0xff]
        %v6975 = vld [vmem:[#allocation3 + $0xa8] sm:$0xff]
        %v6976 = vld [vmem:[#allocation3 + $0xb0] sm:$0xff]
        %v6977 = vld [vmem:[#allocation3 + $0xc8] sm:$0xff]
        %v6978 = vld [vmem:[#allocation3 + $0xd0] sm:$0xff]
        %v6979 = vld [vmem:[#allocation3 + $0xe8] sm:$0xff]
        %v6980 = vld [vmem:[#allocation3 + $0xf0] sm:$0xff]
        %v6981 = vld [vmem:[#allocation3 + $0x108] sm:$0xff]
        %v6982 = vld [vmem:[#allocation3 + $0x110] sm:$0xff]
        %v6983 = vld [vmem:[#allocation3 + $0x128] sm:$0xff]
        %v6984 = vld [vmem:[#allocation3 + $0x130] sm:$0xff]
        %v6985 = vld [vmem:[#allocation3 + $0x148] sm:$0xff]
        %v6986 = vld [vmem:[#allocation3 + $0x150] sm:$0xff]
        %v6987 = vld [vmem:[#allocation3 + $0x168] sm:$0xff]
        %v6988 = vld [vmem:[#allocation3 + $0x170] sm:$0xff]
        %v6989 = vld [vmem:[#allocation3 + $0x188] sm:$0xff]
        %v6990 = vld [vmem:[#allocation3 + $0x190] sm:$0xff]
        %v6991 = vld [vmem:[#allocation3 + $0x1a8] sm:$0xff]
        %v6992 = vld [vmem:[#allocation3 + $0x1b0] sm:$0xff]
        %v6993 = vld [vmem:[#allocation3 + $0x1c8] sm:$0xff]
        %v6994 = vld [vmem:[#allocation3 + $0x1d0] sm:$0xff]
        %v6995 = vld [vmem:[#allocation3 + $0x1e8] sm:$0xff]
        %v6996 = vld [vmem:[#allocation3 + $0x1f0] sm:$0xff]
        %v6997 = vld [vmem:[#allocation3 + $0x208] sm:$0xff]
        %v6998 = vld [vmem:[#allocation3 + $0x210] sm:$0xff]
        %v6999 = vld [vmem:[#allocation3 + $0x228] sm:$0xff]
        %v7000 = vld [vmem:[#allocation3 + $0x230] sm:$0xff]
        %7033 = vrot.lane.b32.xlu0 %v6967, 64
        %v7034 = vpop.permute.xlu0 %7033
        %7035 = vrot.lane.b32.xlu0 %v6968, 64
        %v7036 = vpop.permute.xlu0 %7035
        %7037 = vrot.lane.b32.xlu0 %v6969, 64
        %v7038 = vpop.permute.xlu0 %7037
        %7039 = vrot.lane.b32.xlu0 %v6970, 64
        %v7040 = vpop.permute.xlu0 %7039
        %7041 = vrot.lane.b32.xlu0 %v6971, 64
        %v7042 = vpop.permute.xlu0 %7041
        %7043 = vrot.lane.b32.xlu0 %v6972, 64
        %v7044 = vpop.permute.xlu0 %7043
        %7045 = vrot.lane.b32.xlu0 %v6973, 64
        %v7046 = vpop.permute.xlu0 %7045
        %7047 = vrot.lane.b32.xlu0 %v6974, 64
        %v7048 = vpop.permute.xlu0 %7047
        %7049 = vrot.lane.b32.xlu0 %v6975, 64
        %v7050 = vpop.permute.xlu0 %7049
        %7051 = vrot.lane.b32.xlu0 %v6976, 64
        %v7052 = vpop.permute.xlu0 %7051
        %7053 = vrot.lane.b32.xlu0 %v6977, 64
        %v7054 = vpop.permute.xlu0 %7053
        %7055 = vrot.lane.b32.xlu0 %v6978, 64
        %v7056 = vpop.permute.xlu0 %7055
        %7057 = vrot.lane.b32.xlu0 %v6979, 64
        %v7058 = vpop.permute.xlu0 %7057
        %7059 = vrot.lane.b32.xlu0 %v6980, 64
        %v7060 = vpop.permute.xlu0 %7059
        %7061 = vrot.lane.b32.xlu0 %v6981, 64
        %v7062 = vpop.permute.xlu0 %7061
        %7063 = vrot.lane.b32.xlu0 %v6982, 64
        %v7064 = vpop.permute.xlu0 %7063
        %7065 = vrot.lane.b32.xlu0 %v6983, 64
        %v7066 = vpop.permute.xlu0 %7065
        %7067 = vrot.lane.b32.xlu0 %v6984, 64
        %v7068 = vpop.permute.xlu0 %7067
        %7069 = vrot.lane.b32.xlu0 %v6985, 64
        %v7070 = vpop.permute.xlu0 %7069
        %7071 = vrot.lane.b32.xlu0 %v6986, 64
        %v7072 = vpop.permute.xlu0 %7071
        %7073 = vrot.lane.b32.xlu0 %v6987, 64
        %v7074 = vpop.permute.xlu0 %7073
        %7075 = vrot.lane.b32.xlu0 %v6988, 64
        %v7076 = vpop.permute.xlu0 %7075
        %7077 = vrot.lane.b32.xlu0 %v6989, 64
        %v7078 = vpop.permute.xlu0 %7077
        %7079 = vrot.lane.b32.xlu0 %v6990, 64
        %v7080 = vpop.permute.xlu0 %7079
        %7081 = vrot.lane.b32.xlu0 %v6991, 64
        %v7082 = vpop.permute.xlu0 %7081
        %7083 = vrot.lane.b32.xlu0 %v6992, 64
        %v7084 = vpop.permute.xlu0 %7083
        %7085 = vrot.lane.b32.xlu0 %v6993, 64
        %v7086 = vpop.permute.xlu0 %7085
        %7087 = vrot.lane.b32.xlu0 %v6994, 64
        %v7088 = vpop.permute.xlu0 %7087
        %7089 = vrot.lane.b32.xlu0 %v6995, 64
        %v7090 = vpop.permute.xlu0 %7089
        %7091 = vrot.lane.b32.xlu0 %v6996, 64
        %v7092 = vpop.permute.xlu0 %7091
        %7093 = vrot.lane.b32.xlu0 %v6997, 64
        %v7094 = vpop.permute.xlu0 %7093
        %7095 = vrot.lane.b32.xlu0 %v6998, 64
        %v7096 = vpop.permute.xlu0 %7095
        %v7129 = vsel %vm4683, %v6965, %v7034
        %v7130 = vsel %vm4683, %v6966, %v7036
        %v7131 = vsel %vm4683, %v6967, %v7038
        %v7132 = vsel %vm4683, %v6968, %v7040
        %v7133 = vsel %vm4683, %v6969, %v7042
        %v7134 = vsel %vm4683, %v6970, %v7044
        %v7135 = vsel %vm4683, %v6971, %v7046
        %v7136 = vsel %vm4683, %v6972, %v7048
        %v7137 = vsel %vm4683, %v6973, %v7050
        %v7138 = vsel %vm4683, %v6974, %v7052
        %v7139 = vsel %vm4683, %v6975, %v7054
        %v7140 = vsel %vm4683, %v6976, %v7056
        %v7141 = vsel %vm4683, %v6977, %v7058
        %v7142 = vsel %vm4683, %v6978, %v7060
        %v7143 = vsel %vm4683, %v6979, %v7062
        %v7144 = vsel %vm4683, %v6980, %v7064
        %v7145 = vsel %vm4683, %v6981, %v7066
        %v7146 = vsel %vm4683, %v6982, %v7068
        %v7147 = vsel %vm4683, %v6983, %v7070
        %v7148 = vsel %vm4683, %v6984, %v7072
        %v7149 = vsel %vm4683, %v6985, %v7074
        %v7150 = vsel %vm4683, %v6986, %v7076
        %v7151 = vsel %vm4683, %v6987, %v7078
        %v7152 = vsel %vm4683, %v6988, %v7080
        %v7153 = vsel %vm4683, %v6989, %v7082
        %v7154 = vsel %vm4683, %v6990, %v7084
        %v7155 = vsel %vm4683, %v6991, %v7086
        %v7156 = vsel %vm4683, %v6992, %v7088
        %v7157 = vsel %vm4683, %v6993, %v7090
        %v7158 = vsel %vm4683, %v6994, %v7092
        %v7159 = vsel %vm4683, %v6995, %v7094
        %v7160 = vsel %vm4683, %v6996, %v7096
        %7161 = vst [vmem:[#allocation4 + $0x10] sm:$0xff] %v7129
        %7162 = vst [vmem:[#allocation4 + $0x40] sm:$0xff] %v7130
        %7163 = vst [vmem:[#allocation4 + $0x70] sm:$0xff] %v7131
        %7164 = vst [vmem:[#allocation4 + $0xa0] sm:$0xff] %v7132
        %7165 = vst [vmem:[#allocation4 + $0xd0] sm:$0xff] %v7133
        %7166 = vst [vmem:[#allocation4 + $0x100] sm:$0xff] %v7134
        %7167 = vst [vmem:[#allocation4 + $0x130] sm:$0xff] %v7135
        %7168 = vst [vmem:[#allocation4 + $0x160] sm:$0xff] %v7136
        %7169 = vst [vmem:[#allocation4 + $0x190] sm:$0xff] %v7137
        %7170 = vst [vmem:[#allocation4 + $0x1c0] sm:$0xff] %v7138
        %7171 = vst [vmem:[#allocation4 + $0x1f0] sm:$0xff] %v7139
        %7172 = vst [vmem:[#allocation4 + $0x220] sm:$0xff] %v7140
        %7173 = vst [vmem:[#allocation4 + $0x250] sm:$0xff] %v7141
        %7174 = vst [vmem:[#allocation4 + $0x280] sm:$0xff] %v7142
        %7175 = vst [vmem:[#allocation4 + $0x2b0] sm:$0xff] %v7143
        %7176 = vst [vmem:[#allocation4 + $0x2e0] sm:$0xff] %v7144
        %7177 = vst [vmem:[#allocation4 + $0x310] sm:$0xff] %v7145
        %7178 = vst [vmem:[#allocation4 + $0x340] sm:$0xff] %v7146
        %7179 = vst [vmem:[#allocation4 + $0x370] sm:$0xff] %v7147
        %7180 = vst [vmem:[#allocation4 + $0x3a0] sm:$0xff] %v7148
        %7181 = vst [vmem:[#allocation4 + $0x3d0] sm:$0xff] %v7149
        %7182 = vst [vmem:[#allocation4 + $0x400] sm:$0xff] %v7150
        %7183 = vst [vmem:[#allocation4 + $0x430] sm:$0xff] %v7151
        %7184 = vst [vmem:[#allocation4 + $0x460] sm:$0xff] %v7152
        %7185 = vst [vmem:[#allocation4 + $0x490] sm:$0xff] %v7153
        %7186 = vst [vmem:[#allocation4 + $0x4c0] sm:$0xff] %v7154
        %7187 = vst [vmem:[#allocation4 + $0x4f0] sm:$0xff] %v7155
        %7188 = vst [vmem:[#allocation4 + $0x520] sm:$0xff] %v7156
        %7189 = vst [vmem:[#allocation4 + $0x550] sm:$0xff] %v7157
        %7190 = vst [vmem:[#allocation4 + $0x580] sm:$0xff] %v7158
        %7191 = vst [vmem:[#allocation4 + $0x5b0] sm:$0xff] %v7159
        %7192 = vst [vmem:[#allocation4 + $0x5e0] sm:$0xff] %v7160
        %v7193 = vsel %vm4683, %v6969, 0.0
        %v7194 = vsel %vm4683, %v6970, 0.0
        %v7195 = vsel %vm4683, %v6971, 0.0
        %v7196 = vsel %vm4683, %v6972, 0.0
        %v7197 = vsel %vm4683, %v6973, 0.0
        %v7198 = vsel %vm4683, %v6974, 0.0
        %v7199 = vsel %vm4683, %v6975, 0.0
        %v7200 = vsel %vm4683, %v6976, 0.0
        %v7201 = vsel %vm4683, %v6977, 0.0
        %v7202 = vsel %vm4683, %v6978, 0.0
        %v7203 = vsel %vm4683, %v6979, 0.0
        %v7204 = vsel %vm4683, %v6980, 0.0
        %v7205 = vsel %vm4683, %v6981, 0.0
        %v7206 = vsel %vm4683, %v6982, 0.0
        %v7207 = vsel %vm4683, %v6983, 0.0
        %v7208 = vsel %vm4683, %v6984, 0.0
        %v7209 = vsel %vm4683, %v6985, 0.0
        %v7210 = vsel %vm4683, %v6986, 0.0
        %v7211 = vsel %vm4683, %v6987, 0.0
        %v7212 = vsel %vm4683, %v6988, 0.0
        %v7213 = vsel %vm4683, %v6989, 0.0
        %v7214 = vsel %vm4683, %v6990, 0.0
        %v7215 = vsel %vm4683, %v6991, 0.0
        %v7216 = vsel %vm4683, %v6992, 0.0
        %v7217 = vsel %vm4683, %v6993, 0.0
        %v7218 = vsel %vm4683, %v6994, 0.0
        %v7219 = vsel %vm4683, %v6995, 0.0
        %v7220 = vsel %vm4683, %v6996, 0.0
        %v7221 = vsel %vm4683, %v6997, 0.0
        %v7222 = vsel %vm4683, %v6998, 0.0
        %v7223 = vsel %vm4683, %v6999, 0.0
        %v7224 = vsel %vm4683, %v7000, 0.0
        %7225 = vst [vmem:[#allocation4 + $0x18] sm:$0xff] %v7193
        %7226 = vst [vmem:[#allocation4 + $0x48] sm:$0xff] %v7194
        %7227 = vst [vmem:[#allocation4 + $0x78] sm:$0xff] %v7195
        %7228 = vst [vmem:[#allocation4 + $0xa8] sm:$0xff] %v7196
        %7229 = vst [vmem:[#allocation4 + $0xd8] sm:$0xff] %v7197
        %7230 = vst [vmem:[#allocation4 + $0x108] sm:$0xff] %v7198
        %7231 = vst [vmem:[#allocation4 + $0x138] sm:$0xff] %v7199
        %7232 = vst [vmem:[#allocation4 + $0x168] sm:$0xff] %v7200
        %7233 = vst [vmem:[#allocation4 + $0x198] sm:$0xff] %v7201
        %7234 = vst [vmem:[#allocation4 + $0x1c8] sm:$0xff] %v7202
        %7235 = vst [vmem:[#allocation4 + $0x1f8] sm:$0xff] %v7203
        %7236 = vst [vmem:[#allocation4 + $0x228] sm:$0xff] %v7204
        %7237 = vst [vmem:[#allocation4 + $0x258] sm:$0xff] %v7205
        %7238 = vst [vmem:[#allocation4 + $0x288] sm:$0xff] %v7206
        %7239 = vst [vmem:[#allocation4 + $0x2b8] sm:$0xff] %v7207
        %7240 = vst [vmem:[#allocation4 + $0x2e8] sm:$0xff] %v7208
        %7241 = vst [vmem:[#allocation4 + $0x318] sm:$0xff] %v7209
        %7242 = vst [vmem:[#allocation4 + $0x348] sm:$0xff] %v7210
        %7243 = vst [vmem:[#allocation4 + $0x378] sm:$0xff] %v7211
        %7244 = vst [vmem:[#allocation4 + $0x3a8] sm:$0xff] %v7212
        %7245 = vst [vmem:[#allocation4 + $0x3d8] sm:$0xff] %v7213
        %7246 = vst [vmem:[#allocation4 + $0x408] sm:$0xff] %v7214
        %7247 = vst [vmem:[#allocation4 + $0x438] sm:$0xff] %v7215
        %7248 = vst [vmem:[#allocation4 + $0x468] sm:$0xff] %v7216
        %7249 = vst [vmem:[#allocation4 + $0x498] sm:$0xff] %v7217
        %7250 = vst [vmem:[#allocation4 + $0x4c8] sm:$0xff] %v7218
        %7251 = vst [vmem:[#allocation4 + $0x4f8] sm:$0xff] %v7219
        %7252 = vst [vmem:[#allocation4 + $0x528] sm:$0xff] %v7220
        %7253 = vst [vmem:[#allocation4 + $0x558] sm:$0xff] %v7221
        %7254 = vst [vmem:[#allocation4 + $0x588] sm:$0xff] %v7222
        %7255 = vst [vmem:[#allocation4 + $0x5b8] sm:$0xff] %v7223
        %7256 = vst [vmem:[#allocation4 + $0x5e8] sm:$0xff] %v7224
        %v7257 = vld [vmem:[#allocation3 + $0x9] sm:$0xff]
        %v7258 = vld [vmem:[#allocation3 + $0x11] sm:$0xff]
        %v7259 = vld [vmem:[#allocation3 + $0x29] sm:$0xff]
        %v7260 = vld [vmem:[#allocation3 + $0x31] sm:$0xff]
        %v7261 = vld [vmem:[#allocation3 + $0x49] sm:$0xff]
        %v7262 = vld [vmem:[#allocation3 + $0x51] sm:$0xff]
        %v7263 = vld [vmem:[#allocation3 + $0x69] sm:$0xff]
        %v7264 = vld [vmem:[#allocation3 + $0x71] sm:$0xff]
        %v7265 = vld [vmem:[#allocation3 + $0x89] sm:$0xff]
        %v7266 = vld [vmem:[#allocation3 + $0x91] sm:$0xff]
        %v7267 = vld [vmem:[#allocation3 + $0xa9] sm:$0xff]
        %v7268 = vld [vmem:[#allocation3 + $0xb1] sm:$0xff]
        %v7269 = vld [vmem:[#allocation3 + $0xc9] sm:$0xff]
        %v7270 = vld [vmem:[#allocation3 + $0xd1] sm:$0xff]
        %v7271 = vld [vmem:[#allocation3 + $0xe9] sm:$0xff]
        %v7272 = vld [vmem:[#allocation3 + $0xf1] sm:$0xff]
        %v7273 = vld [vmem:[#allocation3 + $0x109] sm:$0xff]
        %v7274 = vld [vmem:[#allocation3 + $0x111] sm:$0xff]
        %v7275 = vld [vmem:[#allocation3 + $0x129] sm:$0xff]
        %v7276 = vld [vmem:[#allocation3 + $0x131] sm:$0xff]
        %v7277 = vld [vmem:[#allocation3 + $0x149] sm:$0xff]
        %v7278 = vld [vmem:[#allocation3 + $0x151] sm:$0xff]
        %v7279 = vld [vmem:[#allocation3 + $0x169] sm:$0xff]
        %v7280 = vld [vmem:[#allocation3 + $0x171] sm:$0xff]
        %v7281 = vld [vmem:[#allocation3 + $0x189] sm:$0xff]
        %v7282 = vld [vmem:[#allocation3 + $0x191] sm:$0xff]
        %v7283 = vld [vmem:[#allocation3 + $0x1a9] sm:$0xff]
        %v7284 = vld [vmem:[#allocation3 + $0x1b1] sm:$0xff]
        %v7285 = vld [vmem:[#allocation3 + $0x1c9] sm:$0xff]
        %v7286 = vld [vmem:[#allocation3 + $0x1d1] sm:$0xff]
        %v7287 = vld [vmem:[#allocation3 + $0x1e9] sm:$0xff]
        %v7288 = vld [vmem:[#allocation3 + $0x1f1] sm:$0xff]
        %v7289 = vld [vmem:[#allocation3 + $0x209] sm:$0xff]
        %v7290 = vld [vmem:[#allocation3 + $0x211] sm:$0xff]
        %v7291 = vld [vmem:[#allocation3 + $0x229] sm:$0xff]
        %v7292 = vld [vmem:[#allocation3 + $0x231] sm:$0xff]
        %7325 = vrot.lane.b32.xlu0 %v7259, 64
        %v7326 = vpop.permute.xlu0 %7325
        %7327 = vrot.lane.b32.xlu0 %v7260, 64
        %v7328 = vpop.permute.xlu0 %7327
        %7329 = vrot.lane.b32.xlu0 %v7261, 64
        %v7330 = vpop.permute.xlu0 %7329
        %7331 = vrot.lane.b32.xlu0 %v7262, 64
        %v7332 = vpop.permute.xlu0 %7331
        %7333 = vrot.lane.b32.xlu0 %v7263, 64
        %v7334 = vpop.permute.xlu0 %7333
        %7335 = vrot.lane.b32.xlu0 %v7264, 64
        %v7336 = vpop.permute.xlu0 %7335
        %7337 = vrot.lane.b32.xlu0 %v7265, 64
        %v7338 = vpop.permute.xlu0 %7337
        %7339 = vrot.lane.b32.xlu0 %v7266, 64
        %v7340 = vpop.permute.xlu0 %7339
        %7341 = vrot.lane.b32.xlu0 %v7267, 64
        %v7342 = vpop.permute.xlu0 %7341
        %7343 = vrot.lane.b32.xlu0 %v7268, 64
        %v7344 = vpop.permute.xlu0 %7343
        %7345 = vrot.lane.b32.xlu0 %v7269, 64
        %v7346 = vpop.permute.xlu0 %7345
        %7347 = vrot.lane.b32.xlu0 %v7270, 64
        %v7348 = vpop.permute.xlu0 %7347
        %7349 = vrot.lane.b32.xlu0 %v7271, 64
        %v7350 = vpop.permute.xlu0 %7349
        %7351 = vrot.lane.b32.xlu0 %v7272, 64
        %v7352 = vpop.permute.xlu0 %7351
        %7353 = vrot.lane.b32.xlu0 %v7273, 64
        %v7354 = vpop.permute.xlu0 %7353
        %7355 = vrot.lane.b32.xlu0 %v7274, 64
        %v7356 = vpop.permute.xlu0 %7355
        %7357 = vrot.lane.b32.xlu0 %v7275, 64
        %v7358 = vpop.permute.xlu0 %7357
        %7359 = vrot.lane.b32.xlu0 %v7276, 64
        %v7360 = vpop.permute.xlu0 %7359
        %7361 = vrot.lane.b32.xlu0 %v7277, 64
        %v7362 = vpop.permute.xlu0 %7361
        %7363 = vrot.lane.b32.xlu0 %v7278, 64
        %v7364 = vpop.permute.xlu0 %7363
        %7365 = vrot.lane.b32.xlu0 %v7279, 64
        %v7366 = vpop.permute.xlu0 %7365
        %7367 = vrot.lane.b32.xlu0 %v7280, 64
        %v7368 = vpop.permute.xlu0 %7367
        %7369 = vrot.lane.b32.xlu0 %v7281, 64
        %v7370 = vpop.permute.xlu0 %7369
        %7371 = vrot.lane.b32.xlu0 %v7282, 64
        %v7372 = vpop.permute.xlu0 %7371
        %7373 = vrot.lane.b32.xlu0 %v7283, 64
        %v7374 = vpop.permute.xlu0 %7373
        %7375 = vrot.lane.b32.xlu0 %v7284, 64
        %v7376 = vpop.permute.xlu0 %7375
        %7377 = vrot.lane.b32.xlu0 %v7285, 64
        %v7378 = vpop.permute.xlu0 %7377
        %7379 = vrot.lane.b32.xlu0 %v7286, 64
        %v7380 = vpop.permute.xlu0 %7379
        %7381 = vrot.lane.b32.xlu0 %v7287, 64
        %v7382 = vpop.permute.xlu0 %7381
        %7383 = vrot.lane.b32.xlu0 %v7288, 64
        %v7384 = vpop.permute.xlu0 %7383
        %7385 = vrot.lane.b32.xlu0 %v7289, 64
        %v7386 = vpop.permute.xlu0 %7385
        %7387 = vrot.lane.b32.xlu0 %v7290, 64
        %v7388 = vpop.permute.xlu0 %7387
        %v7421 = vsel %vm4683, %v7257, %v7326
        %v7422 = vsel %vm4683, %v7258, %v7328
        %v7423 = vsel %vm4683, %v7259, %v7330
        %v7424 = vsel %vm4683, %v7260, %v7332
        %v7425 = vsel %vm4683, %v7261, %v7334
        %v7426 = vsel %vm4683, %v7262, %v7336
        %v7427 = vsel %vm4683, %v7263, %v7338
        %v7428 = vsel %vm4683, %v7264, %v7340
        %v7429 = vsel %vm4683, %v7265, %v7342
        %v7430 = vsel %vm4683, %v7266, %v7344
        %v7431 = vsel %vm4683, %v7267, %v7346
        %v7432 = vsel %vm4683, %v7268, %v7348
        %v7433 = vsel %vm4683, %v7269, %v7350
        %v7434 = vsel %vm4683, %v7270, %v7352
        %v7435 = vsel %vm4683, %v7271, %v7354
        %v7436 = vsel %vm4683, %v7272, %v7356
        %v7437 = vsel %vm4683, %v7273, %v7358
        %v7438 = vsel %vm4683, %v7274, %v7360
        %v7439 = vsel %vm4683, %v7275, %v7362
        %v7440 = vsel %vm4683, %v7276, %v7364
        %v7441 = vsel %vm4683, %v7277, %v7366
        %v7442 = vsel %vm4683, %v7278, %v7368
        %v7443 = vsel %vm4683, %v7279, %v7370
        %v7444 = vsel %vm4683, %v7280, %v7372
        %v7445 = vsel %vm4683, %v7281, %v7374
        %v7446 = vsel %vm4683, %v7282, %v7376
        %v7447 = vsel %vm4683, %v7283, %v7378
        %v7448 = vsel %vm4683, %v7284, %v7380
        %v7449 = vsel %vm4683, %v7285, %v7382
        %v7450 = vsel %vm4683, %v7286, %v7384
        %v7451 = vsel %vm4683, %v7287, %v7386
        %v7452 = vsel %vm4683, %v7288, %v7388
        %7453 = vst [vmem:[#allocation4 + $0x20] sm:$0xff] %v7421
        %7454 = vst [vmem:[#allocation4 + $0x50] sm:$0xff] %v7422
        %7455 = vst [vmem:[#allocation4 + $0x80] sm:$0xff] %v7423
        %7456 = vst [vmem:[#allocation4 + $0xb0] sm:$0xff] %v7424
        %7457 = vst [vmem:[#allocation4 + $0xe0] sm:$0xff] %v7425
        %7458 = vst [vmem:[#allocation4 + $0x110] sm:$0xff] %v7426
        %7459 = vst [vmem:[#allocation4 + $0x140] sm:$0xff] %v7427
        %7460 = vst [vmem:[#allocation4 + $0x170] sm:$0xff] %v7428
        %7461 = vst [vmem:[#allocation4 + $0x1a0] sm:$0xff] %v7429
        %7462 = vst [vmem:[#allocation4 + $0x1d0] sm:$0xff] %v7430
        %7463 = vst [vmem:[#allocation4 + $0x200] sm:$0xff] %v7431
        %7464 = vst [vmem:[#allocation4 + $0x230] sm:$0xff] %v7432
        %7465 = vst [vmem:[#allocation4 + $0x260] sm:$0xff] %v7433
        %7466 = vst [vmem:[#allocation4 + $0x290] sm:$0xff] %v7434
        %7467 = vst [vmem:[#allocation4 + $0x2c0] sm:$0xff] %v7435
        %7468 = vst [vmem:[#allocation4 + $0x2f0] sm:$0xff] %v7436
        %7469 = vst [vmem:[#allocation4 + $0x320] sm:$0xff] %v7437
        %7470 = vst [vmem:[#allocation4 + $0x350] sm:$0xff] %v7438
        %7471 = vst [vmem:[#allocation4 + $0x380] sm:$0xff] %v7439
        %7472 = vst [vmem:[#allocation4 + $0x3b0] sm:$0xff] %v7440
        %7473 = vst [vmem:[#allocation4 + $0x3e0] sm:$0xff] %v7441
        %7474 = vst [vmem:[#allocation4 + $0x410] sm:$0xff] %v7442
        %7475 = vst [vmem:[#allocation4 + $0x440] sm:$0xff] %v7443
        %7476 = vst [vmem:[#allocation4 + $0x470] sm:$0xff] %v7444
        %7477 = vst [vmem:[#allocation4 + $0x4a0] sm:$0xff] %v7445
        %7478 = vst [vmem:[#allocation4 + $0x4d0] sm:$0xff] %v7446
        %7479 = vst [vmem:[#allocation4 + $0x500] sm:$0xff] %v7447
        %7480 = vst [vmem:[#allocation4 + $0x530] sm:$0xff] %v7448
        %7481 = vst [vmem:[#allocation4 + $0x560] sm:$0xff] %v7449
        %7482 = vst [vmem:[#allocation4 + $0x590] sm:$0xff] %v7450
        %7483 = vst [vmem:[#allocation4 + $0x5c0] sm:$0xff] %v7451
        %7484 = vst [vmem:[#allocation4 + $0x5f0] sm:$0xff] %v7452
        %v7485 = vsel %vm4683, %v7261, 0.0
        %v7486 = vsel %vm4683, %v7262, 0.0
        %v7487 = vsel %vm4683, %v7263, 0.0
        %v7488 = vsel %vm4683, %v7264, 0.0
        %v7489 = vsel %vm4683, %v7265, 0.0
        %v7490 = vsel %vm4683, %v7266, 0.0
        %v7491 = vsel %vm4683, %v7267, 0.0
        %v7492 = vsel %vm4683, %v7268, 0.0
        %v7493 = vsel %vm4683, %v7269, 0.0
        %v7494 = vsel %vm4683, %v7270, 0.0
        %v7495 = vsel %vm4683, %v7271, 0.0
        %v7496 = vsel %vm4683, %v7272, 0.0
        %v7497 = vsel %vm4683, %v7273, 0.0
        %v7498 = vsel %vm4683, %v7274, 0.0
        %v7499 = vsel %vm4683, %v7275, 0.0
        %v7500 = vsel %vm4683, %v7276, 0.0
        %v7501 = vsel %vm4683, %v7277, 0.0
        %v7502 = vsel %vm4683, %v7278, 0.0
        %v7503 = vsel %vm4683, %v7279, 0.0
        %v7504 = vsel %vm4683, %v7280, 0.0
        %v7505 = vsel %vm4683, %v7281, 0.0
        %v7506 = vsel %vm4683, %v7282, 0.0
        %v7507 = vsel %vm4683, %v7283, 0.0
        %v7508 = vsel %vm4683, %v7284, 0.0
        %v7509 = vsel %vm4683, %v7285, 0.0
        %v7510 = vsel %vm4683, %v7286, 0.0
        %v7511 = vsel %vm4683, %v7287, 0.0
        %v7512 = vsel %vm4683, %v7288, 0.0
        %v7513 = vsel %vm4683, %v7289, 0.0
        %v7514 = vsel %vm4683, %v7290, 0.0
        %v7515 = vsel %vm4683, %v7291, 0.0
        %v7516 = vsel %vm4683, %v7292, 0.0
        %7517 = vst [vmem:[#allocation4 + $0x28] sm:$0xff] %v7485
        %7518 = vst [vmem:[#allocation4 + $0x58] sm:$0xff] %v7486
        %7519 = vst [vmem:[#allocation4 + $0x88] sm:$0xff] %v7487
        %7520 = vst [vmem:[#allocation4 + $0xb8] sm:$0xff] %v7488
        %7521 = vst [vmem:[#allocation4 + $0xe8] sm:$0xff] %v7489
        %7522 = vst [vmem:[#allocation4 + $0x118] sm:$0xff] %v7490
        %7523 = vst [vmem:[#allocation4 + $0x148] sm:$0xff] %v7491
        %7524 = vst [vmem:[#allocation4 + $0x178] sm:$0xff] %v7492
        %7525 = vst [vmem:[#allocation4 + $0x1a8] sm:$0xff] %v7493
        %7526 = vst [vmem:[#allocation4 + $0x1d8] sm:$0xff] %v7494
        %7527 = vst [vmem:[#allocation4 + $0x208] sm:$0xff] %v7495
        %7528 = vst [vmem:[#allocation4 + $0x238] sm:$0xff] %v7496
        %7529 = vst [vmem:[#allocation4 + $0x268] sm:$0xff] %v7497
        %7530 = vst [vmem:[#allocation4 + $0x298] sm:$0xff] %v7498
        %7531 = vst [vmem:[#allocation4 + $0x2c8] sm:$0xff] %v7499
        %7532 = vst [vmem:[#allocation4 + $0x2f8] sm:$0xff] %v7500
        %7533 = vst [vmem:[#allocation4 + $0x328] sm:$0xff] %v7501
        %7534 = vst [vmem:[#allocation4 + $0x358] sm:$0xff] %v7502
        %7535 = vst [vmem:[#allocation4 + $0x388] sm:$0xff] %v7503
        %7536 = vst [vmem:[#allocation4 + $0x3b8] sm:$0xff] %v7504
        %7537 = vst [vmem:[#allocation4 + $0x3e8] sm:$0xff] %v7505
        %7538 = vst [vmem:[#allocation4 + $0x418] sm:$0xff] %v7506
        %7539 = vst [vmem:[#allocation4 + $0x448] sm:$0xff] %v7507
        %7540 = vst [vmem:[#allocation4 + $0x478] sm:$0xff] %v7508
        %7541 = vst [vmem:[#allocation4 + $0x4a8] sm:$0xff] %v7509
        %7542 = vst [vmem:[#allocation4 + $0x4d8] sm:$0xff] %v7510
        %7543 = vst [vmem:[#allocation4 + $0x508] sm:$0xff] %v7511
        %7544 = vst [vmem:[#allocation4 + $0x538] sm:$0xff] %v7512
        %7545 = vst [vmem:[#allocation4 + $0x568] sm:$0xff] %v7513
        %7546 = vst [vmem:[#allocation4 + $0x598] sm:$0xff] %v7514
        %7547 = vst [vmem:[#allocation4 + $0x5c8] sm:$0xff] %v7515
        %7548 = vst [vmem:[#allocation4 + $0x5f8] sm:$0xff] %v7516
        %v7549 = vld [vmem:[#allocation4] sm:$0xff]
        %v7550 = vld [vmem:[#allocation4 + $0x8] sm:$0xff]
        %v7551 = vld [vmem:[#allocation4 + $0x10] sm:$0xff]
        %v7552 = vld [vmem:[#allocation4 + $0x18] sm:$0xff]
        %v7553 = vld [vmem:[#allocation4 + $0x20] sm:$0xff]
        %v7554 = vld [vmem:[#allocation4 + $0x28] sm:$0xff]
        %v7555 = vld [vmem:[#allocation4 + $0x30] sm:$0xff]
        %v7556 = vld [vmem:[#allocation4 + $0x38] sm:$0xff]
        %v7557 = vld [vmem:[#allocation4 + $0x40] sm:$0xff]
        %v7558 = vld [vmem:[#allocation4 + $0x48] sm:$0xff]
        %v7559 = vld [vmem:[#allocation4 + $0x50] sm:$0xff]
        %v7560 = vld [vmem:[#allocation4 + $0x58] sm:$0xff]
        %v7561 = vld [vmem:[#allocation4 + $0x60] sm:$0xff]
        %v7562 = vld [vmem:[#allocation4 + $0x68] sm:$0xff]
        %v7563 = vld [vmem:[#allocation4 + $0x70] sm:$0xff]
        %v7564 = vld [vmem:[#allocation4 + $0x78] sm:$0xff]
        %v7565 = vld [vmem:[#allocation4 + $0x80] sm:$0xff]
        %v7566 = vld [vmem:[#allocation4 + $0x88] sm:$0xff]
        %v7567 = vld [vmem:[#allocation4 + $0x90] sm:$0xff]
        %v7568 = vld [vmem:[#allocation4 + $0x98] sm:$0xff]
        %v7569 = vld [vmem:[#allocation4 + $0xa0] sm:$0xff]
        %v7570 = vld [vmem:[#allocation4 + $0xa8] sm:$0xff]
        %v7571 = vld [vmem:[#allocation4 + $0xb0] sm:$0xff]
        %v7572 = vld [vmem:[#allocation4 + $0xb8] sm:$0xff]
        %v7573 = vld [vmem:[#allocation4 + $0xc0] sm:$0xff]
        %v7574 = vld [vmem:[#allocation4 + $0xc8] sm:$0xff]
        %v7575 = vld [vmem:[#allocation4 + $0xd0] sm:$0xff]
        %v7576 = vld [vmem:[#allocation4 + $0xd8] sm:$0xff]
        %v7577 = vld [vmem:[#allocation4 + $0xe0] sm:$0xff]
        %v7578 = vld [vmem:[#allocation4 + $0xe8] sm:$0xff]
        %v7579 = vld [vmem:[#allocation4 + $0xf0] sm:$0xff]
        %v7580 = vld [vmem:[#allocation4 + $0xf8] sm:$0xff]
        %v7581 = vld [vmem:[#allocation4 + $0x100] sm:$0xff]
        %v7582 = vld [vmem:[#allocation4 + $0x108] sm:$0xff]
        %v7583 = vld [vmem:[#allocation4 + $0x110] sm:$0xff]
        %v7584 = vld [vmem:[#allocation4 + $0x118] sm:$0xff]
        %v7585 = vld [vmem:[#allocation4 + $0x120] sm:$0xff]
        %v7586 = vld [vmem:[#allocation4 + $0x128] sm:$0xff]
        %v7587 = vld [vmem:[#allocation4 + $0x130] sm:$0xff]
        %v7588 = vld [vmem:[#allocation4 + $0x138] sm:$0xff]
        %v7589 = vld [vmem:[#allocation4 + $0x140] sm:$0xff]
        %v7590 = vld [vmem:[#allocation4 + $0x148] sm:$0xff]
        %v7591 = vld [vmem:[#allocation4 + $0x150] sm:$0xff]
        %v7592 = vld [vmem:[#allocation4 + $0x158] sm:$0xff]
        %v7593 = vld [vmem:[#allocation4 + $0x160] sm:$0xff]
        %v7594 = vld [vmem:[#allocation4 + $0x168] sm:$0xff]
        %v7595 = vld [vmem:[#allocation4 + $0x170] sm:$0xff]
        %v7596 = vld [vmem:[#allocation4 + $0x178] sm:$0xff]
        %v7597 = vld [vmem:[#allocation4 + $0x180] sm:$0xff]
        %v7598 = vld [vmem:[#allocation4 + $0x188] sm:$0xff]
        %v7599 = vld [vmem:[#allocation4 + $0x190] sm:$0xff]
        %v7600 = vld [vmem:[#allocation4 + $0x198] sm:$0xff]
        %v7601 = vld [vmem:[#allocation4 + $0x1a0] sm:$0xff]
        %v7602 = vld [vmem:[#allocation4 + $0x1a8] sm:$0xff]
        %v7603 = vld [vmem:[#allocation4 + $0x1b0] sm:$0xff]
        %v7604 = vld [vmem:[#allocation4 + $0x1b8] sm:$0xff]
        %v7605 = vld [vmem:[#allocation4 + $0x1c0] sm:$0xff]
        %v7606 = vld [vmem:[#allocation4 + $0x1c8] sm:$0xff]
        %v7607 = vld [vmem:[#allocation4 + $0x1d0] sm:$0xff]
        %v7608 = vld [vmem:[#allocation4 + $0x1d8] sm:$0xff]
        %v7609 = vld [vmem:[#allocation4 + $0x1e0] sm:$0xff]
        %v7610 = vld [vmem:[#allocation4 + $0x1e8] sm:$0xff]
        %v7611 = vld [vmem:[#allocation4 + $0x1f0] sm:$0xff]
        %v7612 = vld [vmem:[#allocation4 + $0x1f8] sm:$0xff]
        %v7613 = vld [vmem:[#allocation4 + $0x200] sm:$0xff]
        %v7614 = vld [vmem:[#allocation4 + $0x208] sm:$0xff]
        %v7615 = vld [vmem:[#allocation4 + $0x210] sm:$0xff]
        %v7616 = vld [vmem:[#allocation4 + $0x218] sm:$0xff]
        %v7617 = vld [vmem:[#allocation4 + $0x220] sm:$0xff]
        %v7618 = vld [vmem:[#allocation4 + $0x228] sm:$0xff]
        %v7619 = vld [vmem:[#allocation4 + $0x230] sm:$0xff]
        %v7620 = vld [vmem:[#allocation4 + $0x238] sm:$0xff]
        %v7621 = vld [vmem:[#allocation4 + $0x240] sm:$0xff]
        %v7622 = vld [vmem:[#allocation4 + $0x248] sm:$0xff]
        %v7623 = vld [vmem:[#allocation4 + $0x250] sm:$0xff]
        %v7624 = vld [vmem:[#allocation4 + $0x258] sm:$0xff]
        %v7625 = vld [vmem:[#allocation4 + $0x260] sm:$0xff]
        %v7626 = vld [vmem:[#allocation4 + $0x268] sm:$0xff]
        %v7627 = vld [vmem:[#allocation4 + $0x270] sm:$0xff]
        %v7628 = vld [vmem:[#allocation4 + $0x278] sm:$0xff]
        %v7629 = vld [vmem:[#allocation4 + $0x280] sm:$0xff]
        %v7630 = vld [vmem:[#allocation4 + $0x288] sm:$0xff]
        %v7631 = vld [vmem:[#allocation4 + $0x290] sm:$0xff]
        %v7632 = vld [vmem:[#allocation4 + $0x298] sm:$0xff]
        %v7633 = vld [vmem:[#allocation4 + $0x2a0] sm:$0xff]
        %v7634 = vld [vmem:[#allocation4 + $0x2a8] sm:$0xff]
        %v7635 = vld [vmem:[#allocation4 + $0x2b0] sm:$0xff]
        %v7636 = vld [vmem:[#allocation4 + $0x2b8] sm:$0xff]
        %v7637 = vld [vmem:[#allocation4 + $0x2c0] sm:$0xff]
        %v7638 = vld [vmem:[#allocation4 + $0x2c8] sm:$0xff]
        %v7639 = vld [vmem:[#allocation4 + $0x2d0] sm:$0xff]
        %v7640 = vld [vmem:[#allocation4 + $0x2d8] sm:$0xff]
        %v7641 = vld [vmem:[#allocation4 + $0x2e0] sm:$0xff]
        %v7642 = vld [vmem:[#allocation4 + $0x2e8] sm:$0xff]
        %v7643 = vld [vmem:[#allocation4 + $0x2f0] sm:$0xff]
        %v7644 = vld [vmem:[#allocation4 + $0x2f8] sm:$0xff]
        %v7645 = vld [vmem:[#allocation4 + $0x300] sm:$0xff]
        %v7646 = vld [vmem:[#allocation4 + $0x308] sm:$0xff]
        %v7647 = vld [vmem:[#allocation4 + $0x310] sm:$0xff]
        %v7648 = vld [vmem:[#allocation4 + $0x318] sm:$0xff]
        %v7649 = vld [vmem:[#allocation4 + $0x320] sm:$0xff]
        %v7650 = vld [vmem:[#allocation4 + $0x328] sm:$0xff]
        %v7651 = vld [vmem:[#allocation4 + $0x330] sm:$0xff]
        %v7652 = vld [vmem:[#allocation4 + $0x338] sm:$0xff]
        %v7653 = vld [vmem:[#allocation4 + $0x340] sm:$0xff]
        %v7654 = vld [vmem:[#allocation4 + $0x348] sm:$0xff]
        %v7655 = vld [vmem:[#allocation4 + $0x350] sm:$0xff]
        %v7656 = vld [vmem:[#allocation4 + $0x358] sm:$0xff]
        %v7657 = vld [vmem:[#allocation4 + $0x360] sm:$0xff]
        %v7658 = vld [vmem:[#allocation4 + $0x368] sm:$0xff]
        %v7659 = vld [vmem:[#allocation4 + $0x370] sm:$0xff]
        %v7660 = vld [vmem:[#allocation4 + $0x378] sm:$0xff]
        %v7661 = vld [vmem:[#allocation4 + $0x380] sm:$0xff]
        %v7662 = vld [vmem:[#allocation4 + $0x388] sm:$0xff]
        %v7663 = vld [vmem:[#allocation4 + $0x390] sm:$0xff]
        %v7664 = vld [vmem:[#allocation4 + $0x398] sm:$0xff]
        %v7665 = vld [vmem:[#allocation4 + $0x3a0] sm:$0xff]
        %v7666 = vld [vmem:[#allocation4 + $0x3a8] sm:$0xff]
        %v7667 = vld [vmem:[#allocation4 + $0x3b0] sm:$0xff]
        %v7668 = vld [vmem:[#allocation4 + $0x3b8] sm:$0xff]
        %v7669 = vld [vmem:[#allocation4 + $0x3c0] sm:$0xff]
        %v7670 = vld [vmem:[#allocation4 + $0x3c8] sm:$0xff]
        %v7671 = vld [vmem:[#allocation4 + $0x3d0] sm:$0xff]
        %v7672 = vld [vmem:[#allocation4 + $0x3d8] sm:$0xff]
        %v7673 = vld [vmem:[#allocation4 + $0x3e0] sm:$0xff]
        %v7674 = vld [vmem:[#allocation4 + $0x3e8] sm:$0xff]
        %v7675 = vld [vmem:[#allocation4 + $0x3f0] sm:$0xff]
        %v7676 = vld [vmem:[#allocation4 + $0x3f8] sm:$0xff]
        %v7677 = vld [vmem:[#allocation4 + $0x400] sm:$0xff]
        %v7678 = vld [vmem:[#allocation4 + $0x408] sm:$0xff]
        %v7679 = vld [vmem:[#allocation4 + $0x410] sm:$0xff]
        %v7680 = vld [vmem:[#allocation4 + $0x418] sm:$0xff]
        %v7681 = vld [vmem:[#allocation4 + $0x420] sm:$0xff]
        %v7682 = vld [vmem:[#allocation4 + $0x428] sm:$0xff]
        %v7683 = vld [vmem:[#allocation4 + $0x430] sm:$0xff]
        %v7684 = vld [vmem:[#allocation4 + $0x438] sm:$0xff]
        %v7685 = vld [vmem:[#allocation4 + $0x440] sm:$0xff]
        %v7686 = vld [vmem:[#allocation4 + $0x448] sm:$0xff]
        %v7687 = vld [vmem:[#allocation4 + $0x450] sm:$0xff]
        %v7688 = vld [vmem:[#allocation4 + $0x458] sm:$0xff]
        %v7689 = vld [vmem:[#allocation4 + $0x460] sm:$0xff]
        %v7690 = vld [vmem:[#allocation4 + $0x468] sm:$0xff]
        %v7691 = vld [vmem:[#allocation4 + $0x470] sm:$0xff]
        %v7692 = vld [vmem:[#allocation4 + $0x478] sm:$0xff]
        %v7693 = vld [vmem:[#allocation4 + $0x480] sm:$0xff]
        %v7694 = vld [vmem:[#allocation4 + $0x488] sm:$0xff]
        %v7695 = vld [vmem:[#allocation4 + $0x490] sm:$0xff]
        %v7696 = vld [vmem:[#allocation4 + $0x498] sm:$0xff]
        %v7697 = vld [vmem:[#allocation4 + $0x4a0] sm:$0xff]
        %v7698 = vld [vmem:[#allocation4 + $0x4a8] sm:$0xff]
        %v7699 = vld [vmem:[#allocation4 + $0x4b0] sm:$0xff]
        %v7700 = vld [vmem:[#allocation4 + $0x4b8] sm:$0xff]
        %v7701 = vld [vmem:[#allocation4 + $0x4c0] sm:$0xff]
        %v7702 = vld [vmem:[#allocation4 + $0x4c8] sm:$0xff]
        %v7703 = vld [vmem:[#allocation4 + $0x4d0] sm:$0xff]
        %v7704 = vld [vmem:[#allocation4 + $0x4d8] sm:$0xff]
        %v7705 = vld [vmem:[#allocation4 + $0x4e0] sm:$0xff]
        %v7706 = vld [vmem:[#allocation4 + $0x4e8] sm:$0xff]
        %v7707 = vld [vmem:[#allocation4 + $0x4f0] sm:$0xff]
        %v7708 = vld [vmem:[#allocation4 + $0x4f8] sm:$0xff]
        %v7709 = vld [vmem:[#allocation4 + $0x500] sm:$0xff]
        %v7710 = vld [vmem:[#allocation4 + $0x508] sm:$0xff]
        %v7711 = vld [vmem:[#allocation4 + $0x510] sm:$0xff]
        %v7712 = vld [vmem:[#allocation4 + $0x518] sm:$0xff]
        %v7713 = vld [vmem:[#allocation4 + $0x520] sm:$0xff]
        %v7714 = vld [vmem:[#allocation4 + $0x528] sm:$0xff]
        %v7715 = vld [vmem:[#allocation4 + $0x530] sm:$0xff]
        %v7716 = vld [vmem:[#allocation4 + $0x538] sm:$0xff]
        %v7717 = vld [vmem:[#allocation4 + $0x540] sm:$0xff]
        %v7718 = vld [vmem:[#allocation4 + $0x548] sm:$0xff]
        %v7719 = vld [vmem:[#allocation4 + $0x550] sm:$0xff]
        %v7720 = vld [vmem:[#allocation4 + $0x558] sm:$0xff]
        %v7721 = vld [vmem:[#allocation4 + $0x560] sm:$0xff]
        %v7722 = vld [vmem:[#allocation4 + $0x568] sm:$0xff]
        %v7723 = vld [vmem:[#allocation4 + $0x570] sm:$0xff]
        %v7724 = vld [vmem:[#allocation4 + $0x578] sm:$0xff]
        %v7725 = vld [vmem:[#allocation4 + $0x580] sm:$0xff]
        %v7726 = vld [vmem:[#allocation4 + $0x588] sm:$0xff]
        %v7727 = vld [vmem:[#allocation4 + $0x590] sm:$0xff]
        %v7728 = vld [vmem:[#allocation4 + $0x598] sm:$0xff]
        %v7729 = vld [vmem:[#allocation4 + $0x5a0] sm:$0xff]
        %v7730 = vld [vmem:[#allocation4 + $0x5a8] sm:$0xff]
        %v7731 = vld [vmem:[#allocation4 + $0x5b0] sm:$0xff]
        %v7732 = vld [vmem:[#allocation4 + $0x5b8] sm:$0xff]
        %v7733 = vld [vmem:[#allocation4 + $0x5c0] sm:$0xff]
        %v7734 = vld [vmem:[#allocation4 + $0x5c8] sm:$0xff]
        %v7735 = vld [vmem:[#allocation4 + $0x5d0] sm:$0xff]
        %v7736 = vld [vmem:[#allocation4 + $0x5d8] sm:$0xff]
        %v7737 = vld [vmem:[#allocation4 + $0x5e0] sm:$0xff]
        %v7738 = vld [vmem:[#allocation4 + $0x5e8] sm:$0xff]
        %v7739 = vld [vmem:[#allocation4 + $0x5f0] sm:$0xff]
        %v7740 = vld [vmem:[#allocation4 + $0x5f8] sm:$0xff]
        %v7741 = vld [vmem:[%s5] sm:$0xff]
        %v7742 = vld [vmem:[%s5 + $0x8] sm:$0xff]
        %v7743 = vld [vmem:[%s5 + $0x10] sm:$0xff]
        %v7744 = vld [vmem:[%s5 + $0x18] sm:$0xff]
        %v7745 = vld [vmem:[%s5 + $0x20] sm:$0xff]
        %v7746 = vld [vmem:[%s5 + $0x28] sm:$0xff]
        %v7747 = vld [vmem:[%s5 + $0x30] sm:$0xff]
        %v7748 = vld [vmem:[%s5 + $0x38] sm:$0xff]
        %v7749 = vld [vmem:[%s5 + $0x40] sm:$0xff]
        %v7750 = vld [vmem:[%s5 + $0x48] sm:$0xff]
        %v7751 = vld [vmem:[%s5 + $0x50] sm:$0xff]
        %v7752 = vld [vmem:[%s5 + $0x58] sm:$0xff]
        %v7753 = vld [vmem:[%s5 + $0x60] sm:$0xff]
        %v7754 = vld [vmem:[%s5 + $0x68] sm:$0xff]
        %v7755 = vld [vmem:[%s5 + $0x70] sm:$0xff]
        %v7756 = vld [vmem:[%s5 + $0x78] sm:$0xff]
        %v7757 = vld [vmem:[%s5 + $0x80] sm:$0xff]
        %v7758 = vld [vmem:[%s5 + $0x88] sm:$0xff]
        %v7759 = vld [vmem:[%s5 + $0x90] sm:$0xff]
        %v7760 = vld [vmem:[%s5 + $0x98] sm:$0xff]
        %v7761 = vld [vmem:[%s5 + $0xa0] sm:$0xff]
        %v7762 = vld [vmem:[%s5 + $0xa8] sm:$0xff]
        %v7763 = vld [vmem:[%s5 + $0xb0] sm:$0xff]
        %v7764 = vld [vmem:[%s5 + $0xb8] sm:$0xff]
        %v7765 = vld [vmem:[%s5 + $0xc0] sm:$0xff]
        %v7766 = vld [vmem:[%s5 + $0xc8] sm:$0xff]
        %v7767 = vld [vmem:[%s5 + $0xd0] sm:$0xff]
        %v7768 = vld [vmem:[%s5 + $0xd8] sm:$0xff]
        %v7769 = vld [vmem:[%s5 + $0xe0] sm:$0xff]
        %v7770 = vld [vmem:[%s5 + $0xe8] sm:$0xff]
        %v7771 = vld [vmem:[%s5 + $0xf0] sm:$0xff]
        %v7772 = vld [vmem:[%s5 + $0xf8] sm:$0xff]
        %v7773 = vld [vmem:[%s5 + $0x100] sm:$0xff]
        %v7774 = vld [vmem:[%s5 + $0x108] sm:$0xff]
        %v7775 = vld [vmem:[%s5 + $0x110] sm:$0xff]
        %v7776 = vld [vmem:[%s5 + $0x118] sm:$0xff]
        %v7777 = vld [vmem:[%s5 + $0x120] sm:$0xff]
        %v7778 = vld [vmem:[%s5 + $0x128] sm:$0xff]
        %v7779 = vld [vmem:[%s5 + $0x130] sm:$0xff]
        %v7780 = vld [vmem:[%s5 + $0x138] sm:$0xff]
        %v7781 = vld [vmem:[%s5 + $0x140] sm:$0xff]
        %v7782 = vld [vmem:[%s5 + $0x148] sm:$0xff]
        %v7783 = vld [vmem:[%s5 + $0x150] sm:$0xff]
        %v7784 = vld [vmem:[%s5 + $0x158] sm:$0xff]
        %v7785 = vld [vmem:[%s5 + $0x160] sm:$0xff]
        %v7786 = vld [vmem:[%s5 + $0x168] sm:$0xff]
        %v7787 = vld [vmem:[%s5 + $0x170] sm:$0xff]
        %v7788 = vld [vmem:[%s5 + $0x178] sm:$0xff]
        %v7789 = vld [vmem:[%s5 + $0x180] sm:$0xff]
        %v7790 = vld [vmem:[%s5 + $0x188] sm:$0xff]
        %v7791 = vld [vmem:[%s5 + $0x190] sm:$0xff]
        %v7792 = vld [vmem:[%s5 + $0x198] sm:$0xff]
        %v7793 = vld [vmem:[%s5 + $0x1a0] sm:$0xff]
        %v7794 = vld [vmem:[%s5 + $0x1a8] sm:$0xff]
        %v7795 = vld [vmem:[%s5 + $0x1b0] sm:$0xff]
        %v7796 = vld [vmem:[%s5 + $0x1b8] sm:$0xff]
        %v7797 = vld [vmem:[%s5 + $0x1c0] sm:$0xff]
        %v7798 = vld [vmem:[%s5 + $0x1c8] sm:$0xff]
        %v7799 = vld [vmem:[%s5 + $0x1d0] sm:$0xff]
        %v7800 = vld [vmem:[%s5 + $0x1d8] sm:$0xff]
        %v7801 = vld [vmem:[%s5 + $0x1e0] sm:$0xff]
        %v7802 = vld [vmem:[%s5 + $0x1e8] sm:$0xff]
        %v7803 = vld [vmem:[%s5 + $0x1f0] sm:$0xff]
        %v7804 = vld [vmem:[%s5 + $0x1f8] sm:$0xff]
        %v7805 = vld [vmem:[%s5 + $0x200] sm:$0xff]
        %v7806 = vld [vmem:[%s5 + $0x208] sm:$0xff]
        %v7807 = vld [vmem:[%s5 + $0x210] sm:$0xff]
        %v7808 = vld [vmem:[%s5 + $0x218] sm:$0xff]
        %v7809 = vld [vmem:[%s5 + $0x220] sm:$0xff]
        %v7810 = vld [vmem:[%s5 + $0x228] sm:$0xff]
        %v7811 = vld [vmem:[%s5 + $0x230] sm:$0xff]
        %v7812 = vld [vmem:[%s5 + $0x238] sm:$0xff]
        %v7813 = vld [vmem:[%s5 + $0x240] sm:$0xff]
        %v7814 = vld [vmem:[%s5 + $0x248] sm:$0xff]
        %v7815 = vld [vmem:[%s5 + $0x250] sm:$0xff]
        %v7816 = vld [vmem:[%s5 + $0x258] sm:$0xff]
        %v7817 = vld [vmem:[%s5 + $0x260] sm:$0xff]
        %v7818 = vld [vmem:[%s5 + $0x268] sm:$0xff]
        %v7819 = vld [vmem:[%s5 + $0x270] sm:$0xff]
        %v7820 = vld [vmem:[%s5 + $0x278] sm:$0xff]
        %v7821 = vld [vmem:[%s5 + $0x280] sm:$0xff]
        %v7822 = vld [vmem:[%s5 + $0x288] sm:$0xff]
        %v7823 = vld [vmem:[%s5 + $0x290] sm:$0xff]
        %v7824 = vld [vmem:[%s5 + $0x298] sm:$0xff]
        %v7825 = vld [vmem:[%s5 + $0x2a0] sm:$0xff]
        %v7826 = vld [vmem:[%s5 + $0x2a8] sm:$0xff]
        %v7827 = vld [vmem:[%s5 + $0x2b0] sm:$0xff]
        %v7828 = vld [vmem:[%s5 + $0x2b8] sm:$0xff]
        %v7829 = vld [vmem:[%s5 + $0x2c0] sm:$0xff]
        %v7830 = vld [vmem:[%s5 + $0x2c8] sm:$0xff]
        %v7831 = vld [vmem:[%s5 + $0x2d0] sm:$0xff]
        %v7832 = vld [vmem:[%s5 + $0x2d8] sm:$0xff]
        %v7833 = vld [vmem:[%s5 + $0x2e0] sm:$0xff]
        %v7834 = vld [vmem:[%s5 + $0x2e8] sm:$0xff]
        %v7835 = vld [vmem:[%s5 + $0x2f0] sm:$0xff]
        %v7836 = vld [vmem:[%s5 + $0x2f8] sm:$0xff]
        %v7837 = vld [vmem:[%s6] sm:$0x1]
        %v7839 = vlaneseq
        %v7840 = vshrl.u32 %v7839, 7
        %v7841 = vsub.s32 0, %v7840
        %v7842 = vrot.slane %v7837, %v7841
        %7844 = vmatprep.subr.mxu0 0.0
        %7845 = vmatpush1.msra.mxu0 %v7741
        %7846 = vmatprep.subr.mxu0 0.0
        %7847 = vmatpush1.msra.mxu0 %v7742
        %7848 = vmatprep.subr.mxu0 0.0
        %7849 = vmatpush1.msra.mxu0 %v7743
        %7850 = vmatprep.subr.mxu0 0.0
        %7851 = vmatpush1.msra.mxu0 %v7744
        %7852 = vmatprep.subr.mxu0 0.0
        %7853 = vmatpush1.msra.mxu0 %v7745
        %7854 = vmatprep.subr.mxu0 0.0
        %7855 = vmatpush1.msra.mxu0 %v7746
        %7856 = vmatprep.subr.mxu0 0.0
        %7857 = vmatpush1.msra.mxu0 %v7747
        %7858 = vmatprep.subr.mxu0 0.0
        %7859 = vmatpush1.msra.mxu0 %v7748
        %7860 = vmatprep.subr.mxu0 0.0
        %7861 = vmatpush1.msra.mxu0 %v7749
        %7862 = vmatprep.subr.mxu0 0.0
        %7863 = vmatpush1.msra.mxu0 %v7750
        %7864 = vmatprep.subr.mxu0 0.0
        %7865 = vmatpush1.msra.mxu0 %v7751
        %7866 = vmatprep.subr.mxu0 0.0
        %7867 = vmatpush1.msra.mxu0 %v7752
        %7868 = vmatprep.subr.mxu0 0.0
        %7869 = vmatpush1.msra.mxu0 %v7753
        %7870 = vmatprep.subr.mxu0 0.0
        %7871 = vmatpush1.msra.mxu0 %v7754
        %7872 = vmatprep.subr.mxu0 0.0
        %7873 = vmatpush1.msra.mxu0 %v7755
        %7874 = vmatprep.subr.mxu0 0.0
        %7875 = vmatpush1.msra.mxu0 %v7756
        %7876 = vmatprep.subr.mxu0 0.0
        %7877 = vmatpush1.msra.mxu0 %v7757
        %7878 = vmatprep.subr.mxu0 0.0
        %7879 = vmatpush1.msra.mxu0 %v7758
        %7880 = vmatprep.subr.mxu0 0.0
        %7881 = vmatpush1.msra.mxu0 %v7759
        %7882 = vmatprep.subr.mxu0 0.0
        %7883 = vmatpush1.msra.mxu0 %v7760
        %7884 = vmatprep.subr.mxu0 0.0
        %7885 = vmatpush1.msra.mxu0 %v7761
        %7886 = vmatprep.subr.mxu0 0.0
        %7887 = vmatpush1.msra.mxu0 %v7762
        %7888 = vmatprep.subr.mxu0 0.0
        %7889 = vmatpush1.msra.mxu0 %v7763
        %7890 = vmatprep.subr.mxu0 0.0
        %7891 = vmatpush1.msra.mxu0 %v7764
        %7892 = vmatprep.subr.mxu0 0.0
        %7893 = vmatpush1.msra.mxu0 %v7765
        %7894 = vmatprep.subr.mxu0 0.0
        %7895 = vmatpush1.msra.mxu0 %v7766
        %7896 = vmatprep.subr.mxu0 0.0
        %7897 = vmatpush1.msra.mxu0 %v7767
        %7898 = vmatprep.subr.mxu0 0.0
        %7899 = vmatpush1.msra.mxu0 %v7768
        %7900 = vmatprep.subr.mxu0 0.0
        %7901 = vmatpush1.msra.mxu0 %v7769
        %7902 = vmatprep.subr.mxu0 0.0
        %7903 = vmatpush1.msra.mxu0 %v7770
        %7904 = vmatprep.subr.mxu0 0.0
        %7905 = vmatpush1.msra.mxu0 %v7771
        %7906 = vmatprep.subr.mxu0 0.0
        %7907 = vmatpush1.msra.mxu0 %v7772
        %7908 = vmatprep.mubr.f32.mxu0 %v7550
        %7909 = vmatmul.mubr.f32.gmra.mrb[0].mxu0 %v7549
        %v7910 = vpop.f32.mrb[0].mxu0
        %v7911 = vadd.f32 %v7842, %v7910
        %v7912 = vpop.f32.mrb[0].mxu0
        %7913 = vmatprep.mubr.f32.mxu0 %v7556
        %7914 = vmatmul.mubr.f32.gmra.mrb[0].mxu0 %v7555
        %v7915 = vpop.f32.mrb[0].mxu0
        %v7916 = vadd.f32 %v7842, %v7915
        %v7917 = vpop.f32.mrb[0].mxu0
        %7918 = vmatprep.mubr.f32.mxu0 %v7562
        %7919 = vmatmul.mubr.f32.gmra.mrb[0].mxu0 %v7561
        %v7920 = vpop.f32.mrb[0].mxu0
        %v7921 = vadd.f32 %v7842, %v7920
        %v7922 = vpop.f32.mrb[0].mxu0
        %7923 = vmatprep.mubr.f32.mxu0 %v7568
        %7924 = vmatmul.mubr.f32.gmra.mrb[0].mxu0 %v7567
        %v7925 = vpop.f32.mrb[0].mxu0
        %v7926 = vadd.f32 %v7842, %v7925
        %v7927 = vpop.f32.mrb[0].mxu0
        %7928 = vmatprep.mubr.f32.mxu0 %v7574
        %7929 = vmatmul.mubr.f32.gmra.mrb[0].mxu0 %v7573
        %v7930 = vpop.f32.mrb[0].mxu0
        %v7931 = vadd.f32 %v7842, %v7930
        %v7932 = vpop.f32.mrb[0].mxu0
        %7933 = vmatprep.mubr.f32.mxu0 %v7580
        %7934 = vmatmul.mubr.f32.gmra.mrb[0].mxu0 %v7579
        %v7935 = vpop.f32.mrb[0].mxu0
        %v7936 = vadd.f32 %v7842, %v7935
        %v7937 = vpop.f32.mrb[0].mxu0
        %7938 = vmatprep.mubr.f32.mxu0 %v7586
        %7939 = vmatmul.mubr.f32.gmra.mrb[0].mxu0 %v7585
        %v7940 = vpop.f32.mrb[0].mxu0
        %v7941 = vadd.f32 %v7842, %v7940
        %v7942 = vpop.f32.mrb[0].mxu0
        %7943 = vmatprep.mubr.f32.mxu0 %v7592
        %7944 = vmatmul.mubr.f32.gmra.mrb[0].mxu0 %v7591
        %v7945 = vpop.f32.mrb[0].mxu0
        %v7946 = vadd.f32 %v7842, %v7945
        %v7947 = vpop.f32.mrb[0].mxu0
        %7948 = vmatprep.mubr.f32.mxu0 %v7598
        %7949 = vmatmul.mubr.f32.gmra.mrb[0].mxu0 %v7597
        %v7950 = vpop.f32.mrb[0].mxu0
        %v7951 = vadd.f32 %v7842, %v7950
        %v7952 = vpop.f32.mrb[0].mxu0
        %7953 = vmatprep.mubr.f32.mxu0 %v7604
        %7954 = vmatmul.mubr.f32.gmra.mrb[0].mxu0 %v7603
        %v7955 = vpop.f32.mrb[0].mxu0
        %v7956 = vadd.f32 %v7842, %v7955
        %v7957 = vpop.f32.mrb[0].mxu0
        %7958 = vmatprep.mubr.f32.mxu0 %v7610
        %7959 = vmatmul.mubr.f32.gmra.mrb[0].mxu0 %v7609
        %v7960 = vpop.f32.mrb[0].mxu0
        %v7961 = vadd.f32 %v7842, %v7960
        %v7962 = vpop.f32.mrb[0].mxu0
        %7963 = vmatprep.mubr.f32.mxu0 %v7616
        %7964 = vmatmul.mubr.f32.gmra.mrb[0].mxu0 %v7615
        %v7965 = vpop.f32.mrb[0].mxu0
        %v7966 = vadd.f32 %v7842, %v7965
        %v7967 = vpop.f32.mrb[0].mxu0
        %7968 = vmatprep.mubr.f32.mxu0 %v7622
        %7969 = vmatmul.mubr.f32.gmra.mrb[0].mxu0 %v7621
        %v7970 = vpop.f32.mrb[0].mxu0
        %v7971 = vadd.f32 %v7842, %v7970
        %v7972 = vpop.f32.mrb[0].mxu0
        %7973 = vmatprep.mubr.f32.mxu0 %v7628
        %7974 = vmatmul.mubr.f32.gmra.mrb[0].mxu0 %v7627
        %v7975 = vpop.f32.mrb[0].mxu0
        %v7976 = vadd.f32 %v7842, %v7975
        %v7977 = vpop.f32.mrb[0].mxu0
        %7978 = vmatprep.mubr.f32.mxu0 %v7634
        %7979 = vmatmul.mubr.f32.gmra.mrb[0].mxu0 %v7633
        %v7980 = vpop.f32.mrb[0].mxu0
        %v7981 = vadd.f32 %v7842, %v7980
        %v7982 = vpop.f32.mrb[0].mxu0
        %7983 = vmatprep.mubr.f32.mxu0 %v7640
        %7984 = vmatmul.mubr.f32.gmra.mrb[0].mxu0 %v7639
        %v7985 = vpop.f32.mrb[0].mxu0
        %v7986 = vadd.f32 %v7842, %v7985
        %v7987 = vpop.f32.mrb[0].mxu0
        %7988 = vmatprep.mubr.f32.mxu0 %v7646
        %7989 = vmatmul.mubr.f32.gmra.mrb[0].mxu0 %v7645
        %v7990 = vpop.f32.mrb[0].mxu0
        %v7991 = vadd.f32 %v7842, %v7990
        %v7992 = vpop.f32.mrb[0].mxu0
        %7993 = vmatprep.mubr.f32.mxu0 %v7652
        %7994 = vmatmul.mubr.f32.gmra.mrb[0].mxu0 %v7651
        %v7995 = vpop.f32.mrb[0].mxu0
        %v7996 = vadd.f32 %v7842, %v7995
        %v7997 = vpop.f32.mrb[0].mxu0
        %7998 = vmatprep.mubr.f32.mxu0 %v7658
        %7999 = vmatmul.mubr.f32.gmra.mrb[0].mxu0 %v7657
        %v8000 = vpop.f32.mrb[0].mxu0
        %v8001 = vadd.f32 %v7842, %v8000
        %v8002 = vpop.f32.mrb[0].mxu0
        %8003 = vmatprep.mubr.f32.mxu0 %v7664
        %8004 = vmatmul.mubr.f32.gmra.mrb[0].mxu0 %v7663
        %v8005 = vpop.f32.mrb[0].mxu0
        %v8006 = vadd.f32 %v7842, %v8005
        %v8007 = vpop.f32.mrb[0].mxu0
        %8008 = vmatprep.mubr.f32.mxu0 %v7670
        %8009 = vmatmul.mubr.f32.gmra.mrb[0].mxu0 %v7669
        %v8010 = vpop.f32.mrb[0].mxu0
        %v8011 = vadd.f32 %v7842, %v8010
        %v8012 = vpop.f32.mrb[0].mxu0
        %8013 = vmatprep.mubr.f32.mxu0 %v7676
        %8014 = vmatmul.mubr.f32.gmra.mrb[0].mxu0 %v7675
        %v8015 = vpop.f32.mrb[0].mxu0
        %v8016 = vadd.f32 %v7842, %v8015
        %v8017 = vpop.f32.mrb[0].mxu0
        %8018 = vmatprep.mubr.f32.mxu0 %v7682
        %8019 = vmatmul.mubr.f32.gmra.mrb[0].mxu0 %v7681
        %v8020 = vpop.f32.mrb[0].mxu0
        %v8021 = vadd.f32 %v7842, %v8020
        %v8022 = vpop.f32.mrb[0].mxu0
        %8023 = vmatprep.mubr.f32.mxu0 %v7688
        %8024 = vmatmul.mubr.f32.gmra.mrb[0].mxu0 %v7687
        %v8025 = vpop.f32.mrb[0].mxu0
        %v8026 = vadd.f32 %v7842, %v8025
        %v8027 = vpop.f32.mrb[0].mxu0
        %8028 = vmatprep.mubr.f32.mxu0 %v7694
        %8029 = vmatmul.mubr.f32.gmra.mrb[0].mxu0 %v7693
        %v8030 = vpop.f32.mrb[0].mxu0
        %v8031 = vadd.f32 %v7842, %v8030
        %v8032 = vpop.f32.mrb[0].mxu0
        %8033 = vmatprep.mubr.f32.mxu0 %v7700
        %8034 = vmatmul.mubr.f32.gmra.mrb[0].mxu0 %v7699
        %v8035 = vpop.f32.mrb[0].mxu0
        %v8036 = vadd.f32 %v7842, %v8035
        %v8037 = vpop.f32.mrb[0].mxu0
        %8038 = vmatprep.mubr.f32.mxu0 %v7706
        %8039 = vmatmul.mubr.f32.gmra.mrb[0].mxu0 %v7705
        %v8040 = vpop.f32.mrb[0].mxu0
        %v8041 = vadd.f32 %v7842, %v8040
        %v8042 = vpop.f32.mrb[0].mxu0
        %8043 = vmatprep.mubr.f32.mxu0 %v7712
        %8044 = vmatmul.mubr.f32.gmra.mrb[0].mxu0 %v7711
        %v8045 = vpop.f32.mrb[0].mxu0
        %v8046 = vadd.f32 %v7842, %v8045
        %v8047 = vpop.f32.mrb[0].mxu0
        %8048 = vmatprep.mubr.f32.mxu0 %v7718
        %8049 = vmatmul.mubr.f32.gmra.mrb[0].mxu0 %v7717
        %v8050 = vpop.f32.mrb[0].mxu0
        %v8051 = vadd.f32 %v7842, %v8050
        %v8052 = vpop.f32.mrb[0].mxu0
        %8053 = vmatprep.mubr.f32.mxu0 %v7724
        %8054 = vmatmul.mubr.f32.gmra.mrb[0].mxu0 %v7723
        %v8055 = vpop.f32.mrb[0].mxu0
        %v8056 = vadd.f32 %v7842, %v8055
        %v8057 = vpop.f32.mrb[0].mxu0
        %8058 = vmatprep.mubr.f32.mxu0 %v7730
        %8059 = vmatmul.mubr.f32.gmra.mrb[0].mxu0 %v7729
        %v8060 = vpop.f32.mrb[0].mxu0
        %v8061 = vadd.f32 %v7842, %v8060
        %v8062 = vpop.f32.mrb[0].mxu0
        %8063 = vmatprep.mubr.f32.mxu0 %v7736
        %8064 = vmatmul.mubr.f32.gmra.mrb[0].mxu0 %v7735
        %v8065 = vpop.f32.mrb[0].mxu0
        %v8066 = vadd.f32 %v7842, %v8065
        %v8067 = vpop.f32.mrb[0].mxu0
        %8068 = vdwg.mxu0
        %8069 = vmatprep.subr.mxu0 0.0
        %8070 = vmatpush1.msra.mxu0 %v7773
        %8071 = vmatprep.subr.mxu0 0.0
        %8072 = vmatpush1.msra.mxu0 %v7774
        %8073 = vmatprep.subr.mxu0 0.0
        %8074 = vmatpush1.msra.mxu0 %v7775
        %8075 = vmatprep.subr.mxu0 0.0
        %8076 = vmatpush1.msra.mxu0 %v7776
        %8077 = vmatprep.subr.mxu0 0.0
        %8078 = vmatpush1.msra.mxu0 %v7777
        %8079 = vmatprep.subr.mxu0 0.0
        %8080 = vmatpush1.msra.mxu0 %v7778
        %8081 = vmatprep.subr.mxu0 0.0
        %8082 = vmatpush1.msra.mxu0 %v7779
        %8083 = vmatprep.subr.mxu0 0.0
        %8084 = vmatpush1.msra.mxu0 %v7780
        %8085 = vmatprep.subr.mxu0 0.0
        %8086 = vmatpush1.msra.mxu0 %v7781
        %8087 = vmatprep.subr.mxu0 0.0
        %8088 = vmatpush1.msra.mxu0 %v7782
        %8089 = vmatprep.subr.mxu0 0.0
        %8090 = vmatpush1.msra.mxu0 %v7783
        %8091 = vmatprep.subr.mxu0 0.0
        %8092 = vmatpush1.msra.mxu0 %v7784
        %8093 = vmatprep.subr.mxu0 0.0
        %8094 = vmatpush1.msra.mxu0 %v7785
        %8095 = vmatprep.subr.mxu0 0.0
        %8096 = vmatpush1.msra.mxu0 %v7786
        %8097 = vmatprep.subr.mxu0 0.0
        %8098 = vmatpush1.msra.mxu0 %v7787
        %8099 = vmatprep.subr.mxu0 0.0
        %8100 = vmatpush1.msra.mxu0 %v7788
        %8101 = vmatprep.subr.mxu0 0.0
        %8102 = vmatpush1.msra.mxu0 %v7789
        %8103 = vmatprep.subr.mxu0 0.0
        %8104 = vmatpush1.msra.mxu0 %v7790
        %8105 = vmatprep.subr.mxu0 0.0
        %8106 = vmatpush1.msra.mxu0 %v7791
        %8107 = vmatprep.subr.mxu0 0.0
        %8108 = vmatpush1.msra.mxu0 %v7792
        %8109 = vmatprep.subr.mxu0 0.0
        %8110 = vmatpush1.msra.mxu0 %v7793
        %8111 = vmatprep.subr.mxu0 0.0
        %8112 = vmatpush1.msra.mxu0 %v7794
        %8113 = vmatprep.subr.mxu0 0.0
        %8114 = vmatpush1.msra.mxu0 %v7795
        %8115 = vmatprep.subr.mxu0 0.0
        %8116 = vmatpush1.msra.mxu0 %v7796
        %8117 = vmatprep.subr.mxu0 0.0
        %8118 = vmatpush1.msra.mxu0 %v7797
        %8119 = vmatprep.subr.mxu0 0.0
        %8120 = vmatpush1.msra.mxu0 %v7798
        %8121 = vmatprep.subr.mxu0 0.0
        %8122 = vmatpush1.msra.mxu0 %v7799
        %8123 = vmatprep.subr.mxu0 0.0
        %8124 = vmatpush1.msra.mxu0 %v7800
        %8125 = vmatprep.subr.mxu0 0.0
        %8126 = vmatpush1.msra.mxu0 %v7801
        %8127 = vmatprep.subr.mxu0 0.0
        %8128 = vmatpush1.msra.mxu0 %v7802
        %8129 = vmatprep.subr.mxu0 0.0
        %8130 = vmatpush1.msra.mxu0 %v7803
        %8131 = vmatprep.subr.mxu0 0.0
        %8132 = vmatpush1.msra.mxu0 %v7804
        %8133 = vmatprep.mubr.f32.mxu0 %v7552
        %8134 = vmatmul.mubr.f32.gmra.mrb[0].mxu0 %v7551
        %v8135 = vpop.f32.mrb[0].mxu0
        %v8136 = vadd.f32 %v7911, %v8135
        %v8137 = vpop.f32.mrb[0].mxu0
        %8138 = vmatprep.mubr.f32.mxu0 %v7558
        %8139 = vmatmul.mubr.f32.gmra.mrb[0].mxu0 %v7557
        %v8140 = vpop.f32.mrb[0].mxu0
        %v8141 = vadd.f32 %v7916, %v8140
        %v8142 = vpop.f32.mrb[0].mxu0
        %8143 = vmatprep.mubr.f32.mxu0 %v7564
        %8144 = vmatmul.mubr.f32.gmra.mrb[0].mxu0 %v7563
        %v8145 = vpop.f32.mrb[0].mxu0
        %v8146 = vadd.f32 %v7921, %v8145
        %v8147 = vpop.f32.mrb[0].mxu0
        %8148 = vmatprep.mubr.f32.mxu0 %v7570
        %8149 = vmatmul.mubr.f32.gmra.mrb[0].mxu0 %v7569
        %v8150 = vpop.f32.mrb[0].mxu0
        %v8151 = vadd.f32 %v7926, %v8150
        %v8152 = vpop.f32.mrb[0].mxu0
        %8153 = vmatprep.mubr.f32.mxu0 %v7576
        %8154 = vmatmul.mubr.f32.gmra.mrb[0].mxu0 %v7575
        %v8155 = vpop.f32.mrb[0].mxu0
        %v8156 = vadd.f32 %v7931, %v8155
        %v8157 = vpop.f32.mrb[0].mxu0
        %8158 = vmatprep.mubr.f32.mxu0 %v7582
        %8159 = vmatmul.mubr.f32.gmra.mrb[0].mxu0 %v7581
        %v8160 = vpop.f32.mrb[0].mxu0
        %v8161 = vadd.f32 %v7936, %v8160
        %v8162 = vpop.f32.mrb[0].mxu0
        %8163 = vmatprep.mubr.f32.mxu0 %v7588
        %8164 = vmatmul.mubr.f32.gmra.mrb[0].mxu0 %v7587
        %v8165 = vpop.f32.mrb[0].mxu0
        %v8166 = vadd.f32 %v7941, %v8165
        %v8167 = vpop.f32.mrb[0].mxu0
        %8168 = vmatprep.mubr.f32.mxu0 %v7594
        %8169 = vmatmul.mubr.f32.gmra.mrb[0].mxu0 %v7593
        %v8170 = vpop.f32.mrb[0].mxu0
        %v8171 = vadd.f32 %v7946, %v8170
        %v8172 = vpop.f32.mrb[0].mxu0
        %8173 = vmatprep.mubr.f32.mxu0 %v7600
        %8174 = vmatmul.mubr.f32.gmra.mrb[0].mxu0 %v7599
        %v8175 = vpop.f32.mrb[0].mxu0
        %v8176 = vadd.f32 %v7951, %v8175
        %v8177 = vpop.f32.mrb[0].mxu0
        %8178 = vmatprep.mubr.f32.mxu0 %v7606
        %8179 = vmatmul.mubr.f32.gmra.mrb[0].mxu0 %v7605
        %v8180 = vpop.f32.mrb[0].mxu0
        %v8181 = vadd.f32 %v7956, %v8180
        %v8182 = vpop.f32.mrb[0].mxu0
        %8183 = vmatprep.mubr.f32.mxu0 %v7612
        %8184 = vmatmul.mubr.f32.gmra.mrb[0].mxu0 %v7611
        %v8185 = vpop.f32.mrb[0].mxu0
        %v8186 = vadd.f32 %v7961, %v8185
        %v8187 = vpop.f32.mrb[0].mxu0
        %8188 = vmatprep.mubr.f32.mxu0 %v7618
        %8189 = vmatmul.mubr.f32.gmra.mrb[0].mxu0 %v7617
        %v8190 = vpop.f32.mrb[0].mxu0
        %v8191 = vadd.f32 %v7966, %v8190
        %v8192 = vpop.f32.mrb[0].mxu0
        %8193 = vmatprep.mubr.f32.mxu0 %v7624
        %8194 = vmatmul.mubr.f32.gmra.mrb[0].mxu0 %v7623
        %v8195 = vpop.f32.mrb[0].mxu0
        %v8196 = vadd.f32 %v7971, %v8195
        %v8197 = vpop.f32.mrb[0].mxu0
        %8198 = vmatprep.mubr.f32.mxu0 %v7630
        %8199 = vmatmul.mubr.f32.gmra.mrb[0].mxu0 %v7629
        %v8200 = vpop.f32.mrb[0].mxu0
        %v8201 = vadd.f32 %v7976, %v8200
        %v8202 = vpop.f32.mrb[0].mxu0
        %8203 = vmatprep.mubr.f32.mxu0 %v7636
        %8204 = vmatmul.mubr.f32.gmra.mrb[0].mxu0 %v7635
        %v8205 = vpop.f32.mrb[0].mxu0
        %v8206 = vadd.f32 %v7981, %v8205
        %v8207 = vpop.f32.mrb[0].mxu0
        %8208 = vmatprep.mubr.f32.mxu0 %v7642
        %8209 = vmatmul.mubr.f32.gmra.mrb[0].mxu0 %v7641
        %v8210 = vpop.f32.mrb[0].mxu0
        %v8211 = vadd.f32 %v7986, %v8210
        %v8212 = vpop.f32.mrb[0].mxu0
        %8213 = vmatprep.mubr.f32.mxu0 %v7648
        %8214 = vmatmul.mubr.f32.gmra.mrb[0].mxu0 %v7647
        %v8215 = vpop.f32.mrb[0].mxu0
        %v8216 = vadd.f32 %v7991, %v8215
        %v8217 = vpop.f32.mrb[0].mxu0
        %8218 = vmatprep.mubr.f32.mxu0 %v7654
        %8219 = vmatmul.mubr.f32.gmra.mrb[0].mxu0 %v7653
        %v8220 = vpop.f32.mrb[0].mxu0
        %v8221 = vadd.f32 %v7996, %v8220
        %v8222 = vpop.f32.mrb[0].mxu0
        %8223 = vmatprep.mubr.f32.mxu0 %v7660
        %8224 = vmatmul.mubr.f32.gmra.mrb[0].mxu0 %v7659
        %v8225 = vpop.f32.mrb[0].mxu0
        %v8226 = vadd.f32 %v8001, %v8225
        %v8227 = vpop.f32.mrb[0].mxu0
        %8228 = vmatprep.mubr.f32.mxu0 %v7666
        %8229 = vmatmul.mubr.f32.gmra.mrb[0].mxu0 %v7665
        %v8230 = vpop.f32.mrb[0].mxu0
        %v8231 = vadd.f32 %v8006, %v8230
        %v8232 = vpop.f32.mrb[0].mxu0
        %8233 = vmatprep.mubr.f32.mxu0 %v7672
        %8234 = vmatmul.mubr.f32.gmra.mrb[0].mxu0 %v7671
        %v8235 = vpop.f32.mrb[0].mxu0
        %v8236 = vadd.f32 %v8011, %v8235
        %v8237 = vpop.f32.mrb[0].mxu0
        %8238 = vmatprep.mubr.f32.mxu0 %v7678
        %8239 = vmatmul.mubr.f32.gmra.mrb[0].mxu0 %v7677
        %v8240 = vpop.f32.mrb[0].mxu0
        %v8241 = vadd.f32 %v8016, %v8240
        %v8242 = vpop.f32.mrb[0].mxu0
        %8243 = vmatprep.mubr.f32.mxu0 %v7684
        %8244 = vmatmul.mubr.f32.gmra.mrb[0].mxu0 %v7683
        %v8245 = vpop.f32.mrb[0].mxu0
        %v8246 = vadd.f32 %v8021, %v8245
        %v8247 = vpop.f32.mrb[0].mxu0
        %8248 = vmatprep.mubr.f32.mxu0 %v7690
        %8249 = vmatmul.mubr.f32.gmra.mrb[0].mxu0 %v7689
        %v8250 = vpop.f32.mrb[0].mxu0
        %v8251 = vadd.f32 %v8026, %v8250
        %v8252 = vpop.f32.mrb[0].mxu0
        %8253 = vmatprep.mubr.f32.mxu0 %v7696
        %8254 = vmatmul.mubr.f32.gmra.mrb[0].mxu0 %v7695
        %v8255 = vpop.f32.mrb[0].mxu0
        %v8256 = vadd.f32 %v8031, %v8255
        %v8257 = vpop.f32.mrb[0].mxu0
        %8258 = vmatprep.mubr.f32.mxu0 %v7702
        %8259 = vmatmul.mubr.f32.gmra.mrb[0].mxu0 %v7701
        %v8260 = vpop.f32.mrb[0].mxu0
        %v8261 = vadd.f32 %v8036, %v8260
        %v8262 = vpop.f32.mrb[0].mxu0
        %8263 = vmatprep.mubr.f32.mxu0 %v7708
        %8264 = vmatmul.mubr.f32.gmra.mrb[0].mxu0 %v7707
        %v8265 = vpop.f32.mrb[0].mxu0
        %v8266 = vadd.f32 %v8041, %v8265
        %v8267 = vpop.f32.mrb[0].mxu0
        %8268 = vmatprep.mubr.f32.mxu0 %v7714
        %8269 = vmatmul.mubr.f32.gmra.mrb[0].mxu0 %v7713
        %v8270 = vpop.f32.mrb[0].mxu0
        %v8271 = vadd.f32 %v8046, %v8270
        %v8272 = vpop.f32.mrb[0].mxu0
        %8273 = vmatprep.mubr.f32.mxu0 %v7720
        %8274 = vmatmul.mubr.f32.gmra.mrb[0].mxu0 %v7719
        %v8275 = vpop.f32.mrb[0].mxu0
        %v8276 = vadd.f32 %v8051, %v8275
        %v8277 = vpop.f32.mrb[0].mxu0
        %8278 = vmatprep.mubr.f32.mxu0 %v7726
        %8279 = vmatmul.mubr.f32.gmra.mrb[0].mxu0 %v7725
        %v8280 = vpop.f32.mrb[0].mxu0
        %v8281 = vadd.f32 %v8056, %v8280
        %v8282 = vpop.f32.mrb[0].mxu0
        %8283 = vmatprep.mubr.f32.mxu0 %v7732
        %8284 = vmatmul.mubr.f32.gmra.mrb[0].mxu0 %v7731
        %v8285 = vpop.f32.mrb[0].mxu0
        %v8286 = vadd.f32 %v8061, %v8285
        %v8287 = vpop.f32.mrb[0].mxu0
        %8288 = vmatprep.mubr.f32.mxu0 %v7738
        %8289 = vmatmul.mubr.f32.gmra.mrb[0].mxu0 %v7737
        %v8290 = vpop.f32.mrb[0].mxu0
        %v8291 = vadd.f32 %v8066, %v8290
        %v8292 = vpop.f32.mrb[0].mxu0
        %8293 = vdwg.mxu0
        %8294 = vmatprep.subr.mxu0 0.0
        %8295 = vmatpush1.msra.mxu0 %v7805
        %8296 = vmatprep.subr.mxu0 0.0
        %8297 = vmatpush1.msra.mxu0 %v7806
        %8298 = vmatprep.subr.mxu0 0.0
        %8299 = vmatpush1.msra.mxu0 %v7807
        %8300 = vmatprep.subr.mxu0 0.0
        %8301 = vmatpush1.msra.mxu0 %v7808
        %8302 = vmatprep.subr.mxu0 0.0
        %8303 = vmatpush1.msra.mxu0 %v7809
        %8304 = vmatprep.subr.mxu0 0.0
        %8305 = vmatpush1.msra.mxu0 %v7810
        %8306 = vmatprep.subr.mxu0 0.0
        %8307 = vmatpush1.msra.mxu0 %v7811
        %8308 = vmatprep.subr.mxu0 0.0
        %8309 = vmatpush1.msra.mxu0 %v7812
        %8310 = vmatprep.subr.mxu0 0.0
        %8311 = vmatpush1.msra.mxu0 %v7813
        %8312 = vmatprep.subr.mxu0 0.0
        %8313 = vmatpush1.msra.mxu0 %v7814
        %8314 = vmatprep.subr.mxu0 0.0
        %8315 = vmatpush1.msra.mxu0 %v7815
        %8316 = vmatprep.subr.mxu0 0.0
        %8317 = vmatpush1.msra.mxu0 %v7816
        %8318 = vmatprep.subr.mxu0 0.0
        %8319 = vmatpush1.msra.mxu0 %v7817
        %8320 = vmatprep.subr.mxu0 0.0
        %8321 = vmatpush1.msra.mxu0 %v7818
        %8322 = vmatprep.subr.mxu0 0.0
        %8323 = vmatpush1.msra.mxu0 %v7819
        %8324 = vmatprep.subr.mxu0 0.0
        %8325 = vmatpush1.msra.mxu0 %v7820
        %8326 = vmatprep.subr.mxu0 0.0
        %8327 = vmatpush1.msra.mxu0 %v7821
        %8328 = vmatprep.subr.mxu0 0.0
        %8329 = vmatpush1.msra.mxu0 %v7822
        %8330 = vmatprep.subr.mxu0 0.0
        %8331 = vmatpush1.msra.mxu0 %v7823
        %8332 = vmatprep.subr.mxu0 0.0
        %8333 = vmatpush1.msra.mxu0 %v7824
        %8334 = vmatprep.subr.mxu0 0.0
        %8335 = vmatpush1.msra.mxu0 %v7825
        %8336 = vmatprep.subr.mxu0 0.0
        %8337 = vmatpush1.msra.mxu0 %v7826
        %8338 = vmatprep.subr.mxu0 0.0
        %8339 = vmatpush1.msra.mxu0 %v7827
        %8340 = vmatprep.subr.mxu0 0.0
        %8341 = vmatpush1.msra.mxu0 %v7828
        %8342 = vmatprep.subr.mxu0 0.0
        %8343 = vmatpush1.msra.mxu0 %v7829
        %8344 = vmatprep.subr.mxu0 0.0
        %8345 = vmatpush1.msra.mxu0 %v7830
        %8346 = vmatprep.subr.mxu0 0.0
        %8347 = vmatpush1.msra.mxu0 %v7831
        %8348 = vmatprep.subr.mxu0 0.0
        %8349 = vmatpush1.msra.mxu0 %v7832
        %8350 = vmatprep.subr.mxu0 0.0
        %8351 = vmatpush1.msra.mxu0 %v7833
        %8352 = vmatprep.subr.mxu0 0.0
        %8353 = vmatpush1.msra.mxu0 %v7834
        %8354 = vmatprep.subr.mxu0 0.0
        %8355 = vmatpush1.msra.mxu0 %v7835
        %8356 = vmatprep.subr.mxu0 0.0
        %8357 = vmatpush1.msra.mxu0 %v7836
        %8358 = vmatprep.mubr.f32.mxu0 %v7554
        %8359 = vmatmul.mubr.f32.gmra.mrb[0].mxu0 %v7553
        %v8360 = vpop.f32.mrb[0].mxu0
        %v8361 = vadd.f32 %v8136, %v8360
        %v8362 = vpop.f32.mrb[0].mxu0
        %8363 = vmatprep.mubr.f32.mxu0 %v7560
        %8364 = vmatmul.mubr.f32.gmra.mrb[0].mxu0 %v7559
        %v8365 = vpop.f32.mrb[0].mxu0
        %v8366 = vadd.f32 %v8141, %v8365
        %v8367 = vpop.f32.mrb[0].mxu0
        %8368 = vmatprep.mubr.f32.mxu0 %v7566
        %8369 = vmatmul.mubr.f32.gmra.mrb[0].mxu0 %v7565
        %v8370 = vpop.f32.mrb[0].mxu0
        %v8371 = vadd.f32 %v8146, %v8370
        %v8372 = vpop.f32.mrb[0].mxu0
        %8373 = vmatprep.mubr.f32.mxu0 %v7572
        %8374 = vmatmul.mubr.f32.gmra.mrb[0].mxu0 %v7571
        %v8375 = vpop.f32.mrb[0].mxu0
        %v8376 = vadd.f32 %v8151, %v8375
        %v8377 = vpop.f32.mrb[0].mxu0
        %8378 = vmatprep.mubr.f32.mxu0 %v7578
        %8379 = vmatmul.mubr.f32.gmra.mrb[0].mxu0 %v7577
        %v8380 = vpop.f32.mrb[0].mxu0
        %v8381 = vadd.f32 %v8156, %v8380
        %v8382 = vpop.f32.mrb[0].mxu0
        %8383 = vmatprep.mubr.f32.mxu0 %v7584
        %8384 = vmatmul.mubr.f32.gmra.mrb[0].mxu0 %v7583
        %v8385 = vpop.f32.mrb[0].mxu0
        %v8386 = vadd.f32 %v8161, %v8385
        %v8387 = vpop.f32.mrb[0].mxu0
        %8388 = vmatprep.mubr.f32.mxu0 %v7590
        %8389 = vmatmul.mubr.f32.gmra.mrb[0].mxu0 %v7589
        %v8390 = vpop.f32.mrb[0].mxu0
        %v8391 = vadd.f32 %v8166, %v8390
        %v8392 = vpop.f32.mrb[0].mxu0
        %8393 = vmatprep.mubr.f32.mxu0 %v7596
        %8394 = vmatmul.mubr.f32.gmra.mrb[0].mxu0 %v7595
        %v8395 = vpop.f32.mrb[0].mxu0
        %v8396 = vadd.f32 %v8171, %v8395
        %v8397 = vpop.f32.mrb[0].mxu0
        %8398 = vmatprep.mubr.f32.mxu0 %v7602
        %8399 = vmatmul.mubr.f32.gmra.mrb[0].mxu0 %v7601
        %v8400 = vpop.f32.mrb[0].mxu0
        %v8401 = vadd.f32 %v8176, %v8400
        %v8402 = vpop.f32.mrb[0].mxu0
        %8403 = vmatprep.mubr.f32.mxu0 %v7608
        %8404 = vmatmul.mubr.f32.gmra.mrb[0].mxu0 %v7607
        %v8405 = vpop.f32.mrb[0].mxu0
        %v8406 = vadd.f32 %v8181, %v8405
        %v8407 = vpop.f32.mrb[0].mxu0
        %8408 = vmatprep.mubr.f32.mxu0 %v7614
        %8409 = vmatmul.mubr.f32.gmra.mrb[0].mxu0 %v7613
        %v8410 = vpop.f32.mrb[0].mxu0
        %v8411 = vadd.f32 %v8186, %v8410
        %v8412 = vpop.f32.mrb[0].mxu0
        %8413 = vmatprep.mubr.f32.mxu0 %v7620
        %8414 = vmatmul.mubr.f32.gmra.mrb[0].mxu0 %v7619
        %v8415 = vpop.f32.mrb[0].mxu0
        %v8416 = vadd.f32 %v8191, %v8415
        %v8417 = vpop.f32.mrb[0].mxu0
        %8418 = vmatprep.mubr.f32.mxu0 %v7626
        %8419 = vmatmul.mubr.f32.gmra.mrb[0].mxu0 %v7625
        %v8420 = vpop.f32.mrb[0].mxu0
        %v8421 = vadd.f32 %v8196, %v8420
        %v8422 = vpop.f32.mrb[0].mxu0
        %8423 = vmatprep.mubr.f32.mxu0 %v7632
        %8424 = vmatmul.mubr.f32.gmra.mrb[0].mxu0 %v7631
        %v8425 = vpop.f32.mrb[0].mxu0
        %v8426 = vadd.f32 %v8201, %v8425
        %v8427 = vpop.f32.mrb[0].mxu0
        %8428 = vmatprep.mubr.f32.mxu0 %v7638
        %8429 = vmatmul.mubr.f32.gmra.mrb[0].mxu0 %v7637
        %v8430 = vpop.f32.mrb[0].mxu0
        %v8431 = vadd.f32 %v8206, %v8430
        %v8432 = vpop.f32.mrb[0].mxu0
        %8433 = vmatprep.mubr.f32.mxu0 %v7644
        %8434 = vmatmul.mubr.f32.gmra.mrb[0].mxu0 %v7643
        %v8435 = vpop.f32.mrb[0].mxu0
        %v8436 = vadd.f32 %v8211, %v8435
        %v8437 = vpop.f32.mrb[0].mxu0
        %8438 = vmatprep.mubr.f32.mxu0 %v7650
        %8439 = vmatmul.mubr.f32.gmra.mrb[0].mxu0 %v7649
        %v8440 = vpop.f32.mrb[0].mxu0
        %v8441 = vadd.f32 %v8216, %v8440
        %v8442 = vpop.f32.mrb[0].mxu0
        %8443 = vmatprep.mubr.f32.mxu0 %v7656
        %8444 = vmatmul.mubr.f32.gmra.mrb[0].mxu0 %v7655
        %v8445 = vpop.f32.mrb[0].mxu0
        %v8446 = vadd.f32 %v8221, %v8445
        %v8447 = vpop.f32.mrb[0].mxu0
        %8448 = vmatprep.mubr.f32.mxu0 %v7662
        %8449 = vmatmul.mubr.f32.gmra.mrb[0].mxu0 %v7661
        %v8450 = vpop.f32.mrb[0].mxu0
        %v8451 = vadd.f32 %v8226, %v8450
        %v8452 = vpop.f32.mrb[0].mxu0
        %8453 = vmatprep.mubr.f32.mxu0 %v7668
        %8454 = vmatmul.mubr.f32.gmra.mrb[0].mxu0 %v7667
        %v8455 = vpop.f32.mrb[0].mxu0
        %v8456 = vadd.f32 %v8231, %v8455
        %v8457 = vpop.f32.mrb[0].mxu0
        %8458 = vmatprep.mubr.f32.mxu0 %v7674
        %8459 = vmatmul.mubr.f32.gmra.mrb[0].mxu0 %v7673
        %v8460 = vpop.f32.mrb[0].mxu0
        %v8461 = vadd.f32 %v8236, %v8460
        %v8462 = vpop.f32.mrb[0].mxu0
        %8463 = vmatprep.mubr.f32.mxu0 %v7680
        %8464 = vmatmul.mubr.f32.gmra.mrb[0].mxu0 %v7679
        %v8465 = vpop.f32.mrb[0].mxu0
        %v8466 = vadd.f32 %v8241, %v8465
        %v8467 = vpop.f32.mrb[0].mxu0
        %8468 = vmatprep.mubr.f32.mxu0 %v7686
        %8469 = vmatmul.mubr.f32.gmra.mrb[0].mxu0 %v7685
        %v8470 = vpop.f32.mrb[0].mxu0
        %v8471 = vadd.f32 %v8246, %v8470
        %v8472 = vpop.f32.mrb[0].mxu0
        %8473 = vmatprep.mubr.f32.mxu0 %v7692
        %8474 = vmatmul.mubr.f32.gmra.mrb[0].mxu0 %v7691
        %v8475 = vpop.f32.mrb[0].mxu0
        %v8476 = vadd.f32 %v8251, %v8475
        %v8477 = vpop.f32.mrb[0].mxu0
        %8478 = vmatprep.mubr.f32.mxu0 %v7698
        %8479 = vmatmul.mubr.f32.gmra.mrb[0].mxu0 %v7697
        %v8480 = vpop.f32.mrb[0].mxu0
        %v8481 = vadd.f32 %v8256, %v8480
        %v8482 = vpop.f32.mrb[0].mxu0
        %8483 = vmatprep.mubr.f32.mxu0 %v7704
        %8484 = vmatmul.mubr.f32.gmra.mrb[0].mxu0 %v7703
        %v8485 = vpop.f32.mrb[0].mxu0
        %v8486 = vadd.f32 %v8261, %v8485
        %v8487 = vpop.f32.mrb[0].mxu0
        %8488 = vmatprep.mubr.f32.mxu0 %v7710
        %8489 = vmatmul.mubr.f32.gmra.mrb[0].mxu0 %v7709
        %v8490 = vpop.f32.mrb[0].mxu0
        %v8491 = vadd.f32 %v8266, %v8490
        %v8492 = vpop.f32.mrb[0].mxu0
        %8493 = vmatprep.mubr.f32.mxu0 %v7716
        %8494 = vmatmul.mubr.f32.gmra.mrb[0].mxu0 %v7715
        %v8495 = vpop.f32.mrb[0].mxu0
        %v8496 = vadd.f32 %v8271, %v8495
        %v8497 = vpop.f32.mrb[0].mxu0
        %8498 = vmatprep.mubr.f32.mxu0 %v7722
        %8499 = vmatmul.mubr.f32.gmra.mrb[0].mxu0 %v7721
        %v8500 = vpop.f32.mrb[0].mxu0
        %v8501 = vadd.f32 %v8276, %v8500
        %v8502 = vpop.f32.mrb[0].mxu0
        %8503 = vmatprep.mubr.f32.mxu0 %v7728
        %8504 = vmatmul.mubr.f32.gmra.mrb[0].mxu0 %v7727
        %v8505 = vpop.f32.mrb[0].mxu0
        %v8506 = vadd.f32 %v8281, %v8505
        %v8507 = vpop.f32.mrb[0].mxu0
        %8508 = vmatprep.mubr.f32.mxu0 %v7734
        %8509 = vmatmul.mubr.f32.gmra.mrb[0].mxu0 %v7733
        %v8510 = vpop.f32.mrb[0].mxu0
        %v8511 = vadd.f32 %v8286, %v8510
        %v8512 = vpop.f32.mrb[0].mxu0
        %8513 = vmatprep.mubr.f32.mxu0 %v7740
        %8514 = vmatmul.mubr.f32.gmra.mrb[0].mxu0 %v7739
        %v8515 = vpop.f32.mrb[0].mxu0
        %v8516 = vadd.f32 %v8291, %v8515
        %v8517 = vpop.f32.mrb[0].mxu0
        %8518 = vdwg.mxu0
        %v8519 = vmax.f32 %v8361, 0.0
        %v8520 = vmax.f32 %v8366, 0.0
        %v8521 = vmax.f32 %v8371, 0.0
        %v8522 = vmax.f32 %v8376, 0.0
        %v8523 = vmax.f32 %v8381, 0.0
        %v8524 = vmax.f32 %v8386, 0.0
        %v8525 = vmax.f32 %v8391, 0.0
        %v8526 = vmax.f32 %v8396, 0.0
        %v8527 = vmax.f32 %v8401, 0.0
        %v8528 = vmax.f32 %v8406, 0.0
        %v8529 = vmax.f32 %v8411, 0.0
        %v8530 = vmax.f32 %v8416, 0.0
        %v8531 = vmax.f32 %v8421, 0.0
        %v8532 = vmax.f32 %v8426, 0.0
        %v8533 = vmax.f32 %v8431, 0.0
        %v8534 = vmax.f32 %v8436, 0.0
        %v8535 = vmax.f32 %v8441, 0.0
        %v8536 = vmax.f32 %v8446, 0.0
        %v8537 = vmax.f32 %v8451, 0.0
        %v8538 = vmax.f32 %v8456, 0.0
        %v8539 = vmax.f32 %v8461, 0.0
        %v8540 = vmax.f32 %v8466, 0.0
        %v8541 = vmax.f32 %v8471, 0.0
        %v8542 = vmax.f32 %v8476, 0.0
        %v8543 = vmax.f32 %v8481, 0.0
        %v8544 = vmax.f32 %v8486, 0.0
        %v8545 = vmax.f32 %v8491, 0.0
        %v8546 = vmax.f32 %v8496, 0.0
        %v8547 = vmax.f32 %v8501, 0.0
        %v8548 = vmax.f32 %v8506, 0.0
        %v8549 = vmax.f32 %v8511, 0.0
        %v8550 = vmax.f32 %v8516, 0.0
        %8551 = vst.msk [vmem:[%s4730 + $0x8] sm:$0xff] %vm1015, %v8519
        %8552 = vst.msk [vmem:[%s4730 + $0x10] sm:$0xff] %vm1015, %v8520
        %8553 = vst.msk [vmem:[%s4730 + $0x28] sm:$0xff] %vm1015, %v8521
        %8554 = vst.msk [vmem:[%s4730 + $0x30] sm:$0xff] %vm1015, %v8522
        %8555 = vst.msk [vmem:[%s4730 + $0x48] sm:$0xff] %vm1015, %v8523
        %8556 = vst.msk [vmem:[%s4730 + $0x50] sm:$0xff] %vm1015, %v8524
        %8557 = vst.msk [vmem:[%s4730 + $0x68] sm:$0xff] %vm1015, %v8525
        %8558 = vst.msk [vmem:[%s4730 + $0x70] sm:$0xff] %vm1015, %v8526
        %8559 = vst.msk [vmem:[%s4730 + $0x88] sm:$0xff] %vm1015, %v8527
        %8560 = vst.msk [vmem:[%s4730 + $0x90] sm:$0xff] %vm1015, %v8528
        %8561 = vst.msk [vmem:[%s4730 + $0xa8] sm:$0xff] %vm1015, %v8529
        %8562 = vst.msk [vmem:[%s4730 + $0xb0] sm:$0xff] %vm1015, %v8530
        %8563 = vst.msk [vmem:[%s4730 + $0xc8] sm:$0xff] %vm1015, %v8531
        %8564 = vst.msk [vmem:[%s4730 + $0xd0] sm:$0xff] %vm1015, %v8532
        %8565 = vst.msk [vmem:[%s4730 + $0xe8] sm:$0xff] %vm1015, %v8533
        %8566 = vst.msk [vmem:[%s4730 + $0xf0] sm:$0xff] %vm1015, %v8534
        %8567 = vst.msk [vmem:[%s4730 + $0x108] sm:$0xff] %vm1015, %v8535
        %8568 = vst.msk [vmem:[%s4730 + $0x110] sm:$0xff] %vm1015, %v8536
        %8569 = vst.msk [vmem:[%s4730 + $0x128] sm:$0xff] %vm1015, %v8537
        %8570 = vst.msk [vmem:[%s4730 + $0x130] sm:$0xff] %vm1015, %v8538
        %8571 = vst.msk [vmem:[%s4730 + $0x148] sm:$0xff] %vm1015, %v8539
        %8572 = vst.msk [vmem:[%s4730 + $0x150] sm:$0xff] %vm1015, %v8540
        %8573 = vst.msk [vmem:[%s4730 + $0x168] sm:$0xff] %vm1015, %v8541
        %8574 = vst.msk [vmem:[%s4730 + $0x170] sm:$0xff] %vm1015, %v8542
        %8575 = vst.msk [vmem:[%s4730 + $0x188] sm:$0xff] %vm1015, %v8543
        %8576 = vst.msk [vmem:[%s4730 + $0x190] sm:$0xff] %vm1015, %v8544
        %8577 = vst.msk [vmem:[%s4730 + $0x1a8] sm:$0xff] %vm1015, %v8545
        %8578 = vst.msk [vmem:[%s4730 + $0x1b0] sm:$0xff] %vm1015, %v8546
        %8579 = vst.msk [vmem:[%s4730 + $0x1c8] sm:$0xff] %vm1015, %v8547
        %8580 = vst.msk [vmem:[%s4730 + $0x1d0] sm:$0xff] %vm1015, %v8548
        %8581 = vst.msk [vmem:[%s4730 + $0x1e8] sm:$0xff] %vm1015, %v8549
        %8582 = vst.msk [vmem:[%s4730 + $0x1f0] sm:$0xff] %vm1015, %v8550
        %v8583 = vld [vmem:[#allocation3 + $0x7] sm:$0xff]
        %v8584 = vld [vmem:[#allocation3 + $0xf] sm:$0xff]
        %v8585 = vld [vmem:[#allocation3 + $0x27] sm:$0xff]
        %v8586 = vld [vmem:[#allocation3 + $0x2f] sm:$0xff]
        %v8587 = vld [vmem:[#allocation3 + $0x47] sm:$0xff]
        %v8588 = vld [vmem:[#allocation3 + $0x4f] sm:$0xff]
        %v8589 = vld [vmem:[#allocation3 + $0x67] sm:$0xff]
        %v8590 = vld [vmem:[#allocation3 + $0x6f] sm:$0xff]
        %v8591 = vld [vmem:[#allocation3 + $0x87] sm:$0xff]
        %v8592 = vld [vmem:[#allocation3 + $0x8f] sm:$0xff]
        %v8593 = vld [vmem:[#allocation3 + $0xa7] sm:$0xff]
        %v8594 = vld [vmem:[#allocation3 + $0xaf] sm:$0xff]
        %v8595 = vld [vmem:[#allocation3 + $0xc7] sm:$0xff]
        %v8596 = vld [vmem:[#allocation3 + $0xcf] sm:$0xff]
        %v8597 = vld [vmem:[#allocation3 + $0xe7] sm:$0xff]
        %v8598 = vld [vmem:[#allocation3 + $0xef] sm:$0xff]
        %v8599 = vld [vmem:[#allocation3 + $0x107] sm:$0xff]
        %v8600 = vld [vmem:[#allocation3 + $0x10f] sm:$0xff]
        %v8601 = vld [vmem:[#allocation3 + $0x127] sm:$0xff]
        %v8602 = vld [vmem:[#allocation3 + $0x12f] sm:$0xff]
        %v8603 = vld [vmem:[#allocation3 + $0x147] sm:$0xff]
        %v8604 = vld [vmem:[#allocation3 + $0x14f] sm:$0xff]
        %v8605 = vld [vmem:[#allocation3 + $0x167] sm:$0xff]
        %v8606 = vld [vmem:[#allocation3 + $0x16f] sm:$0xff]
        %v8607 = vld [vmem:[#allocation3 + $0x187] sm:$0xff]
        %v8608 = vld [vmem:[#allocation3 + $0x18f] sm:$0xff]
        %v8609 = vld [vmem:[#allocation3 + $0x1a7] sm:$0xff]
        %v8610 = vld [vmem:[#allocation3 + $0x1af] sm:$0xff]
        %v8611 = vld [vmem:[#allocation3 + $0x1c7] sm:$0xff]
        %v8612 = vld [vmem:[#allocation3 + $0x1cf] sm:$0xff]
        %v8613 = vld [vmem:[#allocation3 + $0x1e7] sm:$0xff]
        %v8614 = vld [vmem:[#allocation3 + $0x1ef] sm:$0xff]
        %v8615 = vld [vmem:[#allocation3 + $0x207] sm:$0xff]
        %v8616 = vld [vmem:[#allocation3 + $0x20f] sm:$0xff]
        %v8617 = vld [vmem:[#allocation3 + $0x227] sm:$0xff]
        %v8618 = vld [vmem:[#allocation3 + $0x22f] sm:$0xff]
        %8651 = vrot.lane.b32.xlu0 %v8585, 32
        %v8652 = vpop.permute.xlu0 %8651
        %8653 = vrot.lane.b32.xlu0 %v8586, 32
        %v8654 = vpop.permute.xlu0 %8653
        %8655 = vrot.lane.b32.xlu0 %v8587, 32
        %v8656 = vpop.permute.xlu0 %8655
        %8657 = vrot.lane.b32.xlu0 %v8588, 32
        %v8658 = vpop.permute.xlu0 %8657
        %8659 = vrot.lane.b32.xlu0 %v8589, 32
        %v8660 = vpop.permute.xlu0 %8659
        %8661 = vrot.lane.b32.xlu0 %v8590, 32
        %v8662 = vpop.permute.xlu0 %8661
        %8663 = vrot.lane.b32.xlu0 %v8591, 32
        %v8664 = vpop.permute.xlu0 %8663
        %8665 = vrot.lane.b32.xlu0 %v8592, 32
        %v8666 = vpop.permute.xlu0 %8665
        %8667 = vrot.lane.b32.xlu0 %v8593, 32
        %v8668 = vpop.permute.xlu0 %8667
        %8669 = vrot.lane.b32.xlu0 %v8594, 32
        %v8670 = vpop.permute.xlu0 %8669
        %8671 = vrot.lane.b32.xlu0 %v8595, 32
        %v8672 = vpop.permute.xlu0 %8671
        %8673 = vrot.lane.b32.xlu0 %v8596, 32
        %v8674 = vpop.permute.xlu0 %8673
        %8675 = vrot.lane.b32.xlu0 %v8597, 32
        %v8676 = vpop.permute.xlu0 %8675
        %8677 = vrot.lane.b32.xlu0 %v8598, 32
        %v8678 = vpop.permute.xlu0 %8677
        %8679 = vrot.lane.b32.xlu0 %v8599, 32
        %v8680 = vpop.permute.xlu0 %8679
        %8681 = vrot.lane.b32.xlu0 %v8600, 32
        %v8682 = vpop.permute.xlu0 %8681
        %8683 = vrot.lane.b32.xlu0 %v8601, 32
        %v8684 = vpop.permute.xlu0 %8683
        %8685 = vrot.lane.b32.xlu0 %v8602, 32
        %v8686 = vpop.permute.xlu0 %8685
        %8687 = vrot.lane.b32.xlu0 %v8603, 32
        %v8688 = vpop.permute.xlu0 %8687
        %8689 = vrot.lane.b32.xlu0 %v8604, 32
        %v8690 = vpop.permute.xlu0 %8689
        %8691 = vrot.lane.b32.xlu0 %v8605, 32
        %v8692 = vpop.permute.xlu0 %8691
        %8693 = vrot.lane.b32.xlu0 %v8606, 32
        %v8694 = vpop.permute.xlu0 %8693
        %8695 = vrot.lane.b32.xlu0 %v8607, 32
        %v8696 = vpop.permute.xlu0 %8695
        %8697 = vrot.lane.b32.xlu0 %v8608, 32
        %v8698 = vpop.permute.xlu0 %8697
        %8699 = vrot.lane.b32.xlu0 %v8609, 32
        %v8700 = vpop.permute.xlu0 %8699
        %8701 = vrot.lane.b32.xlu0 %v8610, 32
        %v8702 = vpop.permute.xlu0 %8701
        %8703 = vrot.lane.b32.xlu0 %v8611, 32
        %v8704 = vpop.permute.xlu0 %8703
        %8705 = vrot.lane.b32.xlu0 %v8612, 32
        %v8706 = vpop.permute.xlu0 %8705
        %8707 = vrot.lane.b32.xlu0 %v8613, 32
        %v8708 = vpop.permute.xlu0 %8707
        %8709 = vrot.lane.b32.xlu0 %v8614, 32
        %v8710 = vpop.permute.xlu0 %8709
        %8711 = vrot.lane.b32.xlu0 %v8615, 32
        %v8712 = vpop.permute.xlu0 %8711
        %8713 = vrot.lane.b32.xlu0 %v8616, 32
        %v8714 = vpop.permute.xlu0 %8713
        %8749 = vrot.lane.b32.xlu0 %v8587, 64
        %v8750 = vpop.permute.xlu0 %8749
        %8751 = vrot.lane.b32.xlu0 %v8588, 64
        %v8752 = vpop.permute.xlu0 %8751
        %8753 = vrot.lane.b32.xlu0 %v8589, 64
        %v8754 = vpop.permute.xlu0 %8753
        %8755 = vrot.lane.b32.xlu0 %v8590, 64
        %v8756 = vpop.permute.xlu0 %8755
        %8757 = vrot.lane.b32.xlu0 %v8591, 64
        %v8758 = vpop.permute.xlu0 %8757
        %8759 = vrot.lane.b32.xlu0 %v8592, 64
        %v8760 = vpop.permute.xlu0 %8759
        %8761 = vrot.lane.b32.xlu0 %v8593, 64
        %v8762 = vpop.permute.xlu0 %8761
        %8763 = vrot.lane.b32.xlu0 %v8594, 64
        %v8764 = vpop.permute.xlu0 %8763
        %8765 = vrot.lane.b32.xlu0 %v8595, 64
        %v8766 = vpop.permute.xlu0 %8765
        %8767 = vrot.lane.b32.xlu0 %v8596, 64
        %v8768 = vpop.permute.xlu0 %8767
        %8769 = vrot.lane.b32.xlu0 %v8597, 64
        %v8770 = vpop.permute.xlu0 %8769
        %8771 = vrot.lane.b32.xlu0 %v8598, 64
        %v8772 = vpop.permute.xlu0 %8771
        %8773 = vrot.lane.b32.xlu0 %v8599, 64
        %v8774 = vpop.permute.xlu0 %8773
        %8775 = vrot.lane.b32.xlu0 %v8600, 64
        %v8776 = vpop.permute.xlu0 %8775
        %8777 = vrot.lane.b32.xlu0 %v8601, 64
        %v8778 = vpop.permute.xlu0 %8777
        %8779 = vrot.lane.b32.xlu0 %v8602, 64
        %v8780 = vpop.permute.xlu0 %8779
        %8781 = vrot.lane.b32.xlu0 %v8603, 64
        %v8782 = vpop.permute.xlu0 %8781
        %8783 = vrot.lane.b32.xlu0 %v8604, 64
        %v8784 = vpop.permute.xlu0 %8783
        %8785 = vrot.lane.b32.xlu0 %v8605, 64
        %v8786 = vpop.permute.xlu0 %8785
        %8787 = vrot.lane.b32.xlu0 %v8606, 64
        %v8788 = vpop.permute.xlu0 %8787
        %8789 = vrot.lane.b32.xlu0 %v8607, 64
        %v8790 = vpop.permute.xlu0 %8789
        %8791 = vrot.lane.b32.xlu0 %v8608, 64
        %v8792 = vpop.permute.xlu0 %8791
        %8793 = vrot.lane.b32.xlu0 %v8609, 64
        %v8794 = vpop.permute.xlu0 %8793
        %8795 = vrot.lane.b32.xlu0 %v8610, 64
        %v8796 = vpop.permute.xlu0 %8795
        %8797 = vrot.lane.b32.xlu0 %v8611, 64
        %v8798 = vpop.permute.xlu0 %8797
        %8799 = vrot.lane.b32.xlu0 %v8612, 64
        %v8800 = vpop.permute.xlu0 %8799
        %8801 = vrot.lane.b32.xlu0 %v8613, 64
        %v8802 = vpop.permute.xlu0 %8801
        %8803 = vrot.lane.b32.xlu0 %v8614, 64
        %v8804 = vpop.permute.xlu0 %8803
        %8805 = vrot.lane.b32.xlu0 %v8615, 64
        %v8806 = vpop.permute.xlu0 %8805
        %8807 = vrot.lane.b32.xlu0 %v8616, 64
        %v8808 = vpop.permute.xlu0 %8807
        %8809 = vrot.lane.b32.xlu0 %v8617, 64
        %v8810 = vpop.permute.xlu0 %8809
        %8811 = vrot.lane.b32.xlu0 %v8618, 64
        %v8812 = vpop.permute.xlu0 %8811
        %v8845 = vsel %vm1015, %v8583, %v8652
        %v8846 = vsel %vm1015, %v8584, %v8654
        %v8847 = vsel %vm1015, %v8585, %v8656
        %v8848 = vsel %vm1015, %v8586, %v8658
        %v8849 = vsel %vm1015, %v8587, %v8660
        %v8850 = vsel %vm1015, %v8588, %v8662
        %v8851 = vsel %vm1015, %v8589, %v8664
        %v8852 = vsel %vm1015, %v8590, %v8666
        %v8853 = vsel %vm1015, %v8591, %v8668
        %v8854 = vsel %vm1015, %v8592, %v8670
        %v8855 = vsel %vm1015, %v8593, %v8672
        %v8856 = vsel %vm1015, %v8594, %v8674
        %v8857 = vsel %vm1015, %v8595, %v8676
        %v8858 = vsel %vm1015, %v8596, %v8678
        %v8859 = vsel %vm1015, %v8597, %v8680
        %v8860 = vsel %vm1015, %v8598, %v8682
        %v8861 = vsel %vm1015, %v8599, %v8684
        %v8862 = vsel %vm1015, %v8600, %v8686
        %v8863 = vsel %vm1015, %v8601, %v8688
        %v8864 = vsel %vm1015, %v8602, %v8690
        %v8865 = vsel %vm1015, %v8603, %v8692
        %v8866 = vsel %vm1015, %v8604, %v8694
        %v8867 = vsel %vm1015, %v8605, %v8696
        %v8868 = vsel %vm1015, %v8606, %v8698
        %v8869 = vsel %vm1015, %v8607, %v8700
        %v8870 = vsel %vm1015, %v8608, %v8702
        %v8871 = vsel %vm1015, %v8609, %v8704
        %v8872 = vsel %vm1015, %v8610, %v8706
        %v8873 = vsel %vm1015, %v8611, %v8708
        %v8874 = vsel %vm1015, %v8612, %v8710
        %v8875 = vsel %vm1015, %v8613, %v8712
        %v8876 = vsel %vm1015, %v8614, %v8714
        %v8877 = vsel %vm4683, %v8845, %v8750
        %v8878 = vsel %vm4683, %v8846, %v8752
        %v8879 = vsel %vm4683, %v8847, %v8754
        %v8880 = vsel %vm4683, %v8848, %v8756
        %v8881 = vsel %vm4683, %v8849, %v8758
        %v8882 = vsel %vm4683, %v8850, %v8760
        %v8883 = vsel %vm4683, %v8851, %v8762
        %v8884 = vsel %vm4683, %v8852, %v8764
        %v8885 = vsel %vm4683, %v8853, %v8766
        %v8886 = vsel %vm4683, %v8854, %v8768
        %v8887 = vsel %vm4683, %v8855, %v8770
        %v8888 = vsel %vm4683, %v8856, %v8772
        %v8889 = vsel %vm4683, %v8857, %v8774
        %v8890 = vsel %vm4683, %v8858, %v8776
        %v8891 = vsel %vm4683, %v8859, %v8778
        %v8892 = vsel %vm4683, %v8860, %v8780
        %v8893 = vsel %vm4683, %v8861, %v8782
        %v8894 = vsel %vm4683, %v8862, %v8784
        %v8895 = vsel %vm4683, %v8863, %v8786
        %v8896 = vsel %vm4683, %v8864, %v8788
        %v8897 = vsel %vm4683, %v8865, %v8790
        %v8898 = vsel %vm4683, %v8866, %v8792
        %v8899 = vsel %vm4683, %v8867, %v8794
        %v8900 = vsel %vm4683, %v8868, %v8796
        %v8901 = vsel %vm4683, %v8869, %v8798
        %v8902 = vsel %vm4683, %v8870, %v8800
        %v8903 = vsel %vm4683, %v8871, %v8802
        %v8904 = vsel %vm4683, %v8872, %v8804
        %v8905 = vsel %vm4683, %v8873, %v8806
        %v8906 = vsel %vm4683, %v8874, %v8808
        %v8907 = vsel %vm4683, %v8875, %v8810
        %v8908 = vsel %vm4683, %v8876, %v8812
        %vm8909 = vcmask 785408
        %v8910 = vsel %vm8909, %v8877, 0.0
        %v8911 = vsel %vm8909, %v8878, 0.0
        %v8912 = vsel %vm8909, %v8879, 0.0
        %v8913 = vsel %vm8909, %v8880, 0.0
        %v8914 = vsel %vm8909, %v8881, 0.0
        %v8915 = vsel %vm8909, %v8882, 0.0
        %v8916 = vsel %vm8909, %v8883, 0.0
        %v8917 = vsel %vm8909, %v8884, 0.0
        %v8918 = vsel %vm8909, %v8885, 0.0
        %v8919 = vsel %vm8909, %v8886, 0.0
        %v8920 = vsel %vm8909, %v8887, 0.0
        %v8921 = vsel %vm8909, %v8888, 0.0
        %v8922 = vsel %vm8909, %v8889, 0.0
        %v8923 = vsel %vm8909, %v8890, 0.0
        %v8924 = vsel %vm8909, %v8891, 0.0
        %v8925 = vsel %vm8909, %v8892, 0.0
        %v8926 = vsel %vm8909, %v8893, 0.0
        %v8927 = vsel %vm8909, %v8894, 0.0
        %v8928 = vsel %vm8909, %v8895, 0.0
        %v8929 = vsel %vm8909, %v8896, 0.0
        %v8930 = vsel %vm8909, %v8897, 0.0
        %v8931 = vsel %vm8909, %v8898, 0.0
        %v8932 = vsel %vm8909, %v8899, 0.0
        %v8933 = vsel %vm8909, %v8900, 0.0
        %v8934 = vsel %vm8909, %v8901, 0.0
        %v8935 = vsel %vm8909, %v8902, 0.0
        %v8936 = vsel %vm8909, %v8903, 0.0
        %v8937 = vsel %vm8909, %v8904, 0.0
        %v8938 = vsel %vm8909, %v8905, 0.0
        %v8939 = vsel %vm8909, %v8906, 0.0
        %v8940 = vsel %vm8909, %v8907, 0.0
        %v8941 = vsel %vm8909, %v8908, 0.0
        %8942 = vst [vmem:[#allocation4] sm:$0xff] %v8910
        %8943 = vst [vmem:[#allocation4 + $0x30] sm:$0xff] %v8911
        %8944 = vst [vmem:[#allocation4 + $0x60] sm:$0xff] %v8912
        %8945 = vst [vmem:[#allocation4 + $0x90] sm:$0xff] %v8913
        %8946 = vst [vmem:[#allocation4 + $0xc0] sm:$0xff] %v8914
        %8947 = vst [vmem:[#allocation4 + $0xf0] sm:$0xff] %v8915
        %8948 = vst [vmem:[#allocation4 + $0x120] sm:$0xff] %v8916
        %8949 = vst [vmem:[#allocation4 + $0x150] sm:$0xff] %v8917
        %8950 = vst [vmem:[#allocation4 + $0x180] sm:$0xff] %v8918
        %8951 = vst [vmem:[#allocation4 + $0x1b0] sm:$0xff] %v8919
        %8952 = vst [vmem:[#allocation4 + $0x1e0] sm:$0xff] %v8920
        %8953 = vst [vmem:[#allocation4 + $0x210] sm:$0xff] %v8921
        %8954 = vst [vmem:[#allocation4 + $0x240] sm:$0xff] %v8922
        %8955 = vst [vmem:[#allocation4 + $0x270] sm:$0xff] %v8923
        %8956 = vst [vmem:[#allocation4 + $0x2a0] sm:$0xff] %v8924
        %8957 = vst [vmem:[#allocation4 + $0x2d0] sm:$0xff] %v8925
        %8958 = vst [vmem:[#allocation4 + $0x300] sm:$0xff] %v8926
        %8959 = vst [vmem:[#allocation4 + $0x330] sm:$0xff] %v8927
        %8960 = vst [vmem:[#allocation4 + $0x360] sm:$0xff] %v8928
        %8961 = vst [vmem:[#allocation4 + $0x390] sm:$0xff] %v8929
        %8962 = vst [vmem:[#allocation4 + $0x3c0] sm:$0xff] %v8930
        %8963 = vst [vmem:[#allocation4 + $0x3f0] sm:$0xff] %v8931
        %8964 = vst [vmem:[#allocation4 + $0x420] sm:$0xff] %v8932
        %8965 = vst [vmem:[#allocation4 + $0x450] sm:$0xff] %v8933
        %8966 = vst [vmem:[#allocation4 + $0x480] sm:$0xff] %v8934
        %8967 = vst [vmem:[#allocation4 + $0x4b0] sm:$0xff] %v8935
        %8968 = vst [vmem:[#allocation4 + $0x4e0] sm:$0xff] %v8936
        %8969 = vst [vmem:[#allocation4 + $0x510] sm:$0xff] %v8937
        %8970 = vst [vmem:[#allocation4 + $0x540] sm:$0xff] %v8938
        %8971 = vst [vmem:[#allocation4 + $0x570] sm:$0xff] %v8939
        %8972 = vst [vmem:[#allocation4 + $0x5a0] sm:$0xff] %v8940
        %8973 = vst [vmem:[#allocation4 + $0x5d0] sm:$0xff] %v8941
        %v8974 = vld [vmem:[#allocation3 + $0x8] sm:$0xff]
        %v8975 = vld [vmem:[#allocation3 + $0x10] sm:$0xff]
        %v8976 = vld [vmem:[#allocation3 + $0x28] sm:$0xff]
        %v8977 = vld [vmem:[#allocation3 + $0x30] sm:$0xff]
        %v8978 = vld [vmem:[#allocation3 + $0x48] sm:$0xff]
        %v8979 = vld [vmem:[#allocation3 + $0x50] sm:$0xff]
        %v8980 = vld [vmem:[#allocation3 + $0x68] sm:$0xff]
        %v8981 = vld [vmem:[#allocation3 + $0x70] sm:$0xff]
        %v8982 = vld [vmem:[#allocation3 + $0x88] sm:$0xff]
        %v8983 = vld [vmem:[#allocation3 + $0x90] sm:$0xff]
        %v8984 = vld [vmem:[#allocation3 + $0xa8] sm:$0xff]
        %v8985 = vld [vmem:[#allocation3 + $0xb0] sm:$0xff]
        %v8986 = vld [vmem:[#allocation3 + $0xc8] sm:$0xff]
        %v8987 = vld [vmem:[#allocation3 + $0xd0] sm:$0xff]
        %v8988 = vld [vmem:[#allocation3 + $0xe8] sm:$0xff]
        %v8989 = vld [vmem:[#allocation3 + $0xf0] sm:$0xff]
        %v8990 = vld [vmem:[#allocation3 + $0x108] sm:$0xff]
        %v8991 = vld [vmem:[#allocation3 + $0x110] sm:$0xff]
        %v8992 = vld [vmem:[#allocation3 + $0x128] sm:$0xff]
        %v8993 = vld [vmem:[#allocation3 + $0x130] sm:$0xff]
        %v8994 = vld [vmem:[#allocation3 + $0x148] sm:$0xff]
        %v8995 = vld [vmem:[#allocation3 + $0x150] sm:$0xff]
        %v8996 = vld [vmem:[#allocation3 + $0x168] sm:$0xff]
        %v8997 = vld [vmem:[#allocation3 + $0x170] sm:$0xff]
        %v8998 = vld [vmem:[#allocation3 + $0x188] sm:$0xff]
        %v8999 = vld [vmem:[#allocation3 + $0x190] sm:$0xff]
        %v9000 = vld [vmem:[#allocation3 + $0x1a8] sm:$0xff]
        %v9001 = vld [vmem:[#allocation3 + $0x1b0] sm:$0xff]
        %v9002 = vld [vmem:[#allocation3 + $0x1c8] sm:$0xff]
        %v9003 = vld [vmem:[#allocation3 + $0x1d0] sm:$0xff]
        %v9004 = vld [vmem:[#allocation3 + $0x1e8] sm:$0xff]
        %v9005 = vld [vmem:[#allocation3 + $0x1f0] sm:$0xff]
        %v9006 = vld [vmem:[#allocation3 + $0x208] sm:$0xff]
        %v9007 = vld [vmem:[#allocation3 + $0x210] sm:$0xff]
        %v9008 = vld [vmem:[#allocation3 + $0x228] sm:$0xff]
        %v9009 = vld [vmem:[#allocation3 + $0x230] sm:$0xff]
        %9042 = vrot.lane.b32.xlu0 %v8976, 32
        %v9043 = vpop.permute.xlu0 %9042
        %9044 = vrot.lane.b32.xlu0 %v8977, 32
        %v9045 = vpop.permute.xlu0 %9044
        %9046 = vrot.lane.b32.xlu0 %v8978, 32
        %v9047 = vpop.permute.xlu0 %9046
        %9048 = vrot.lane.b32.xlu0 %v8979, 32
        %v9049 = vpop.permute.xlu0 %9048
        %9050 = vrot.lane.b32.xlu0 %v8980, 32
        %v9051 = vpop.permute.xlu0 %9050
        %9052 = vrot.lane.b32.xlu0 %v8981, 32
        %v9053 = vpop.permute.xlu0 %9052
        %9054 = vrot.lane.b32.xlu0 %v8982, 32
        %v9055 = vpop.permute.xlu0 %9054
        %9056 = vrot.lane.b32.xlu0 %v8983, 32
        %v9057 = vpop.permute.xlu0 %9056
        %9058 = vrot.lane.b32.xlu0 %v8984, 32
        %v9059 = vpop.permute.xlu0 %9058
        %9060 = vrot.lane.b32.xlu0 %v8985, 32
        %v9061 = vpop.permute.xlu0 %9060
        %9062 = vrot.lane.b32.xlu0 %v8986, 32
        %v9063 = vpop.permute.xlu0 %9062
        %9064 = vrot.lane.b32.xlu0 %v8987, 32
        %v9065 = vpop.permute.xlu0 %9064
        %9066 = vrot.lane.b32.xlu0 %v8988, 32
        %v9067 = vpop.permute.xlu0 %9066
        %9068 = vrot.lane.b32.xlu0 %v8989, 32
        %v9069 = vpop.permute.xlu0 %9068
        %9070 = vrot.lane.b32.xlu0 %v8990, 32
        %v9071 = vpop.permute.xlu0 %9070
        %9072 = vrot.lane.b32.xlu0 %v8991, 32
        %v9073 = vpop.permute.xlu0 %9072
        %9074 = vrot.lane.b32.xlu0 %v8992, 32
        %v9075 = vpop.permute.xlu0 %9074
        %9076 = vrot.lane.b32.xlu0 %v8993, 32
        %v9077 = vpop.permute.xlu0 %9076
        %9078 = vrot.lane.b32.xlu0 %v8994, 32
        %v9079 = vpop.permute.xlu0 %9078
        %9080 = vrot.lane.b32.xlu0 %v8995, 32
        %v9081 = vpop.permute.xlu0 %9080
        %9082 = vrot.lane.b32.xlu0 %v8996, 32
        %v9083 = vpop.permute.xlu0 %9082
        %9084 = vrot.lane.b32.xlu0 %v8997, 32
        %v9085 = vpop.permute.xlu0 %9084
        %9086 = vrot.lane.b32.xlu0 %v8998, 32
        %v9087 = vpop.permute.xlu0 %9086
        %9088 = vrot.lane.b32.xlu0 %v8999, 32
        %v9089 = vpop.permute.xlu0 %9088
        %9090 = vrot.lane.b32.xlu0 %v9000, 32
        %v9091 = vpop.permute.xlu0 %9090
        %9092 = vrot.lane.b32.xlu0 %v9001, 32
        %v9093 = vpop.permute.xlu0 %9092
        %9094 = vrot.lane.b32.xlu0 %v9002, 32
        %v9095 = vpop.permute.xlu0 %9094
        %9096 = vrot.lane.b32.xlu0 %v9003, 32
        %v9097 = vpop.permute.xlu0 %9096
        %9098 = vrot.lane.b32.xlu0 %v9004, 32
        %v9099 = vpop.permute.xlu0 %9098
        %9100 = vrot.lane.b32.xlu0 %v9005, 32
        %v9101 = vpop.permute.xlu0 %9100
        %9102 = vrot.lane.b32.xlu0 %v9006, 32
        %v9103 = vpop.permute.xlu0 %9102
        %9104 = vrot.lane.b32.xlu0 %v9007, 32
        %v9105 = vpop.permute.xlu0 %9104
        %9140 = vrot.lane.b32.xlu0 %v8978, 64
        %v9141 = vpop.permute.xlu0 %9140
        %9142 = vrot.lane.b32.xlu0 %v8979, 64
        %v9143 = vpop.permute.xlu0 %9142
        %9144 = vrot.lane.b32.xlu0 %v8980, 64
        %v9145 = vpop.permute.xlu0 %9144
        %9146 = vrot.lane.b32.xlu0 %v8981, 64
        %v9147 = vpop.permute.xlu0 %9146
        %9148 = vrot.lane.b32.xlu0 %v8982, 64
        %v9149 = vpop.permute.xlu0 %9148
        %9150 = vrot.lane.b32.xlu0 %v8983, 64
        %v9151 = vpop.permute.xlu0 %9150
        %9152 = vrot.lane.b32.xlu0 %v8984, 64
        %v9153 = vpop.permute.xlu0 %9152
        %9154 = vrot.lane.b32.xlu0 %v8985, 64
        %v9155 = vpop.permute.xlu0 %9154
        %9156 = vrot.lane.b32.xlu0 %v8986, 64
        %v9157 = vpop.permute.xlu0 %9156
        %9158 = vrot.lane.b32.xlu0 %v8987, 64
        %v9159 = vpop.permute.xlu0 %9158
        %9160 = vrot.lane.b32.xlu0 %v8988, 64
        %v9161 = vpop.permute.xlu0 %9160
        %9162 = vrot.lane.b32.xlu0 %v8989, 64
        %v9163 = vpop.permute.xlu0 %9162
        %9164 = vrot.lane.b32.xlu0 %v8990, 64
        %v9165 = vpop.permute.xlu0 %9164
        %9166 = vrot.lane.b32.xlu0 %v8991, 64
        %v9167 = vpop.permute.xlu0 %9166
        %9168 = vrot.lane.b32.xlu0 %v8992, 64
        %v9169 = vpop.permute.xlu0 %9168
        %9170 = vrot.lane.b32.xlu0 %v8993, 64
        %v9171 = vpop.permute.xlu0 %9170
        %9172 = vrot.lane.b32.xlu0 %v8994, 64
        %v9173 = vpop.permute.xlu0 %9172
        %9174 = vrot.lane.b32.xlu0 %v8995, 64
        %v9175 = vpop.permute.xlu0 %9174
        %9176 = vrot.lane.b32.xlu0 %v8996, 64
        %v9177 = vpop.permute.xlu0 %9176
        %9178 = vrot.lane.b32.xlu0 %v8997, 64
        %v9179 = vpop.permute.xlu0 %9178
        %9180 = vrot.lane.b32.xlu0 %v8998, 64
        %v9181 = vpop.permute.xlu0 %9180
        %9182 = vrot.lane.b32.xlu0 %v8999, 64
        %v9183 = vpop.permute.xlu0 %9182
        %9184 = vrot.lane.b32.xlu0 %v9000, 64
        %v9185 = vpop.permute.xlu0 %9184
        %9186 = vrot.lane.b32.xlu0 %v9001, 64
        %v9187 = vpop.permute.xlu0 %9186
        %9188 = vrot.lane.b32.xlu0 %v9002, 64
        %v9189 = vpop.permute.xlu0 %9188
        %9190 = vrot.lane.b32.xlu0 %v9003, 64
        %v9191 = vpop.permute.xlu0 %9190
        %9192 = vrot.lane.b32.xlu0 %v9004, 64
        %v9193 = vpop.permute.xlu0 %9192
        %9194 = vrot.lane.b32.xlu0 %v9005, 64
        %v9195 = vpop.permute.xlu0 %9194
        %9196 = vrot.lane.b32.xlu0 %v9006, 64
        %v9197 = vpop.permute.xlu0 %9196
        %9198 = vrot.lane.b32.xlu0 %v9007, 64
        %v9199 = vpop.permute.xlu0 %9198
        %9200 = vrot.lane.b32.xlu0 %v9008, 64
        %v9201 = vpop.permute.xlu0 %9200
        %9202 = vrot.lane.b32.xlu0 %v9009, 64
        %v9203 = vpop.permute.xlu0 %9202
        %v9236 = vsel %vm1015, %v8974, %v9043
        %v9237 = vsel %vm1015, %v8975, %v9045
        %v9238 = vsel %vm1015, %v8976, %v9047
        %v9239 = vsel %vm1015, %v8977, %v9049
        %v9240 = vsel %vm1015, %v8978, %v9051
        %v9241 = vsel %vm1015, %v8979, %v9053
        %v9242 = vsel %vm1015, %v8980, %v9055
        %v9243 = vsel %vm1015, %v8981, %v9057
        %v9244 = vsel %vm1015, %v8982, %v9059
        %v9245 = vsel %vm1015, %v8983, %v9061
        %v9246 = vsel %vm1015, %v8984, %v9063
        %v9247 = vsel %vm1015, %v8985, %v9065
        %v9248 = vsel %vm1015, %v8986, %v9067
        %v9249 = vsel %vm1015, %v8987, %v9069
        %v9250 = vsel %vm1015, %v8988, %v9071
        %v9251 = vsel %vm1015, %v8989, %v9073
        %v9252 = vsel %vm1015, %v8990, %v9075
        %v9253 = vsel %vm1015, %v8991, %v9077
        %v9254 = vsel %vm1015, %v8992, %v9079
        %v9255 = vsel %vm1015, %v8993, %v9081
        %v9256 = vsel %vm1015, %v8994, %v9083
        %v9257 = vsel %vm1015, %v8995, %v9085
        %v9258 = vsel %vm1015, %v8996, %v9087
        %v9259 = vsel %vm1015, %v8997, %v9089
        %v9260 = vsel %vm1015, %v8998, %v9091
        %v9261 = vsel %vm1015, %v8999, %v9093
        %v9262 = vsel %vm1015, %v9000, %v9095
        %v9263 = vsel %vm1015, %v9001, %v9097
        %v9264 = vsel %vm1015, %v9002, %v9099
        %v9265 = vsel %vm1015, %v9003, %v9101
        %v9266 = vsel %vm1015, %v9004, %v9103
        %v9267 = vsel %vm1015, %v9005, %v9105
        %v9268 = vsel %vm4683, %v9236, %v9141
        %v9269 = vsel %vm4683, %v9237, %v9143
        %v9270 = vsel %vm4683, %v9238, %v9145
        %v9271 = vsel %vm4683, %v9239, %v9147
        %v9272 = vsel %vm4683, %v9240, %v9149
        %v9273 = vsel %vm4683, %v9241, %v9151
        %v9274 = vsel %vm4683, %v9242, %v9153
        %v9275 = vsel %vm4683, %v9243, %v9155
        %v9276 = vsel %vm4683, %v9244, %v9157
        %v9277 = vsel %vm4683, %v9245, %v9159
        %v9278 = vsel %vm4683, %v9246, %v9161
        %v9279 = vsel %vm4683, %v9247, %v9163
        %v9280 = vsel %vm4683, %v9248, %v9165
        %v9281 = vsel %vm4683, %v9249, %v9167
        %v9282 = vsel %vm4683, %v9250, %v9169
        %v9283 = vsel %vm4683, %v9251, %v9171
        %v9284 = vsel %vm4683, %v9252, %v9173
        %v9285 = vsel %vm4683, %v9253, %v9175
        %v9286 = vsel %vm4683, %v9254, %v9177
        %v9287 = vsel %vm4683, %v9255, %v9179
        %v9288 = vsel %vm4683, %v9256, %v9181
        %v9289 = vsel %vm4683, %v9257, %v9183
        %v9290 = vsel %vm4683, %v9258, %v9185
        %v9291 = vsel %vm4683, %v9259, %v9187
        %v9292 = vsel %vm4683, %v9260, %v9189
        %v9293 = vsel %vm4683, %v9261, %v9191
        %v9294 = vsel %vm4683, %v9262, %v9193
        %v9295 = vsel %vm4683, %v9263, %v9195
        %v9296 = vsel %vm4683, %v9264, %v9197
        %v9297 = vsel %vm4683, %v9265, %v9199
        %v9298 = vsel %vm4683, %v9266, %v9201
        %v9299 = vsel %vm4683, %v9267, %v9203
        %v9300 = vsel %vm8909, %v9268, 0.0
        %v9301 = vsel %vm8909, %v9269, 0.0
        %v9302 = vsel %vm8909, %v9270, 0.0
        %v9303 = vsel %vm8909, %v9271, 0.0
        %v9304 = vsel %vm8909, %v9272, 0.0
        %v9305 = vsel %vm8909, %v9273, 0.0
        %v9306 = vsel %vm8909, %v9274, 0.0
        %v9307 = vsel %vm8909, %v9275, 0.0
        %v9308 = vsel %vm8909, %v9276, 0.0
        %v9309 = vsel %vm8909, %v9277, 0.0
        %v9310 = vsel %vm8909, %v9278, 0.0
        %v9311 = vsel %vm8909, %v9279, 0.0
        %v9312 = vsel %vm8909, %v9280, 0.0
        %v9313 = vsel %vm8909, %v9281, 0.0
        %v9314 = vsel %vm8909, %v9282, 0.0
        %v9315 = vsel %vm8909, %v9283, 0.0
        %v9316 = vsel %vm8909, %v9284, 0.0
        %v9317 = vsel %vm8909, %v9285, 0.0
        %v9318 = vsel %vm8909, %v9286, 0.0
        %v9319 = vsel %vm8909, %v9287, 0.0
        %v9320 = vsel %vm8909, %v9288, 0.0
        %v9321 = vsel %vm8909, %v9289, 0.0
        %v9322 = vsel %vm8909, %v9290, 0.0
        %v9323 = vsel %vm8909, %v9291, 0.0
        %v9324 = vsel %vm8909, %v9292, 0.0
        %v9325 = vsel %vm8909, %v9293, 0.0
        %v9326 = vsel %vm8909, %v9294, 0.0
        %v9327 = vsel %vm8909, %v9295, 0.0
        %v9328 = vsel %vm8909, %v9296, 0.0
        %v9329 = vsel %vm8909, %v9297, 0.0
        %v9330 = vsel %vm8909, %v9298, 0.0
        %v9331 = vsel %vm8909, %v9299, 0.0
        %9332 = vst [vmem:[#allocation4 + $0x8] sm:$0xff] %v9300
        %9333 = vst [vmem:[#allocation4 + $0x38] sm:$0xff] %v9301
        %9334 = vst [vmem:[#allocation4 + $0x68] sm:$0xff] %v9302
        %9335 = vst [vmem:[#allocation4 + $0x98] sm:$0xff] %v9303
        %9336 = vst [vmem:[#allocation4 + $0xc8] sm:$0xff] %v9304
        %9337 = vst [vmem:[#allocation4 + $0xf8] sm:$0xff] %v9305
        %9338 = vst [vmem:[#allocation4 + $0x128] sm:$0xff] %v9306
        %9339 = vst [vmem:[#allocation4 + $0x158] sm:$0xff] %v9307
        %9340 = vst [vmem:[#allocation4 + $0x188] sm:$0xff] %v9308
        %9341 = vst [vmem:[#allocation4 + $0x1b8] sm:$0xff] %v9309
        %9342 = vst [vmem:[#allocation4 + $0x1e8] sm:$0xff] %v9310
        %9343 = vst [vmem:[#allocation4 + $0x218] sm:$0xff] %v9311
        %9344 = vst [vmem:[#allocation4 + $0x248] sm:$0xff] %v9312
        %9345 = vst [vmem:[#allocation4 + $0x278] sm:$0xff] %v9313
        %9346 = vst [vmem:[#allocation4 + $0x2a8] sm:$0xff] %v9314
        %9347 = vst [vmem:[#allocation4 + $0x2d8] sm:$0xff] %v9315
        %9348 = vst [vmem:[#allocation4 + $0x308] sm:$0xff] %v9316
        %9349 = vst [vmem:[#allocation4 + $0x338] sm:$0xff] %v9317
        %9350 = vst [vmem:[#allocation4 + $0x368] sm:$0xff] %v9318
        %9351 = vst [vmem:[#allocation4 + $0x398] sm:$0xff] %v9319
        %9352 = vst [vmem:[#allocation4 + $0x3c8] sm:$0xff] %v9320
        %9353 = vst [vmem:[#allocation4 + $0x3f8] sm:$0xff] %v9321
        %9354 = vst [vmem:[#allocation4 + $0x428] sm:$0xff] %v9322
        %9355 = vst [vmem:[#allocation4 + $0x458] sm:$0xff] %v9323
        %9356 = vst [vmem:[#allocation4 + $0x488] sm:$0xff] %v9324
        %9357 = vst [vmem:[#allocation4 + $0x4b8] sm:$0xff] %v9325
        %9358 = vst [vmem:[#allocation4 + $0x4e8] sm:$0xff] %v9326
        %9359 = vst [vmem:[#allocation4 + $0x518] sm:$0xff] %v9327
        %9360 = vst [vmem:[#allocation4 + $0x548] sm:$0xff] %v9328
        %9361 = vst [vmem:[#allocation4 + $0x578] sm:$0xff] %v9329
        %9362 = vst [vmem:[#allocation4 + $0x5a8] sm:$0xff] %v9330
        %9363 = vst [vmem:[#allocation4 + $0x5d8] sm:$0xff] %v9331
        %v9364 = vld [vmem:[#allocation3 + $0x9] sm:$0xff]
        %v9365 = vld [vmem:[#allocation3 + $0x11] sm:$0xff]
        %v9366 = vld [vmem:[#allocation3 + $0x29] sm:$0xff]
        %v9367 = vld [vmem:[#allocation3 + $0x31] sm:$0xff]
        %v9368 = vld [vmem:[#allocation3 + $0x49] sm:$0xff]
        %v9369 = vld [vmem:[#allocation3 + $0x51] sm:$0xff]
        %v9370 = vld [vmem:[#allocation3 + $0x69] sm:$0xff]
        %v9371 = vld [vmem:[#allocation3 + $0x71] sm:$0xff]
        %v9372 = vld [vmem:[#allocation3 + $0x89] sm:$0xff]
        %v9373 = vld [vmem:[#allocation3 + $0x91] sm:$0xff]
        %v9374 = vld [vmem:[#allocation3 + $0xa9] sm:$0xff]
        %v9375 = vld [vmem:[#allocation3 + $0xb1] sm:$0xff]
        %v9376 = vld [vmem:[#allocation3 + $0xc9] sm:$0xff]
        %v9377 = vld [vmem:[#allocation3 + $0xd1] sm:$0xff]
        %v9378 = vld [vmem:[#allocation3 + $0xe9] sm:$0xff]
        %v9379 = vld [vmem:[#allocation3 + $0xf1] sm:$0xff]
        %v9380 = vld [vmem:[#allocation3 + $0x109] sm:$0xff]
        %v9381 = vld [vmem:[#allocation3 + $0x111] sm:$0xff]
        %v9382 = vld [vmem:[#allocation3 + $0x129] sm:$0xff]
        %v9383 = vld [vmem:[#allocation3 + $0x131] sm:$0xff]
        %v9384 = vld [vmem:[#allocation3 + $0x149] sm:$0xff]
        %v9385 = vld [vmem:[#allocation3 + $0x151] sm:$0xff]
        %v9386 = vld [vmem:[#allocation3 + $0x169] sm:$0xff]
        %v9387 = vld [vmem:[#allocation3 + $0x171] sm:$0xff]
        %v9388 = vld [vmem:[#allocation3 + $0x189] sm:$0xff]
        %v9389 = vld [vmem:[#allocation3 + $0x191] sm:$0xff]
        %v9390 = vld [vmem:[#allocation3 + $0x1a9] sm:$0xff]
        %v9391 = vld [vmem:[#allocation3 + $0x1b1] sm:$0xff]
        %v9392 = vld [vmem:[#allocation3 + $0x1c9] sm:$0xff]
        %v9393 = vld [vmem:[#allocation3 + $0x1d1] sm:$0xff]
        %v9394 = vld [vmem:[#allocation3 + $0x1e9] sm:$0xff]
        %v9395 = vld [vmem:[#allocation3 + $0x1f1] sm:$0xff]
        %v9396 = vld [vmem:[#allocation3 + $0x209] sm:$0xff]
        %v9397 = vld [vmem:[#allocation3 + $0x211] sm:$0xff]
        %v9398 = vld [vmem:[#allocation3 + $0x229] sm:$0xff]
        %v9399 = vld [vmem:[#allocation3 + $0x231] sm:$0xff]
        %9432 = vrot.lane.b32.xlu0 %v9366, 32
        %v9433 = vpop.permute.xlu0 %9432
        %9434 = vrot.lane.b32.xlu0 %v9367, 32
        %v9435 = vpop.permute.xlu0 %9434
        %9436 = vrot.lane.b32.xlu0 %v9368, 32
        %v9437 = vpop.permute.xlu0 %9436
        %9438 = vrot.lane.b32.xlu0 %v9369, 32
        %v9439 = vpop.permute.xlu0 %9438
        %9440 = vrot.lane.b32.xlu0 %v9370, 32
        %v9441 = vpop.permute.xlu0 %9440
        %9442 = vrot.lane.b32.xlu0 %v9371, 32
        %v9443 = vpop.permute.xlu0 %9442
        %9444 = vrot.lane.b32.xlu0 %v9372, 32
        %v9445 = vpop.permute.xlu0 %9444
        %9446 = vrot.lane.b32.xlu0 %v9373, 32
        %v9447 = vpop.permute.xlu0 %9446
        %9448 = vrot.lane.b32.xlu0 %v9374, 32
        %v9449 = vpop.permute.xlu0 %9448
        %9450 = vrot.lane.b32.xlu0 %v9375, 32
        %v9451 = vpop.permute.xlu0 %9450
        %9452 = vrot.lane.b32.xlu0 %v9376, 32
        %v9453 = vpop.permute.xlu0 %9452
        %9454 = vrot.lane.b32.xlu0 %v9377, 32
        %v9455 = vpop.permute.xlu0 %9454
        %9456 = vrot.lane.b32.xlu0 %v9378, 32
        %v9457 = vpop.permute.xlu0 %9456
        %9458 = vrot.lane.b32.xlu0 %v9379, 32
        %v9459 = vpop.permute.xlu0 %9458
        %9460 = vrot.lane.b32.xlu0 %v9380, 32
        %v9461 = vpop.permute.xlu0 %9460
        %9462 = vrot.lane.b32.xlu0 %v9381, 32
        %v9463 = vpop.permute.xlu0 %9462
        %9464 = vrot.lane.b32.xlu0 %v9382, 32
        %v9465 = vpop.permute.xlu0 %9464
        %9466 = vrot.lane.b32.xlu0 %v9383, 32
        %v9467 = vpop.permute.xlu0 %9466
        %9468 = vrot.lane.b32.xlu0 %v9384, 32
        %v9469 = vpop.permute.xlu0 %9468
        %9470 = vrot.lane.b32.xlu0 %v9385, 32
        %v9471 = vpop.permute.xlu0 %9470
        %9472 = vrot.lane.b32.xlu0 %v9386, 32
        %v9473 = vpop.permute.xlu0 %9472
        %9474 = vrot.lane.b32.xlu0 %v9387, 32
        %v9475 = vpop.permute.xlu0 %9474
        %9476 = vrot.lane.b32.xlu0 %v9388, 32
        %v9477 = vpop.permute.xlu0 %9476
        %9478 = vrot.lane.b32.xlu0 %v9389, 32
        %v9479 = vpop.permute.xlu0 %9478
        %9480 = vrot.lane.b32.xlu0 %v9390, 32
        %v9481 = vpop.permute.xlu0 %9480
        %9482 = vrot.lane.b32.xlu0 %v9391, 32
        %v9483 = vpop.permute.xlu0 %9482
        %9484 = vrot.lane.b32.xlu0 %v9392, 32
        %v9485 = vpop.permute.xlu0 %9484
        %9486 = vrot.lane.b32.xlu0 %v9393, 32
        %v9487 = vpop.permute.xlu0 %9486
        %9488 = vrot.lane.b32.xlu0 %v9394, 32
        %v9489 = vpop.permute.xlu0 %9488
        %9490 = vrot.lane.b32.xlu0 %v9395, 32
        %v9491 = vpop.permute.xlu0 %9490
        %9492 = vrot.lane.b32.xlu0 %v9396, 32
        %v9493 = vpop.permute.xlu0 %9492
        %9494 = vrot.lane.b32.xlu0 %v9397, 32
        %v9495 = vpop.permute.xlu0 %9494
        %9530 = vrot.lane.b32.xlu0 %v9368, 64
        %v9531 = vpop.permute.xlu0 %9530
        %9532 = vrot.lane.b32.xlu0 %v9369, 64
        %v9533 = vpop.permute.xlu0 %9532
        %9534 = vrot.lane.b32.xlu0 %v9370, 64
        %v9535 = vpop.permute.xlu0 %9534
        %9536 = vrot.lane.b32.xlu0 %v9371, 64
        %v9537 = vpop.permute.xlu0 %9536
        %9538 = vrot.lane.b32.xlu0 %v9372, 64
        %v9539 = vpop.permute.xlu0 %9538
        %9540 = vrot.lane.b32.xlu0 %v9373, 64
        %v9541 = vpop.permute.xlu0 %9540
        %9542 = vrot.lane.b32.xlu0 %v9374, 64
        %v9543 = vpop.permute.xlu0 %9542
        %9544 = vrot.lane.b32.xlu0 %v9375, 64
        %v9545 = vpop.permute.xlu0 %9544
        %9546 = vrot.lane.b32.xlu0 %v9376, 64
        %v9547 = vpop.permute.xlu0 %9546
        %9548 = vrot.lane.b32.xlu0 %v9377, 64
        %v9549 = vpop.permute.xlu0 %9548
        %9550 = vrot.lane.b32.xlu0 %v9378, 64
        %v9551 = vpop.permute.xlu0 %9550
        %9552 = vrot.lane.b32.xlu0 %v9379, 64
        %v9553 = vpop.permute.xlu0 %9552
        %9554 = vrot.lane.b32.xlu0 %v9380, 64
        %v9555 = vpop.permute.xlu0 %9554
        %9556 = vrot.lane.b32.xlu0 %v9381, 64
        %v9557 = vpop.permute.xlu0 %9556
        %9558 = vrot.lane.b32.xlu0 %v9382, 64
        %v9559 = vpop.permute.xlu0 %9558
        %9560 = vrot.lane.b32.xlu0 %v9383, 64
        %v9561 = vpop.permute.xlu0 %9560
        %9562 = vrot.lane.b32.xlu0 %v9384, 64
        %v9563 = vpop.permute.xlu0 %9562
        %9564 = vrot.lane.b32.xlu0 %v9385, 64
        %v9565 = vpop.permute.xlu0 %9564
        %9566 = vrot.lane.b32.xlu0 %v9386, 64
        %v9567 = vpop.permute.xlu0 %9566
        %9568 = vrot.lane.b32.xlu0 %v9387, 64
        %v9569 = vpop.permute.xlu0 %9568
        %9570 = vrot.lane.b32.xlu0 %v9388, 64
        %v9571 = vpop.permute.xlu0 %9570
        %9572 = vrot.lane.b32.xlu0 %v9389, 64
        %v9573 = vpop.permute.xlu0 %9572
        %9574 = vrot.lane.b32.xlu0 %v9390, 64
        %v9575 = vpop.permute.xlu0 %9574
        %9576 = vrot.lane.b32.xlu0 %v9391, 64
        %v9577 = vpop.permute.xlu0 %9576
        %9578 = vrot.lane.b32.xlu0 %v9392, 64
        %v9579 = vpop.permute.xlu0 %9578
        %9580 = vrot.lane.b32.xlu0 %v9393, 64
        %v9581 = vpop.permute.xlu0 %9580
        %9582 = vrot.lane.b32.xlu0 %v9394, 64
        %v9583 = vpop.permute.xlu0 %9582
        %9584 = vrot.lane.b32.xlu0 %v9395, 64
        %v9585 = vpop.permute.xlu0 %9584
        %9586 = vrot.lane.b32.xlu0 %v9396, 64
        %v9587 = vpop.permute.xlu0 %9586
        %9588 = vrot.lane.b32.xlu0 %v9397, 64
        %v9589 = vpop.permute.xlu0 %9588
        %9590 = vrot.lane.b32.xlu0 %v9398, 64
        %v9591 = vpop.permute.xlu0 %9590
        %9592 = vrot.lane.b32.xlu0 %v9399, 64
        %v9593 = vpop.permute.xlu0 %9592
        %v9626 = vsel %vm1015, %v9364, %v9433
        %v9627 = vsel %vm1015, %v9365, %v9435
        %v9628 = vsel %vm1015, %v9366, %v9437
        %v9629 = vsel %vm1015, %v9367, %v9439
        %v9630 = vsel %vm1015, %v9368, %v9441
        %v9631 = vsel %vm1015, %v9369, %v9443
        %v9632 = vsel %vm1015, %v9370, %v9445
        %v9633 = vsel %vm1015, %v9371, %v9447
        %v9634 = vsel %vm1015, %v9372, %v9449
        %v9635 = vsel %vm1015, %v9373, %v9451
        %v9636 = vsel %vm1015, %v9374, %v9453
        %v9637 = vsel %vm1015, %v9375, %v9455
        %v9638 = vsel %vm1015, %v9376, %v9457
        %v9639 = vsel %vm1015, %v9377, %v9459
        %v9640 = vsel %vm1015, %v9378, %v9461
        %v9641 = vsel %vm1015, %v9379, %v9463
        %v9642 = vsel %vm1015, %v9380, %v9465
        %v9643 = vsel %vm1015, %v9381, %v9467
        %v9644 = vsel %vm1015, %v9382, %v9469
        %v9645 = vsel %vm1015, %v9383, %v9471
        %v9646 = vsel %vm1015, %v9384, %v9473
        %v9647 = vsel %vm1015, %v9385, %v9475
        %v9648 = vsel %vm1015, %v9386, %v9477
        %v9649 = vsel %vm1015, %v9387, %v9479
        %v9650 = vsel %vm1015, %v9388, %v9481
        %v9651 = vsel %vm1015, %v9389, %v9483
        %v9652 = vsel %vm1015, %v9390, %v9485
        %v9653 = vsel %vm1015, %v9391, %v9487
        %v9654 = vsel %vm1015, %v9392, %v9489
        %v9655 = vsel %vm1015, %v9393, %v9491
        %v9656 = vsel %vm1015, %v9394, %v9493
        %v9657 = vsel %vm1015, %v9395, %v9495
        %v9658 = vsel %vm4683, %v9626, %v9531
        %v9659 = vsel %vm4683, %v9627, %v9533
        %v9660 = vsel %vm4683, %v9628, %v9535
        %v9661 = vsel %vm4683, %v9629, %v9537
        %v9662 = vsel %vm4683, %v9630, %v9539
        %v9663 = vsel %vm4683, %v9631, %v9541
        %v9664 = vsel %vm4683, %v9632, %v9543
        %v9665 = vsel %vm4683, %v9633, %v9545
        %v9666 = vsel %vm4683, %v9634, %v9547
        %v9667 = vsel %vm4683, %v9635, %v9549
        %v9668 = vsel %vm4683, %v9636, %v9551
        %v9669 = vsel %vm4683, %v9637, %v9553
        %v9670 = vsel %vm4683, %v9638, %v9555
        %v9671 = vsel %vm4683, %v9639, %v9557
        %v9672 = vsel %vm4683, %v9640, %v9559
        %v9673 = vsel %vm4683, %v9641, %v9561
        %v9674 = vsel %vm4683, %v9642, %v9563
        %v9675 = vsel %vm4683, %v9643, %v9565
        %v9676 = vsel %vm4683, %v9644, %v9567
        %v9677 = vsel %vm4683, %v9645, %v9569
        %v9678 = vsel %vm4683, %v9646, %v9571
        %v9679 = vsel %vm4683, %v9647, %v9573
        %v9680 = vsel %vm4683, %v9648, %v9575
        %v9681 = vsel %vm4683, %v9649, %v9577
        %v9682 = vsel %vm4683, %v9650, %v9579
        %v9683 = vsel %vm4683, %v9651, %v9581
        %v9684 = vsel %vm4683, %v9652, %v9583
        %v9685 = vsel %vm4683, %v9653, %v9585
        %v9686 = vsel %vm4683, %v9654, %v9587
        %v9687 = vsel %vm4683, %v9655, %v9589
        %v9688 = vsel %vm4683, %v9656, %v9591
        %v9689 = vsel %vm4683, %v9657, %v9593
        %v9690 = vsel %vm8909, %v9658, 0.0
        %v9691 = vsel %vm8909, %v9659, 0.0
        %v9692 = vsel %vm8909, %v9660, 0.0
        %v9693 = vsel %vm8909, %v9661, 0.0
        %v9694 = vsel %vm8909, %v9662, 0.0
        %v9695 = vsel %vm8909, %v9663, 0.0
        %v9696 = vsel %vm8909, %v9664, 0.0
        %v9697 = vsel %vm8909, %v9665, 0.0
        %v9698 = vsel %vm8909, %v9666, 0.0
        %v9699 = vsel %vm8909, %v9667, 0.0
        %v9700 = vsel %vm8909, %v9668, 0.0
        %v9701 = vsel %vm8909, %v9669, 0.0
        %v9702 = vsel %vm8909, %v9670, 0.0
        %v9703 = vsel %vm8909, %v9671, 0.0
        %v9704 = vsel %vm8909, %v9672, 0.0
        %v9705 = vsel %vm8909, %v9673, 0.0
        %v9706 = vsel %vm8909, %v9674, 0.0
        %v9707 = vsel %vm8909, %v9675, 0.0
        %v9708 = vsel %vm8909, %v9676, 0.0
        %v9709 = vsel %vm8909, %v9677, 0.0
        %v9710 = vsel %vm8909, %v9678, 0.0
        %v9711 = vsel %vm8909, %v9679, 0.0
        %v9712 = vsel %vm8909, %v9680, 0.0
        %v9713 = vsel %vm8909, %v9681, 0.0
        %v9714 = vsel %vm8909, %v9682, 0.0
        %v9715 = vsel %vm8909, %v9683, 0.0
        %v9716 = vsel %vm8909, %v9684, 0.0
        %v9717 = vsel %vm8909, %v9685, 0.0
        %v9718 = vsel %vm8909, %v9686, 0.0
        %v9719 = vsel %vm8909, %v9687, 0.0
        %v9720 = vsel %vm8909, %v9688, 0.0
        %v9721 = vsel %vm8909, %v9689, 0.0
        %9722 = vst [vmem:[#allocation4 + $0x10] sm:$0xff] %v9690
        %9723 = vst [vmem:[#allocation4 + $0x40] sm:$0xff] %v9691
        %9724 = vst [vmem:[#allocation4 + $0x70] sm:$0xff] %v9692
        %9725 = vst [vmem:[#allocation4 + $0xa0] sm:$0xff] %v9693
        %9726 = vst [vmem:[#allocation4 + $0xd0] sm:$0xff] %v9694
        %9727 = vst [vmem:[#allocation4 + $0x100] sm:$0xff] %v9695
        %9728 = vst [vmem:[#allocation4 + $0x130] sm:$0xff] %v9696
        %9729 = vst [vmem:[#allocation4 + $0x160] sm:$0xff] %v9697
        %9730 = vst [vmem:[#allocation4 + $0x190] sm:$0xff] %v9698
        %9731 = vst [vmem:[#allocation4 + $0x1c0] sm:$0xff] %v9699
        %9732 = vst [vmem:[#allocation4 + $0x1f0] sm:$0xff] %v9700
        %9733 = vst [vmem:[#allocation4 + $0x220] sm:$0xff] %v9701
        %9734 = vst [vmem:[#allocation4 + $0x250] sm:$0xff] %v9702
        %9735 = vst [vmem:[#allocation4 + $0x280] sm:$0xff] %v9703
        %9736 = vst [vmem:[#allocation4 + $0x2b0] sm:$0xff] %v9704
        %9737 = vst [vmem:[#allocation4 + $0x2e0] sm:$0xff] %v9705
        %9738 = vst [vmem:[#allocation4 + $0x310] sm:$0xff] %v9706
        %9739 = vst [vmem:[#allocation4 + $0x340] sm:$0xff] %v9707
        %9740 = vst [vmem:[#allocation4 + $0x370] sm:$0xff] %v9708
        %9741 = vst [vmem:[#allocation4 + $0x3a0] sm:$0xff] %v9709
        %9742 = vst [vmem:[#allocation4 + $0x3d0] sm:$0xff] %v9710
        %9743 = vst [vmem:[#allocation4 + $0x400] sm:$0xff] %v9711
        %9744 = vst [vmem:[#allocation4 + $0x430] sm:$0xff] %v9712
        %9745 = vst [vmem:[#allocation4 + $0x460] sm:$0xff] %v9713
        %9746 = vst [vmem:[#allocation4 + $0x490] sm:$0xff] %v9714
        %9747 = vst [vmem:[#allocation4 + $0x4c0] sm:$0xff] %v9715
        %9748 = vst [vmem:[#allocation4 + $0x4f0] sm:$0xff] %v9716
        %9749 = vst [vmem:[#allocation4 + $0x520] sm:$0xff] %v9717
        %9750 = vst [vmem:[#allocation4 + $0x550] sm:$0xff] %v9718
        %9751 = vst [vmem:[#allocation4 + $0x580] sm:$0xff] %v9719
        %9752 = vst [vmem:[#allocation4 + $0x5b0] sm:$0xff] %v9720
        %9753 = vst [vmem:[#allocation4 + $0x5e0] sm:$0xff] %v9721
        %v9754 = vld [vmem:[#allocation4] sm:$0xff]
        %v9755 = vld [vmem:[#allocation4 + $0x8] sm:$0xff]
        %v9756 = vld [vmem:[#allocation4 + $0x10] sm:$0xff]
        %v9757 = vld [vmem:[#allocation4 + $0x30] sm:$0xff]
        %v9758 = vld [vmem:[#allocation4 + $0x38] sm:$0xff]
        %v9759 = vld [vmem:[#allocation4 + $0x40] sm:$0xff]
        %v9760 = vld [vmem:[#allocation4 + $0x60] sm:$0xff]
        %v9761 = vld [vmem:[#allocation4 + $0x68] sm:$0xff]
        %v9762 = vld [vmem:[#allocation4 + $0x70] sm:$0xff]
        %v9763 = vld [vmem:[#allocation4 + $0x90] sm:$0xff]
        %v9764 = vld [vmem:[#allocation4 + $0x98] sm:$0xff]
        %v9765 = vld [vmem:[#allocation4 + $0xa0] sm:$0xff]
        %v9766 = vld [vmem:[#allocation4 + $0xc0] sm:$0xff]
        %v9767 = vld [vmem:[#allocation4 + $0xc8] sm:$0xff]
        %v9768 = vld [vmem:[#allocation4 + $0xd0] sm:$0xff]
        %v9769 = vld [vmem:[#allocation4 + $0xf0] sm:$0xff]
        %v9770 = vld [vmem:[#allocation4 + $0xf8] sm:$0xff]
        %v9771 = vld [vmem:[#allocation4 + $0x100] sm:$0xff]
        %v9772 = vld [vmem:[#allocation4 + $0x120] sm:$0xff]
        %v9773 = vld [vmem:[#allocation4 + $0x128] sm:$0xff]
        %v9774 = vld [vmem:[#allocation4 + $0x130] sm:$0xff]
        %v9775 = vld [vmem:[#allocation4 + $0x150] sm:$0xff]
        %v9776 = vld [vmem:[#allocation4 + $0x158] sm:$0xff]
        %v9777 = vld [vmem:[#allocation4 + $0x160] sm:$0xff]
        %v9778 = vld [vmem:[#allocation4 + $0x180] sm:$0xff]
        %v9779 = vld [vmem:[#allocation4 + $0x188] sm:$0xff]
        %v9780 = vld [vmem:[#allocation4 + $0x190] sm:$0xff]
        %v9781 = vld [vmem:[#allocation4 + $0x1b0] sm:$0xff]
        %v9782 = vld [vmem:[#allocation4 + $0x1b8] sm:$0xff]
        %v9783 = vld [vmem:[#allocation4 + $0x1c0] sm:$0xff]
        %v9784 = vld [vmem:[#allocation4 + $0x1e0] sm:$0xff]
        %v9785 = vld [vmem:[#allocation4 + $0x1e8] sm:$0xff]
        %v9786 = vld [vmem:[#allocation4 + $0x1f0] sm:$0xff]
        %v9787 = vld [vmem:[#allocation4 + $0x210] sm:$0xff]
        %v9788 = vld [vmem:[#allocation4 + $0x218] sm:$0xff]
        %v9789 = vld [vmem:[#allocation4 + $0x220] sm:$0xff]
        %v9790 = vld [vmem:[#allocation4 + $0x240] sm:$0xff]
        %v9791 = vld [vmem:[#allocation4 + $0x248] sm:$0xff]
        %v9792 = vld [vmem:[#allocation4 + $0x250] sm:$0xff]
        %v9793 = vld [vmem:[#allocation4 + $0x270] sm:$0xff]
        %v9794 = vld [vmem:[#allocation4 + $0x278] sm:$0xff]
        %v9795 = vld [vmem:[#allocation4 + $0x280] sm:$0xff]
        %v9796 = vld [vmem:[#allocation4 + $0x2a0] sm:$0xff]
        %v9797 = vld [vmem:[#allocation4 + $0x2a8] sm:$0xff]
        %v9798 = vld [vmem:[#allocation4 + $0x2b0] sm:$0xff]
        %v9799 = vld [vmem:[#allocation4 + $0x2d0] sm:$0xff]
        %v9800 = vld [vmem:[#allocation4 + $0x2d8] sm:$0xff]
        %v9801 = vld [vmem:[#allocation4 + $0x2e0] sm:$0xff]
        %v9802 = vld [vmem:[#allocation4 + $0x300] sm:$0xff]
        %v9803 = vld [vmem:[#allocation4 + $0x308] sm:$0xff]
        %v9804 = vld [vmem:[#allocation4 + $0x310] sm:$0xff]
        %v9805 = vld [vmem:[#allocation4 + $0x330] sm:$0xff]
        %v9806 = vld [vmem:[#allocation4 + $0x338] sm:$0xff]
        %v9807 = vld [vmem:[#allocation4 + $0x340] sm:$0xff]
        %v9808 = vld [vmem:[#allocation4 + $0x360] sm:$0xff]
        %v9809 = vld [vmem:[#allocation4 + $0x368] sm:$0xff]
        %v9810 = vld [vmem:[#allocation4 + $0x370] sm:$0xff]
        %v9811 = vld [vmem:[#allocation4 + $0x390] sm:$0xff]
        %v9812 = vld [vmem:[#allocation4 + $0x398] sm:$0xff]
        %v9813 = vld [vmem:[#allocation4 + $0x3a0] sm:$0xff]
        %v9814 = vld [vmem:[#allocation4 + $0x3c0] sm:$0xff]
        %v9815 = vld [vmem:[#allocation4 + $0x3c8] sm:$0xff]
        %v9816 = vld [vmem:[#allocation4 + $0x3d0] sm:$0xff]
        %v9817 = vld [vmem:[#allocation4 + $0x3f0] sm:$0xff]
        %v9818 = vld [vmem:[#allocation4 + $0x3f8] sm:$0xff]
        %v9819 = vld [vmem:[#allocation4 + $0x400] sm:$0xff]
        %v9820 = vld [vmem:[#allocation4 + $0x420] sm:$0xff]
        %v9821 = vld [vmem:[#allocation4 + $0x428] sm:$0xff]
        %v9822 = vld [vmem:[#allocation4 + $0x430] sm:$0xff]
        %v9823 = vld [vmem:[#allocation4 + $0x450] sm:$0xff]
        %v9824 = vld [vmem:[#allocation4 + $0x458] sm:$0xff]
        %v9825 = vld [vmem:[#allocation4 + $0x460] sm:$0xff]
        %v9826 = vld [vmem:[#allocation4 + $0x480] sm:$0xff]
        %v9827 = vld [vmem:[#allocation4 + $0x488] sm:$0xff]
        %v9828 = vld [vmem:[#allocation4 + $0x490] sm:$0xff]
        %v9829 = vld [vmem:[#allocation4 + $0x4b0] sm:$0xff]
        %v9830 = vld [vmem:[#allocation4 + $0x4b8] sm:$0xff]
        %v9831 = vld [vmem:[#allocation4 + $0x4c0] sm:$0xff]
        %v9832 = vld [vmem:[#allocation4 + $0x4e0] sm:$0xff]
        %v9833 = vld [vmem:[#allocation4 + $0x4e8] sm:$0xff]
        %v9834 = vld [vmem:[#allocation4 + $0x4f0] sm:$0xff]
        %v9835 = vld [vmem:[#allocation4 + $0x510] sm:$0xff]
        %v9836 = vld [vmem:[#allocation4 + $0x518] sm:$0xff]
        %v9837 = vld [vmem:[#allocation4 + $0x520] sm:$0xff]
        %v9838 = vld [vmem:[#allocation4 + $0x540] sm:$0xff]
        %v9839 = vld [vmem:[#allocation4 + $0x548] sm:$0xff]
        %v9840 = vld [vmem:[#allocation4 + $0x550] sm:$0xff]
        %v9841 = vld [vmem:[#allocation4 + $0x570] sm:$0xff]
        %v9842 = vld [vmem:[#allocation4 + $0x578] sm:$0xff]
        %v9843 = vld [vmem:[#allocation4 + $0x580] sm:$0xff]
        %v9844 = vld [vmem:[#allocation4 + $0x5a0] sm:$0xff]
        %v9845 = vld [vmem:[#allocation4 + $0x5a8] sm:$0xff]
        %v9846 = vld [vmem:[#allocation4 + $0x5b0] sm:$0xff]
        %v9847 = vld [vmem:[#allocation4 + $0x5d0] sm:$0xff]
        %v9848 = vld [vmem:[#allocation4 + $0x5d8] sm:$0xff]
        %v9849 = vld [vmem:[#allocation4 + $0x5e0] sm:$0xff]
        %v9850 = vld [vmem:[%s7] sm:$0xff]
        %v9851 = vld [vmem:[%s7 + $0x8] sm:$0xff]
        %v9852 = vld [vmem:[%s7 + $0x10] sm:$0xff]
        %v9853 = vld [vmem:[%s7 + $0x18] sm:$0xff]
        %v9854 = vld [vmem:[%s7 + $0x20] sm:$0xff]
        %v9855 = vld [vmem:[%s7 + $0x28] sm:$0xff]
        %v9856 = vld [vmem:[%s7 + $0x30] sm:$0xff]
        %v9857 = vld [vmem:[%s7 + $0x38] sm:$0xff]
        %v9858 = vld [vmem:[%s7 + $0x40] sm:$0xff]
        %v9859 = vld [vmem:[%s7 + $0x48] sm:$0xff]
        %v9860 = vld [vmem:[%s7 + $0x50] sm:$0xff]
        %v9861 = vld [vmem:[%s7 + $0x58] sm:$0xff]
        %v9862 = vld [vmem:[%s7 + $0x60] sm:$0xff]
        %v9863 = vld [vmem:[%s7 + $0x68] sm:$0xff]
        %v9864 = vld [vmem:[%s7 + $0x70] sm:$0xff]
        %v9865 = vld [vmem:[%s7 + $0x78] sm:$0xff]
        %v9866 = vld [vmem:[%s7 + $0x80] sm:$0xff]
        %v9867 = vld [vmem:[%s7 + $0x88] sm:$0xff]
        %v9868 = vld [vmem:[%s7 + $0x90] sm:$0xff]
        %v9869 = vld [vmem:[%s7 + $0x98] sm:$0xff]
        %v9870 = vld [vmem:[%s7 + $0xa0] sm:$0xff]
        %v9871 = vld [vmem:[%s7 + $0xa8] sm:$0xff]
        %v9872 = vld [vmem:[%s7 + $0xb0] sm:$0xff]
        %v9873 = vld [vmem:[%s7 + $0xb8] sm:$0xff]
        %v9874 = vld [vmem:[%s7 + $0xc0] sm:$0xff]
        %v9875 = vld [vmem:[%s7 + $0xc8] sm:$0xff]
        %v9876 = vld [vmem:[%s7 + $0xd0] sm:$0xff]
        %v9877 = vld [vmem:[%s7 + $0xd8] sm:$0xff]
        %v9878 = vld [vmem:[%s7 + $0xe0] sm:$0xff]
        %v9879 = vld [vmem:[%s7 + $0xe8] sm:$0xff]
        %v9880 = vld [vmem:[%s7 + $0xf0] sm:$0xff]
        %v9881 = vld [vmem:[%s7 + $0xf8] sm:$0xff]
        %v9882 = vld [vmem:[%s7 + $0x100] sm:$0xff]
        %v9883 = vld [vmem:[%s7 + $0x108] sm:$0xff]
        %v9884 = vld [vmem:[%s7 + $0x110] sm:$0xff]
        %v9885 = vld [vmem:[%s7 + $0x118] sm:$0xff]
        %v9886 = vld [vmem:[%s7 + $0x120] sm:$0xff]
        %v9887 = vld [vmem:[%s7 + $0x128] sm:$0xff]
        %v9888 = vld [vmem:[%s7 + $0x130] sm:$0xff]
        %v9889 = vld [vmem:[%s7 + $0x138] sm:$0xff]
        %v9890 = vld [vmem:[%s7 + $0x140] sm:$0xff]
        %v9891 = vld [vmem:[%s7 + $0x148] sm:$0xff]
        %v9892 = vld [vmem:[%s7 + $0x150] sm:$0xff]
        %v9893 = vld [vmem:[%s7 + $0x158] sm:$0xff]
        %v9894 = vld [vmem:[%s7 + $0x160] sm:$0xff]
        %v9895 = vld [vmem:[%s7 + $0x168] sm:$0xff]
        %v9896 = vld [vmem:[%s7 + $0x170] sm:$0xff]
        %v9897 = vld [vmem:[%s7 + $0x178] sm:$0xff]
        %v9898 = vld [vmem:[%s8] sm:$0x1]
        %v9900 = vlaneseq
        %v9901 = vshrl.u32 %v9900, 7
        %v9902 = vsub.s32 0, %v9901
        %v9903 = vrot.slane %v9898, %v9902
        %9905 = vmatprep.subr.mxu0 0.0
        %9906 = vmatpush1.msra.mxu0 %v9850
        %9907 = vmatprep.subr.mxu0 0.0
        %9908 = vmatpush1.msra.mxu0 %v9851
        %9909 = vmatprep.subr.mxu0 0.0
        %9910 = vmatpush1.msra.mxu0 %v9852
        %9911 = vmatprep.subr.mxu0 0.0
        %9912 = vmatpush1.msra.mxu0 %v9853
        %9913 = vmatprep.subr.mxu0 0.0
        %9914 = vmatpush1.msra.mxu0 %v9854
        %9915 = vmatprep.subr.mxu0 0.0
        %9916 = vmatpush1.msra.mxu0 %v9855
        %9917 = vmatprep.subr.mxu0 0.0
        %9918 = vmatpush1.msra.mxu0 %v9856
        %9919 = vmatprep.subr.mxu0 0.0
        %9920 = vmatpush1.msra.mxu0 %v9857
        %9921 = vmatprep.subr.mxu0 0.0
        %9922 = vmatpush1.msra.mxu0 %v9858
        %9923 = vmatprep.subr.mxu0 0.0
        %9924 = vmatpush1.msra.mxu0 %v9859
        %9925 = vmatprep.subr.mxu0 0.0
        %9926 = vmatpush1.msra.mxu0 %v9860
        %9927 = vmatprep.subr.mxu0 0.0
        %9928 = vmatpush1.msra.mxu0 %v9861
        %9929 = vmatprep.subr.mxu0 0.0
        %9930 = vmatpush1.msra.mxu0 %v9862
        %9931 = vmatprep.subr.mxu0 0.0
        %9932 = vmatpush1.msra.mxu0 %v9863
        %9933 = vmatprep.subr.mxu0 0.0
        %9934 = vmatpush1.msra.mxu0 %v9864
        %9935 = vmatprep.subr.mxu0 0.0
        %9936 = vmatpush1.msra.mxu0 %v9865
        %9937 = vmatprep.subr.mxu0 0.0
        %9938 = vmatpush1.msra.mxu0 %v9866
        %9939 = vmatprep.subr.mxu0 0.0
        %9940 = vmatpush1.msra.mxu0 %v9867
        %9941 = vmatprep.subr.mxu0 0.0
        %9942 = vmatpush1.msra.mxu0 %v9868
        %9943 = vmatprep.subr.mxu0 0.0
        %9944 = vmatpush1.msra.mxu0 %v9869
        %9945 = vmatprep.subr.mxu0 0.0
        %9946 = vmatpush1.msra.mxu0 %v9870
        %9947 = vmatprep.subr.mxu0 0.0
        %9948 = vmatpush1.msra.mxu0 %v9871
        %9949 = vmatprep.subr.mxu0 0.0
        %9950 = vmatpush1.msra.mxu0 %v9872
        %9951 = vmatprep.subr.mxu0 0.0
        %9952 = vmatpush1.msra.mxu0 %v9873
        %9953 = vmatprep.subr.mxu0 0.0
        %9954 = vmatpush1.msra.mxu0 %v9874
        %9955 = vmatprep.subr.mxu0 0.0
        %9956 = vmatpush1.msra.mxu0 %v9875
        %9957 = vmatprep.subr.mxu0 0.0
        %9958 = vmatpush1.msra.mxu0 %v9876
        %9959 = vmatprep.subr.mxu0 0.0
        %9960 = vmatpush1.msra.mxu0 %v9877
        %9961 = vmatprep.subr.mxu0 0.0
        %9962 = vmatpush1.msra.mxu0 %v9878
        %9963 = vmatprep.subr.mxu0 0.0
        %9964 = vmatpush1.msra.mxu0 %v9879
        %9965 = vmatprep.subr.mxu0 0.0
        %9966 = vmatpush1.msra.mxu0 %v9880
        %9967 = vmatprep.subr.mxu0 0.0
        %9968 = vmatpush1.msra.mxu0 %v9881
        %9969 = vmatprep.mubr.f32.mxu0 %v9755
        %9970 = vmatmul.mubr.f32.gmra.mrb[0].mxu0 %v9754
        %v9971 = vpop.f32.mrb[0].mxu0
        %v9972 = vadd.f32 %v9903, %v9971
        %v9973 = vpop.f32.mrb[0].mxu0
        %9974 = vmatprep.mubr.f32.mxu0 %v9758
        %9975 = vmatmul.mubr.f32.gmra.mrb[0].mxu0 %v9757
        %v9976 = vpop.f32.mrb[0].mxu0
        %v9977 = vadd.f32 %v9903, %v9976
        %v9978 = vpop.f32.mrb[0].mxu0
        %9979 = vmatprep.mubr.f32.mxu0 %v9761
        %9980 = vmatmul.mubr.f32.gmra.mrb[0].mxu0 %v9760
        %v9981 = vpop.f32.mrb[0].mxu0
        %v9982 = vadd.f32 %v9903, %v9981
        %v9983 = vpop.f32.mrb[0].mxu0
        %9984 = vmatprep.mubr.f32.mxu0 %v9764
        %9985 = vmatmul.mubr.f32.gmra.mrb[0].mxu0 %v9763
        %v9986 = vpop.f32.mrb[0].mxu0
        %v9987 = vadd.f32 %v9903, %v9986
        %v9988 = vpop.f32.mrb[0].mxu0
        %9989 = vmatprep.mubr.f32.mxu0 %v9767
        %9990 = vmatmul.mubr.f32.gmra.mrb[0].mxu0 %v9766
        %v9991 = vpop.f32.mrb[0].mxu0
        %v9992 = vadd.f32 %v9903, %v9991
        %v9993 = vpop.f32.mrb[0].mxu0
        %9994 = vmatprep.mubr.f32.mxu0 %v9770
        %9995 = vmatmul.mubr.f32.gmra.mrb[0].mxu0 %v9769
        %v9996 = vpop.f32.mrb[0].mxu0
        %v9997 = vadd.f32 %v9903, %v9996
        %v9998 = vpop.f32.mrb[0].mxu0
        %9999 = vmatprep.mubr.f32.mxu0 %v9773
        %10000 = vmatmul.mubr.f32.gmra.mrb[0].mxu0 %v9772
        %v10001 = vpop.f32.mrb[0].mxu0
        %v10002 = vadd.f32 %v9903, %v10001
        %v10003 = vpop.f32.mrb[0].mxu0
        %10004 = vmatprep.mubr.f32.mxu0 %v9776
        %10005 = vmatmul.mubr.f32.gmra.mrb[0].mxu0 %v9775
        %v10006 = vpop.f32.mrb[0].mxu0
        %v10007 = vadd.f32 %v9903, %v10006
        %v10008 = vpop.f32.mrb[0].mxu0
        %10009 = vmatprep.mubr.f32.mxu0 %v9779
        %10010 = vmatmul.mubr.f32.gmra.mrb[0].mxu0 %v9778
        %v10011 = vpop.f32.mrb[0].mxu0
        %v10012 = vadd.f32 %v9903, %v10011
        %v10013 = vpop.f32.mrb[0].mxu0
        %10014 = vmatprep.mubr.f32.mxu0 %v9782
        %10015 = vmatmul.mubr.f32.gmra.mrb[0].mxu0 %v9781
        %v10016 = vpop.f32.mrb[0].mxu0
        %v10017 = vadd.f32 %v9903, %v10016
        %v10018 = vpop.f32.mrb[0].mxu0
        %10019 = vmatprep.mubr.f32.mxu0 %v9785
        %10020 = vmatmul.mubr.f32.gmra.mrb[0].mxu0 %v9784
        %v10021 = vpop.f32.mrb[0].mxu0
        %v10022 = vadd.f32 %v9903, %v10021
        %v10023 = vpop.f32.mrb[0].mxu0
        %10024 = vmatprep.mubr.f32.mxu0 %v9788
        %10025 = vmatmul.mubr.f32.gmra.mrb[0].mxu0 %v9787
        %v10026 = vpop.f32.mrb[0].mxu0
        %v10027 = vadd.f32 %v9903, %v10026
        %v10028 = vpop.f32.mrb[0].mxu0
        %10029 = vmatprep.mubr.f32.mxu0 %v9791
        %10030 = vmatmul.mubr.f32.gmra.mrb[0].mxu0 %v9790
        %v10031 = vpop.f32.mrb[0].mxu0
        %v10032 = vadd.f32 %v9903, %v10031
        %v10033 = vpop.f32.mrb[0].mxu0
        %10034 = vmatprep.mubr.f32.mxu0 %v9794
        %10035 = vmatmul.mubr.f32.gmra.mrb[0].mxu0 %v9793
        %v10036 = vpop.f32.mrb[0].mxu0
        %v10037 = vadd.f32 %v9903, %v10036
        %v10038 = vpop.f32.mrb[0].mxu0
        %10039 = vmatprep.mubr.f32.mxu0 %v9797
        %10040 = vmatmul.mubr.f32.gmra.mrb[0].mxu0 %v9796
        %v10041 = vpop.f32.mrb[0].mxu0
        %v10042 = vadd.f32 %v9903, %v10041
        %v10043 = vpop.f32.mrb[0].mxu0
        %10044 = vmatprep.mubr.f32.mxu0 %v9800
        %10045 = vmatmul.mubr.f32.gmra.mrb[0].mxu0 %v9799
        %v10046 = vpop.f32.mrb[0].mxu0
        %v10047 = vadd.f32 %v9903, %v10046
        %v10048 = vpop.f32.mrb[0].mxu0
        %10049 = vmatprep.mubr.f32.mxu0 %v9803
        %10050 = vmatmul.mubr.f32.gmra.mrb[0].mxu0 %v9802
        %v10051 = vpop.f32.mrb[0].mxu0
        %v10052 = vadd.f32 %v9903, %v10051
        %v10053 = vpop.f32.mrb[0].mxu0
        %10054 = vmatprep.mubr.f32.mxu0 %v9806
        %10055 = vmatmul.mubr.f32.gmra.mrb[0].mxu0 %v9805
        %v10056 = vpop.f32.mrb[0].mxu0
        %v10057 = vadd.f32 %v9903, %v10056
        %v10058 = vpop.f32.mrb[0].mxu0
        %10059 = vmatprep.mubr.f32.mxu0 %v9809
        %10060 = vmatmul.mubr.f32.gmra.mrb[0].mxu0 %v9808
        %v10061 = vpop.f32.mrb[0].mxu0
        %v10062 = vadd.f32 %v9903, %v10061
        %v10063 = vpop.f32.mrb[0].mxu0
        %10064 = vmatprep.mubr.f32.mxu0 %v9812
        %10065 = vmatmul.mubr.f32.gmra.mrb[0].mxu0 %v9811
        %v10066 = vpop.f32.mrb[0].mxu0
        %v10067 = vadd.f32 %v9903, %v10066
        %v10068 = vpop.f32.mrb[0].mxu0
        %10069 = vmatprep.mubr.f32.mxu0 %v9815
        %10070 = vmatmul.mubr.f32.gmra.mrb[0].mxu0 %v9814
        %v10071 = vpop.f32.mrb[0].mxu0
        %v10072 = vadd.f32 %v9903, %v10071
        %v10073 = vpop.f32.mrb[0].mxu0
        %10074 = vmatprep.mubr.f32.mxu0 %v9818
        %10075 = vmatmul.mubr.f32.gmra.mrb[0].mxu0 %v9817
        %v10076 = vpop.f32.mrb[0].mxu0
        %v10077 = vadd.f32 %v9903, %v10076
        %v10078 = vpop.f32.mrb[0].mxu0
        %10079 = vmatprep.mubr.f32.mxu0 %v9821
        %10080 = vmatmul.mubr.f32.gmra.mrb[0].mxu0 %v9820
        %v10081 = vpop.f32.mrb[0].mxu0
        %v10082 = vadd.f32 %v9903, %v10081
        %v10083 = vpop.f32.mrb[0].mxu0
        %10084 = vmatprep.mubr.f32.mxu0 %v9824
        %10085 = vmatmul.mubr.f32.gmra.mrb[0].mxu0 %v9823
        %v10086 = vpop.f32.mrb[0].mxu0
        %v10087 = vadd.f32 %v9903, %v10086
        %v10088 = vpop.f32.mrb[0].mxu0
        %10089 = vmatprep.mubr.f32.mxu0 %v9827
        %10090 = vmatmul.mubr.f32.gmra.mrb[0].mxu0 %v9826
        %v10091 = vpop.f32.mrb[0].mxu0
        %v10092 = vadd.f32 %v9903, %v10091
        %v10093 = vpop.f32.mrb[0].mxu0
        %10094 = vmatprep.mubr.f32.mxu0 %v9830
        %10095 = vmatmul.mubr.f32.gmra.mrb[0].mxu0 %v9829
        %v10096 = vpop.f32.mrb[0].mxu0
        %v10097 = vadd.f32 %v9903, %v10096
        %v10098 = vpop.f32.mrb[0].mxu0
        %10099 = vmatprep.mubr.f32.mxu0 %v9833
        %10100 = vmatmul.mubr.f32.gmra.mrb[0].mxu0 %v9832
        %v10101 = vpop.f32.mrb[0].mxu0
        %v10102 = vadd.f32 %v9903, %v10101
        %v10103 = vpop.f32.mrb[0].mxu0
        %10104 = vmatprep.mubr.f32.mxu0 %v9836
        %10105 = vmatmul.mubr.f32.gmra.mrb[0].mxu0 %v9835
        %v10106 = vpop.f32.mrb[0].mxu0
        %v10107 = vadd.f32 %v9903, %v10106
        %v10108 = vpop.f32.mrb[0].mxu0
        %10109 = vmatprep.mubr.f32.mxu0 %v9839
        %10110 = vmatmul.mubr.f32.gmra.mrb[0].mxu0 %v9838
        %v10111 = vpop.f32.mrb[0].mxu0
        %v10112 = vadd.f32 %v9903, %v10111
        %v10113 = vpop.f32.mrb[0].mxu0
        %10114 = vmatprep.mubr.f32.mxu0 %v9842
        %10115 = vmatmul.mubr.f32.gmra.mrb[0].mxu0 %v9841
        %v10116 = vpop.f32.mrb[0].mxu0
        %v10117 = vadd.f32 %v9903, %v10116
        %v10118 = vpop.f32.mrb[0].mxu0
        %10119 = vmatprep.mubr.f32.mxu0 %v9845
        %10120 = vmatmul.mubr.f32.gmra.mrb[0].mxu0 %v9844
        %v10121 = vpop.f32.mrb[0].mxu0
        %v10122 = vadd.f32 %v9903, %v10121
        %v10123 = vpop.f32.mrb[0].mxu0
        %10124 = vmatprep.mubr.f32.mxu0 %v9848
        %10125 = vmatmul.mubr.f32.gmra.mrb[0].mxu0 %v9847
        %v10126 = vpop.f32.mrb[0].mxu0
        %v10127 = vadd.f32 %v9903, %v10126
        %v10128 = vpop.f32.mrb[0].mxu0
        %10129 = vdwg.mxu0
        %10130 = vmatprep.subr.mxu0 0.0
        %10131 = vmatpush1.msra.mxu0 %v9882
        %10132 = vmatprep.subr.mxu0 0.0
        %10133 = vmatpush1.msra.mxu0 %v9883
        %10134 = vmatprep.subr.mxu0 0.0
        %10135 = vmatpush1.msra.mxu0 %v9884
        %10136 = vmatprep.subr.mxu0 0.0
        %10137 = vmatpush1.msra.mxu0 %v9885
        %10138 = vmatprep.subr.mxu0 0.0
        %10139 = vmatpush1.msra.mxu0 %v9886
        %10140 = vmatprep.subr.mxu0 0.0
        %10141 = vmatpush1.msra.mxu0 %v9887
        %10142 = vmatprep.subr.mxu0 0.0
        %10143 = vmatpush1.msra.mxu0 %v9888
        %10144 = vmatprep.subr.mxu0 0.0
        %10145 = vmatpush1.msra.mxu0 %v9889
        %10146 = vmatprep.subr.mxu0 0.0
        %10147 = vmatpush1.msra.mxu0 %v9890
        %10148 = vmatprep.subr.mxu0 0.0
        %10149 = vmatpush1.msra.mxu0 %v9891
        %10150 = vmatprep.subr.mxu0 0.0
        %10151 = vmatpush1.msra.mxu0 %v9892
        %10152 = vmatprep.subr.mxu0 0.0
        %10153 = vmatpush1.msra.mxu0 %v9893
        %10154 = vmatprep.subr.mxu0 0.0
        %10155 = vmatpush1.msra.mxu0 %v9894
        %10156 = vmatprep.subr.mxu0 0.0
        %10157 = vmatpush1.msra.mxu0 %v9895
        %10158 = vmatprep.subr.mxu0 0.0
        %10159 = vmatpush1.msra.mxu0 %v9896
        %10160 = vmatprep.subr.mxu0 0.0
        %10161 = vmatpush1.msra.mxu0 %v9897
        %10162 = vmatprep.subr.mxu0 0.0
        %10163 = vmatpush1.msra.mxu0 0.0
        %10164 = vmatprep.subr.mxu0 0.0
        %10165 = vmatpush1.msra.mxu0 0.0
        %10166 = vmatprep.subr.mxu0 0.0
        %10167 = vmatpush1.msra.mxu0 0.0
        %10168 = vmatprep.subr.mxu0 0.0
        %10169 = vmatpush1.msra.mxu0 0.0
        %10170 = vmatprep.subr.mxu0 0.0
        %10171 = vmatpush1.msra.mxu0 0.0
        %10172 = vmatprep.subr.mxu0 0.0
        %10173 = vmatpush1.msra.mxu0 0.0
        %10174 = vmatprep.subr.mxu0 0.0
        %10175 = vmatpush1.msra.mxu0 0.0
        %10176 = vmatprep.subr.mxu0 0.0
        %10177 = vmatpush1.msra.mxu0 0.0
        %10178 = vmatprep.subr.mxu0 0.0
        %10179 = vmatpush1.msra.mxu0 0.0
        %10180 = vmatprep.subr.mxu0 0.0
        %10181 = vmatpush1.msra.mxu0 0.0
        %10182 = vmatprep.subr.mxu0 0.0
        %10183 = vmatpush1.msra.mxu0 0.0
        %10184 = vmatprep.subr.mxu0 0.0
        %10185 = vmatpush1.msra.mxu0 0.0
        %10186 = vmatprep.subr.mxu0 0.0
        %10187 = vmatpush1.msra.mxu0 0.0
        %10188 = vmatprep.subr.mxu0 0.0
        %10189 = vmatpush1.msra.mxu0 0.0
        %10190 = vmatprep.subr.mxu0 0.0
        %10191 = vmatpush1.msra.mxu0 0.0
        %10192 = vmatprep.subr.mxu0 0.0
        %10193 = vmatpush1.msra.mxu0 0.0
        %10194 = vmatprep.mubr.f32.mxu0 0.0
        %10195 = vmatmul.mubr.f32.gmra.mrb[0].mxu0 %v9756
        %v10196 = vpop.f32.mrb[0].mxu0
        %v10197 = vadd.f32 %v9972, %v10196
        %v10198 = vpop.f32.mrb[0].mxu0
        %10199 = vmatprep.mubr.f32.mxu0 0.0
        %10200 = vmatmul.mubr.f32.gmra.mrb[0].mxu0 %v9759
        %v10201 = vpop.f32.mrb[0].mxu0
        %v10202 = vadd.f32 %v9977, %v10201
        %v10203 = vpop.f32.mrb[0].mxu0
        %10204 = vmatprep.mubr.f32.mxu0 0.0
        %10205 = vmatmul.mubr.f32.gmra.mrb[0].mxu0 %v9762
        %v10206 = vpop.f32.mrb[0].mxu0
        %v10207 = vadd.f32 %v9982, %v10206
        %v10208 = vpop.f32.mrb[0].mxu0
        %10209 = vmatprep.mubr.f32.mxu0 0.0
        %10210 = vmatmul.mubr.f32.gmra.mrb[0].mxu0 %v9765
        %v10211 = vpop.f32.mrb[0].mxu0
        %v10212 = vadd.f32 %v9987, %v10211
        %v10213 = vpop.f32.mrb[0].mxu0
        %10214 = vmatprep.mubr.f32.mxu0 0.0
        %10215 = vmatmul.mubr.f32.gmra.mrb[0].mxu0 %v9768
        %v10216 = vpop.f32.mrb[0].mxu0
        %v10217 = vadd.f32 %v9992, %v10216
        %v10218 = vpop.f32.mrb[0].mxu0
        %10219 = vmatprep.mubr.f32.mxu0 0.0
        %10220 = vmatmul.mubr.f32.gmra.mrb[0].mxu0 %v9771
        %v10221 = vpop.f32.mrb[0].mxu0
        %v10222 = vadd.f32 %v9997, %v10221
        %v10223 = vpop.f32.mrb[0].mxu0
        %10224 = vmatprep.mubr.f32.mxu0 0.0
        %10225 = vmatmul.mubr.f32.gmra.mrb[0].mxu0 %v9774
        %v10226 = vpop.f32.mrb[0].mxu0
        %v10227 = vadd.f32 %v10002, %v10226
        %v10228 = vpop.f32.mrb[0].mxu0
        %10229 = vmatprep.mubr.f32.mxu0 0.0
        %10230 = vmatmul.mubr.f32.gmra.mrb[0].mxu0 %v9777
        %v10231 = vpop.f32.mrb[0].mxu0
        %v10232 = vadd.f32 %v10007, %v10231
        %v10233 = vpop.f32.mrb[0].mxu0
        %10234 = vmatprep.mubr.f32.mxu0 0.0
        %10235 = vmatmul.mubr.f32.gmra.mrb[0].mxu0 %v9780
        %v10236 = vpop.f32.mrb[0].mxu0
        %v10237 = vadd.f32 %v10012, %v10236
        %v10238 = vpop.f32.mrb[0].mxu0
        %10239 = vmatprep.mubr.f32.mxu0 0.0
        %10240 = vmatmul.mubr.f32.gmra.mrb[0].mxu0 %v9783
        %v10241 = vpop.f32.mrb[0].mxu0
        %v10242 = vadd.f32 %v10017, %v10241
        %v10243 = vpop.f32.mrb[0].mxu0
        %10244 = vmatprep.mubr.f32.mxu0 0.0
        %10245 = vmatmul.mubr.f32.gmra.mrb[0].mxu0 %v9786
        %v10246 = vpop.f32.mrb[0].mxu0
        %v10247 = vadd.f32 %v10022, %v10246
        %v10248 = vpop.f32.mrb[0].mxu0
        %10249 = vmatprep.mubr.f32.mxu0 0.0
        %10250 = vmatmul.mubr.f32.gmra.mrb[0].mxu0 %v9789
        %v10251 = vpop.f32.mrb[0].mxu0
        %v10252 = vadd.f32 %v10027, %v10251
        %v10253 = vpop.f32.mrb[0].mxu0
        %10254 = vmatprep.mubr.f32.mxu0 0.0
        %10255 = vmatmul.mubr.f32.gmra.mrb[0].mxu0 %v9792
        %v10256 = vpop.f32.mrb[0].mxu0
        %v10257 = vadd.f32 %v10032, %v10256
        %v10258 = vpop.f32.mrb[0].mxu0
        %10259 = vmatprep.mubr.f32.mxu0 0.0
        %10260 = vmatmul.mubr.f32.gmra.mrb[0].mxu0 %v9795
        %v10261 = vpop.f32.mrb[0].mxu0
        %v10262 = vadd.f32 %v10037, %v10261
        %v10263 = vpop.f32.mrb[0].mxu0
        %10264 = vmatprep.mubr.f32.mxu0 0.0
        %10265 = vmatmul.mubr.f32.gmra.mrb[0].mxu0 %v9798
        %v10266 = vpop.f32.mrb[0].mxu0
        %v10267 = vadd.f32 %v10042, %v10266
        %v10268 = vpop.f32.mrb[0].mxu0
        %10269 = vmatprep.mubr.f32.mxu0 0.0
        %10270 = vmatmul.mubr.f32.gmra.mrb[0].mxu0 %v9801
        %v10271 = vpop.f32.mrb[0].mxu0
        %v10272 = vadd.f32 %v10047, %v10271
        %v10273 = vpop.f32.mrb[0].mxu0
        %10274 = vmatprep.mubr.f32.mxu0 0.0
        %10275 = vmatmul.mubr.f32.gmra.mrb[0].mxu0 %v9804
        %v10276 = vpop.f32.mrb[0].mxu0
        %v10277 = vadd.f32 %v10052, %v10276
        %v10278 = vpop.f32.mrb[0].mxu0
        %10279 = vmatprep.mubr.f32.mxu0 0.0
        %10280 = vmatmul.mubr.f32.gmra.mrb[0].mxu0 %v9807
        %v10281 = vpop.f32.mrb[0].mxu0
        %v10282 = vadd.f32 %v10057, %v10281
        %v10283 = vpop.f32.mrb[0].mxu0
        %10284 = vmatprep.mubr.f32.mxu0 0.0
        %10285 = vmatmul.mubr.f32.gmra.mrb[0].mxu0 %v9810
        %v10286 = vpop.f32.mrb[0].mxu0
        %v10287 = vadd.f32 %v10062, %v10286
        %v10288 = vpop.f32.mrb[0].mxu0
        %10289 = vmatprep.mubr.f32.mxu0 0.0
        %10290 = vmatmul.mubr.f32.gmra.mrb[0].mxu0 %v9813
        %v10291 = vpop.f32.mrb[0].mxu0
        %v10292 = vadd.f32 %v10067, %v10291
        %v10293 = vpop.f32.mrb[0].mxu0
        %10294 = vmatprep.mubr.f32.mxu0 0.0
        %10295 = vmatmul.mubr.f32.gmra.mrb[0].mxu0 %v9816
        %v10296 = vpop.f32.mrb[0].mxu0
        %v10297 = vadd.f32 %v10072, %v10296
        %v10298 = vpop.f32.mrb[0].mxu0
        %10299 = vmatprep.mubr.f32.mxu0 0.0
        %10300 = vmatmul.mubr.f32.gmra.mrb[0].mxu0 %v9819
        %v10301 = vpop.f32.mrb[0].mxu0
        %v10302 = vadd.f32 %v10077, %v10301
        %v10303 = vpop.f32.mrb[0].mxu0
        %10304 = vmatprep.mubr.f32.mxu0 0.0
        %10305 = vmatmul.mubr.f32.gmra.mrb[0].mxu0 %v9822
        %v10306 = vpop.f32.mrb[0].mxu0
        %v10307 = vadd.f32 %v10082, %v10306
        %v10308 = vpop.f32.mrb[0].mxu0
        %10309 = vmatprep.mubr.f32.mxu0 0.0
        %10310 = vmatmul.mubr.f32.gmra.mrb[0].mxu0 %v9825
        %v10311 = vpop.f32.mrb[0].mxu0
        %v10312 = vadd.f32 %v10087, %v10311
        %v10313 = vpop.f32.mrb[0].mxu0
        %10314 = vmatprep.mubr.f32.mxu0 0.0
        %10315 = vmatmul.mubr.f32.gmra.mrb[0].mxu0 %v9828
        %v10316 = vpop.f32.mrb[0].mxu0
        %v10317 = vadd.f32 %v10092, %v10316
        %v10318 = vpop.f32.mrb[0].mxu0
        %10319 = vmatprep.mubr.f32.mxu0 0.0
        %10320 = vmatmul.mubr.f32.gmra.mrb[0].mxu0 %v9831
        %v10321 = vpop.f32.mrb[0].mxu0
        %v10322 = vadd.f32 %v10097, %v10321
        %v10323 = vpop.f32.mrb[0].mxu0
        %10324 = vmatprep.mubr.f32.mxu0 0.0
        %10325 = vmatmul.mubr.f32.gmra.mrb[0].mxu0 %v9834
        %v10326 = vpop.f32.mrb[0].mxu0
        %v10327 = vadd.f32 %v10102, %v10326
        %v10328 = vpop.f32.mrb[0].mxu0
        %10329 = vmatprep.mubr.f32.mxu0 0.0
        %10330 = vmatmul.mubr.f32.gmra.mrb[0].mxu0 %v9837
        %v10331 = vpop.f32.mrb[0].mxu0
        %v10332 = vadd.f32 %v10107, %v10331
        %v10333 = vpop.f32.mrb[0].mxu0
        %10334 = vmatprep.mubr.f32.mxu0 0.0
        %10335 = vmatmul.mubr.f32.gmra.mrb[0].mxu0 %v9840
        %v10336 = vpop.f32.mrb[0].mxu0
        %v10337 = vadd.f32 %v10112, %v10336
        %v10338 = vpop.f32.mrb[0].mxu0
        %10339 = vmatprep.mubr.f32.mxu0 0.0
        %10340 = vmatmul.mubr.f32.gmra.mrb[0].mxu0 %v9843
        %v10341 = vpop.f32.mrb[0].mxu0
        %v10342 = vadd.f32 %v10117, %v10341
        %v10343 = vpop.f32.mrb[0].mxu0
        %10344 = vmatprep.mubr.f32.mxu0 0.0
        %10345 = vmatmul.mubr.f32.gmra.mrb[0].mxu0 %v9846
        %v10346 = vpop.f32.mrb[0].mxu0
        %v10347 = vadd.f32 %v10122, %v10346
        %v10348 = vpop.f32.mrb[0].mxu0
        %10349 = vmatprep.mubr.f32.mxu0 0.0
        %10350 = vmatmul.mubr.f32.gmra.mrb[0].mxu0 %v9849
        %v10351 = vpop.f32.mrb[0].mxu0
        %v10352 = vadd.f32 %v10127, %v10351
        %v10353 = vpop.f32.mrb[0].mxu0
        %10354 = vdwg.mxu0
        %10355 = vst [vmem:[%s325] sm:$0xff] %v10197
        %10356 = vst [vmem:[%s325 + $0x8] sm:$0xff] %v10202
        %10357 = vst [vmem:[%s325 + $0x10] sm:$0xff] %v10207
        %10358 = vst [vmem:[%s325 + $0x18] sm:$0xff] %v10212
        %10359 = vst [vmem:[%s325 + $0x20] sm:$0xff] %v10217
        %10360 = vst [vmem:[%s325 + $0x28] sm:$0xff] %v10222
        %10361 = vst [vmem:[%s325 + $0x30] sm:$0xff] %v10227
        %10362 = vst [vmem:[%s325 + $0x38] sm:$0xff] %v10232
        %10363 = vst [vmem:[%s325 + $0x40] sm:$0xff] %v10237
        %10364 = vst [vmem:[%s325 + $0x48] sm:$0xff] %v10242
        %10365 = vst [vmem:[%s325 + $0x50] sm:$0xff] %v10247
        %10366 = vst [vmem:[%s325 + $0x58] sm:$0xff] %v10252
        %10367 = vst [vmem:[%s325 + $0x60] sm:$0xff] %v10257
        %10368 = vst [vmem:[%s325 + $0x68] sm:$0xff] %v10262
        %10369 = vst [vmem:[%s325 + $0x70] sm:$0xff] %v10267
        %10370 = vst [vmem:[%s325 + $0x78] sm:$0xff] %v10272
        %10371 = vst [vmem:[%s325 + $0x80] sm:$0xff] %v10277
        %10372 = vst [vmem:[%s325 + $0x88] sm:$0xff] %v10282
        %10373 = vst [vmem:[%s325 + $0x90] sm:$0xff] %v10287
        %10374 = vst [vmem:[%s325 + $0x98] sm:$0xff] %v10292
        %10375 = vst [vmem:[%s325 + $0xa0] sm:$0xff] %v10297
        %10376 = vst [vmem:[%s325 + $0xa8] sm:$0xff] %v10302
        %10377 = vst [vmem:[%s325 + $0xb0] sm:$0xff] %v10307
        %10378 = vst [vmem:[%s325 + $0xb8] sm:$0xff] %v10312
        %10379 = vst [vmem:[%s325 + $0xc0] sm:$0xff] %v10317
        %10380 = vst [vmem:[%s325 + $0xc8] sm:$0xff] %v10322
        %10381 = vst [vmem:[%s325 + $0xd0] sm:$0xff] %v10327
        %10382 = vst [vmem:[%s325 + $0xd8] sm:$0xff] %v10332
        %10383 = vst [vmem:[%s325 + $0xe0] sm:$0xff] %v10337
        %10384 = vst [vmem:[%s325 + $0xe8] sm:$0xff] %v10342
        %10385 = vst [vmem:[%s325 + $0xf0] sm:$0xff] %v10347
        %10386 = vst [vmem:[%s325 + $0xf8] sm:$0xff] %v10352
        %s10387 = sand.u32 %s225, 1
        %s10388 = scalar_lea.sflag [#allocation6], %s10387
        %s10389 = sand.u32 %s225, 1
        %s10390 = smul.addr %s10389, 256
        %s10391 = scalar_lea.vmem [#allocation5], %s10390
        // Predicated region
        $region57: #{tpu_custom_call.1} parent=55 // pred_check
          %p10392 = pneg %p235
        $region58: #{tpu_custom_call.1} parent=55 // pred_check_branch
          %10394 = sbr.rel (%p10392) target = $region60
        $region59: #{tpu_custom_call.1} parent=55 // pred_region
          %s10396 = ssub.s32 4096, 4096
          %10397 = vsyncadd %s10388, %s10396
          %s10398 = smul.addr %s23, 32
          %s10399 = smul.addr %s10398, 128
          %s10400 = scalar_lea.hbm %s9, %s10399
          %s10401 = sshll.u32 %s10391, 4
          %s10402 = int_to_ptr.vmem [resolvable:$true] %s10401
          %10407 = dma.vmem_to_hbm [thread:$0]  %s10402, 4096, %s10400, %s10388, 128, 128, 8
        $region60: #{tpu_custom_call.1} parent=55 // pred_fallthru
          _
      $region56: #{tpu_custom_call.1} parent=5 // pred_fallthru
        _
      %p10408 = scmp.le.s32.totalorder 2, %s18
      // Predicated region
      $region61: #{tpu_custom_call.1} parent=5 // pred_check
        %p10409 = pneg %p10408
      $region62: #{tpu_custom_call.1} parent=5 // pred_check_branch
        %10411 = sbr.rel (%p10409) target = $region64
      $region63: #{tpu_custom_call.1} parent=5 // pred_region
        %s10412 = ssub.s32 %s18, 2
        // Predicated region
        $region65: #{tpu_custom_call.1} parent=63 // pred_check
          %p10413 = pneg %p241
        $region66: #{tpu_custom_call.1} parent=63 // pred_check_branch
          %10415 = sbr.rel (%p10413) target = $region68
        $region67: #{tpu_custom_call.1} parent=63 // pred_region
          %s10416 = sand.u32 %s226, 1
          %s10417 = scalar_lea.sflag [#allocation6], %s10416
          %s10418 = sand.u32 %s226, 1
          %s10419 = smul.addr %s10418, 256
          %s10420 = scalar_lea.vmem [#allocation5], %s10419
          %10421 = dma.done %s10417, 4096
        $region68: #{tpu_custom_call.1} parent=63 // pred_fallthru
          _
      $region64: #{tpu_custom_call.1} parent=5 // pred_fallthru
        _
    $region6: #{tpu_custom_call.1} parent=1 // loop_footer
      %s22 = sadd.s32 1, %s18
    $region7: #{tpu_custom_call.1} parent=1 // loop_footer_branch
      %17 = sbr.rel target = $region3
    $region8: #{tpu_custom_call.1} parent=1 // loop_exit
      _
    %10422 = vsyncpa [#allocation6], 1
    %s10423 = scalar_lea.sflag [#allocation6], 1
    %10424 = vsyncpa %s10423, 1

</llo_original>
